<compile_context>
chip_gen: v6e
topology: v6e:2x2x1
jax: 0.10.0
libtpu: 0.0.40
codegen_flags: <defaults>
</compile_context>

<pallas_src>
import functools

import jax
import jax.numpy as jnp
from jax.experimental import pallas as pl
from jax.experimental.pallas import tpu as pltpu


def transformer_block_kernel(x_ref, wlin_ref, blin_ref,
                             wqkv_ref, bqkv_ref, wo_ref, bo_ref, wmlp_ref,
                             out_ref, attn_ref,
                             *, num_layers, num_heads, bblk, seq):
    # Channel-major activations: (C, L) with L = bblk * seq on the lane axis.
    p = x_ref[0].astype(jnp.float32)                       # (C, L)
    c = p.shape[0]
    dh = c // num_heads
    tq = min(128, seq)                                     # query tile (lanes)

    # p <- p + Linear(p)   (learned positional embedding, bias in f32)
    p = p + (jnp.dot(wlin_ref[...], p.astype(jnp.bfloat16),
                     preferred_element_type=jnp.float32) + blin_ref[...])

    for l in range(num_layers):
        # Fused q/k/v projection: external bias-free Linear folded with the
        # MHA in_proj (and 1/sqrt(dh) folded into the q rows) host-side.
        qkv = (jnp.dot(wqkv_ref[l], p.astype(jnp.bfloat16),
                       preferred_element_type=jnp.float32)
               + bqkv_ref[l])                              # (3C, L) f32

        for img in range(bblk):                            # images in this step
            c0 = img * seq
            # Keys transposed once per image (proven (32,256)->(256,32) path),
            # sliced per head below.
            k_t = qkv[c:2 * c, c0:c0 + seq].T              # (S, C) f32

            for hh in range(num_heads):
                lo = hh * dh
                q_h = qkv[lo:lo + dh, c0:c0 + seq]                          # (dh, S) f32
                v_h = qkv[2 * c + lo:2 * c + lo + dh,
                          c0:c0 + seq].astype(jnp.bfloat16)                 # (dh, S) bf16
                k_h = k_t[:, lo:lo + dh]                                    # (S, dh) f32

                for q0 in range(0, seq, tq):
                    # Scores with keys on sublanes / queries on lanes: softmax
                    # stats are (1, tq) and broadcast over the (dh, tq) output.
                    s_t = jnp.dot(k_h, q_h[:, q0:q0 + tq],
                                  preferred_element_type=jnp.float32)       # (S, tq)
                    e = jnp.exp(s_t - jnp.max(s_t, axis=0, keepdims=True))
                    inv = pl.reciprocal(jnp.sum(e, axis=0, keepdims=True),
                                        approx=True)                        # (1, tq)
                    o = jnp.dot(v_h, e.astype(jnp.bfloat16),
                                preferred_element_type=jnp.float32)         # (dh, tq)
                    # Deferred normalization + aligned full-vreg scratch write.
                    attn_ref[lo:lo + dh, c0 + q0:c0 + q0 + tq] = o * inv

        # Output projection + residual 1.
        p = (jnp.dot(wo_ref[l], attn_ref[...].astype(jnp.bfloat16),
                     preferred_element_type=jnp.float32) + bo_ref[l]) + p
        # MLP (fc2 @ fc1 folded host-side) + residual 2.
        p = jnp.dot(wmlp_ref[l], p.astype(jnp.bfloat16),
                    preferred_element_type=jnp.float32) + p

    out_ref[0] = p.astype(out_ref.dtype)


def transformer_block(x, params, *, num_heads, bblk=None):
    n, c, w, h = x.shape
    s = w * h
    assert c % num_heads == 0, "embed dim must be divisible by num_heads"
    assert s % 128 == 0, "w*h must be a multiple of 128 for lane-dense tiles"
    layers = params["layers"]
    num_layers = len(layers)
    scale = 1.0 / float(c // num_heads) ** 0.5

    if bblk is None:
        # Keep >= 2 grid steps (v7x has 2 TensorCores); for larger batches
        # widen the lane axis to amortize per-step overhead.
        bblk = n // 2 if (n >= 4 and n % 2 == 0) else 1
    assert n % bblk == 0

    # Host-side folds (f32), then cast the matmul weights to bf16 operands.
    def fold(lp):
        wi, bi = lp["in_proj_w"], lp["in_proj_b"]
        wq = scale * (wi[:c] @ lp["wq"])
        bq = scale * bi[:c]
        wk = wi[c:2 * c] @ lp["wk"]
        bk = bi[c:2 * c]
        wv = wi[2 * c:] @ lp["wv"]
        bv = bi[2 * c:]
        wqkv = jnp.concatenate([wq, wk, wv], axis=0)        # (3C, C)
        bqkv = jnp.concatenate([bq, bk, bv], axis=0)        # (3C,)
        wmlp = lp["w2"] @ lp["w1"]                          # (C, C)
        return wqkv, bqkv, lp["wo"], lp["bo"], wmlp

    folded = [fold(lp) for lp in layers]
    wqkv = jnp.stack([f[0] for f in folded]).astype(jnp.bfloat16)   # (L, 3C, C)
    bqkv = jnp.stack([f[1] for f in folded])[..., None]             # (L, 3C, 1) f32
    wo = jnp.stack([f[2] for f in folded]).astype(jnp.bfloat16)     # (L, C, C)
    bo = jnp.stack([f[3] for f in folded])[..., None]               # (L, C, 1) f32
    wmlp = jnp.stack([f[4] for f in folded]).astype(jnp.bfloat16)   # (L, C, C)
    wlin = params["wlin"].astype(jnp.bfloat16)                      # (C, C)
    blin = params["blin"].reshape(c, 1)                             # (C, 1) f32

    steps = n // bblk
    lw = bblk * s
    # Lane-dense per-step layout: (steps, C, bblk*S). Host-side shuffle only.
    x_flat = x.reshape(steps, bblk, c, s).transpose(0, 2, 1, 3).reshape(steps, c, lw)

    const2 = lambda a: pl.BlockSpec(a.shape, lambda g: (0, 0))
    const3 = lambda a: pl.BlockSpec(a.shape, lambda g: (0, 0, 0))

    kernel = functools.partial(transformer_block_kernel,
                               num_layers=num_layers, num_heads=num_heads,
                               bblk=bblk, seq=s)

    out_flat = pl.pallas_call(
        kernel,
        out_shape=jax.ShapeDtypeStruct((steps, c, lw), x.dtype),
        grid_spec=pltpu.PrefetchScalarGridSpec(
            num_scalar_prefetch=0,
            grid=(steps,),
            in_specs=[
                pl.BlockSpec((1, c, lw), lambda g: (g, 0, 0)),   # x
                const2(wlin), const2(blin),
                const3(wqkv), const3(bqkv),
                const3(wo), const3(bo),
                const3(wmlp),
            ],
            out_specs=pl.BlockSpec((1, c, lw), lambda g: (g, 0, 0)),
            scratch_shapes=[pltpu.VMEM((c, lw), jnp.float32)],   # attn output
        ),
        compiler_params=pltpu.CompilerParams(
            dimension_semantics=("parallel",)),
    )(x_flat, wlin, blin, wqkv, bqkv, wo, bo, wmlp)

    return (out_flat.reshape(steps, c, bblk, s)
            .transpose(0, 2, 1, 3).reshape(n, c, w, h))


def transformer_block_ref(x, params, *, num_heads):
    """Pure-JAX f32 reference mirroring the PyTorch forward (unfolded weights)."""
    n, c, w, h = x.shape
    s = w * h
    dh = c // num_heads
    p = jnp.transpose(x.reshape(n, c, s), (2, 0, 1))       # (S, n, c)
    p = p + (p @ params["wlin"].T + params["blin"])
    for lp in params["layers"]:
        q = p @ lp["wq"].T
        k = p @ lp["wk"].T
        v = p @ lp["wv"].T
        wi, bi = lp["in_proj_w"], lp["in_proj_b"]
        q = q @ wi[:c].T + bi[:c]
        k = k @ wi[c:2 * c].T + bi[c:2 * c]
        v = v @ wi[2 * c:].T + bi[2 * c:]

        def heads(t):
            return jnp.transpose(t.reshape(s, n, num_heads, dh), (1, 2, 0, 3))

        qh, kh, vh = heads(q), heads(k), heads(v)
        scores = jnp.einsum("bnqd,bnkd->bnqk", qh, kh) * (1.0 / float(dh) ** 0.5)
        attn = jax.nn.softmax(scores, axis=-1)
        oh = jnp.einsum("bnqk,bnkd->bnqd", attn, vh)
        o = jnp.transpose(oh, (2, 0, 1, 3)).reshape(s, n, c)
        o = o @ lp["wo"].T + lp["bo"]
        p = o + p
        p = (p @ lp["w1"].T) @ lp["w2"].T + p
    return jnp.transpose(p, (1, 2, 0)).reshape(n, c, w, h)


def make_params(key, c, num_heads, num_layers):
    def lin(k, shape, scale=0.1):
        return scale * jax.random.normal(k, shape, jnp.float32)

    keys = jax.random.split(key, 2 + num_layers)
    params = {
        "wlin": lin(keys[0], (c, c)),
        "blin": lin(keys[1], (c,)),
        "layers": [],
    }
    for i in range(num_layers):
        ks = jax.random.split(keys[2 + i], 9)
        params["layers"].append({
            "wq": lin(ks[0], (c, c)),
            "wk": lin(ks[1], (c, c)),
            "wv": lin(ks[2], (c, c)),
            "in_proj_w": lin(ks[3], (3 * c, c)),
            "in_proj_b": lin(ks[4], (3 * c,)),
            "wo": lin(ks[5], (c, c)),
            "bo": lin(ks[6], (c,)),
            "w1": lin(ks[7], (c, c)),
            "w2": lin(ks[8], (c, c)),
        })
    return params


if __name__ == "__main__":
    # c1 == c2 == 32 (so self.conv is None), num_heads=4, num_layers=2,
    # spatial 16x16 -> seq = 256 tokens (lane-dense), batch = 2.
    b, c, w, h = 2, 32, 16, 16
    num_heads, num_layers = 4, 2

    key = jax.random.PRNGKey(0)
    kx, kp, kx2 = jax.random.split(key, 3)
    x = jax.random.normal(kx, (b, c, w, h), jnp.float32)
    params = make_params(kp, c, num_heads, num_layers)

    out = jax.block_until_ready(transformer_block(x, params, num_heads=num_heads))
    ref = transformer_block_ref(x, params, num_heads=num_heads)
    assert out.shape == (b, c, w, h)
    # bf16 matmul operands + approx reciprocal -> loosened tolerance vs f32 ref.
    assert jnp.allclose(out, ref, rtol=2e-2, atol=2e-2), "mismatch vs JAX reference (b=2)"

    # Also exercise the per-step batch-widening path (b=4 -> bblk=2, 2 grid
    # steps, 512-lane activation tiles).
    x2 = jax.random.normal(kx2, (4, c, w, h), jnp.float32)
    out2 = jax.block_until_ready(transformer_block(x2, params, num_heads=num_heads))
    ref2 = transformer_block_ref(x2, params, num_heads=num_heads)
    assert jnp.allclose(out2, ref2, rtol=2e-2, atol=2e-2), "mismatch vs JAX reference (b=4)"

    print("KERNEL_OK")
</pallas_src>

<mosaic_0001>
module attributes {stable_mosaic.version = 11 : i64} {
  func.func @transformer_block_kernel(%arg0: i32, %arg1: memref<1x32x256xf32, #tpu.memory_space<vmem>>, %arg2: memref<32x32xbf16, #tpu.memory_space<vmem>>, %arg3: memref<32x1xf32, #tpu.memory_space<vmem>>, %arg4: memref<2x96x32xbf16, #tpu.memory_space<vmem>>, %arg5: memref<2x96x1xf32, #tpu.memory_space<vmem>>, %arg6: memref<2x32x32xbf16, #tpu.memory_space<vmem>>, %arg7: memref<2x32x1xf32, #tpu.memory_space<vmem>>, %arg8: memref<2x32x32xbf16, #tpu.memory_space<vmem>>, %arg9: memref<1x32x256xf32, #tpu.memory_space<vmem>>, %arg10: memref<32x256xf32, #tpu.memory_space<vmem>>) attributes {dimension_semantics = [#tpu.dimension_semantics<parallel>], iteration_bounds = array<i64: 2>, scalar_prefetch = 0 : i64, scratch_operands = 1 : i64, tpu.core_type = #tpu.core_type<tc>, window_params = [{transform_indices = @transform_0, window_bounds = array<i64: 1, 32, 256>}, {pipeline_mode = #tpu.pipeline_mode<synchronous>, transform_indices = @transform_1, window_bounds = array<i64: 32, 32>}, {pipeline_mode = #tpu.pipeline_mode<synchronous>, transform_indices = @transform_2, window_bounds = array<i64: 32, 1>}, {pipeline_mode = #tpu.pipeline_mode<synchronous>, transform_indices = @transform_3, window_bounds = array<i64: 2, 96, 32>}, {pipeline_mode = #tpu.pipeline_mode<synchronous>, transform_indices = @transform_4, window_bounds = array<i64: 2, 96, 1>}, {pipeline_mode = #tpu.pipeline_mode<synchronous>, transform_indices = @transform_5, window_bounds = array<i64: 2, 32, 32>}, {pipeline_mode = #tpu.pipeline_mode<synchronous>, transform_indices = @transform_6, window_bounds = array<i64: 2, 32, 1>}, {pipeline_mode = #tpu.pipeline_mode<synchronous>, transform_indices = @transform_7, window_bounds = array<i64: 2, 32, 32>}, {transform_indices = @transform_8, window_bounds = array<i64: 1, 32, 256>}]} {
    %c0 = arith.constant 0 : index
    %c0_0 = arith.constant 0 : index
    %c0_1 = arith.constant 0 : index
    %0 = vector.load %arg1[%c0, %c0_0, %c0_1] : memref<1x32x256xf32, #tpu.memory_space<vmem>>, vector<1x32x256xf32>
    %1 = vector.shape_cast %0 : vector<1x32x256xf32> to vector<32x256xf32>
    %c0_2 = arith.constant 0 : index
    %c0_3 = arith.constant 0 : index
    %2 = vector.load %arg2[%c0_2, %c0_3] : memref<32x32xbf16, #tpu.memory_space<vmem>>, vector<32x32xbf16>
    %3 = arith.truncf %1 : vector<32x256xf32> to vector<32x256xbf16>
    %cst = arith.constant dense<0.000000e+00> : vector<32x256xf32>
    %4 = tpu.matmul %2, %3, %cst {dimension_numbers = #tpu.dot_dimension_numbers<[1], [0], [0], [1], [0, 0, 1, 1], [], []>} : vector<32x32xbf16>, vector<32x256xbf16>, vector<32x256xf32> -> vector<32x256xf32>
    %c0_4 = arith.constant 0 : index
    %c0_5 = arith.constant 0 : index
    %5 = vector.load %arg3[%c0_4, %c0_5] : memref<32x1xf32, #tpu.memory_space<vmem>>, vector<32x1xf32>
    %6 = vector.broadcast %5 : vector<32x1xf32> to vector<32x256xf32>
    %7 = arith.addf %4, %6 : vector<32x256xf32>
    %8 = arith.addf %1, %7 : vector<32x256xf32>
    %c0_6 = arith.constant 0 : index
    %c0_7 = arith.constant 0 : index
    %c0_8 = arith.constant 0 : index
    %9 = vector.load %arg4[%c0_6, %c0_7, %c0_8] : memref<2x96x32xbf16, #tpu.memory_space<vmem>>, vector<1x96x32xbf16>
    %10 = vector.shape_cast %9 : vector<1x96x32xbf16> to vector<96x32xbf16>
    %11 = arith.truncf %8 : vector<32x256xf32> to vector<32x256xbf16>
    %cst_9 = arith.constant dense<0.000000e+00> : vector<96x256xf32>
    %12 = tpu.matmul %10, %11, %cst_9 {dimension_numbers = #tpu.dot_dimension_numbers<[1], [0], [0], [1], [0, 0, 1, 1], [], []>} : vector<96x32xbf16>, vector<32x256xbf16>, vector<96x256xf32> -> vector<96x256xf32>
    %c0_10 = arith.constant 0 : index
    %c0_11 = arith.constant 0 : index
    %c0_12 = arith.constant 0 : index
    %13 = vector.load %arg5[%c0_10, %c0_11, %c0_12] : memref<2x96x1xf32, #tpu.memory_space<vmem>>, vector<1x96x1xf32>
    %14 = vector.shape_cast %13 : vector<1x96x1xf32> to vector<96x1xf32>
    %15 = vector.broadcast %14 : vector<96x1xf32> to vector<96x256xf32>
    %16 = arith.addf %12, %15 : vector<96x256xf32>
    %17 = vector.extract_strided_slice %16 {offsets = [32, 0], sizes = [32, 256], strides = [1, 1]} : vector<96x256xf32> to vector<32x256xf32>
    %18 = tpu.transpose %17, [1, 0] : vector<32x256xf32> -> vector<256x32xf32>
    %19 = vector.extract_strided_slice %16 {offsets = [0, 0], sizes = [8, 256], strides = [1, 1]} : vector<96x256xf32> to vector<8x256xf32>
    %20 = vector.extract_strided_slice %16 {offsets = [64, 0], sizes = [8, 256], strides = [1, 1]} : vector<96x256xf32> to vector<8x256xf32>
    %21 = arith.truncf %20 : vector<8x256xf32> to vector<8x256xbf16>
    %22 = vector.extract_strided_slice %18 {offsets = [0, 0], sizes = [256, 8], strides = [1, 1]} : vector<256x32xf32> to vector<256x8xf32>
    %23 = vector.extract_strided_slice %19 {offsets = [0, 0], sizes = [8, 128], strides = [1, 1]} : vector<8x256xf32> to vector<8x128xf32>
    %cst_13 = arith.constant dense<0.000000e+00> : vector<256x128xf32>
    %24 = tpu.matmul %22, %23, %cst_13 {dimension_numbers = #tpu.dot_dimension_numbers<[1], [0], [0], [1], [0, 0, 1, 1], [], []>} : vector<256x8xf32>, vector<8x128xf32>, vector<256x128xf32> -> vector<256x128xf32>
    %cst_14 = arith.constant dense<0xFF800000> : vector<128xf32>
    %25 = vector.multi_reduction <maximumf>, %24, %cst_14 [0] : vector<256x128xf32> to vector<128xf32>
    %26 = vector.shape_cast %25 : vector<128xf32> to vector<1x128xf32>
    %27 = vector.broadcast %26 : vector<1x128xf32> to vector<256x128xf32>
    %28 = arith.subf %24, %27 : vector<256x128xf32>
    %29 = math.exp %28 : vector<256x128xf32>
    %cst_15 = arith.constant dense<0.000000e+00> : vector<128xf32>
    %30 = vector.multi_reduction <add>, %29, %cst_15 [0] : vector<256x128xf32> to vector<128xf32>
    %31 = vector.shape_cast %30 : vector<128xf32> to vector<1x128xf32>
    %32 = tpu.reciprocal %31 {approx = true} : vector<1x128xf32> -> vector<1x128xf32>
    %33 = arith.truncf %29 : vector<256x128xf32> to vector<256x128xbf16>
    %cst_16 = arith.constant dense<0.000000e+00> : vector<8x128xf32>
    %34 = tpu.matmul %21, %33, %cst_16 {dimension_numbers = #tpu.dot_dimension_numbers<[1], [0], [0], [1], [0, 0, 1, 1], [], []>} : vector<8x256xbf16>, vector<256x128xbf16>, vector<8x128xf32> -> vector<8x128xf32>
    %35 = vector.broadcast %32 : vector<1x128xf32> to vector<8x128xf32>
    %36 = arith.mulf %34, %35 : vector<8x128xf32>
    %c0_17 = arith.constant 0 : index
    %c0_18 = arith.constant 0 : index
    %37 = vector.load %arg10[%c0_17, %c0_18] : memref<32x256xf32, #tpu.memory_space<vmem>>, vector<8x128xf32>
    tpu.vector_store %arg10[%c0_17, %c0_18], %36 {strides = array<i32>} : memref<32x256xf32, #tpu.memory_space<vmem>>, vector<8x128xf32>,
    %38 = vector.extract_strided_slice %19 {offsets = [0, 128], sizes = [8, 128], strides = [1, 1]} : vector<8x256xf32> to vector<8x128xf32>
    %cst_19 = arith.constant dense<0.000000e+00> : vector<256x128xf32>
    %39 = tpu.matmul %22, %38, %cst_19 {dimension_numbers = #tpu.dot_dimension_numbers<[1], [0], [0], [1], [0, 0, 1, 1], [], []>} : vector<256x8xf32>, vector<8x128xf32>, vector<256x128xf32> -> vector<256x128xf32>
    %cst_20 = arith.constant dense<0xFF800000> : vector<128xf32>
    %40 = vector.multi_reduction <maximumf>, %39, %cst_20 [0] : vector<256x128xf32> to vector<128xf32>
    %41 = vector.shape_cast %40 : vector<128xf32> to vector<1x128xf32>
    %42 = vector.broadcast %41 : vector<1x128xf32> to vector<256x128xf32>
    %43 = arith.subf %39, %42 : vector<256x128xf32>
    %44 = math.exp %43 : vector<256x128xf32>
    %cst_21 = arith.constant dense<0.000000e+00> : vector<128xf32>
    %45 = vector.multi_reduction <add>, %44, %cst_21 [0] : vector<256x128xf32> to vector<128xf32>
    %46 = vector.shape_cast %45 : vector<128xf32> to vector<1x128xf32>
    %47 = tpu.reciprocal %46 {approx = true} : vector<1x128xf32> -> vector<1x128xf32>
    %48 = arith.truncf %44 : vector<256x128xf32> to vector<256x128xbf16>
    %cst_22 = arith.constant dense<0.000000e+00> : vector<8x128xf32>
    %49 = tpu.matmul %21, %48, %cst_22 {dimension_numbers = #tpu.dot_dimension_numbers<[1], [0], [0], [1], [0, 0, 1, 1], [], []>} : vector<8x256xbf16>, vector<256x128xbf16>, vector<8x128xf32> -> vector<8x128xf32>
    %50 = vector.broadcast %47 : vector<1x128xf32> to vector<8x128xf32>
    %51 = arith.mulf %49, %50 : vector<8x128xf32>
    %c0_23 = arith.constant 0 : index
    %c128 = arith.constant 128 : index
    %52 = vector.load %arg10[%c0_23, %c128] : memref<32x256xf32, #tpu.memory_space<vmem>>, vector<8x128xf32>
    tpu.vector_store %arg10[%c0_23, %c128], %51 {strides = array<i32>} : memref<32x256xf32, #tpu.memory_space<vmem>>, vector<8x128xf32>,
    %53 = vector.extract_strided_slice %16 {offsets = [8, 0], sizes = [8, 256], strides = [1, 1]} : vector<96x256xf32> to vector<8x256xf32>
    %54 = vector.extract_strided_slice %16 {offsets = [72, 0], sizes = [8, 256], strides = [1, 1]} : vector<96x256xf32> to vector<8x256xf32>
    %55 = arith.truncf %54 : vector<8x256xf32> to vector<8x256xbf16>
    %56 = vector.extract_strided_slice %18 {offsets = [0, 8], sizes = [256, 8], strides = [1, 1]} : vector<256x32xf32> to vector<256x8xf32>
    %57 = vector.extract_strided_slice %53 {offsets = [0, 0], sizes = [8, 128], strides = [1, 1]} : vector<8x256xf32> to vector<8x128xf32>
    %cst_24 = arith.constant dense<0.000000e+00> : vector<256x128xf32>
    %58 = tpu.matmul %56, %57, %cst_24 {dimension_numbers = #tpu.dot_dimension_numbers<[1], [0], [0], [1], [0, 0, 1, 1], [], []>} : vector<256x8xf32>, vector<8x128xf32>, vector<256x128xf32> -> vector<256x128xf32>
    %cst_25 = arith.constant dense<0xFF800000> : vector<128xf32>
    %59 = vector.multi_reduction <maximumf>, %58, %cst_25 [0] : vector<256x128xf32> to vector<128xf32>
    %60 = vector.shape_cast %59 : vector<128xf32> to vector<1x128xf32>
    %61 = vector.broadcast %60 : vector<1x128xf32> to vector<256x128xf32>
    %62 = arith.subf %58, %61 : vector<256x128xf32>
    %63 = math.exp %62 : vector<256x128xf32>
    %cst_26 = arith.constant dense<0.000000e+00> : vector<128xf32>
    %64 = vector.multi_reduction <add>, %63, %cst_26 [0] : vector<256x128xf32> to vector<128xf32>
    %65 = vector.shape_cast %64 : vector<128xf32> to vector<1x128xf32>
    %66 = tpu.reciprocal %65 {approx = true} : vector<1x128xf32> -> vector<1x128xf32>
    %67 = arith.truncf %63 : vector<256x128xf32> to vector<256x128xbf16>
    %cst_27 = arith.constant dense<0.000000e+00> : vector<8x128xf32>
    %68 = tpu.matmul %55, %67, %cst_27 {dimension_numbers = #tpu.dot_dimension_numbers<[1], [0], [0], [1], [0, 0, 1, 1], [], []>} : vector<8x256xbf16>, vector<256x128xbf16>, vector<8x128xf32> -> vector<8x128xf32>
    %69 = vector.broadcast %66 : vector<1x128xf32> to vector<8x128xf32>
    %70 = arith.mulf %68, %69 : vector<8x128xf32>
    %c8 = arith.constant 8 : index
    %c0_28 = arith.constant 0 : index
    %71 = vector.load %arg10[%c8, %c0_28] : memref<32x256xf32, #tpu.memory_space<vmem>>, vector<8x128xf32>
    tpu.vector_store %arg10[%c8, %c0_28], %70 {strides = array<i32>} : memref<32x256xf32, #tpu.memory_space<vmem>>, vector<8x128xf32>,
    %72 = vector.extract_strided_slice %53 {offsets = [0, 128], sizes = [8, 128], strides = [1, 1]} : vector<8x256xf32> to vector<8x128xf32>
    %cst_29 = arith.constant dense<0.000000e+00> : vector<256x128xf32>
    %73 = tpu.matmul %56, %72, %cst_29 {dimension_numbers = #tpu.dot_dimension_numbers<[1], [0], [0], [1], [0, 0, 1, 1], [], []>} : vector<256x8xf32>, vector<8x128xf32>, vector<256x128xf32> -> vector<256x128xf32>
    %cst_30 = arith.constant dense<0xFF800000> : vector<128xf32>
    %74 = vector.multi_reduction <maximumf>, %73, %cst_30 [0] : vector<256x128xf32> to vector<128xf32>
    %75 = vector.shape_cast %74 : vector<128xf32> to vector<1x128xf32>
    %76 = vector.broadcast %75 : vector<1x128xf32> to vector<256x128xf32>
    %77 = arith.subf %73, %76 : vector<256x128xf32>
    %78 = math.exp %77 : vector<256x128xf32>
    %cst_31 = arith.constant dense<0.000000e+00> : vector<128xf32>
    %79 = vector.multi_reduction <add>, %78, %cst_31 [0] : vector<256x128xf32> to vector<128xf32>
    %80 = vector.shape_cast %79 : vector<128xf32> to vector<1x128xf32>
    %81 = tpu.reciprocal %80 {approx = true} : vector<1x128xf32> -> vector<1x128xf32>
    %82 = arith.truncf %78 : vector<256x128xf32> to vector<256x128xbf16>
    %cst_32 = arith.constant dense<0.000000e+00> : vector<8x128xf32>
    %83 = tpu.matmul %55, %82, %cst_32 {dimension_numbers = #tpu.dot_dimension_numbers<[1], [0], [0], [1], [0, 0, 1, 1], [], []>} : vector<8x256xbf16>, vector<256x128xbf16>, vector<8x128xf32> -> vector<8x128xf32>
    %84 = vector.broadcast %81 : vector<1x128xf32> to vector<8x128xf32>
    %85 = arith.mulf %83, %84 : vector<8x128xf32>
    %c8_33 = arith.constant 8 : index
    %c128_34 = arith.constant 128 : index
    %86 = vector.load %arg10[%c8_33, %c128_34] : memref<32x256xf32, #tpu.memory_space<vmem>>, vector<8x128xf32>
    tpu.vector_store %arg10[%c8_33, %c128_34], %85 {strides = array<i32>} : memref<32x256xf32, #tpu.memory_space<vmem>>, vector<8x128xf32>,
    %87 = vector.extract_strided_slice %16 {offsets = [16, 0], sizes = [8, 256], strides = [1, 1]} : vector<96x256xf32> to vector<8x256xf32>
    %88 = vector.extract_strided_slice %16 {offsets = [80, 0], sizes = [8, 256], strides = [1, 1]} : vector<96x256xf32> to vector<8x256xf32>
    %89 = arith.truncf %88 : vector<8x256xf32> to vector<8x256xbf16>
    %90 = vector.extract_strided_slice %18 {offsets = [0, 16], sizes = [256, 8], strides = [1, 1]} : vector<256x32xf32> to vector<256x8xf32>
    %91 = vector.extract_strided_slice %87 {offsets = [0, 0], sizes = [8, 128], strides = [1, 1]} : vector<8x256xf32> to vector<8x128xf32>
    %cst_35 = arith.constant dense<0.000000e+00> : vector<256x128xf32>
    %92 = tpu.matmul %90, %91, %cst_35 {dimension_numbers = #tpu.dot_dimension_numbers<[1], [0], [0], [1], [0, 0, 1, 1], [], []>} : vector<256x8xf32>, vector<8x128xf32>, vector<256x128xf32> -> vector<256x128xf32>
    %cst_36 = arith.constant dense<0xFF800000> : vector<128xf32>
    %93 = vector.multi_reduction <maximumf>, %92, %cst_36 [0] : vector<256x128xf32> to vector<128xf32>
    %94 = vector.shape_cast %93 : vector<128xf32> to vector<1x128xf32>
    %95 = vector.broadcast %94 : vector<1x128xf32> to vector<256x128xf32>
    %96 = arith.subf %92, %95 : vector<256x128xf32>
    %97 = math.exp %96 : vector<256x128xf32>
    %cst_37 = arith.constant dense<0.000000e+00> : vector<128xf32>
    %98 = vector.multi_reduction <add>, %97, %cst_37 [0] : vector<256x128xf32> to vector<128xf32>
    %99 = vector.shape_cast %98 : vector<128xf32> to vector<1x128xf32>
    %100 = tpu.reciprocal %99 {approx = true} : vector<1x128xf32> -> vector<1x128xf32>
    %101 = arith.truncf %97 : vector<256x128xf32> to vector<256x128xbf16>
    %cst_38 = arith.constant dense<0.000000e+00> : vector<8x128xf32>
    %102 = tpu.matmul %89, %101, %cst_38 {dimension_numbers = #tpu.dot_dimension_numbers<[1], [0], [0], [1], [0, 0, 1, 1], [], []>} : vector<8x256xbf16>, vector<256x128xbf16>, vector<8x128xf32> -> vector<8x128xf32>
    %103 = vector.broadcast %100 : vector<1x128xf32> to vector<8x128xf32>
    %104 = arith.mulf %102, %103 : vector<8x128xf32>
    %c16 = arith.constant 16 : index
    %c0_39 = arith.constant 0 : index
    %105 = vector.load %arg10[%c16, %c0_39] : memref<32x256xf32, #tpu.memory_space<vmem>>, vector<8x128xf32>
    tpu.vector_store %arg10[%c16, %c0_39], %104 {strides = array<i32>} : memref<32x256xf32, #tpu.memory_space<vmem>>, vector<8x128xf32>,
    %106 = vector.extract_strided_slice %87 {offsets = [0, 128], sizes = [8, 128], strides = [1, 1]} : vector<8x256xf32> to vector<8x128xf32>
    %cst_40 = arith.constant dense<0.000000e+00> : vector<256x128xf32>
    %107 = tpu.matmul %90, %106, %cst_40 {dimension_numbers = #tpu.dot_dimension_numbers<[1], [0], [0], [1], [0, 0, 1, 1], [], []>} : vector<256x8xf32>, vector<8x128xf32>, vector<256x128xf32> -> vector<256x128xf32>
    %cst_41 = arith.constant dense<0xFF800000> : vector<128xf32>
    %108 = vector.multi_reduction <maximumf>, %107, %cst_41 [0] : vector<256x128xf32> to vector<128xf32>
    %109 = vector.shape_cast %108 : vector<128xf32> to vector<1x128xf32>
    %110 = vector.broadcast %109 : vector<1x128xf32> to vector<256x128xf32>
    %111 = arith.subf %107, %110 : vector<256x128xf32>
    %112 = math.exp %111 : vector<256x128xf32>
    %cst_42 = arith.constant dense<0.000000e+00> : vector<128xf32>
    %113 = vector.multi_reduction <add>, %112, %cst_42 [0] : vector<256x128xf32> to vector<128xf32>
    %114 = vector.shape_cast %113 : vector<128xf32> to vector<1x128xf32>
    %115 = tpu.reciprocal %114 {approx = true} : vector<1x128xf32> -> vector<1x128xf32>
    %116 = arith.truncf %112 : vector<256x128xf32> to vector<256x128xbf16>
    %cst_43 = arith.constant dense<0.000000e+00> : vector<8x128xf32>
    %117 = tpu.matmul %89, %116, %cst_43 {dimension_numbers = #tpu.dot_dimension_numbers<[1], [0], [0], [1], [0, 0, 1, 1], [], []>} : vector<8x256xbf16>, vector<256x128xbf16>, vector<8x128xf32> -> vector<8x128xf32>
    %118 = vector.broadcast %115 : vector<1x128xf32> to vector<8x128xf32>
    %119 = arith.mulf %117, %118 : vector<8x128xf32>
    %c16_44 = arith.constant 16 : index
    %c128_45 = arith.constant 128 : index
    %120 = vector.load %arg10[%c16_44, %c128_45] : memref<32x256xf32, #tpu.memory_space<vmem>>, vector<8x128xf32>
    tpu.vector_store %arg10[%c16_44, %c128_45], %119 {strides = array<i32>} : memref<32x256xf32, #tpu.memory_space<vmem>>, vector<8x128xf32>,
    %121 = vector.extract_strided_slice %16 {offsets = [24, 0], sizes = [8, 256], strides = [1, 1]} : vector<96x256xf32> to vector<8x256xf32>
    %122 = vector.extract_strided_slice %16 {offsets = [88, 0], sizes = [8, 256], strides = [1, 1]} : vector<96x256xf32> to vector<8x256xf32>
    %123 = arith.truncf %122 : vector<8x256xf32> to vector<8x256xbf16>
    %124 = vector.extract_strided_slice %18 {offsets = [0, 24], sizes = [256, 8], strides = [1, 1]} : vector<256x32xf32> to vector<256x8xf32>
    %125 = vector.extract_strided_slice %121 {offsets = [0, 0], sizes = [8, 128], strides = [1, 1]} : vector<8x256xf32> to vector<8x128xf32>
    %cst_46 = arith.constant dense<0.000000e+00> : vector<256x128xf32>
    %126 = tpu.matmul %124, %125, %cst_46 {dimension_numbers = #tpu.dot_dimension_numbers<[1], [0], [0], [1], [0, 0, 1, 1], [], []>} : vector<256x8xf32>, vector<8x128xf32>, vector<256x128xf32> -> vector<256x128xf32>
    %cst_47 = arith.constant dense<0xFF800000> : vector<128xf32>
    %127 = vector.multi_reduction <maximumf>, %126, %cst_47 [0] : vector<256x128xf32> to vector<128xf32>
    %128 = vector.shape_cast %127 : vector<128xf32> to vector<1x128xf32>
    %129 = vector.broadcast %128 : vector<1x128xf32> to vector<256x128xf32>
    %130 = arith.subf %126, %129 : vector<256x128xf32>
    %131 = math.exp %130 : vector<256x128xf32>
    %cst_48 = arith.constant dense<0.000000e+00> : vector<128xf32>
    %132 = vector.multi_reduction <add>, %131, %cst_48 [0] : vector<256x128xf32> to vector<128xf32>
    %133 = vector.shape_cast %132 : vector<128xf32> to vector<1x128xf32>
    %134 = tpu.reciprocal %133 {approx = true} : vector<1x128xf32> -> vector<1x128xf32>
    %135 = arith.truncf %131 : vector<256x128xf32> to vector<256x128xbf16>
    %cst_49 = arith.constant dense<0.000000e+00> : vector<8x128xf32>
    %136 = tpu.matmul %123, %135, %cst_49 {dimension_numbers = #tpu.dot_dimension_numbers<[1], [0], [0], [1], [0, 0, 1, 1], [], []>} : vector<8x256xbf16>, vector<256x128xbf16>, vector<8x128xf32> -> vector<8x128xf32>
    %137 = vector.broadcast %134 : vector<1x128xf32> to vector<8x128xf32>
    %138 = arith.mulf %136, %137 : vector<8x128xf32>
    %c24 = arith.constant 24 : index
    %c0_50 = arith.constant 0 : index
    %139 = vector.load %arg10[%c24, %c0_50] : memref<32x256xf32, #tpu.memory_space<vmem>>, vector<8x128xf32>
    tpu.vector_store %arg10[%c24, %c0_50], %138 {strides = array<i32>} : memref<32x256xf32, #tpu.memory_space<vmem>>, vector<8x128xf32>,
    %140 = vector.extract_strided_slice %121 {offsets = [0, 128], sizes = [8, 128], strides = [1, 1]} : vector<8x256xf32> to vector<8x128xf32>
    %cst_51 = arith.constant dense<0.000000e+00> : vector<256x128xf32>
    %141 = tpu.matmul %124, %140, %cst_51 {dimension_numbers = #tpu.dot_dimension_numbers<[1], [0], [0], [1], [0, 0, 1, 1], [], []>} : vector<256x8xf32>, vector<8x128xf32>, vector<256x128xf32> -> vector<256x128xf32>
    %cst_52 = arith.constant dense<0xFF800000> : vector<128xf32>
    %142 = vector.multi_reduction <maximumf>, %141, %cst_52 [0] : vector<256x128xf32> to vector<128xf32>
    %143 = vector.shape_cast %142 : vector<128xf32> to vector<1x128xf32>
    %144 = vector.broadcast %143 : vector<1x128xf32> to vector<256x128xf32>
    %145 = arith.subf %141, %144 : vector<256x128xf32>
    %146 = math.exp %145 : vector<256x128xf32>
    %cst_53 = arith.constant dense<0.000000e+00> : vector<128xf32>
    %147 = vector.multi_reduction <add>, %146, %cst_53 [0] : vector<256x128xf32> to vector<128xf32>
    %148 = vector.shape_cast %147 : vector<128xf32> to vector<1x128xf32>
    %149 = tpu.reciprocal %148 {approx = true} : vector<1x128xf32> -> vector<1x128xf32>
    %150 = arith.truncf %146 : vector<256x128xf32> to vector<256x128xbf16>
    %cst_54 = arith.constant dense<0.000000e+00> : vector<8x128xf32>
    %151 = tpu.matmul %123, %150, %cst_54 {dimension_numbers = #tpu.dot_dimension_numbers<[1], [0], [0], [1], [0, 0, 1, 1], [], []>} : vector<8x256xbf16>, vector<256x128xbf16>, vector<8x128xf32> -> vector<8x128xf32>
    %152 = vector.broadcast %149 : vector<1x128xf32> to vector<8x128xf32>
    %153 = arith.mulf %151, %152 : vector<8x128xf32>
    %c24_55 = arith.constant 24 : index
    %c128_56 = arith.constant 128 : index
    %154 = vector.load %arg10[%c24_55, %c128_56] : memref<32x256xf32, #tpu.memory_space<vmem>>, vector<8x128xf32>
    tpu.vector_store %arg10[%c24_55, %c128_56], %153 {strides = array<i32>} : memref<32x256xf32, #tpu.memory_space<vmem>>, vector<8x128xf32>,
    %c0_57 = arith.constant 0 : index
    %c0_58 = arith.constant 0 : index
    %c0_59 = arith.constant 0 : index
    %155 = vector.load %arg6[%c0_57, %c0_58, %c0_59] : memref<2x32x32xbf16, #tpu.memory_space<vmem>>, vector<1x32x32xbf16>
    %156 = vector.shape_cast %155 : vector<1x32x32xbf16> to vector<32x32xbf16>
    %c0_60 = arith.constant 0 : index
    %c0_61 = arith.constant 0 : index
    %157 = vector.load %arg10[%c0_60, %c0_61] : memref<32x256xf32, #tpu.memory_space<vmem>>, vector<32x256xf32>
    %158 = arith.truncf %157 : vector<32x256xf32> to vector<32x256xbf16>
    %cst_62 = arith.constant dense<0.000000e+00> : vector<32x256xf32>
    %159 = tpu.matmul %156, %158, %cst_62 {dimension_numbers = #tpu.dot_dimension_numbers<[1], [0], [0], [1], [0, 0, 1, 1], [], []>} : vector<32x32xbf16>, vector<32x256xbf16>, vector<32x256xf32> -> vector<32x256xf32>
    %c0_63 = arith.constant 0 : index
    %c0_64 = arith.constant 0 : index
    %c0_65 = arith.constant 0 : index
    %160 = vector.load %arg7[%c0_63, %c0_64, %c0_65] : memref<2x32x1xf32, #tpu.memory_space<vmem>>, vector<1x32x1xf32>
    %161 = vector.shape_cast %160 : vector<1x32x1xf32> to vector<32x1xf32>
    %162 = vector.broadcast %161 : vector<32x1xf32> to vector<32x256xf32>
    %163 = arith.addf %159, %162 : vector<32x256xf32>
    %164 = arith.addf %163, %8 : vector<32x256xf32>
    %c0_66 = arith.constant 0 : index
    %c0_67 = arith.constant 0 : index
    %c0_68 = arith.constant 0 : index
    %165 = vector.load %arg8[%c0_66, %c0_67, %c0_68] : memref<2x32x32xbf16, #tpu.memory_space<vmem>>, vector<1x32x32xbf16>
    %166 = vector.shape_cast %165 : vector<1x32x32xbf16> to vector<32x32xbf16>
    %167 = arith.truncf %164 : vector<32x256xf32> to vector<32x256xbf16>
    %cst_69 = arith.constant dense<0.000000e+00> : vector<32x256xf32>
    %168 = tpu.matmul %166, %167, %cst_69 {dimension_numbers = #tpu.dot_dimension_numbers<[1], [0], [0], [1], [0, 0, 1, 1], [], []>} : vector<32x32xbf16>, vector<32x256xbf16>, vector<32x256xf32> -> vector<32x256xf32>
    %169 = arith.addf %168, %164 : vector<32x256xf32>
    %c1 = arith.constant 1 : index
    %c0_70 = arith.constant 0 : index
    %c0_71 = arith.constant 0 : index
    %170 = vector.load %arg4[%c1, %c0_70, %c0_71] : memref<2x96x32xbf16, #tpu.memory_space<vmem>>, vector<1x96x32xbf16>
    %171 = vector.shape_cast %170 : vector<1x96x32xbf16> to vector<96x32xbf16>
    %172 = arith.truncf %169 : vector<32x256xf32> to vector<32x256xbf16>
    %cst_72 = arith.constant dense<0.000000e+00> : vector<96x256xf32>
    %173 = tpu.matmul %171, %172, %cst_72 {dimension_numbers = #tpu.dot_dimension_numbers<[1], [0], [0], [1], [0, 0, 1, 1], [], []>} : vector<96x32xbf16>, vector<32x256xbf16>, vector<96x256xf32> -> vector<96x256xf32>
    %c1_73 = arith.constant 1 : index
    %c0_74 = arith.constant 0 : index
    %c0_75 = arith.constant 0 : index
    %174 = vector.load %arg5[%c1_73, %c0_74, %c0_75] : memref<2x96x1xf32, #tpu.memory_space<vmem>>, vector<1x96x1xf32>
    %175 = vector.shape_cast %174 : vector<1x96x1xf32> to vector<96x1xf32>
    %176 = vector.broadcast %175 : vector<96x1xf32> to vector<96x256xf32>
    %177 = arith.addf %173, %176 : vector<96x256xf32>
    %178 = vector.extract_strided_slice %177 {offsets = [32, 0], sizes = [32, 256], strides = [1, 1]} : vector<96x256xf32> to vector<32x256xf32>
    %179 = tpu.transpose %178, [1, 0] : vector<32x256xf32> -> vector<256x32xf32>
    %180 = vector.extract_strided_slice %177 {offsets = [0, 0], sizes = [8, 256], strides = [1, 1]} : vector<96x256xf32> to vector<8x256xf32>
    %181 = vector.extract_strided_slice %177 {offsets = [64, 0], sizes = [8, 256], strides = [1, 1]} : vector<96x256xf32> to vector<8x256xf32>
    %182 = arith.truncf %181 : vector<8x256xf32> to vector<8x256xbf16>
    %183 = vector.extract_strided_slice %179 {offsets = [0, 0], sizes = [256, 8], strides = [1, 1]} : vector<256x32xf32> to vector<256x8xf32>
    %184 = vector.extract_strided_slice %180 {offsets = [0, 0], sizes = [8, 128], strides = [1, 1]} : vector<8x256xf32> to vector<8x128xf32>
    %cst_76 = arith.constant dense<0.000000e+00> : vector<256x128xf32>
    %185 = tpu.matmul %183, %184, %cst_76 {dimension_numbers = #tpu.dot_dimension_numbers<[1], [0], [0], [1], [0, 0, 1, 1], [], []>} : vector<256x8xf32>, vector<8x128xf32>, vector<256x128xf32> -> vector<256x128xf32>
    %cst_77 = arith.constant dense<0xFF800000> : vector<128xf32>
    %186 = vector.multi_reduction <maximumf>, %185, %cst_77 [0] : vector<256x128xf32> to vector<128xf32>
    %187 = vector.shape_cast %186 : vector<128xf32> to vector<1x128xf32>
    %188 = vector.broadcast %187 : vector<1x128xf32> to vector<256x128xf32>
    %189 = arith.subf %185, %188 : vector<256x128xf32>
    %190 = math.exp %189 : vector<256x128xf32>
    %cst_78 = arith.constant dense<0.000000e+00> : vector<128xf32>
    %191 = vector.multi_reduction <add>, %190, %cst_78 [0] : vector<256x128xf32> to vector<128xf32>
    %192 = vector.shape_cast %191 : vector<128xf32> to vector<1x128xf32>
    %193 = tpu.reciprocal %192 {approx = true} : vector<1x128xf32> -> vector<1x128xf32>
    %194 = arith.truncf %190 : vector<256x128xf32> to vector<256x128xbf16>
    %cst_79 = arith.constant dense<0.000000e+00> : vector<8x128xf32>
    %195 = tpu.matmul %182, %194, %cst_79 {dimension_numbers = #tpu.dot_dimension_numbers<[1], [0], [0], [1], [0, 0, 1, 1], [], []>} : vector<8x256xbf16>, vector<256x128xbf16>, vector<8x128xf32> -> vector<8x128xf32>
    %196 = vector.broadcast %193 : vector<1x128xf32> to vector<8x128xf32>
    %197 = arith.mulf %195, %196 : vector<8x128xf32>
    %c0_80 = arith.constant 0 : index
    %c0_81 = arith.constant 0 : index
    %198 = vector.load %arg10[%c0_80, %c0_81] : memref<32x256xf32, #tpu.memory_space<vmem>>, vector<8x128xf32>
    tpu.vector_store %arg10[%c0_80, %c0_81], %197 {strides = array<i32>} : memref<32x256xf32, #tpu.memory_space<vmem>>, vector<8x128xf32>,
    %199 = vector.extract_strided_slice %180 {offsets = [0, 128], sizes = [8, 128], strides = [1, 1]} : vector<8x256xf32> to vector<8x128xf32>
    %cst_82 = arith.constant dense<0.000000e+00> : vector<256x128xf32>
    %200 = tpu.matmul %183, %199, %cst_82 {dimension_numbers = #tpu.dot_dimension_numbers<[1], [0], [0], [1], [0, 0, 1, 1], [], []>} : vector<256x8xf32>, vector<8x128xf32>, vector<256x128xf32> -> vector<256x128xf32>
    %cst_83 = arith.constant dense<0xFF800000> : vector<128xf32>
    %201 = vector.multi_reduction <maximumf>, %200, %cst_83 [0] : vector<256x128xf32> to vector<128xf32>
    %202 = vector.shape_cast %201 : vector<128xf32> to vector<1x128xf32>
    %203 = vector.broadcast %202 : vector<1x128xf32> to vector<256x128xf32>
    %204 = arith.subf %200, %203 : vector<256x128xf32>
    %205 = math.exp %204 : vector<256x128xf32>
    %cst_84 = arith.constant dense<0.000000e+00> : vector<128xf32>
    %206 = vector.multi_reduction <add>, %205, %cst_84 [0] : vector<256x128xf32> to vector<128xf32>
    %207 = vector.shape_cast %206 : vector<128xf32> to vector<1x128xf32>
    %208 = tpu.reciprocal %207 {approx = true} : vector<1x128xf32> -> vector<1x128xf32>
    %209 = arith.truncf %205 : vector<256x128xf32> to vector<256x128xbf16>
    %cst_85 = arith.constant dense<0.000000e+00> : vector<8x128xf32>
    %210 = tpu.matmul %182, %209, %cst_85 {dimension_numbers = #tpu.dot_dimension_numbers<[1], [0], [0], [1], [0, 0, 1, 1], [], []>} : vector<8x256xbf16>, vector<256x128xbf16>, vector<8x128xf32> -> vector<8x128xf32>
    %211 = vector.broadcast %208 : vector<1x128xf32> to vector<8x128xf32>
    %212 = arith.mulf %210, %211 : vector<8x128xf32>
    %c0_86 = arith.constant 0 : index
    %c128_87 = arith.constant 128 : index
    %213 = vector.load %arg10[%c0_86, %c128_87] : memref<32x256xf32, #tpu.memory_space<vmem>>, vector<8x128xf32>
    tpu.vector_store %arg10[%c0_86, %c128_87], %212 {strides = array<i32>} : memref<32x256xf32, #tpu.memory_space<vmem>>, vector<8x128xf32>,
    %214 = vector.extract_strided_slice %177 {offsets = [8, 0], sizes = [8, 256], strides = [1, 1]} : vector<96x256xf32> to vector<8x256xf32>
    %215 = vector.extract_strided_slice %177 {offsets = [72, 0], sizes = [8, 256], strides = [1, 1]} : vector<96x256xf32> to vector<8x256xf32>
    %216 = arith.truncf %215 : vector<8x256xf32> to vector<8x256xbf16>
    %217 = vector.extract_strided_slice %179 {offsets = [0, 8], sizes = [256, 8], strides = [1, 1]} : vector<256x32xf32> to vector<256x8xf32>
    %218 = vector.extract_strided_slice %214 {offsets = [0, 0], sizes = [8, 128], strides = [1, 1]} : vector<8x256xf32> to vector<8x128xf32>
    %cst_88 = arith.constant dense<0.000000e+00> : vector<256x128xf32>
    %219 = tpu.matmul %217, %218, %cst_88 {dimension_numbers = #tpu.dot_dimension_numbers<[1], [0], [0], [1], [0, 0, 1, 1], [], []>} : vector<256x8xf32>, vector<8x128xf32>, vector<256x128xf32> -> vector<256x128xf32>
    %cst_89 = arith.constant dense<0xFF800000> : vector<128xf32>
    %220 = vector.multi_reduction <maximumf>, %219, %cst_89 [0] : vector<256x128xf32> to vector<128xf32>
    %221 = vector.shape_cast %220 : vector<128xf32> to vector<1x128xf32>
    %222 = vector.broadcast %221 : vector<1x128xf32> to vector<256x128xf32>
    %223 = arith.subf %219, %222 : vector<256x128xf32>
    %224 = math.exp %223 : vector<256x128xf32>
    %cst_90 = arith.constant dense<0.000000e+00> : vector<128xf32>
    %225 = vector.multi_reduction <add>, %224, %cst_90 [0] : vector<256x128xf32> to vector<128xf32>
    %226 = vector.shape_cast %225 : vector<128xf32> to vector<1x128xf32>
    %227 = tpu.reciprocal %226 {approx = true} : vector<1x128xf32> -> vector<1x128xf32>
    %228 = arith.truncf %224 : vector<256x128xf32> to vector<256x128xbf16>
    %cst_91 = arith.constant dense<0.000000e+00> : vector<8x128xf32>
    %229 = tpu.matmul %216, %228, %cst_91 {dimension_numbers = #tpu.dot_dimension_numbers<[1], [0], [0], [1], [0, 0, 1, 1], [], []>} : vector<8x256xbf16>, vector<256x128xbf16>, vector<8x128xf32> -> vector<8x128xf32>
    %230 = vector.broadcast %227 : vector<1x128xf32> to vector<8x128xf32>
    %231 = arith.mulf %229, %230 : vector<8x128xf32>
    %c8_92 = arith.constant 8 : index
    %c0_93 = arith.constant 0 : index
    %232 = vector.load %arg10[%c8_92, %c0_93] : memref<32x256xf32, #tpu.memory_space<vmem>>, vector<8x128xf32>
    tpu.vector_store %arg10[%c8_92, %c0_93], %231 {strides = array<i32>} : memref<32x256xf32, #tpu.memory_space<vmem>>, vector<8x128xf32>,
    %233 = vector.extract_strided_slice %214 {offsets = [0, 128], sizes = [8, 128], strides = [1, 1]} : vector<8x256xf32> to vector<8x128xf32>
    %cst_94 = arith.constant dense<0.000000e+00> : vector<256x128xf32>
    %234 = tpu.matmul %217, %233, %cst_94 {dimension_numbers = #tpu.dot_dimension_numbers<[1], [0], [0], [1], [0, 0, 1, 1], [], []>} : vector<256x8xf32>, vector<8x128xf32>, vector<256x128xf32> -> vector<256x128xf32>
    %cst_95 = arith.constant dense<0xFF800000> : vector<128xf32>
    %235 = vector.multi_reduction <maximumf>, %234, %cst_95 [0] : vector<256x128xf32> to vector<128xf32>
    %236 = vector.shape_cast %235 : vector<128xf32> to vector<1x128xf32>
    %237 = vector.broadcast %236 : vector<1x128xf32> to vector<256x128xf32>
    %238 = arith.subf %234, %237 : vector<256x128xf32>
    %239 = math.exp %238 : vector<256x128xf32>
    %cst_96 = arith.constant dense<0.000000e+00> : vector<128xf32>
    %240 = vector.multi_reduction <add>, %239, %cst_96 [0] : vector<256x128xf32> to vector<128xf32>
    %241 = vector.shape_cast %240 : vector<128xf32> to vector<1x128xf32>
    %242 = tpu.reciprocal %241 {approx = true} : vector<1x128xf32> -> vector<1x128xf32>
    %243 = arith.truncf %239 : vector<256x128xf32> to vector<256x128xbf16>
    %cst_97 = arith.constant dense<0.000000e+00> : vector<8x128xf32>
    %244 = tpu.matmul %216, %243, %cst_97 {dimension_numbers = #tpu.dot_dimension_numbers<[1], [0], [0], [1], [0, 0, 1, 1], [], []>} : vector<8x256xbf16>, vector<256x128xbf16>, vector<8x128xf32> -> vector<8x128xf32>
    %245 = vector.broadcast %242 : vector<1x128xf32> to vector<8x128xf32>
    %246 = arith.mulf %244, %245 : vector<8x128xf32>
    %c8_98 = arith.constant 8 : index
    %c128_99 = arith.constant 128 : index
    %247 = vector.load %arg10[%c8_98, %c128_99] : memref<32x256xf32, #tpu.memory_space<vmem>>, vector<8x128xf32>
    tpu.vector_store %arg10[%c8_98, %c128_99], %246 {strides = array<i32>} : memref<32x256xf32, #tpu.memory_space<vmem>>, vector<8x128xf32>,
    %248 = vector.extract_strided_slice %177 {offsets = [16, 0], sizes = [8, 256], strides = [1, 1]} : vector<96x256xf32> to vector<8x256xf32>
    %249 = vector.extract_strided_slice %177 {offsets = [80, 0], sizes = [8, 256], strides = [1, 1]} : vector<96x256xf32> to vector<8x256xf32>
    %250 = arith.truncf %249 : vector<8x256xf32> to vector<8x256xbf16>
    %251 = vector.extract_strided_slice %179 {offsets = [0, 16], sizes = [256, 8], strides = [1, 1]} : vector<256x32xf32> to vector<256x8xf32>
    %252 = vector.extract_strided_slice %248 {offsets = [0, 0], sizes = [8, 128], strides = [1, 1]} : vector<8x256xf32> to vector<8x128xf32>
    %cst_100 = arith.constant dense<0.000000e+00> : vector<256x128xf32>
    %253 = tpu.matmul %251, %252, %cst_100 {dimension_numbers = #tpu.dot_dimension_numbers<[1], [0], [0], [1], [0, 0, 1, 1], [], []>} : vector<256x8xf32>, vector<8x128xf32>, vector<256x128xf32> -> vector<256x128xf32>
    %cst_101 = arith.constant dense<0xFF800000> : vector<128xf32>
    %254 = vector.multi_reduction <maximumf>, %253, %cst_101 [0] : vector<256x128xf32> to vector<128xf32>
    %255 = vector.shape_cast %254 : vector<128xf32> to vector<1x128xf32>
    %256 = vector.broadcast %255 : vector<1x128xf32> to vector<256x128xf32>
    %257 = arith.subf %253, %256 : vector<256x128xf32>
    %258 = math.exp %257 : vector<256x128xf32>
    %cst_102 = arith.constant dense<0.000000e+00> : vector<128xf32>
    %259 = vector.multi_reduction <add>, %258, %cst_102 [0] : vector<256x128xf32> to vector<128xf32>
    %260 = vector.shape_cast %259 : vector<128xf32> to vector<1x128xf32>
    %261 = tpu.reciprocal %260 {approx = true} : vector<1x128xf32> -> vector<1x128xf32>
    %262 = arith.truncf %258 : vector<256x128xf32> to vector<256x128xbf16>
    %cst_103 = arith.constant dense<0.000000e+00> : vector<8x128xf32>
    %263 = tpu.matmul %250, %262, %cst_103 {dimension_numbers = #tpu.dot_dimension_numbers<[1], [0], [0], [1], [0, 0, 1, 1], [], []>} : vector<8x256xbf16>, vector<256x128xbf16>, vector<8x128xf32> -> vector<8x128xf32>
    %264 = vector.broadcast %261 : vector<1x128xf32> to vector<8x128xf32>
    %265 = arith.mulf %263, %264 : vector<8x128xf32>
    %c16_104 = arith.constant 16 : index
    %c0_105 = arith.constant 0 : index
    %266 = vector.load %arg10[%c16_104, %c0_105] : memref<32x256xf32, #tpu.memory_space<vmem>>, vector<8x128xf32>
    tpu.vector_store %arg10[%c16_104, %c0_105], %265 {strides = array<i32>} : memref<32x256xf32, #tpu.memory_space<vmem>>, vector<8x128xf32>,
    %267 = vector.extract_strided_slice %248 {offsets = [0, 128], sizes = [8, 128], strides = [1, 1]} : vector<8x256xf32> to vector<8x128xf32>
    %cst_106 = arith.constant dense<0.000000e+00> : vector<256x128xf32>
    %268 = tpu.matmul %251, %267, %cst_106 {dimension_numbers = #tpu.dot_dimension_numbers<[1], [0], [0], [1], [0, 0, 1, 1], [], []>} : vector<256x8xf32>, vector<8x128xf32>, vector<256x128xf32> -> vector<256x128xf32>
    %cst_107 = arith.constant dense<0xFF800000> : vector<128xf32>
    %269 = vector.multi_reduction <maximumf>, %268, %cst_107 [0] : vector<256x128xf32> to vector<128xf32>
    %270 = vector.shape_cast %269 : vector<128xf32> to vector<1x128xf32>
    %271 = vector.broadcast %270 : vector<1x128xf32> to vector<256x128xf32>
    %272 = arith.subf %268, %271 : vector<256x128xf32>
    %273 = math.exp %272 : vector<256x128xf32>
    %cst_108 = arith.constant dense<0.000000e+00> : vector<128xf32>
    %274 = vector.multi_reduction <add>, %273, %cst_108 [0] : vector<256x128xf32> to vector<128xf32>
    %275 = vector.shape_cast %274 : vector<128xf32> to vector<1x128xf32>
    %276 = tpu.reciprocal %275 {approx = true} : vector<1x128xf32> -> vector<1x128xf32>
    %277 = arith.truncf %273 : vector<256x128xf32> to vector<256x128xbf16>
    %cst_109 = arith.constant dense<0.000000e+00> : vector<8x128xf32>
    %278 = tpu.matmul %250, %277, %cst_109 {dimension_numbers = #tpu.dot_dimension_numbers<[1], [0], [0], [1], [0, 0, 1, 1], [], []>} : vector<8x256xbf16>, vector<256x128xbf16>, vector<8x128xf32> -> vector<8x128xf32>
    %279 = vector.broadcast %276 : vector<1x128xf32> to vector<8x128xf32>
    %280 = arith.mulf %278, %279 : vector<8x128xf32>
    %c16_110 = arith.constant 16 : index
    %c128_111 = arith.constant 128 : index
    %281 = vector.load %arg10[%c16_110, %c128_111] : memref<32x256xf32, #tpu.memory_space<vmem>>, vector<8x128xf32>
    tpu.vector_store %arg10[%c16_110, %c128_111], %280 {strides = array<i32>} : memref<32x256xf32, #tpu.memory_space<vmem>>, vector<8x128xf32>,
    %282 = vector.extract_strided_slice %177 {offsets = [24, 0], sizes = [8, 256], strides = [1, 1]} : vector<96x256xf32> to vector<8x256xf32>
    %283 = vector.extract_strided_slice %177 {offsets = [88, 0], sizes = [8, 256], strides = [1, 1]} : vector<96x256xf32> to vector<8x256xf32>
    %284 = arith.truncf %283 : vector<8x256xf32> to vector<8x256xbf16>
    %285 = vector.extract_strided_slice %179 {offsets = [0, 24], sizes = [256, 8], strides = [1, 1]} : vector<256x32xf32> to vector<256x8xf32>
    %286 = vector.extract_strided_slice %282 {offsets = [0, 0], sizes = [8, 128], strides = [1, 1]} : vector<8x256xf32> to vector<8x128xf32>
    %cst_112 = arith.constant dense<0.000000e+00> : vector<256x128xf32>
    %287 = tpu.matmul %285, %286, %cst_112 {dimension_numbers = #tpu.dot_dimension_numbers<[1], [0], [0], [1], [0, 0, 1, 1], [], []>} : vector<256x8xf32>, vector<8x128xf32>, vector<256x128xf32> -> vector<256x128xf32>
    %cst_113 = arith.constant dense<0xFF800000> : vector<128xf32>
    %288 = vector.multi_reduction <maximumf>, %287, %cst_113 [0] : vector<256x128xf32> to vector<128xf32>
    %289 = vector.shape_cast %288 : vector<128xf32> to vector<1x128xf32>
    %290 = vector.broadcast %289 : vector<1x128xf32> to vector<256x128xf32>
    %291 = arith.subf %287, %290 : vector<256x128xf32>
    %292 = math.exp %291 : vector<256x128xf32>
    %cst_114 = arith.constant dense<0.000000e+00> : vector<128xf32>
    %293 = vector.multi_reduction <add>, %292, %cst_114 [0] : vector<256x128xf32> to vector<128xf32>
    %294 = vector.shape_cast %293 : vector<128xf32> to vector<1x128xf32>
    %295 = tpu.reciprocal %294 {approx = true} : vector<1x128xf32> -> vector<1x128xf32>
    %296 = arith.truncf %292 : vector<256x128xf32> to vector<256x128xbf16>
    %cst_115 = arith.constant dense<0.000000e+00> : vector<8x128xf32>
    %297 = tpu.matmul %284, %296, %cst_115 {dimension_numbers = #tpu.dot_dimension_numbers<[1], [0], [0], [1], [0, 0, 1, 1], [], []>} : vector<8x256xbf16>, vector<256x128xbf16>, vector<8x128xf32> -> vector<8x128xf32>
    %298 = vector.broadcast %295 : vector<1x128xf32> to vector<8x128xf32>
    %299 = arith.mulf %297, %298 : vector<8x128xf32>
    %c24_116 = arith.constant 24 : index
    %c0_117 = arith.constant 0 : index
    %300 = vector.load %arg10[%c24_116, %c0_117] : memref<32x256xf32, #tpu.memory_space<vmem>>, vector<8x128xf32>
    tpu.vector_store %arg10[%c24_116, %c0_117], %299 {strides = array<i32>} : memref<32x256xf32, #tpu.memory_space<vmem>>, vector<8x128xf32>,
    %301 = vector.extract_strided_slice %282 {offsets = [0, 128], sizes = [8, 128], strides = [1, 1]} : vector<8x256xf32> to vector<8x128xf32>
    %cst_118 = arith.constant dense<0.000000e+00> : vector<256x128xf32>
    %302 = tpu.matmul %285, %301, %cst_118 {dimension_numbers = #tpu.dot_dimension_numbers<[1], [0], [0], [1], [0, 0, 1, 1], [], []>} : vector<256x8xf32>, vector<8x128xf32>, vector<256x128xf32> -> vector<256x128xf32>
    %cst_119 = arith.constant dense<0xFF800000> : vector<128xf32>
    %303 = vector.multi_reduction <maximumf>, %302, %cst_119 [0] : vector<256x128xf32> to vector<128xf32>
    %304 = vector.shape_cast %303 : vector<128xf32> to vector<1x128xf32>
    %305 = vector.broadcast %304 : vector<1x128xf32> to vector<256x128xf32>
    %306 = arith.subf %302, %305 : vector<256x128xf32>
    %307 = math.exp %306 : vector<256x128xf32>
    %cst_120 = arith.constant dense<0.000000e+00> : vector<128xf32>
    %308 = vector.multi_reduction <add>, %307, %cst_120 [0] : vector<256x128xf32> to vector<128xf32>
    %309 = vector.shape_cast %308 : vector<128xf32> to vector<1x128xf32>
    %310 = tpu.reciprocal %309 {approx = true} : vector<1x128xf32> -> vector<1x128xf32>
    %311 = arith.truncf %307 : vector<256x128xf32> to vector<256x128xbf16>
    %cst_121 = arith.constant dense<0.000000e+00> : vector<8x128xf32>
    %312 = tpu.matmul %284, %311, %cst_121 {dimension_numbers = #tpu.dot_dimension_numbers<[1], [0], [0], [1], [0, 0, 1, 1], [], []>} : vector<8x256xbf16>, vector<256x128xbf16>, vector<8x128xf32> -> vector<8x128xf32>
    %313 = vector.broadcast %310 : vector<1x128xf32> to vector<8x128xf32>
    %314 = arith.mulf %312, %313 : vector<8x128xf32>
    %c24_122 = arith.constant 24 : index
    %c128_123 = arith.constant 128 : index
    %315 = vector.load %arg10[%c24_122, %c128_123] : memref<32x256xf32, #tpu.memory_space<vmem>>, vector<8x128xf32>
    tpu.vector_store %arg10[%c24_122, %c128_123], %314 {strides = array<i32>} : memref<32x256xf32, #tpu.memory_space<vmem>>, vector<8x128xf32>,
    %c1_124 = arith.constant 1 : index
    %c0_125 = arith.constant 0 : index
    %c0_126 = arith.constant 0 : index
    %316 = vector.load %arg6[%c1_124, %c0_125, %c0_126] : memref<2x32x32xbf16, #tpu.memory_space<vmem>>, vector<1x32x32xbf16>
    %317 = vector.shape_cast %316 : vector<1x32x32xbf16> to vector<32x32xbf16>
    %c0_127 = arith.constant 0 : index
    %c0_128 = arith.constant 0 : index
    %318 = vector.load %arg10[%c0_127, %c0_128] : memref<32x256xf32, #tpu.memory_space<vmem>>, vector<32x256xf32>
    %319 = arith.truncf %318 : vector<32x256xf32> to vector<32x256xbf16>
    %cst_129 = arith.constant dense<0.000000e+00> : vector<32x256xf32>
    %320 = tpu.matmul %317, %319, %cst_129 {dimension_numbers = #tpu.dot_dimension_numbers<[1], [0], [0], [1], [0, 0, 1, 1], [], []>} : vector<32x32xbf16>, vector<32x256xbf16>, vector<32x256xf32> -> vector<32x256xf32>
    %c1_130 = arith.constant 1 : index
    %c0_131 = arith.constant 0 : index
    %c0_132 = arith.constant 0 : index
    %321 = vector.load %arg7[%c1_130, %c0_131, %c0_132] : memref<2x32x1xf32, #tpu.memory_space<vmem>>, vector<1x32x1xf32>
    %322 = vector.shape_cast %321 : vector<1x32x1xf32> to vector<32x1xf32>
    %323 = vector.broadcast %322 : vector<32x1xf32> to vector<32x256xf32>
    %324 = arith.addf %320, %323 : vector<32x256xf32>
    %325 = arith.addf %324, %169 : vector<32x256xf32>
    %c1_133 = arith.constant 1 : index
    %c0_134 = arith.constant 0 : index
    %c0_135 = arith.constant 0 : index
    %326 = vector.load %arg8[%c1_133, %c0_134, %c0_135] : memref<2x32x32xbf16, #tpu.memory_space<vmem>>, vector<1x32x32xbf16>
    %327 = vector.shape_cast %326 : vector<1x32x32xbf16> to vector<32x32xbf16>
    %328 = arith.truncf %325 : vector<32x256xf32> to vector<32x256xbf16>
    %cst_136 = arith.constant dense<0.000000e+00> : vector<32x256xf32>
    %329 = tpu.matmul %327, %328, %cst_136 {dimension_numbers = #tpu.dot_dimension_numbers<[1], [0], [0], [1], [0, 0, 1, 1], [], []>} : vector<32x32xbf16>, vector<32x256xbf16>, vector<32x256xf32> -> vector<32x256xf32>
    %330 = arith.addf %329, %325 : vector<32x256xf32>
    %c0_137 = arith.constant 0 : index
    %c0_138 = arith.constant 0 : index
    %c0_139 = arith.constant 0 : index
    %331 = vector.load %arg9[%c0_137, %c0_138, %c0_139] : memref<1x32x256xf32, #tpu.memory_space<vmem>>, vector<1x32x256xf32>
    %332 = vector.shape_cast %331 : vector<1x32x256xf32> to vector<32x256xf32>
    %333 = vector.shape_cast %330 : vector<32x256xf32> to vector<1x32x256xf32>
    tpu.vector_store %arg9[%c0_137, %c0_138, %c0_139], %333 {strides = array<i32>} : memref<1x32x256xf32, #tpu.memory_space<vmem>>, vector<1x32x256xf32>,
    return
  }
  func.func @transform_0(%arg0: i32) -> (i32, i32, i32) {
    %c0_i32 = arith.constant 0 : i32
    %c0_i32_0 = arith.constant 0 : i32
    %c0_i32_1 = arith.constant 0 : i32
    return %arg0, %c0_i32, %c0_i32_0 : i32, i32, i32
  }
  func.func @transform_1(%arg0: i32) -> (i32, i32) {
    %c0_i32 = arith.constant 0 : i32
    %c0_i32_0 = arith.constant 0 : i32
    %c0_i32_1 = arith.constant 0 : i32
    return %c0_i32, %c0_i32_0 : i32, i32
  }
  func.func @transform_2(%arg0: i32) -> (i32, i32) {
    %c0_i32 = arith.constant 0 : i32
    %c0_i32_0 = arith.constant 0 : i32
    %c0_i32_1 = arith.constant 0 : i32
    return %c0_i32, %c0_i32_0 : i32, i32
  }
  func.func @transform_3(%arg0: i32) -> (i32, i32, i32) {
    %c0_i32 = arith.constant 0 : i32
    %c0_i32_0 = arith.constant 0 : i32
    %c0_i32_1 = arith.constant 0 : i32
    %c0_i32_2 = arith.constant 0 : i32
    return %c0_i32, %c0_i32_0, %c0_i32_1 : i32, i32, i32
  }
  func.func @transform_4(%arg0: i32) -> (i32, i32, i32) {
    %c0_i32 = arith.constant 0 : i32
    %c0_i32_0 = arith.constant 0 : i32
    %c0_i32_1 = arith.constant 0 : i32
    %c0_i32_2 = arith.constant 0 : i32
    return %c0_i32, %c0_i32_0, %c0_i32_1 : i32, i32, i32
  }
  func.func @transform_5(%arg0: i32) -> (i32, i32, i32) {
    %c0_i32 = arith.constant 0 : i32
    %c0_i32_0 = arith.constant 0 : i32
    %c0_i32_1 = arith.constant 0 : i32
    %c0_i32_2 = arith.constant 0 : i32
    return %c0_i32, %c0_i32_0, %c0_i32_1 : i32, i32, i32
  }
  func.func @transform_6(%arg0: i32) -> (i32, i32, i32) {
    %c0_i32 = arith.constant 0 : i32
    %c0_i32_0 = arith.constant 0 : i32
    %c0_i32_1 = arith.constant 0 : i32
    %c0_i32_2 = arith.constant 0 : i32
    return %c0_i32, %c0_i32_0, %c0_i32_1 : i32, i32, i32
  }
  func.func @transform_7(%arg0: i32) -> (i32, i32, i32) {
    %c0_i32 = arith.constant 0 : i32
    %c0_i32_0 = arith.constant 0 : i32
    %c0_i32_1 = arith.constant 0 : i32
    %c0_i32_2 = arith.constant 0 : i32
    return %c0_i32, %c0_i32_0, %c0_i32_1 : i32, i32, i32
  }
  func.func @transform_8(%arg0: i32) -> (i32, i32, i32) {
    %c0_i32 = arith.constant 0 : i32
    %c0_i32_0 = arith.constant 0 : i32
    %c0_i32_1 = arith.constant 0 : i32
    return %arg0, %c0_i32, %c0_i32_0 : i32, i32, i32
  }
}

</mosaic_0001>

<llo_original>
// kernel: tpu_custom_call.1
$region0: #{tpu_custom_call.1}
  #allocation0 [shape = 'u32[]', space=smem, size = 0x4, offset = 0x4, fixed_abs, tag = 'smem constant byte address 0x4 - core index']
  #allocation1 [shape = 'u32[144,128]{1,0:T(1,128)}', space=vmem, size = 0x12000, scoped, tag = 'internal scratch']
  #allocation2 [shape = 'f32[32,256]{1,0:T(8,128)}', space=vmem, size = 0x8000, scoped, tag = 'scratch operand']
  %s0 = inlined_call_operand.vmem [shape: f32[2,32,256], index: 0, kind: input, shape index: {}]
  %s1 = inlined_call_operand.vmem [shape: bf16[32,32], index: 1, kind: input, shape index: {}]
  %s2 = inlined_call_operand.vmem [shape: f32[32,1], index: 2, kind: input, shape index: {}]
  %s3 = inlined_call_operand.vmem [shape: bf16[2,96,32], index: 3, kind: input, shape index: {}]
  %s4 = inlined_call_operand.vmem [shape: f32[2,96,1], index: 4, kind: input, shape index: {}]
  %s5 = inlined_call_operand.vmem [shape: bf16[2,32,32], index: 5, kind: input, shape index: {}]
  %s6 = inlined_call_operand.vmem [shape: f32[2,32,1], index: 6, kind: input, shape index: {}]
  %s7 = inlined_call_operand.vmem [shape: bf16[2,32,32], index: 7, kind: input, shape index: {}]
  %s8 = inlined_call_operand.hbm [shape: f32[2,32,256], index: 8, kind: output, shape index: {}]
  %s9 = sld [smem:[#allocation0]]
  $region65: #{tpu_custom_call.1} parent=0
    _
  %s11 = ssub.s32 1, %s9
  %s12 = scalar_select 0, %s11, %s9
  $region1: #{tpu_custom_call.1} parent=0
    #allocation3 [shape = 'u8[65536]{0}', space=vmem, size = 0x10000, scoped, tag = 'output window, operand 0']
    #allocation4 [shape = 's32[2]{0}', space=sflag, size = 0x8, scoped, tag = 'scoped memory for tpu_custom_call.1']
    %13 = vsyncpa [#allocation4], 0
    %s14 = scalar_lea.sflag [#allocation4], 1
    %15 = vsyncpa %s14, 0
    loop: start=0, step=1, limit=4
    $region2: #{tpu_custom_call.1} parent=1 // loop_pre_header
      _
    $region3: #{tpu_custom_call.1} parent=1 // loop_header
      %s17 = sphi 0, %s21
      %p18 = scmp.ge.s32.totalorder %s17, 4
      %s27 = sphi 0, %s29
      %s30 = sphi 0, %s27
      %s31 = sphi 0, %s30
      %s47 = sphi 0, %s31
      %s51 = sphi 0, %s51
      %s53 = sphi 0, %s51
      %s54 = sphi 0, %s53
      %s68 = sphi 0, %s54
      %s72 = sphi 0, %s72
      %s74 = sphi 0, %s72
      %s75 = sphi 0, %s74
      %s89 = sphi 0, %s75
      %s93 = sphi 0, %s93
      %s95 = sphi 0, %s93
      %s96 = sphi 0, %s95
      %s110 = sphi 0, %s96
      %s114 = sphi 0, %s114
      %s116 = sphi 0, %s114
      %s117 = sphi 0, %s116
      %s131 = sphi 0, %s117
      %s135 = sphi 0, %s135
      %s137 = sphi 0, %s135
      %s138 = sphi 0, %s137
      %s152 = sphi 0, %s138
      %s156 = sphi 0, %s156
      %s158 = sphi 0, %s156
      %s159 = sphi 0, %s158
      %s173 = sphi 0, %s159
      %s177 = sphi 0, %s177
      %s179 = sphi 0, %s177
      %s180 = sphi 0, %s179
      %s194 = sphi 0, %s180
      %s200 = sphi 0, %s202
      %s203 = sphi 0, %s200
      %s204 = sphi 0, %s203
      %s220 = sphi 0, %s204
    $region4: #{tpu_custom_call.1} parent=1 // loop_header_branch
      %20 = sbr.rel (%p18) target = $region8
    $region5: #{tpu_custom_call.1} parent=1 // loop_body
      %s22 = ssub.s32 %s17, 1
      %s23 = ssub.s32 %s17, 2
      %s24 = sadd.s32 %s17, 1
      %s25 = ssub.s32 %s17, %s24
      %p26 = scmp.eq.s32.totalorder %s25, 0
      %s28 = sadd.s32 %s27, 1
      %s29 = scalar_select %p26, %s27, %s28
      %p32 = pneg %p26
      %p33 = scmp.eq.s32.totalorder %s17, 1
      %p34 = por %p32, %p33
      %p35 = scmp.ne.s32.totalorder %s27, %s30
      %p36 = scmp.eq.s32.totalorder %s17, 0
      %p37 = por %p35, %p36
      %p38 = scmp.ne.s32.totalorder %s27, %s30
      %p39 = scmp.eq.s32.totalorder %s22, 1
      %p40 = por %p38, %p39
      %p41 = scmp.ne.s32.totalorder %s30, %s31
      %p42 = scmp.eq.s32.totalorder %s22, 0
      %p43 = por %p41, %p42
      %p44 = scmp.ne.s32.totalorder %s30, %s31
      %p45 = scmp.eq.s32.totalorder %s23, 1
      %p46 = por %p44, %p45
      %p48 = scmp.ne.s32.totalorder %s31, %s47
      %p49 = scmp.eq.s32.totalorder %s23, 0
      %p50 = por %p48, %p49
      %s52 = sadd.s32 %s51, 1
      %p55 = scmp.eq.s32.totalorder %s17, 1
      %p56 = scmp.ne.s32.totalorder %s51, %s53
      %p57 = scmp.eq.s32.totalorder %s17, 0
      %p58 = por %p56, %p57
      %p59 = scmp.ne.s32.totalorder %s51, %s53
      %p60 = scmp.eq.s32.totalorder %s22, 1
      %p61 = por %p59, %p60
      %p62 = scmp.ne.s32.totalorder %s53, %s54
      %p63 = scmp.eq.s32.totalorder %s22, 0
      %p64 = por %p62, %p63
      %p65 = scmp.ne.s32.totalorder %s53, %s54
      %p66 = scmp.eq.s32.totalorder %s23, 1
      %p67 = por %p65, %p66
      %p69 = scmp.ne.s32.totalorder %s54, %s68
      %p70 = scmp.eq.s32.totalorder %s23, 0
      %p71 = por %p69, %p70
      %s73 = sadd.s32 %s72, 1
      %p76 = scmp.eq.s32.totalorder %s17, 1
      %p77 = scmp.ne.s32.totalorder %s72, %s74
      %p78 = scmp.eq.s32.totalorder %s17, 0
      %p79 = por %p77, %p78
      %p80 = scmp.ne.s32.totalorder %s72, %s74
      %p81 = scmp.eq.s32.totalorder %s22, 1
      %p82 = por %p80, %p81
      %p83 = scmp.ne.s32.totalorder %s74, %s75
      %p84 = scmp.eq.s32.totalorder %s22, 0
      %p85 = por %p83, %p84
      %p86 = scmp.ne.s32.totalorder %s74, %s75
      %p87 = scmp.eq.s32.totalorder %s23, 1
      %p88 = por %p86, %p87
      %p90 = scmp.ne.s32.totalorder %s75, %s89
      %p91 = scmp.eq.s32.totalorder %s23, 0
      %p92 = por %p90, %p91
      %s94 = sadd.s32 %s93, 1
      %p97 = scmp.eq.s32.totalorder %s17, 1
      %p98 = scmp.ne.s32.totalorder %s93, %s95
      %p99 = scmp.eq.s32.totalorder %s17, 0
      %p100 = por %p98, %p99
      %p101 = scmp.ne.s32.totalorder %s93, %s95
      %p102 = scmp.eq.s32.totalorder %s22, 1
      %p103 = por %p101, %p102
      %p104 = scmp.ne.s32.totalorder %s95, %s96
      %p105 = scmp.eq.s32.totalorder %s22, 0
      %p106 = por %p104, %p105
      %p107 = scmp.ne.s32.totalorder %s95, %s96
      %p108 = scmp.eq.s32.totalorder %s23, 1
      %p109 = por %p107, %p108
      %p111 = scmp.ne.s32.totalorder %s96, %s110
      %p112 = scmp.eq.s32.totalorder %s23, 0
      %p113 = por %p111, %p112
      %s115 = sadd.s32 %s114, 1
      %p118 = scmp.eq.s32.totalorder %s17, 1
      %p119 = scmp.ne.s32.totalorder %s114, %s116
      %p120 = scmp.eq.s32.totalorder %s17, 0
      %p121 = por %p119, %p120
      %p122 = scmp.ne.s32.totalorder %s114, %s116
      %p123 = scmp.eq.s32.totalorder %s22, 1
      %p124 = por %p122, %p123
      %p125 = scmp.ne.s32.totalorder %s116, %s117
      %p126 = scmp.eq.s32.totalorder %s22, 0
      %p127 = por %p125, %p126
      %p128 = scmp.ne.s32.totalorder %s116, %s117
      %p129 = scmp.eq.s32.totalorder %s23, 1
      %p130 = por %p128, %p129
      %p132 = scmp.ne.s32.totalorder %s117, %s131
      %p133 = scmp.eq.s32.totalorder %s23, 0
      %p134 = por %p132, %p133
      %s136 = sadd.s32 %s135, 1
      %p139 = scmp.eq.s32.totalorder %s17, 1
      %p140 = scmp.ne.s32.totalorder %s135, %s137
      %p141 = scmp.eq.s32.totalorder %s17, 0
      %p142 = por %p140, %p141
      %p143 = scmp.ne.s32.totalorder %s135, %s137
      %p144 = scmp.eq.s32.totalorder %s22, 1
      %p145 = por %p143, %p144
      %p146 = scmp.ne.s32.totalorder %s137, %s138
      %p147 = scmp.eq.s32.totalorder %s22, 0
      %p148 = por %p146, %p147
      %p149 = scmp.ne.s32.totalorder %s137, %s138
      %p150 = scmp.eq.s32.totalorder %s23, 1
      %p151 = por %p149, %p150
      %p153 = scmp.ne.s32.totalorder %s138, %s152
      %p154 = scmp.eq.s32.totalorder %s23, 0
      %p155 = por %p153, %p154
      %s157 = sadd.s32 %s156, 1
      %p160 = scmp.eq.s32.totalorder %s17, 1
      %p161 = scmp.ne.s32.totalorder %s156, %s158
      %p162 = scmp.eq.s32.totalorder %s17, 0
      %p163 = por %p161, %p162
      %p164 = scmp.ne.s32.totalorder %s156, %s158
      %p165 = scmp.eq.s32.totalorder %s22, 1
      %p166 = por %p164, %p165
      %p167 = scmp.ne.s32.totalorder %s158, %s159
      %p168 = scmp.eq.s32.totalorder %s22, 0
      %p169 = por %p167, %p168
      %p170 = scmp.ne.s32.totalorder %s158, %s159
      %p171 = scmp.eq.s32.totalorder %s23, 1
      %p172 = por %p170, %p171
      %p174 = scmp.ne.s32.totalorder %s159, %s173
      %p175 = scmp.eq.s32.totalorder %s23, 0
      %p176 = por %p174, %p175
      %s178 = sadd.s32 %s177, 1
      %p181 = scmp.eq.s32.totalorder %s17, 1
      %p182 = scmp.ne.s32.totalorder %s177, %s179
      %p183 = scmp.eq.s32.totalorder %s17, 0
      %p184 = por %p182, %p183
      %p185 = scmp.ne.s32.totalorder %s177, %s179
      %p186 = scmp.eq.s32.totalorder %s22, 1
      %p187 = por %p185, %p186
      %p188 = scmp.ne.s32.totalorder %s179, %s180
      %p189 = scmp.eq.s32.totalorder %s22, 0
      %p190 = por %p188, %p189
      %p191 = scmp.ne.s32.totalorder %s179, %s180
      %p192 = scmp.eq.s32.totalorder %s23, 1
      %p193 = por %p191, %p192
      %p195 = scmp.ne.s32.totalorder %s180, %s194
      %p196 = scmp.eq.s32.totalorder %s23, 0
      %p197 = por %p195, %p196
      %s198 = ssub.s32 %s17, %s24
      %p199 = scmp.eq.s32.totalorder %s198, 0
      %s201 = sadd.s32 %s200, 1
      %s202 = scalar_select %p199, %s200, %s201
      %p205 = pneg %p199
      %p206 = scmp.eq.s32.totalorder %s17, 1
      %p207 = por %p205, %p206
      %p208 = scmp.ne.s32.totalorder %s200, %s203
      %p209 = scmp.eq.s32.totalorder %s17, 0
      %p210 = por %p208, %p209
      %p211 = scmp.ne.s32.totalorder %s200, %s203
      %p212 = scmp.eq.s32.totalorder %s22, 1
      %p213 = por %p211, %p212
      %p214 = scmp.ne.s32.totalorder %s203, %s204
      %p215 = scmp.eq.s32.totalorder %s22, 0
      %p216 = por %p214, %p215
      %p217 = scmp.ne.s32.totalorder %s203, %s204
      %p218 = scmp.eq.s32.totalorder %s23, 1
      %p219 = por %p217, %p218
      %p221 = scmp.ne.s32.totalorder %s204, %s220
      %p222 = scmp.eq.s32.totalorder %s23, 0
      %p223 = por %p221, %p222
      %p224 = scmp.le.s32.totalorder 1, %s17
      %p225 = scmp.lt.s32.totalorder %s17, 3
      %p226 = pnand %p224, %p225
      %p227 = pneg %p226
      // Predicated region
      $region9: #{tpu_custom_call.1} parent=5 // pred_check
        _
      $region10: #{tpu_custom_call.1} parent=5 // pred_check_branch
        %229 = sbr.rel (%p226) target = $region12
      $region11: #{tpu_custom_call.1} parent=5 // pred_region
        %s230 = ssub.s32 %s17, 1
        // Predicated region
        $region13: #{tpu_custom_call.1} parent=11 // pred_check
          %p231 = pneg %p64
        $region14: #{tpu_custom_call.1} parent=11 // pred_check_branch
          %233 = sbr.rel (%p231) target = $region16
        $region15: #{tpu_custom_call.1} parent=11 // pred_region
          _
        $region16: #{tpu_custom_call.1} parent=11 // pred_fallthru
          _
        // Predicated region
        $region17: #{tpu_custom_call.1} parent=11 // pred_check
          %p234 = pneg %p85
        $region18: #{tpu_custom_call.1} parent=11 // pred_check_branch
          %236 = sbr.rel (%p234) target = $region20
        $region19: #{tpu_custom_call.1} parent=11 // pred_region
          _
        $region20: #{tpu_custom_call.1} parent=11 // pred_fallthru
          _
        // Predicated region
        $region21: #{tpu_custom_call.1} parent=11 // pred_check
          %p237 = pneg %p106
        $region22: #{tpu_custom_call.1} parent=11 // pred_check_branch
          %239 = sbr.rel (%p237) target = $region24
        $region23: #{tpu_custom_call.1} parent=11 // pred_region
          _
        $region24: #{tpu_custom_call.1} parent=11 // pred_fallthru
          _
        // Predicated region
        $region25: #{tpu_custom_call.1} parent=11 // pred_check
          %p240 = pneg %p127
        $region26: #{tpu_custom_call.1} parent=11 // pred_check_branch
          %242 = sbr.rel (%p240) target = $region28
        $region27: #{tpu_custom_call.1} parent=11 // pred_region
          _
        $region28: #{tpu_custom_call.1} parent=11 // pred_fallthru
          _
        // Predicated region
        $region29: #{tpu_custom_call.1} parent=11 // pred_check
          %p243 = pneg %p148
        $region30: #{tpu_custom_call.1} parent=11 // pred_check_branch
          %245 = sbr.rel (%p243) target = $region32
        $region31: #{tpu_custom_call.1} parent=11 // pred_region
          _
        $region32: #{tpu_custom_call.1} parent=11 // pred_fallthru
          _
        // Predicated region
        $region33: #{tpu_custom_call.1} parent=11 // pred_check
          %p246 = pneg %p169
        $region34: #{tpu_custom_call.1} parent=11 // pred_check_branch
          %248 = sbr.rel (%p246) target = $region36
        $region35: #{tpu_custom_call.1} parent=11 // pred_region
          _
        $region36: #{tpu_custom_call.1} parent=11 // pred_fallthru
          _
        // Predicated region
        $region37: #{tpu_custom_call.1} parent=11 // pred_check
          %p249 = pneg %p190
        $region38: #{tpu_custom_call.1} parent=11 // pred_check_branch
          %251 = sbr.rel (%p249) target = $region40
        $region39: #{tpu_custom_call.1} parent=11 // pred_region
          _
        $region40: #{tpu_custom_call.1} parent=11 // pred_fallthru
          _
      $region12: #{tpu_custom_call.1} parent=5 // pred_fallthru
        _
      %p252 = scmp.lt.s32.totalorder %s17, 2
      // Predicated region
      $region41: #{tpu_custom_call.1} parent=5 // pred_check
        %p253 = pneg %p252
      $region42: #{tpu_custom_call.1} parent=5 // pred_check_branch
        %255 = sbr.rel (%p253) target = $region44
      $region43: #{tpu_custom_call.1} parent=5 // pred_region
        // Predicated region
        $region45: #{tpu_custom_call.1} parent=43 // pred_check
          %p256 = pneg %p37
        $region46: #{tpu_custom_call.1} parent=43 // pred_check_branch
          %258 = sbr.rel (%p256) target = $region48
        $region47: #{tpu_custom_call.1} parent=43 // pred_region
          %p259 = scmp.lt.s32.totalorder %s17, 1
          %s260 = scalar_select %p259, %s17, 1
          %s261 = smul.addr %s260, 8
          %s262 = smul.addr %s261, 8
          %s263 = scalar_lea.vmem %s0, %s262
        $region48: #{tpu_custom_call.1} parent=43 // pred_fallthru
          _
      $region44: #{tpu_custom_call.1} parent=5 // pred_fallthru
        _
      %p264 = scmp.le.s32.totalorder 1, %s17
      %p265 = scmp.lt.s32.totalorder %s17, 3
      %p266 = pnand %p264, %p265
      %p267 = pneg %p266
      // Predicated region
      $region49: #{tpu_custom_call.1} parent=5 // pred_check
        _
      $region50: #{tpu_custom_call.1} parent=5 // pred_check_branch
        %269 = sbr.rel (%p266) target = $region52
      $region51: #{tpu_custom_call.1} parent=5 // pred_region
        %s270 = ssub.s32 %s17, 1
        %p271 = scmp.lt.s32.totalorder %s22, 1
        %s272 = scalar_select %p271, %s22, 1
        %s273 = smul.addr %s272, 8
        %s274 = smul.addr %s273, 8
        %s275 = scalar_lea.vmem %s0, %s274
        %p276 = pneg %p43
        %p277 = pneg %p40
        %p278 = pneg %p64
        %p279 = pneg %p61
        %p280 = pneg %p85
        %p281 = pneg %p82
        %p282 = pneg %p106
        %p283 = pneg %p103
        %p284 = pneg %p127
        %p285 = pneg %p124
        %p286 = pneg %p148
        %p287 = pneg %p145
        %p288 = pneg %p169
        %p289 = pneg %p166
        %p290 = pneg %p190
        %p291 = pneg %p187
        %p292 = pneg %p216
        %p293 = pneg %p213
        %s294 = sand.u32 %s203, 1
        %s295 = scalar_lea.sflag [#allocation4], %s294
        %s296 = sand.u32 %s203, 1
        %s297 = smul.addr %s296, 64
        %s298 = scalar_lea.vmem [#allocation3], %s297
        %p299 = scmp.lt.s32.totalorder %s22, 1
        %s300 = scalar_select %p299, %s22, 1
        %s301 = smul.addr %s300, 8
        %s302 = smul.addr %s301, 8
        %s303 = scalar_lea.vmem %s0, %s302
        %v305 = vld [vmem:[%s303] sm:$0xff]
        %v306 = vld [vmem:[%s303 + $0x8] sm:$0xff]
        %v307 = vld [vmem:[%s303 + $0x10] sm:$0xff]
        %v308 = vld [vmem:[%s303 + $0x18] sm:$0xff]
        %v309 = vld [vmem:[%s303 + $0x20] sm:$0xff]
        %v310 = vld [vmem:[%s303 + $0x28] sm:$0xff]
        %v311 = vld [vmem:[%s303 + $0x30] sm:$0xff]
        %v312 = vld [vmem:[%s303 + $0x38] sm:$0xff]
        %v313 = vld [vmem:[%s1] sm:$0xf]
        %v314 = vld [vmem:[%s1 + $0x4] sm:$0xf]
        %v315 = vld [vmem:[%s1 + $0x8] sm:$0xf]
        %v316 = vld [vmem:[%s1 + $0xc] sm:$0xf]
        %v317 = vpack.c.bf16 %v307, %v305
        %v318 = vpack.c.bf16 %v308, %v306
        %v319 = vpack.c.bf16 %v311, %v309
        %v320 = vpack.c.bf16 %v312, %v310
        %v321 = vld [vmem:[%s2] sm:$0xff]
        %v322 = vld [vmem:[%s2 + $0x8] sm:$0xff]
        %v323 = vld [vmem:[%s2 + $0x10] sm:$0xff]
        %v324 = vld [vmem:[%s2 + $0x18] sm:$0xff]
        %326 = vset.pattern.permute.xlu0 0
        %327 = vperm.xlu0 %326, %v321
        %v328 = vpop.permute.xlu0 %327
        %331 = vset.pattern.permute.xlu0 0
        %332 = vperm.xlu0 %331, %v322
        %v333 = vpop.permute.xlu0 %332
        %336 = vset.pattern.permute.xlu0 0
        %337 = vperm.xlu0 %336, %v323
        %v338 = vpop.permute.xlu0 %337
        %341 = vset.pattern.permute.xlu0 0
        %342 = vperm.xlu0 %341, %v324
        %v343 = vpop.permute.xlu0 %342
        %v349 = vunpack.c.l.b16 %v313
        %v350 = vunpack.c.l.b16 %v314
        %v351 = vunpack.c.l.b16 %v315
        %v352 = vunpack.c.l.b16 %v316
        %v353 = vpack.c.b16 %v350, %v349
        %v354 = vpack.c.b16 %v352, %v351
        %vm355 = vcmask 261120
        %v357 = vsel %vm355, %v353, 0
        %v360 = vsel %vm355, %v354, 0
        %362 = vmatprep.subr.bf16.mxu0 0
        %363 = vmatpush1.bf16.msra.mxu0 0
        %364 = vmatprep.subr.bf16.mxu0 0
        %365 = vmatpush1.bf16.msra.mxu0 0
        %366 = vmatprep.subr.bf16.mxu0 0
        %367 = vmatpush1.bf16.msra.mxu0 0
        %368 = vmatprep.subr.bf16.mxu0 0
        %369 = vmatpush1.bf16.msra.mxu0 0
        %370 = vmatprep.subr.bf16.mxu0 0
        %371 = vmatpush1.bf16.msra.mxu0 0
        %372 = vmatprep.subr.bf16.mxu0 0
        %373 = vmatpush1.bf16.msra.mxu0 0
        %374 = vmatprep.subr.bf16.mxu0 %v320
        %375 = vmatpush1.bf16.msra.mxu0 %v319
        %376 = vmatprep.subr.bf16.mxu0 %v318
        %377 = vmatpush1.bf16.msra.mxu0 %v317
        %378 = vmatprep.subr.bf16.mxu0 0
        %379 = vmatpush2.bf16.msra.mxu0 0
        %380 = vmatprep.subr.bf16.mxu0 0
        %381 = vmatpush2.bf16.msra.mxu0 0
        %382 = vmatprep.subr.bf16.mxu0 0
        %383 = vmatpush2.bf16.msra.mxu0 0
        %384 = vmatprep.subr.bf16.mxu0 0
        %385 = vmatpush2.bf16.msra.mxu0 0
        %386 = vmatprep.subr.bf16.mxu0 0
        %387 = vmatpush2.bf16.msra.mxu0 0
        %388 = vmatprep.subr.bf16.mxu0 0
        %389 = vmatpush2.bf16.msra.mxu0 0
        %390 = vmatprep.subr.bf16.mxu0 0
        %391 = vmatpush2.bf16.msra.mxu0 0
        %392 = vmatprep.subr.bf16.mxu0 0
        %393 = vmatpush2.bf16.msra.mxu0 0
        %394 = vmatprep.mubr.bf16.mxu0 0
        %395 = vmatmul.mubr.bf16.gmra.mxu0 %v357
        %v396 = vpop.f32.mrf.mxu0
        %v397 = vadd.f32 %v328, %v396
        %v398 = vpop.f32.mrf.mxu0
        %v399 = vadd.f32 %v328, %v398
        %v400 = vpop.f32.mrf.mxu0
        %v401 = vadd.f32 %v333, %v400
        %v402 = vpop.f32.mrf.mxu0
        %v403 = vadd.f32 %v333, %v402
        %404 = vmatprep.mubr.bf16.mxu0 0
        %405 = vmatmul.mubr.bf16.gmra.mxu0 %v360
        %v406 = vpop.f32.mrf.mxu0
        %v407 = vadd.f32 %v338, %v406
        %v408 = vpop.f32.mrf.mxu0
        %v409 = vadd.f32 %v338, %v408
        %v410 = vpop.f32.mrf.mxu0
        %v411 = vadd.f32 %v343, %v410
        %v412 = vpop.f32.mrf.mxu0
        %v413 = vadd.f32 %v343, %v412
        %414 = vdwg.mxu0
        %v415 = vadd.f32 %v305, %v397
        %v416 = vadd.f32 %v306, %v399
        %v417 = vadd.f32 %v307, %v401
        %v418 = vadd.f32 %v308, %v403
        %v419 = vadd.f32 %v309, %v407
        %v420 = vadd.f32 %v310, %v409
        %v421 = vadd.f32 %v311, %v411
        %v422 = vadd.f32 %v312, %v413
        %v423 = vld [vmem:[%s3] sm:$0xf]
        %v424 = vld [vmem:[%s3 + $0x4] sm:$0xf]
        %v425 = vld [vmem:[%s3 + $0x8] sm:$0xf]
        %v426 = vld [vmem:[%s3 + $0xc] sm:$0xf]
        %v427 = vld [vmem:[%s3 + $0x10] sm:$0xf]
        %v428 = vld [vmem:[%s3 + $0x14] sm:$0xf]
        %v429 = vld [vmem:[%s3 + $0x18] sm:$0xf]
        %v430 = vld [vmem:[%s3 + $0x1c] sm:$0xf]
        %v431 = vld [vmem:[%s3 + $0x20] sm:$0xf]
        %v432 = vld [vmem:[%s3 + $0x24] sm:$0xf]
        %v433 = vld [vmem:[%s3 + $0x28] sm:$0xf]
        %v434 = vld [vmem:[%s3 + $0x2c] sm:$0xf]
        %v435 = vpack.c.bf16 %v417, %v415
        %v436 = vpack.c.bf16 %v418, %v416
        %v437 = vpack.c.bf16 %v421, %v419
        %v438 = vpack.c.bf16 %v422, %v420
        %v439 = vld [vmem:[%s4] sm:$0xff]
        %v440 = vld [vmem:[%s4 + $0x8] sm:$0xff]
        %v441 = vld [vmem:[%s4 + $0x10] sm:$0xff]
        %v442 = vld [vmem:[%s4 + $0x18] sm:$0xff]
        %v443 = vld [vmem:[%s4 + $0x20] sm:$0xff]
        %v444 = vld [vmem:[%s4 + $0x28] sm:$0xff]
        %v445 = vld [vmem:[%s4 + $0x30] sm:$0xff]
        %v446 = vld [vmem:[%s4 + $0x38] sm:$0xff]
        %v447 = vld [vmem:[%s4 + $0x40] sm:$0xff]
        %v448 = vld [vmem:[%s4 + $0x48] sm:$0xff]
        %v449 = vld [vmem:[%s4 + $0x50] sm:$0xff]
        %v450 = vld [vmem:[%s4 + $0x58] sm:$0xff]
        %452 = vset.pattern.permute.xlu0 0
        %453 = vperm.xlu0 %452, %v439
        %v454 = vpop.permute.xlu0 %453
        %457 = vset.pattern.permute.xlu0 0
        %458 = vperm.xlu0 %457, %v440
        %v459 = vpop.permute.xlu0 %458
        %462 = vset.pattern.permute.xlu0 0
        %463 = vperm.xlu0 %462, %v441
        %v464 = vpop.permute.xlu0 %463
        %467 = vset.pattern.permute.xlu0 0
        %468 = vperm.xlu0 %467, %v442
        %v469 = vpop.permute.xlu0 %468
        %472 = vset.pattern.permute.xlu0 0
        %473 = vperm.xlu0 %472, %v443
        %v474 = vpop.permute.xlu0 %473
        %477 = vset.pattern.permute.xlu0 0
        %478 = vperm.xlu0 %477, %v444
        %v479 = vpop.permute.xlu0 %478
        %482 = vset.pattern.permute.xlu0 0
        %483 = vperm.xlu0 %482, %v445
        %v484 = vpop.permute.xlu0 %483
        %487 = vset.pattern.permute.xlu0 0
        %488 = vperm.xlu0 %487, %v446
        %v489 = vpop.permute.xlu0 %488
        %492 = vset.pattern.permute.xlu0 0
        %493 = vperm.xlu0 %492, %v447
        %v494 = vpop.permute.xlu0 %493
        %497 = vset.pattern.permute.xlu0 0
        %498 = vperm.xlu0 %497, %v448
        %v499 = vpop.permute.xlu0 %498
        %502 = vset.pattern.permute.xlu0 0
        %503 = vperm.xlu0 %502, %v449
        %v504 = vpop.permute.xlu0 %503
        %507 = vset.pattern.permute.xlu0 0
        %508 = vperm.xlu0 %507, %v450
        %v509 = vpop.permute.xlu0 %508
        %v523 = vunpack.c.l.b16 %v423
        %v524 = vunpack.c.l.b16 %v424
        %v525 = vunpack.c.l.b16 %v425
        %v526 = vunpack.c.l.b16 %v426
        %v527 = vunpack.c.l.b16 %v427
        %v528 = vunpack.c.l.b16 %v428
        %v529 = vunpack.c.l.b16 %v429
        %v530 = vunpack.c.l.b16 %v430
        %v531 = vunpack.c.l.b16 %v431
        %v532 = vunpack.c.l.b16 %v432
        %v533 = vunpack.c.l.b16 %v433
        %v534 = vunpack.c.l.b16 %v434
        %v535 = vpack.c.b16 %v524, %v523
        %v536 = vpack.c.b16 %v526, %v525
        %v537 = vpack.c.b16 %v528, %v527
        %v538 = vpack.c.b16 %v530, %v529
        %v539 = vpack.c.b16 %v532, %v531
        %v540 = vpack.c.b16 %v534, %v533
        %v542 = vsel %vm355, %v535, 0
        %v545 = vsel %vm355, %v536, 0
        %v548 = vsel %vm355, %v537, 0
        %v551 = vsel %vm355, %v538, 0
        %v554 = vsel %vm355, %v539, 0
        %v557 = vsel %vm355, %v540, 0
        %559 = vmatprep.subr.bf16.mxu0 0
        %560 = vmatpush1.bf16.msra.mxu0 0
        %561 = vmatprep.subr.bf16.mxu0 0
        %562 = vmatpush1.bf16.msra.mxu0 0
        %563 = vmatprep.subr.bf16.mxu0 0
        %564 = vmatpush1.bf16.msra.mxu0 0
        %565 = vmatprep.subr.bf16.mxu0 0
        %566 = vmatpush1.bf16.msra.mxu0 0
        %567 = vmatprep.subr.bf16.mxu0 0
        %568 = vmatpush1.bf16.msra.mxu0 0
        %569 = vmatprep.subr.bf16.mxu0 0
        %570 = vmatpush1.bf16.msra.mxu0 0
        %571 = vmatprep.subr.bf16.mxu0 %v438
        %572 = vmatpush1.bf16.msra.mxu0 %v437
        %573 = vmatprep.subr.bf16.mxu0 %v436
        %574 = vmatpush1.bf16.msra.mxu0 %v435
        %575 = vmatprep.subr.bf16.mxu0 0
        %576 = vmatpush2.bf16.msra.mxu0 0
        %577 = vmatprep.subr.bf16.mxu0 0
        %578 = vmatpush2.bf16.msra.mxu0 0
        %579 = vmatprep.subr.bf16.mxu0 0
        %580 = vmatpush2.bf16.msra.mxu0 0
        %581 = vmatprep.subr.bf16.mxu0 0
        %582 = vmatpush2.bf16.msra.mxu0 0
        %583 = vmatprep.subr.bf16.mxu0 0
        %584 = vmatpush2.bf16.msra.mxu0 0
        %585 = vmatprep.subr.bf16.mxu0 0
        %586 = vmatpush2.bf16.msra.mxu0 0
        %587 = vmatprep.subr.bf16.mxu0 0
        %588 = vmatpush2.bf16.msra.mxu0 0
        %589 = vmatprep.subr.bf16.mxu0 0
        %590 = vmatpush2.bf16.msra.mxu0 0
        %591 = vmatprep.mubr.bf16.mxu0 0
        %592 = vmatmul.mubr.bf16.gmra.mxu0 %v542
        %v593 = vpop.f32.mrf.mxu0
        %v594 = vadd.f32 %v454, %v593
        %v595 = vpop.f32.mrf.mxu0
        %v596 = vadd.f32 %v454, %v595
        %v597 = vpop.f32.mrf.mxu0
        %v598 = vadd.f32 %v459, %v597
        %v599 = vpop.f32.mrf.mxu0
        %v600 = vadd.f32 %v459, %v599
        %601 = vmatprep.mubr.bf16.mxu0 0
        %602 = vmatmul.mubr.bf16.gmra.mxu0 %v545
        %v603 = vpop.f32.mrf.mxu0
        %v604 = vadd.f32 %v464, %v603
        %v605 = vpop.f32.mrf.mxu0
        %v606 = vadd.f32 %v464, %v605
        %v607 = vpop.f32.mrf.mxu0
        %v608 = vadd.f32 %v469, %v607
        %v609 = vpop.f32.mrf.mxu0
        %v610 = vadd.f32 %v469, %v609
        %611 = vmatprep.mubr.bf16.mxu0 0
        %612 = vmatmul.mubr.bf16.gmra.mxu0 %v548
        %v613 = vpop.f32.mrf.mxu0
        %v614 = vadd.f32 %v474, %v613
        %v615 = vpop.f32.mrf.mxu0
        %v616 = vadd.f32 %v474, %v615
        %v617 = vpop.f32.mrf.mxu0
        %v618 = vadd.f32 %v479, %v617
        %v619 = vpop.f32.mrf.mxu0
        %v620 = vadd.f32 %v479, %v619
        %621 = vmatprep.mubr.bf16.mxu0 0
        %622 = vmatmul.mubr.bf16.gmra.mxu0 %v551
        %v623 = vpop.f32.mrf.mxu0
        %v624 = vadd.f32 %v484, %v623
        %v625 = vpop.f32.mrf.mxu0
        %v626 = vadd.f32 %v484, %v625
        %v627 = vpop.f32.mrf.mxu0
        %v628 = vadd.f32 %v489, %v627
        %v629 = vpop.f32.mrf.mxu0
        %v630 = vadd.f32 %v489, %v629
        %631 = vmatprep.mubr.bf16.mxu0 0
        %632 = vmatmul.mubr.bf16.gmra.mxu0 %v554
        %v633 = vpop.f32.mrf.mxu0
        %v634 = vadd.f32 %v494, %v633
        %v635 = vpop.f32.mrf.mxu0
        %v636 = vadd.f32 %v494, %v635
        %v637 = vpop.f32.mrf.mxu0
        %v638 = vadd.f32 %v499, %v637
        %v639 = vpop.f32.mrf.mxu0
        %v640 = vadd.f32 %v499, %v639
        %641 = vmatprep.mubr.bf16.mxu0 0
        %642 = vmatmul.mubr.bf16.gmra.mxu0 %v557
        %v643 = vpop.f32.mrf.mxu0
        %v644 = vadd.f32 %v504, %v643
        %v645 = vpop.f32.mrf.mxu0
        %v646 = vadd.f32 %v504, %v645
        %v647 = vpop.f32.mrf.mxu0
        %v648 = vadd.f32 %v509, %v647
        %v649 = vpop.f32.mrf.mxu0
        %v650 = vadd.f32 %v509, %v649
        %651 = vdwg.mxu0
        %652 = vxpose.xlu0.b32.start [1/16] %v614, 128
        %653 = vxpose.xlu0.b32.cont [2/16] %v618, 128
        %654 = vxpose.xlu0.b32.cont [3/16] %v624, 128
        %655 = vxpose.xlu0.b32.cont [4/16] %v628, 128
        %656 = vxpose.xlu0.b32.cont [5/16] 0.0, 128
        %657 = vxpose.xlu0.b32.cont [6/16] 0.0, 128
        %658 = vxpose.xlu0.b32.cont [7/16] 0.0, 128
        %659 = vxpose.xlu0.b32.cont [8/16] 0.0, 128
        %660 = vxpose.xlu0.b32.cont [9/16] 0.0, 128
        %661 = vxpose.xlu0.b32.cont [10/16] 0.0, 128
        %662 = vxpose.xlu0.b32.cont [11/16] 0.0, 128
        %663 = vxpose.xlu0.b32.cont [12/16] 0.0, 128
        %664 = vxpose.xlu0.b32.cont [13/16] 0.0, 128
        %665 = vxpose.xlu0.b32.cont [14/16] 0.0, 128
        %666 = vxpose.xlu0.b32.cont [15/16] 0.0, 128
        %667 = vxpose.xlu0.b32.end [16/16] 0.0, 128
        %v668 = vpop.trf.xlu0
        %v669 = vpop.trf.xlu0
        %v670 = vpop.trf.xlu0
        %v671 = vpop.trf.xlu0
        %v672 = vpop.trf.xlu0
        %v673 = vpop.trf.xlu0
        %v674 = vpop.trf.xlu0
        %v675 = vpop.trf.xlu0
        %v676 = vpop.trf.xlu0
        %v677 = vpop.trf.xlu0
        %v678 = vpop.trf.xlu0
        %v679 = vpop.trf.xlu0
        %v680 = vpop.trf.xlu0
        %v681 = vpop.trf.xlu0
        %v682 = vpop.trf.xlu0
        %v683 = vpop.trf.xlu0
        %684 = vxpose.xlu0.b32.start [1/16] %v616, 128
        %685 = vxpose.xlu0.b32.cont [2/16] %v620, 128
        %686 = vxpose.xlu0.b32.cont [3/16] %v626, 128
        %687 = vxpose.xlu0.b32.cont [4/16] %v630, 128
        %688 = vxpose.xlu0.b32.cont [5/16] 0.0, 128
        %689 = vxpose.xlu0.b32.cont [6/16] 0.0, 128
        %690 = vxpose.xlu0.b32.cont [7/16] 0.0, 128
        %691 = vxpose.xlu0.b32.cont [8/16] 0.0, 128
        %692 = vxpose.xlu0.b32.cont [9/16] 0.0, 128
        %693 = vxpose.xlu0.b32.cont [10/16] 0.0, 128
        %694 = vxpose.xlu0.b32.cont [11/16] 0.0, 128
        %695 = vxpose.xlu0.b32.cont [12/16] 0.0, 128
        %696 = vxpose.xlu0.b32.cont [13/16] 0.0, 128
        %697 = vxpose.xlu0.b32.cont [14/16] 0.0, 128
        %698 = vxpose.xlu0.b32.cont [15/16] 0.0, 128
        %699 = vxpose.xlu0.b32.end [16/16] 0.0, 128
        %v700 = vpop.trf.xlu0
        %v701 = vpop.trf.xlu0
        %v702 = vpop.trf.xlu0
        %v703 = vpop.trf.xlu0
        %v704 = vpop.trf.xlu0
        %v705 = vpop.trf.xlu0
        %v706 = vpop.trf.xlu0
        %v707 = vpop.trf.xlu0
        %v708 = vpop.trf.xlu0
        %v709 = vpop.trf.xlu0
        %v710 = vpop.trf.xlu0
        %v711 = vpop.trf.xlu0
        %v712 = vpop.trf.xlu0
        %v713 = vpop.trf.xlu0
        %v714 = vpop.trf.xlu0
        %v715 = vpop.trf.xlu0
        %v716 = vpack.c.bf16 %v634, %v634
        %v717 = vpack.c.bf16 %v636, %v636
        %vm718 = vcmask 64512
        %v720 = vsel %vm718, %v668, 0
        %v723 = vsel %vm718, %v669, 0
        %v726 = vsel %vm718, %v670, 0
        %v729 = vsel %vm718, %v671, 0
        %v732 = vsel %vm718, %v672, 0
        %v735 = vsel %vm718, %v673, 0
        %v738 = vsel %vm718, %v674, 0
        %v741 = vsel %vm718, %v675, 0
        %v744 = vsel %vm718, %v676, 0
        %v747 = vsel %vm718, %v677, 0
        %v750 = vsel %vm718, %v678, 0
        %v753 = vsel %vm718, %v679, 0
        %v756 = vsel %vm718, %v680, 0
        %v759 = vsel %vm718, %v681, 0
        %v762 = vsel %vm718, %v682, 0
        %v765 = vsel %vm718, %v683, 0
        %v768 = vsel %vm718, %v700, 0
        %v771 = vsel %vm718, %v701, 0
        %v774 = vsel %vm718, %v702, 0
        %v777 = vsel %vm718, %v703, 0
        %v780 = vsel %vm718, %v704, 0
        %v783 = vsel %vm718, %v705, 0
        %v786 = vsel %vm718, %v706, 0
        %v789 = vsel %vm718, %v707, 0
        %v792 = vsel %vm718, %v708, 0
        %v795 = vsel %vm718, %v709, 0
        %v798 = vsel %vm718, %v710, 0
        %v801 = vsel %vm718, %v711, 0
        %v804 = vsel %vm718, %v712, 0
        %v807 = vsel %vm718, %v713, 0
        %v810 = vsel %vm718, %v714, 0
        %v813 = vsel %vm718, %v715, 0
        %815 = vmatprep.subr.mxu0 0.0
        %816 = vmatpush1.msra.mxu0 0.0
        %817 = vmatprep.subr.mxu0 0.0
        %818 = vmatpush1.msra.mxu0 0.0
        %819 = vmatprep.subr.mxu0 0.0
        %820 = vmatpush1.msra.mxu0 0.0
        %821 = vmatprep.subr.mxu0 0.0
        %822 = vmatpush1.msra.mxu0 0.0
        %823 = vmatprep.subr.mxu0 0.0
        %824 = vmatpush1.msra.mxu0 0.0
        %825 = vmatprep.subr.mxu0 0.0
        %826 = vmatpush1.msra.mxu0 0.0
        %827 = vmatprep.subr.mxu0 0.0
        %828 = vmatpush1.msra.mxu0 0.0
        %829 = vmatprep.subr.mxu0 0.0
        %830 = vmatpush1.msra.mxu0 0.0
        %831 = vmatprep.subr.mxu0 0.0
        %832 = vmatpush1.msra.mxu0 0.0
        %833 = vmatprep.subr.mxu0 0.0
        %834 = vmatpush1.msra.mxu0 0.0
        %835 = vmatprep.subr.mxu0 0.0
        %836 = vmatpush1.msra.mxu0 0.0
        %837 = vmatprep.subr.mxu0 0.0
        %838 = vmatpush1.msra.mxu0 0.0
        %839 = vmatprep.subr.mxu0 0.0
        %840 = vmatpush1.msra.mxu0 0.0
        %841 = vmatprep.subr.mxu0 0.0
        %842 = vmatpush1.msra.mxu0 0.0
        %843 = vmatprep.subr.mxu0 0.0
        %844 = vmatpush1.msra.mxu0 0.0
        %845 = vmatprep.subr.mxu0 0.0
        %846 = vmatpush1.msra.mxu0 %v594
        %847 = vmatprep.subr.mxu0 0.0
        %848 = vmatpush2.msra.mxu0 0.0
        %849 = vmatprep.subr.mxu0 0.0
        %850 = vmatpush2.msra.mxu0 0.0
        %851 = vmatprep.subr.mxu0 0.0
        %852 = vmatpush2.msra.mxu0 0.0
        %853 = vmatprep.subr.mxu0 0.0
        %854 = vmatpush2.msra.mxu0 0.0
        %855 = vmatprep.subr.mxu0 0.0
        %856 = vmatpush2.msra.mxu0 0.0
        %857 = vmatprep.subr.mxu0 0.0
        %858 = vmatpush2.msra.mxu0 0.0
        %859 = vmatprep.subr.mxu0 0.0
        %860 = vmatpush2.msra.mxu0 0.0
        %861 = vmatprep.subr.mxu0 0.0
        %862 = vmatpush2.msra.mxu0 0.0
        %863 = vmatprep.subr.mxu0 0.0
        %864 = vmatpush2.msra.mxu0 0.0
        %865 = vmatprep.subr.mxu0 0.0
        %866 = vmatpush2.msra.mxu0 0.0
        %867 = vmatprep.subr.mxu0 0.0
        %868 = vmatpush2.msra.mxu0 0.0
        %869 = vmatprep.subr.mxu0 0.0
        %870 = vmatpush2.msra.mxu0 0.0
        %871 = vmatprep.subr.mxu0 0.0
        %872 = vmatpush2.msra.mxu0 0.0
        %873 = vmatprep.subr.mxu0 0.0
        %874 = vmatpush2.msra.mxu0 0.0
        %875 = vmatprep.subr.mxu0 0.0
        %876 = vmatpush2.msra.mxu0 0.0
        %877 = vmatprep.subr.mxu0 0.0
        %878 = vmatpush2.msra.mxu0 0.0
        %879 = vmatprep.mubr.f32.mxu0 0.0
        %880 = vmatmul.mubr.f32.gmra.mxu0 %v720
        %v881 = vpop.f32.mrf.mxu0
        %v882 = vadd.f32 0.0, %v881
        %v883 = vpop.f32.mrf.mxu0
        %884 = vmatprep.mubr.f32.mxu0 0.0
        %885 = vmatmul.mubr.f32.gmra.mxu0 %v723
        %v886 = vpop.f32.mrf.mxu0
        %v887 = vadd.f32 0.0, %v886
        %v888 = vpop.f32.mrf.mxu0
        %889 = vmatprep.mubr.f32.mxu0 0.0
        %890 = vmatmul.mubr.f32.gmra.mxu0 %v726
        %v891 = vpop.f32.mrf.mxu0
        %v892 = vadd.f32 0.0, %v891
        %v893 = vpop.f32.mrf.mxu0
        %894 = vmatprep.mubr.f32.mxu0 0.0
        %895 = vmatmul.mubr.f32.gmra.mxu0 %v729
        %v896 = vpop.f32.mrf.mxu0
        %v897 = vadd.f32 0.0, %v896
        %v898 = vpop.f32.mrf.mxu0
        %899 = vmatprep.mubr.f32.mxu0 0.0
        %900 = vmatmul.mubr.f32.gmra.mxu0 %v732
        %v901 = vpop.f32.mrf.mxu0
        %v902 = vadd.f32 0.0, %v901
        %v903 = vpop.f32.mrf.mxu0
        %904 = vmatprep.mubr.f32.mxu0 0.0
        %905 = vmatmul.mubr.f32.gmra.mxu0 %v735
        %v906 = vpop.f32.mrf.mxu0
        %v907 = vadd.f32 0.0, %v906
        %v908 = vpop.f32.mrf.mxu0
        %909 = vmatprep.mubr.f32.mxu0 0.0
        %910 = vmatmul.mubr.f32.gmra.mxu0 %v738
        %v911 = vpop.f32.mrf.mxu0
        %v912 = vadd.f32 0.0, %v911
        %v913 = vpop.f32.mrf.mxu0
        %914 = vmatprep.mubr.f32.mxu0 0.0
        %915 = vmatmul.mubr.f32.gmra.mxu0 %v741
        %v916 = vpop.f32.mrf.mxu0
        %v917 = vadd.f32 0.0, %v916
        %v918 = vpop.f32.mrf.mxu0
        %919 = vmatprep.mubr.f32.mxu0 0.0
        %920 = vmatmul.mubr.f32.gmra.mxu0 %v744
        %v921 = vpop.f32.mrf.mxu0
        %v922 = vadd.f32 0.0, %v921
        %v923 = vpop.f32.mrf.mxu0
        %924 = vmatprep.mubr.f32.mxu0 0.0
        %925 = vmatmul.mubr.f32.gmra.mxu0 %v747
        %v926 = vpop.f32.mrf.mxu0
        %v927 = vadd.f32 0.0, %v926
        %v928 = vpop.f32.mrf.mxu0
        %929 = vmatprep.mubr.f32.mxu0 0.0
        %930 = vmatmul.mubr.f32.gmra.mxu0 %v750
        %v931 = vpop.f32.mrf.mxu0
        %v932 = vadd.f32 0.0, %v931
        %v933 = vpop.f32.mrf.mxu0
        %934 = vmatprep.mubr.f32.mxu0 0.0
        %935 = vmatmul.mubr.f32.gmra.mxu0 %v753
        %v936 = vpop.f32.mrf.mxu0
        %v937 = vadd.f32 0.0, %v936
        %v938 = vpop.f32.mrf.mxu0
        %939 = vmatprep.mubr.f32.mxu0 0.0
        %940 = vmatmul.mubr.f32.gmra.mxu0 %v756
        %v941 = vpop.f32.mrf.mxu0
        %v942 = vadd.f32 0.0, %v941
        %v943 = vpop.f32.mrf.mxu0
        %944 = vmatprep.mubr.f32.mxu0 0.0
        %945 = vmatmul.mubr.f32.gmra.mxu0 %v759
        %v946 = vpop.f32.mrf.mxu0
        %v947 = vadd.f32 0.0, %v946
        %v948 = vpop.f32.mrf.mxu0
        %949 = vmatprep.mubr.f32.mxu0 0.0
        %950 = vmatmul.mubr.f32.gmra.mxu0 %v762
        %v951 = vpop.f32.mrf.mxu0
        %v952 = vadd.f32 0.0, %v951
        %v953 = vpop.f32.mrf.mxu0
        %954 = vmatprep.mubr.f32.mxu0 0.0
        %955 = vmatmul.mubr.f32.gmra.mxu0 %v765
        %v956 = vpop.f32.mrf.mxu0
        %v957 = vadd.f32 0.0, %v956
        %v958 = vpop.f32.mrf.mxu0
        %959 = vmatprep.mubr.f32.mxu0 0.0
        %960 = vmatmul.mubr.f32.gmra.mxu0 %v768
        %v961 = vpop.f32.mrf.mxu0
        %v962 = vadd.f32 0.0, %v961
        %v963 = vpop.f32.mrf.mxu0
        %964 = vmatprep.mubr.f32.mxu0 0.0
        %965 = vmatmul.mubr.f32.gmra.mxu0 %v771
        %v966 = vpop.f32.mrf.mxu0
        %v967 = vadd.f32 0.0, %v966
        %v968 = vpop.f32.mrf.mxu0
        %969 = vmatprep.mubr.f32.mxu0 0.0
        %970 = vmatmul.mubr.f32.gmra.mxu0 %v774
        %v971 = vpop.f32.mrf.mxu0
        %v972 = vadd.f32 0.0, %v971
        %v973 = vpop.f32.mrf.mxu0
        %974 = vmatprep.mubr.f32.mxu0 0.0
        %975 = vmatmul.mubr.f32.gmra.mxu0 %v777
        %v976 = vpop.f32.mrf.mxu0
        %v977 = vadd.f32 0.0, %v976
        %v978 = vpop.f32.mrf.mxu0
        %979 = vmatprep.mubr.f32.mxu0 0.0
        %980 = vmatmul.mubr.f32.gmra.mxu0 %v780
        %v981 = vpop.f32.mrf.mxu0
        %v982 = vadd.f32 0.0, %v981
        %v983 = vpop.f32.mrf.mxu0
        %984 = vmatprep.mubr.f32.mxu0 0.0
        %985 = vmatmul.mubr.f32.gmra.mxu0 %v783
        %v986 = vpop.f32.mrf.mxu0
        %v987 = vadd.f32 0.0, %v986
        %v988 = vpop.f32.mrf.mxu0
        %989 = vmatprep.mubr.f32.mxu0 0.0
        %990 = vmatmul.mubr.f32.gmra.mxu0 %v786
        %v991 = vpop.f32.mrf.mxu0
        %v992 = vadd.f32 0.0, %v991
        %v993 = vpop.f32.mrf.mxu0
        %994 = vmatprep.mubr.f32.mxu0 0.0
        %995 = vmatmul.mubr.f32.gmra.mxu0 %v789
        %v996 = vpop.f32.mrf.mxu0
        %v997 = vadd.f32 0.0, %v996
        %v998 = vpop.f32.mrf.mxu0
        %999 = vmatprep.mubr.f32.mxu0 0.0
        %1000 = vmatmul.mubr.f32.gmra.mxu0 %v792
        %v1001 = vpop.f32.mrf.mxu0
        %v1002 = vadd.f32 0.0, %v1001
        %v1003 = vpop.f32.mrf.mxu0
        %1004 = vmatprep.mubr.f32.mxu0 0.0
        %1005 = vmatmul.mubr.f32.gmra.mxu0 %v795
        %v1006 = vpop.f32.mrf.mxu0
        %v1007 = vadd.f32 0.0, %v1006
        %v1008 = vpop.f32.mrf.mxu0
        %1009 = vmatprep.mubr.f32.mxu0 0.0
        %1010 = vmatmul.mubr.f32.gmra.mxu0 %v798
        %v1011 = vpop.f32.mrf.mxu0
        %v1012 = vadd.f32 0.0, %v1011
        %v1013 = vpop.f32.mrf.mxu0
        %1014 = vmatprep.mubr.f32.mxu0 0.0
        %1015 = vmatmul.mubr.f32.gmra.mxu0 %v801
        %v1016 = vpop.f32.mrf.mxu0
        %v1017 = vadd.f32 0.0, %v1016
        %v1018 = vpop.f32.mrf.mxu0
        %1019 = vmatprep.mubr.f32.mxu0 0.0
        %1020 = vmatmul.mubr.f32.gmra.mxu0 %v804
        %v1021 = vpop.f32.mrf.mxu0
        %v1022 = vadd.f32 0.0, %v1021
        %v1023 = vpop.f32.mrf.mxu0
        %1024 = vmatprep.mubr.f32.mxu0 0.0
        %1025 = vmatmul.mubr.f32.gmra.mxu0 %v807
        %v1026 = vpop.f32.mrf.mxu0
        %v1027 = vadd.f32 0.0, %v1026
        %v1028 = vpop.f32.mrf.mxu0
        %1029 = vmatprep.mubr.f32.mxu0 0.0
        %1030 = vmatmul.mubr.f32.gmra.mxu0 %v810
        %v1031 = vpop.f32.mrf.mxu0
        %v1032 = vadd.f32 0.0, %v1031
        %v1033 = vpop.f32.mrf.mxu0
        %1034 = vmatprep.mubr.f32.mxu0 0.0
        %1035 = vmatmul.mubr.f32.gmra.mxu0 %v813
        %v1036 = vpop.f32.mrf.mxu0
        %v1037 = vadd.f32 0.0, %v1036
        %v1038 = vpop.f32.mrf.mxu0
        %1039 = vdwg.mxu0
        %v1040 = vmax.f32 %v882, %v902
        %v1041 = vmax.f32 %v887, %v907
        %v1042 = vmax.f32 %v892, %v912
        %v1043 = vmax.f32 %v897, %v917
        %v1044 = vmax.f32 %v1040, %v922
        %v1045 = vmax.f32 %v1041, %v927
        %v1046 = vmax.f32 %v1042, %v932
        %v1047 = vmax.f32 %v1043, %v937
        %v1048 = vmax.f32 %v1044, %v942
        %v1049 = vmax.f32 %v1045, %v947
        %v1050 = vmax.f32 %v1046, %v952
        %v1051 = vmax.f32 %v1047, %v957
        %v1052 = vmax.f32 %v1048, %v962
        %v1053 = vmax.f32 %v1049, %v967
        %v1054 = vmax.f32 %v1050, %v972
        %v1055 = vmax.f32 %v1051, %v977
        %v1056 = vmax.f32 %v1052, %v982
        %v1057 = vmax.f32 %v1053, %v987
        %v1058 = vmax.f32 %v1054, %v992
        %v1059 = vmax.f32 %v1055, %v997
        %v1060 = vmax.f32 %v1056, %v1002
        %v1061 = vmax.f32 %v1057, %v1007
        %v1062 = vmax.f32 %v1058, %v1012
        %v1063 = vmax.f32 %v1059, %v1017
        %v1064 = vmax.f32 %v1060, %v1022
        %v1065 = vmax.f32 %v1061, %v1027
        %v1066 = vmax.f32 %v1062, %v1032
        %v1067 = vmax.f32 %v1063, %v1037
        %v1068 = vmax.f32 %v1064, %v1065
        %v1069 = vmax.f32 %v1066, %v1067
        %v1070 = vmax.f32 %v1068, %v1069
        %v1071 = vrot.slane %v1070, 4
        %v1072 = vmax.f32 %v1070, %v1071
        %v1073 = vrot.slane %v1072, 2
        %v1074 = vmax.f32 %v1072, %v1073
        %v1075 = vrot.slane %v1074, 1
        %v1076 = vmax.f32 %v1074, %v1075
        %v1077 = vsub.f32 %v882, %v1076
        %v1078 = vsub.f32 %v887, %v1076
        %v1079 = vsub.f32 %v892, %v1076
        %v1080 = vsub.f32 %v897, %v1076
        %v1081 = vsub.f32 %v902, %v1076
        %v1082 = vsub.f32 %v907, %v1076
        %v1083 = vsub.f32 %v912, %v1076
        %v1084 = vsub.f32 %v917, %v1076
        %v1085 = vsub.f32 %v922, %v1076
        %v1086 = vsub.f32 %v927, %v1076
        %v1087 = vsub.f32 %v932, %v1076
        %v1088 = vsub.f32 %v937, %v1076
        %v1089 = vsub.f32 %v942, %v1076
        %v1090 = vsub.f32 %v947, %v1076
        %v1091 = vsub.f32 %v952, %v1076
        %v1092 = vsub.f32 %v957, %v1076
        %v1093 = vsub.f32 %v962, %v1076
        %v1094 = vsub.f32 %v967, %v1076
        %v1095 = vsub.f32 %v972, %v1076
        %v1096 = vsub.f32 %v977, %v1076
        %v1097 = vsub.f32 %v982, %v1076
        %v1098 = vsub.f32 %v987, %v1076
        %v1099 = vsub.f32 %v992, %v1076
        %v1100 = vsub.f32 %v997, %v1076
        %v1101 = vsub.f32 %v1002, %v1076
        %v1102 = vsub.f32 %v1007, %v1076
        %v1103 = vsub.f32 %v1012, %v1076
        %v1104 = vsub.f32 %v1017, %v1076
        %v1105 = vsub.f32 %v1022, %v1076
        %v1106 = vsub.f32 %v1027, %v1076
        %v1107 = vsub.f32 %v1032, %v1076
        %v1108 = vsub.f32 %v1037, %v1076
        %v1109 = vmul.f32 %v1077, 1.442695
        %v1110 = vpow.pop %v1109
        %v1111 = vmul.f32 %v1078, 1.442695
        %v1112 = vpow.pop %v1111
        %v1113 = vmul.f32 %v1079, 1.442695
        %v1114 = vpow.pop %v1113
        %v1115 = vmul.f32 %v1080, 1.442695
        %v1116 = vpow.pop %v1115
        %v1117 = vmul.f32 %v1081, 1.442695
        %v1118 = vpow.pop %v1117
        %v1119 = vmul.f32 %v1082, 1.442695
        %v1120 = vpow.pop %v1119
        %v1121 = vmul.f32 %v1083, 1.442695
        %v1122 = vpow.pop %v1121
        %v1123 = vmul.f32 %v1084, 1.442695
        %v1124 = vpow.pop %v1123
        %v1125 = vmul.f32 %v1085, 1.442695
        %v1126 = vpow.pop %v1125
        %v1127 = vmul.f32 %v1086, 1.442695
        %v1128 = vpow.pop %v1127
        %v1129 = vmul.f32 %v1087, 1.442695
        %v1130 = vpow.pop %v1129
        %v1131 = vmul.f32 %v1088, 1.442695
        %v1132 = vpow.pop %v1131
        %v1133 = vmul.f32 %v1089, 1.442695
        %v1134 = vpow.pop %v1133
        %v1135 = vmul.f32 %v1090, 1.442695
        %v1136 = vpow.pop %v1135
        %v1137 = vmul.f32 %v1091, 1.442695
        %v1138 = vpow.pop %v1137
        %v1139 = vmul.f32 %v1092, 1.442695
        %v1140 = vpow.pop %v1139
        %v1141 = vmul.f32 %v1093, 1.442695
        %v1142 = vpow.pop %v1141
        %v1143 = vmul.f32 %v1094, 1.442695
        %v1144 = vpow.pop %v1143
        %v1145 = vmul.f32 %v1095, 1.442695
        %v1146 = vpow.pop %v1145
        %v1147 = vmul.f32 %v1096, 1.442695
        %v1148 = vpow.pop %v1147
        %v1149 = vmul.f32 %v1097, 1.442695
        %v1150 = vpow.pop %v1149
        %v1151 = vmul.f32 %v1098, 1.442695
        %v1152 = vpow.pop %v1151
        %v1153 = vmul.f32 %v1099, 1.442695
        %v1154 = vpow.pop %v1153
        %v1155 = vmul.f32 %v1100, 1.442695
        %v1156 = vpow.pop %v1155
        %v1157 = vmul.f32 %v1101, 1.442695
        %v1158 = vpow.pop %v1157
        %v1159 = vmul.f32 %v1102, 1.442695
        %v1160 = vpow.pop %v1159
        %v1161 = vmul.f32 %v1103, 1.442695
        %v1162 = vpow.pop %v1161
        %v1163 = vmul.f32 %v1104, 1.442695
        %v1164 = vpow.pop %v1163
        %v1165 = vmul.f32 %v1105, 1.442695
        %v1166 = vpow.pop %v1165
        %v1167 = vmul.f32 %v1106, 1.442695
        %v1168 = vpow.pop %v1167
        %v1169 = vmul.f32 %v1107, 1.442695
        %v1170 = vpow.pop %v1169
        %v1171 = vmul.f32 %v1108, 1.442695
        %v1172 = vpow.pop %v1171
        %v1173 = vadd.f32 %v1110, %v1112
        %v1174 = vadd.f32 %v1173, %v1114
        %v1175 = vadd.f32 %v1174, %v1116
        %v1176 = vadd.f32 %v1175, %v1118
        %v1177 = vadd.f32 %v1176, %v1120
        %v1178 = vadd.f32 %v1177, %v1122
        %v1179 = vadd.f32 %v1178, %v1124
        %v1180 = vadd.f32 %v1179, %v1126
        %v1181 = vadd.f32 %v1180, %v1128
        %v1182 = vadd.f32 %v1181, %v1130
        %v1183 = vadd.f32 %v1182, %v1132
        %v1184 = vadd.f32 %v1183, %v1134
        %v1185 = vadd.f32 %v1184, %v1136
        %v1186 = vadd.f32 %v1185, %v1138
        %v1187 = vadd.f32 %v1186, %v1140
        %v1188 = vadd.f32 %v1187, %v1142
        %v1189 = vadd.f32 %v1188, %v1144
        %v1190 = vadd.f32 %v1189, %v1146
        %v1191 = vadd.f32 %v1190, %v1148
        %v1192 = vadd.f32 %v1191, %v1150
        %v1193 = vadd.f32 %v1192, %v1152
        %v1194 = vadd.f32 %v1193, %v1154
        %v1195 = vadd.f32 %v1194, %v1156
        %v1196 = vadd.f32 %v1195, %v1158
        %v1197 = vadd.f32 %v1196, %v1160
        %v1198 = vadd.f32 %v1197, %v1162
        %v1199 = vadd.f32 %v1198, %v1164
        %v1200 = vadd.f32 %v1199, %v1166
        %v1201 = vadd.f32 %v1200, %v1168
        %v1202 = vadd.f32 %v1201, %v1170
        %v1203 = vadd.f32 %v1202, %v1172
        %v1204 = vrot.slane %v1203, 4
        %v1205 = vadd.f32 %v1203, %v1204
        %v1206 = vrot.slane %v1205, 2
        %v1207 = vadd.f32 %v1205, %v1206
        %v1208 = vrot.slane %v1207, 1
        %v1209 = vadd.f32 %v1207, %v1208
        %v1210 = vrcp.pop %v1209
        %v1211 = vpack.c.bf16 %v1112, %v1110
        %v1212 = vpack.c.bf16 %v1116, %v1114
        %v1213 = vpack.c.bf16 %v1120, %v1118
        %v1214 = vpack.c.bf16 %v1124, %v1122
        %v1215 = vpack.c.bf16 %v1128, %v1126
        %v1216 = vpack.c.bf16 %v1132, %v1130
        %v1217 = vpack.c.bf16 %v1136, %v1134
        %v1218 = vpack.c.bf16 %v1140, %v1138
        %v1219 = vpack.c.bf16 %v1144, %v1142
        %v1220 = vpack.c.bf16 %v1148, %v1146
        %v1221 = vpack.c.bf16 %v1152, %v1150
        %v1222 = vpack.c.bf16 %v1156, %v1154
        %v1223 = vpack.c.bf16 %v1160, %v1158
        %v1224 = vpack.c.bf16 %v1164, %v1162
        %v1225 = vpack.c.bf16 %v1168, %v1166
        %v1226 = vpack.c.bf16 %v1172, %v1170
        %1227 = vmatprep.subr.bf16.mxu0 0
        %1228 = vmatpush1.bf16.msra.mxu0 %v1218
        %1229 = vmatprep.subr.bf16.mxu0 0
        %1230 = vmatpush1.bf16.msra.mxu0 %v1217
        %1231 = vmatprep.subr.bf16.mxu0 0
        %1232 = vmatpush1.bf16.msra.mxu0 %v1216
        %1233 = vmatprep.subr.bf16.mxu0 0
        %1234 = vmatpush1.bf16.msra.mxu0 %v1215
        %1235 = vmatprep.subr.bf16.mxu0 0
        %1236 = vmatpush1.bf16.msra.mxu0 %v1214
        %1237 = vmatprep.subr.bf16.mxu0 0
        %1238 = vmatpush1.bf16.msra.mxu0 %v1213
        %1239 = vmatprep.subr.bf16.mxu0 0
        %1240 = vmatpush1.bf16.msra.mxu0 %v1212
        %1241 = vmatprep.subr.bf16.mxu0 0
        %1242 = vmatpush1.bf16.msra.mxu0 %v1211
        %1243 = vmatprep.subr.bf16.mxu0 0
        %1244 = vmatpush2.bf16.msra.mxu0 %v1226
        %1245 = vmatprep.subr.bf16.mxu0 0
        %1246 = vmatpush2.bf16.msra.mxu0 %v1225
        %1247 = vmatprep.subr.bf16.mxu0 0
        %1248 = vmatpush2.bf16.msra.mxu0 %v1224
        %1249 = vmatprep.subr.bf16.mxu0 0
        %1250 = vmatpush2.bf16.msra.mxu0 %v1223
        %1251 = vmatprep.subr.bf16.mxu0 0
        %1252 = vmatpush2.bf16.msra.mxu0 %v1222
        %1253 = vmatprep.subr.bf16.mxu0 0
        %1254 = vmatpush2.bf16.msra.mxu0 %v1221
        %1255 = vmatprep.subr.bf16.mxu0 0
        %1256 = vmatpush2.bf16.msra.mxu0 %v1220
        %1257 = vmatprep.subr.bf16.mxu0 0
        %1258 = vmatpush2.bf16.msra.mxu0 %v1219
        %1259 = vmatprep.mubr.bf16.mxu0 %v717
        %1260 = vmatmul.mubr.bf16.gmra.mxu0 %v716
        %v1261 = vpop.f32.mrf.mxu0
        %v1262 = vadd.f32 0.0, %v1261
        %v1263 = vpop.f32.mrf.mxu0
        %v1264 = vpop.f32.mrf.mxu0
        %v1265 = vpop.f32.mrf.mxu0
        %1266 = vdwg.mxu0
        %v1267 = vmul.f32 %v1262, %v1210
        %1268 = vst [vmem:[#allocation2] sm:$0xff] %v1267
        %1269 = vmatprep.subr.mxu0 0.0
        %1270 = vmatpush1.msra.mxu0 0.0
        %1271 = vmatprep.subr.mxu0 0.0
        %1272 = vmatpush1.msra.mxu0 0.0
        %1273 = vmatprep.subr.mxu0 0.0
        %1274 = vmatpush1.msra.mxu0 0.0
        %1275 = vmatprep.subr.mxu0 0.0
        %1276 = vmatpush1.msra.mxu0 0.0
        %1277 = vmatprep.subr.mxu0 0.0
        %1278 = vmatpush1.msra.mxu0 0.0
        %1279 = vmatprep.subr.mxu0 0.0
        %1280 = vmatpush1.msra.mxu0 0.0
        %1281 = vmatprep.subr.mxu0 0.0
        %1282 = vmatpush1.msra.mxu0 0.0
        %1283 = vmatprep.subr.mxu0 0.0
        %1284 = vmatpush1.msra.mxu0 0.0
        %1285 = vmatprep.subr.mxu0 0.0
        %1286 = vmatpush1.msra.mxu0 0.0
        %1287 = vmatprep.subr.mxu0 0.0
        %1288 = vmatpush1.msra.mxu0 0.0
        %1289 = vmatprep.subr.mxu0 0.0
        %1290 = vmatpush1.msra.mxu0 0.0
        %1291 = vmatprep.subr.mxu0 0.0
        %1292 = vmatpush1.msra.mxu0 0.0
        %1293 = vmatprep.subr.mxu0 0.0
        %1294 = vmatpush1.msra.mxu0 0.0
        %1295 = vmatprep.subr.mxu0 0.0
        %1296 = vmatpush1.msra.mxu0 0.0
        %1297 = vmatprep.subr.mxu0 0.0
        %1298 = vmatpush1.msra.mxu0 0.0
        %1299 = vmatprep.subr.mxu0 0.0
        %1300 = vmatpush1.msra.mxu0 %v596
        %1301 = vmatprep.subr.mxu0 0.0
        %1302 = vmatpush2.msra.mxu0 0.0
        %1303 = vmatprep.subr.mxu0 0.0
        %1304 = vmatpush2.msra.mxu0 0.0
        %1305 = vmatprep.subr.mxu0 0.0
        %1306 = vmatpush2.msra.mxu0 0.0
        %1307 = vmatprep.subr.mxu0 0.0
        %1308 = vmatpush2.msra.mxu0 0.0
        %1309 = vmatprep.subr.mxu0 0.0
        %1310 = vmatpush2.msra.mxu0 0.0
        %1311 = vmatprep.subr.mxu0 0.0
        %1312 = vmatpush2.msra.mxu0 0.0
        %1313 = vmatprep.subr.mxu0 0.0
        %1314 = vmatpush2.msra.mxu0 0.0
        %1315 = vmatprep.subr.mxu0 0.0
        %1316 = vmatpush2.msra.mxu0 0.0
        %1317 = vmatprep.subr.mxu0 0.0
        %1318 = vmatpush2.msra.mxu0 0.0
        %1319 = vmatprep.subr.mxu0 0.0
        %1320 = vmatpush2.msra.mxu0 0.0
        %1321 = vmatprep.subr.mxu0 0.0
        %1322 = vmatpush2.msra.mxu0 0.0
        %1323 = vmatprep.subr.mxu0 0.0
        %1324 = vmatpush2.msra.mxu0 0.0
        %1325 = vmatprep.subr.mxu0 0.0
        %1326 = vmatpush2.msra.mxu0 0.0
        %1327 = vmatprep.subr.mxu0 0.0
        %1328 = vmatpush2.msra.mxu0 0.0
        %1329 = vmatprep.subr.mxu0 0.0
        %1330 = vmatpush2.msra.mxu0 0.0
        %1331 = vmatprep.subr.mxu0 0.0
        %1332 = vmatpush2.msra.mxu0 0.0
        %1333 = vmatprep.mubr.f32.mxu0 0.0
        %1334 = vmatmul.mubr.f32.gmra.mxu0 %v720
        %v1335 = vpop.f32.mrf.mxu0
        %v1336 = vadd.f32 0.0, %v1335
        %v1337 = vpop.f32.mrf.mxu0
        %1338 = vmatprep.mubr.f32.mxu0 0.0
        %1339 = vmatmul.mubr.f32.gmra.mxu0 %v723
        %v1340 = vpop.f32.mrf.mxu0
        %v1341 = vadd.f32 0.0, %v1340
        %v1342 = vpop.f32.mrf.mxu0
        %1343 = vmatprep.mubr.f32.mxu0 0.0
        %1344 = vmatmul.mubr.f32.gmra.mxu0 %v726
        %v1345 = vpop.f32.mrf.mxu0
        %v1346 = vadd.f32 0.0, %v1345
        %v1347 = vpop.f32.mrf.mxu0
        %1348 = vmatprep.mubr.f32.mxu0 0.0
        %1349 = vmatmul.mubr.f32.gmra.mxu0 %v729
        %v1350 = vpop.f32.mrf.mxu0
        %v1351 = vadd.f32 0.0, %v1350
        %v1352 = vpop.f32.mrf.mxu0
        %1353 = vmatprep.mubr.f32.mxu0 0.0
        %1354 = vmatmul.mubr.f32.gmra.mxu0 %v732
        %v1355 = vpop.f32.mrf.mxu0
        %v1356 = vadd.f32 0.0, %v1355
        %v1357 = vpop.f32.mrf.mxu0
        %1358 = vmatprep.mubr.f32.mxu0 0.0
        %1359 = vmatmul.mubr.f32.gmra.mxu0 %v735
        %v1360 = vpop.f32.mrf.mxu0
        %v1361 = vadd.f32 0.0, %v1360
        %v1362 = vpop.f32.mrf.mxu0
        %1363 = vmatprep.mubr.f32.mxu0 0.0
        %1364 = vmatmul.mubr.f32.gmra.mxu0 %v738
        %v1365 = vpop.f32.mrf.mxu0
        %v1366 = vadd.f32 0.0, %v1365
        %v1367 = vpop.f32.mrf.mxu0
        %1368 = vmatprep.mubr.f32.mxu0 0.0
        %1369 = vmatmul.mubr.f32.gmra.mxu0 %v741
        %v1370 = vpop.f32.mrf.mxu0
        %v1371 = vadd.f32 0.0, %v1370
        %v1372 = vpop.f32.mrf.mxu0
        %1373 = vmatprep.mubr.f32.mxu0 0.0
        %1374 = vmatmul.mubr.f32.gmra.mxu0 %v744
        %v1375 = vpop.f32.mrf.mxu0
        %v1376 = vadd.f32 0.0, %v1375
        %v1377 = vpop.f32.mrf.mxu0
        %1378 = vmatprep.mubr.f32.mxu0 0.0
        %1379 = vmatmul.mubr.f32.gmra.mxu0 %v747
        %v1380 = vpop.f32.mrf.mxu0
        %v1381 = vadd.f32 0.0, %v1380
        %v1382 = vpop.f32.mrf.mxu0
        %1383 = vmatprep.mubr.f32.mxu0 0.0
        %1384 = vmatmul.mubr.f32.gmra.mxu0 %v750
        %v1385 = vpop.f32.mrf.mxu0
        %v1386 = vadd.f32 0.0, %v1385
        %v1387 = vpop.f32.mrf.mxu0
        %1388 = vmatprep.mubr.f32.mxu0 0.0
        %1389 = vmatmul.mubr.f32.gmra.mxu0 %v753
        %v1390 = vpop.f32.mrf.mxu0
        %v1391 = vadd.f32 0.0, %v1390
        %v1392 = vpop.f32.mrf.mxu0
        %1393 = vmatprep.mubr.f32.mxu0 0.0
        %1394 = vmatmul.mubr.f32.gmra.mxu0 %v756
        %v1395 = vpop.f32.mrf.mxu0
        %v1396 = vadd.f32 0.0, %v1395
        %v1397 = vpop.f32.mrf.mxu0
        %1398 = vmatprep.mubr.f32.mxu0 0.0
        %1399 = vmatmul.mubr.f32.gmra.mxu0 %v759
        %v1400 = vpop.f32.mrf.mxu0
        %v1401 = vadd.f32 0.0, %v1400
        %v1402 = vpop.f32.mrf.mxu0
        %1403 = vmatprep.mubr.f32.mxu0 0.0
        %1404 = vmatmul.mubr.f32.gmra.mxu0 %v762
        %v1405 = vpop.f32.mrf.mxu0
        %v1406 = vadd.f32 0.0, %v1405
        %v1407 = vpop.f32.mrf.mxu0
        %1408 = vmatprep.mubr.f32.mxu0 0.0
        %1409 = vmatmul.mubr.f32.gmra.mxu0 %v765
        %v1410 = vpop.f32.mrf.mxu0
        %v1411 = vadd.f32 0.0, %v1410
        %v1412 = vpop.f32.mrf.mxu0
        %1413 = vmatprep.mubr.f32.mxu0 0.0
        %1414 = vmatmul.mubr.f32.gmra.mxu0 %v768
        %v1415 = vpop.f32.mrf.mxu0
        %v1416 = vadd.f32 0.0, %v1415
        %v1417 = vpop.f32.mrf.mxu0
        %1418 = vmatprep.mubr.f32.mxu0 0.0
        %1419 = vmatmul.mubr.f32.gmra.mxu0 %v771
        %v1420 = vpop.f32.mrf.mxu0
        %v1421 = vadd.f32 0.0, %v1420
        %v1422 = vpop.f32.mrf.mxu0
        %1423 = vmatprep.mubr.f32.mxu0 0.0
        %1424 = vmatmul.mubr.f32.gmra.mxu0 %v774
        %v1425 = vpop.f32.mrf.mxu0
        %v1426 = vadd.f32 0.0, %v1425
        %v1427 = vpop.f32.mrf.mxu0
        %1428 = vmatprep.mubr.f32.mxu0 0.0
        %1429 = vmatmul.mubr.f32.gmra.mxu0 %v777
        %v1430 = vpop.f32.mrf.mxu0
        %v1431 = vadd.f32 0.0, %v1430
        %v1432 = vpop.f32.mrf.mxu0
        %1433 = vmatprep.mubr.f32.mxu0 0.0
        %1434 = vmatmul.mubr.f32.gmra.mxu0 %v780
        %v1435 = vpop.f32.mrf.mxu0
        %v1436 = vadd.f32 0.0, %v1435
        %v1437 = vpop.f32.mrf.mxu0
        %1438 = vmatprep.mubr.f32.mxu0 0.0
        %1439 = vmatmul.mubr.f32.gmra.mxu0 %v783
        %v1440 = vpop.f32.mrf.mxu0
        %v1441 = vadd.f32 0.0, %v1440
        %v1442 = vpop.f32.mrf.mxu0
        %1443 = vmatprep.mubr.f32.mxu0 0.0
        %1444 = vmatmul.mubr.f32.gmra.mxu0 %v786
        %v1445 = vpop.f32.mrf.mxu0
        %v1446 = vadd.f32 0.0, %v1445
        %v1447 = vpop.f32.mrf.mxu0
        %1448 = vmatprep.mubr.f32.mxu0 0.0
        %1449 = vmatmul.mubr.f32.gmra.mxu0 %v789
        %v1450 = vpop.f32.mrf.mxu0
        %v1451 = vadd.f32 0.0, %v1450
        %v1452 = vpop.f32.mrf.mxu0
        %1453 = vmatprep.mubr.f32.mxu0 0.0
        %1454 = vmatmul.mubr.f32.gmra.mxu0 %v792
        %v1455 = vpop.f32.mrf.mxu0
        %v1456 = vadd.f32 0.0, %v1455
        %v1457 = vpop.f32.mrf.mxu0
        %1458 = vmatprep.mubr.f32.mxu0 0.0
        %1459 = vmatmul.mubr.f32.gmra.mxu0 %v795
        %v1460 = vpop.f32.mrf.mxu0
        %v1461 = vadd.f32 0.0, %v1460
        %v1462 = vpop.f32.mrf.mxu0
        %1463 = vmatprep.mubr.f32.mxu0 0.0
        %1464 = vmatmul.mubr.f32.gmra.mxu0 %v798
        %v1465 = vpop.f32.mrf.mxu0
        %v1466 = vadd.f32 0.0, %v1465
        %v1467 = vpop.f32.mrf.mxu0
        %1468 = vmatprep.mubr.f32.mxu0 0.0
        %1469 = vmatmul.mubr.f32.gmra.mxu0 %v801
        %v1470 = vpop.f32.mrf.mxu0
        %v1471 = vadd.f32 0.0, %v1470
        %v1472 = vpop.f32.mrf.mxu0
        %1473 = vmatprep.mubr.f32.mxu0 0.0
        %1474 = vmatmul.mubr.f32.gmra.mxu0 %v804
        %v1475 = vpop.f32.mrf.mxu0
        %v1476 = vadd.f32 0.0, %v1475
        %v1477 = vpop.f32.mrf.mxu0
        %1478 = vmatprep.mubr.f32.mxu0 0.0
        %1479 = vmatmul.mubr.f32.gmra.mxu0 %v807
        %v1480 = vpop.f32.mrf.mxu0
        %v1481 = vadd.f32 0.0, %v1480
        %v1482 = vpop.f32.mrf.mxu0
        %1483 = vmatprep.mubr.f32.mxu0 0.0
        %1484 = vmatmul.mubr.f32.gmra.mxu0 %v810
        %v1485 = vpop.f32.mrf.mxu0
        %v1486 = vadd.f32 0.0, %v1485
        %v1487 = vpop.f32.mrf.mxu0
        %1488 = vmatprep.mubr.f32.mxu0 0.0
        %1489 = vmatmul.mubr.f32.gmra.mxu0 %v813
        %v1490 = vpop.f32.mrf.mxu0
        %v1491 = vadd.f32 0.0, %v1490
        %v1492 = vpop.f32.mrf.mxu0
        %1493 = vdwg.mxu0
        %v1494 = vmax.f32 %v1336, %v1356
        %v1495 = vmax.f32 %v1341, %v1361
        %v1496 = vmax.f32 %v1346, %v1366
        %v1497 = vmax.f32 %v1351, %v1371
        %v1498 = vmax.f32 %v1494, %v1376
        %v1499 = vmax.f32 %v1495, %v1381
        %v1500 = vmax.f32 %v1496, %v1386
        %v1501 = vmax.f32 %v1497, %v1391
        %v1502 = vmax.f32 %v1498, %v1396
        %v1503 = vmax.f32 %v1499, %v1401
        %v1504 = vmax.f32 %v1500, %v1406
        %v1505 = vmax.f32 %v1501, %v1411
        %v1506 = vmax.f32 %v1502, %v1416
        %v1507 = vmax.f32 %v1503, %v1421
        %v1508 = vmax.f32 %v1504, %v1426
        %v1509 = vmax.f32 %v1505, %v1431
        %v1510 = vmax.f32 %v1506, %v1436
        %v1511 = vmax.f32 %v1507, %v1441
        %v1512 = vmax.f32 %v1508, %v1446
        %v1513 = vmax.f32 %v1509, %v1451
        %v1514 = vmax.f32 %v1510, %v1456
        %v1515 = vmax.f32 %v1511, %v1461
        %v1516 = vmax.f32 %v1512, %v1466
        %v1517 = vmax.f32 %v1513, %v1471
        %v1518 = vmax.f32 %v1514, %v1476
        %v1519 = vmax.f32 %v1515, %v1481
        %v1520 = vmax.f32 %v1516, %v1486
        %v1521 = vmax.f32 %v1517, %v1491
        %v1522 = vmax.f32 %v1518, %v1519
        %v1523 = vmax.f32 %v1520, %v1521
        %v1524 = vmax.f32 %v1522, %v1523
        %v1525 = vrot.slane %v1524, 4
        %v1526 = vmax.f32 %v1524, %v1525
        %v1527 = vrot.slane %v1526, 2
        %v1528 = vmax.f32 %v1526, %v1527
        %v1529 = vrot.slane %v1528, 1
        %v1530 = vmax.f32 %v1528, %v1529
        %v1531 = vsub.f32 %v1336, %v1530
        %v1532 = vsub.f32 %v1341, %v1530
        %v1533 = vsub.f32 %v1346, %v1530
        %v1534 = vsub.f32 %v1351, %v1530
        %v1535 = vsub.f32 %v1356, %v1530
        %v1536 = vsub.f32 %v1361, %v1530
        %v1537 = vsub.f32 %v1366, %v1530
        %v1538 = vsub.f32 %v1371, %v1530
        %v1539 = vsub.f32 %v1376, %v1530
        %v1540 = vsub.f32 %v1381, %v1530
        %v1541 = vsub.f32 %v1386, %v1530
        %v1542 = vsub.f32 %v1391, %v1530
        %v1543 = vsub.f32 %v1396, %v1530
        %v1544 = vsub.f32 %v1401, %v1530
        %v1545 = vsub.f32 %v1406, %v1530
        %v1546 = vsub.f32 %v1411, %v1530
        %v1547 = vsub.f32 %v1416, %v1530
        %v1548 = vsub.f32 %v1421, %v1530
        %v1549 = vsub.f32 %v1426, %v1530
        %v1550 = vsub.f32 %v1431, %v1530
        %v1551 = vsub.f32 %v1436, %v1530
        %v1552 = vsub.f32 %v1441, %v1530
        %v1553 = vsub.f32 %v1446, %v1530
        %v1554 = vsub.f32 %v1451, %v1530
        %v1555 = vsub.f32 %v1456, %v1530
        %v1556 = vsub.f32 %v1461, %v1530
        %v1557 = vsub.f32 %v1466, %v1530
        %v1558 = vsub.f32 %v1471, %v1530
        %v1559 = vsub.f32 %v1476, %v1530
        %v1560 = vsub.f32 %v1481, %v1530
        %v1561 = vsub.f32 %v1486, %v1530
        %v1562 = vsub.f32 %v1491, %v1530
        %v1563 = vmul.f32 %v1531, 1.442695
        %v1564 = vpow.pop %v1563
        %v1565 = vmul.f32 %v1532, 1.442695
        %v1566 = vpow.pop %v1565
        %v1567 = vmul.f32 %v1533, 1.442695
        %v1568 = vpow.pop %v1567
        %v1569 = vmul.f32 %v1534, 1.442695
        %v1570 = vpow.pop %v1569
        %v1571 = vmul.f32 %v1535, 1.442695
        %v1572 = vpow.pop %v1571
        %v1573 = vmul.f32 %v1536, 1.442695
        %v1574 = vpow.pop %v1573
        %v1575 = vmul.f32 %v1537, 1.442695
        %v1576 = vpow.pop %v1575
        %v1577 = vmul.f32 %v1538, 1.442695
        %v1578 = vpow.pop %v1577
        %v1579 = vmul.f32 %v1539, 1.442695
        %v1580 = vpow.pop %v1579
        %v1581 = vmul.f32 %v1540, 1.442695
        %v1582 = vpow.pop %v1581
        %v1583 = vmul.f32 %v1541, 1.442695
        %v1584 = vpow.pop %v1583
        %v1585 = vmul.f32 %v1542, 1.442695
        %v1586 = vpow.pop %v1585
        %v1587 = vmul.f32 %v1543, 1.442695
        %v1588 = vpow.pop %v1587
        %v1589 = vmul.f32 %v1544, 1.442695
        %v1590 = vpow.pop %v1589
        %v1591 = vmul.f32 %v1545, 1.442695
        %v1592 = vpow.pop %v1591
        %v1593 = vmul.f32 %v1546, 1.442695
        %v1594 = vpow.pop %v1593
        %v1595 = vmul.f32 %v1547, 1.442695
        %v1596 = vpow.pop %v1595
        %v1597 = vmul.f32 %v1548, 1.442695
        %v1598 = vpow.pop %v1597
        %v1599 = vmul.f32 %v1549, 1.442695
        %v1600 = vpow.pop %v1599
        %v1601 = vmul.f32 %v1550, 1.442695
        %v1602 = vpow.pop %v1601
        %v1603 = vmul.f32 %v1551, 1.442695
        %v1604 = vpow.pop %v1603
        %v1605 = vmul.f32 %v1552, 1.442695
        %v1606 = vpow.pop %v1605
        %v1607 = vmul.f32 %v1553, 1.442695
        %v1608 = vpow.pop %v1607
        %v1609 = vmul.f32 %v1554, 1.442695
        %v1610 = vpow.pop %v1609
        %v1611 = vmul.f32 %v1555, 1.442695
        %v1612 = vpow.pop %v1611
        %v1613 = vmul.f32 %v1556, 1.442695
        %v1614 = vpow.pop %v1613
        %v1615 = vmul.f32 %v1557, 1.442695
        %v1616 = vpow.pop %v1615
        %v1617 = vmul.f32 %v1558, 1.442695
        %v1618 = vpow.pop %v1617
        %v1619 = vmul.f32 %v1559, 1.442695
        %v1620 = vpow.pop %v1619
        %v1621 = vmul.f32 %v1560, 1.442695
        %v1622 = vpow.pop %v1621
        %v1623 = vmul.f32 %v1561, 1.442695
        %v1624 = vpow.pop %v1623
        %v1625 = vmul.f32 %v1562, 1.442695
        %v1626 = vpow.pop %v1625
        %v1627 = vadd.f32 %v1564, %v1566
        %v1628 = vadd.f32 %v1627, %v1568
        %v1629 = vadd.f32 %v1628, %v1570
        %v1630 = vadd.f32 %v1629, %v1572
        %v1631 = vadd.f32 %v1630, %v1574
        %v1632 = vadd.f32 %v1631, %v1576
        %v1633 = vadd.f32 %v1632, %v1578
        %v1634 = vadd.f32 %v1633, %v1580
        %v1635 = vadd.f32 %v1634, %v1582
        %v1636 = vadd.f32 %v1635, %v1584
        %v1637 = vadd.f32 %v1636, %v1586
        %v1638 = vadd.f32 %v1637, %v1588
        %v1639 = vadd.f32 %v1638, %v1590
        %v1640 = vadd.f32 %v1639, %v1592
        %v1641 = vadd.f32 %v1640, %v1594
        %v1642 = vadd.f32 %v1641, %v1596
        %v1643 = vadd.f32 %v1642, %v1598
        %v1644 = vadd.f32 %v1643, %v1600
        %v1645 = vadd.f32 %v1644, %v1602
        %v1646 = vadd.f32 %v1645, %v1604
        %v1647 = vadd.f32 %v1646, %v1606
        %v1648 = vadd.f32 %v1647, %v1608
        %v1649 = vadd.f32 %v1648, %v1610
        %v1650 = vadd.f32 %v1649, %v1612
        %v1651 = vadd.f32 %v1650, %v1614
        %v1652 = vadd.f32 %v1651, %v1616
        %v1653 = vadd.f32 %v1652, %v1618
        %v1654 = vadd.f32 %v1653, %v1620
        %v1655 = vadd.f32 %v1654, %v1622
        %v1656 = vadd.f32 %v1655, %v1624
        %v1657 = vadd.f32 %v1656, %v1626
        %v1658 = vrot.slane %v1657, 4
        %v1659 = vadd.f32 %v1657, %v1658
        %v1660 = vrot.slane %v1659, 2
        %v1661 = vadd.f32 %v1659, %v1660
        %v1662 = vrot.slane %v1661, 1
        %v1663 = vadd.f32 %v1661, %v1662
        %v1664 = vrcp.pop %v1663
        %v1665 = vpack.c.bf16 %v1566, %v1564
        %v1666 = vpack.c.bf16 %v1570, %v1568
        %v1667 = vpack.c.bf16 %v1574, %v1572
        %v1668 = vpack.c.bf16 %v1578, %v1576
        %v1669 = vpack.c.bf16 %v1582, %v1580
        %v1670 = vpack.c.bf16 %v1586, %v1584
        %v1671 = vpack.c.bf16 %v1590, %v1588
        %v1672 = vpack.c.bf16 %v1594, %v1592
        %v1673 = vpack.c.bf16 %v1598, %v1596
        %v1674 = vpack.c.bf16 %v1602, %v1600
        %v1675 = vpack.c.bf16 %v1606, %v1604
        %v1676 = vpack.c.bf16 %v1610, %v1608
        %v1677 = vpack.c.bf16 %v1614, %v1612
        %v1678 = vpack.c.bf16 %v1618, %v1616
        %v1679 = vpack.c.bf16 %v1622, %v1620
        %v1680 = vpack.c.bf16 %v1626, %v1624
        %1681 = vmatprep.subr.bf16.mxu0 0
        %1682 = vmatpush1.bf16.msra.mxu0 %v1672
        %1683 = vmatprep.subr.bf16.mxu0 0
        %1684 = vmatpush1.bf16.msra.mxu0 %v1671
        %1685 = vmatprep.subr.bf16.mxu0 0
        %1686 = vmatpush1.bf16.msra.mxu0 %v1670
        %1687 = vmatprep.subr.bf16.mxu0 0
        %1688 = vmatpush1.bf16.msra.mxu0 %v1669
        %1689 = vmatprep.subr.bf16.mxu0 0
        %1690 = vmatpush1.bf16.msra.mxu0 %v1668
        %1691 = vmatprep.subr.bf16.mxu0 0
        %1692 = vmatpush1.bf16.msra.mxu0 %v1667
        %1693 = vmatprep.subr.bf16.mxu0 0
        %1694 = vmatpush1.bf16.msra.mxu0 %v1666
        %1695 = vmatprep.subr.bf16.mxu0 0
        %1696 = vmatpush1.bf16.msra.mxu0 %v1665
        %1697 = vmatprep.subr.bf16.mxu0 0
        %1698 = vmatpush2.bf16.msra.mxu0 %v1680
        %1699 = vmatprep.subr.bf16.mxu0 0
        %1700 = vmatpush2.bf16.msra.mxu0 %v1679
        %1701 = vmatprep.subr.bf16.mxu0 0
        %1702 = vmatpush2.bf16.msra.mxu0 %v1678
        %1703 = vmatprep.subr.bf16.mxu0 0
        %1704 = vmatpush2.bf16.msra.mxu0 %v1677
        %1705 = vmatprep.subr.bf16.mxu0 0
        %1706 = vmatpush2.bf16.msra.mxu0 %v1676
        %1707 = vmatprep.subr.bf16.mxu0 0
        %1708 = vmatpush2.bf16.msra.mxu0 %v1675
        %1709 = vmatprep.subr.bf16.mxu0 0
        %1710 = vmatpush2.bf16.msra.mxu0 %v1674
        %1711 = vmatprep.subr.bf16.mxu0 0
        %1712 = vmatpush2.bf16.msra.mxu0 %v1673
        %1713 = vmatprep.mubr.bf16.mxu0 %v717
        %1714 = vmatmul.mubr.bf16.gmra.mxu0 %v716
        %v1715 = vpop.f32.mrf.mxu0
        %v1716 = vadd.f32 0.0, %v1715
        %v1717 = vpop.f32.mrf.mxu0
        %v1718 = vpop.f32.mrf.mxu0
        %v1719 = vpop.f32.mrf.mxu0
        %1720 = vdwg.mxu0
        %v1721 = vmul.f32 %v1716, %v1664
        %1722 = vst [vmem:[#allocation2 + $0x8] sm:$0xff] %v1721
        %v1723 = vpack.c.bf16 %v638, %v638
        %v1724 = vpack.c.bf16 %v640, %v640
        %1725 = vrot.lane.b32.xlu0 %v668, 120
        %v1726 = vpop.permute.xlu0 %1725
        %1727 = vrot.lane.b32.xlu0 %v669, 120
        %v1728 = vpop.permute.xlu0 %1727
        %1729 = vrot.lane.b32.xlu0 %v670, 120
        %v1730 = vpop.permute.xlu0 %1729
        %1731 = vrot.lane.b32.xlu0 %v671, 120
        %v1732 = vpop.permute.xlu0 %1731
        %1733 = vrot.lane.b32.xlu0 %v672, 120
        %v1734 = vpop.permute.xlu0 %1733
        %1735 = vrot.lane.b32.xlu0 %v673, 120
        %v1736 = vpop.permute.xlu0 %1735
        %1737 = vrot.lane.b32.xlu0 %v674, 120
        %v1738 = vpop.permute.xlu0 %1737
        %1739 = vrot.lane.b32.xlu0 %v675, 120
        %v1740 = vpop.permute.xlu0 %1739
        %1741 = vrot.lane.b32.xlu0 %v676, 120
        %v1742 = vpop.permute.xlu0 %1741
        %1743 = vrot.lane.b32.xlu0 %v677, 120
        %v1744 = vpop.permute.xlu0 %1743
        %1745 = vrot.lane.b32.xlu0 %v678, 120
        %v1746 = vpop.permute.xlu0 %1745
        %1747 = vrot.lane.b32.xlu0 %v679, 120
        %v1748 = vpop.permute.xlu0 %1747
        %1749 = vrot.lane.b32.xlu0 %v680, 120
        %v1750 = vpop.permute.xlu0 %1749
        %1751 = vrot.lane.b32.xlu0 %v681, 120
        %v1752 = vpop.permute.xlu0 %1751
        %1753 = vrot.lane.b32.xlu0 %v682, 120
        %v1754 = vpop.permute.xlu0 %1753
        %1755 = vrot.lane.b32.xlu0 %v683, 120
        %v1756 = vpop.permute.xlu0 %1755
        %1757 = vrot.lane.b32.xlu0 %v700, 120
        %v1758 = vpop.permute.xlu0 %1757
        %1759 = vrot.lane.b32.xlu0 %v701, 120
        %v1760 = vpop.permute.xlu0 %1759
        %1761 = vrot.lane.b32.xlu0 %v702, 120
        %v1762 = vpop.permute.xlu0 %1761
        %1763 = vrot.lane.b32.xlu0 %v703, 120
        %v1764 = vpop.permute.xlu0 %1763
        %1765 = vrot.lane.b32.xlu0 %v704, 120
        %v1766 = vpop.permute.xlu0 %1765
        %1767 = vrot.lane.b32.xlu0 %v705, 120
        %v1768 = vpop.permute.xlu0 %1767
        %1769 = vrot.lane.b32.xlu0 %v706, 120
        %v1770 = vpop.permute.xlu0 %1769
        %1771 = vrot.lane.b32.xlu0 %v707, 120
        %v1772 = vpop.permute.xlu0 %1771
        %1773 = vrot.lane.b32.xlu0 %v708, 120
        %v1774 = vpop.permute.xlu0 %1773
        %1775 = vrot.lane.b32.xlu0 %v709, 120
        %v1776 = vpop.permute.xlu0 %1775
        %1777 = vrot.lane.b32.xlu0 %v710, 120
        %v1778 = vpop.permute.xlu0 %1777
        %1779 = vrot.lane.b32.xlu0 %v711, 120
        %v1780 = vpop.permute.xlu0 %1779
        %1781 = vrot.lane.b32.xlu0 %v712, 120
        %v1782 = vpop.permute.xlu0 %1781
        %1783 = vrot.lane.b32.xlu0 %v713, 120
        %v1784 = vpop.permute.xlu0 %1783
        %1785 = vrot.lane.b32.xlu0 %v714, 120
        %v1786 = vpop.permute.xlu0 %1785
        %1787 = vrot.lane.b32.xlu0 %v715, 120
        %v1788 = vpop.permute.xlu0 %1787
        %v1789 = vsel %vm718, %v1726, 0
        %v1791 = vsel %vm718, %v1728, 0
        %v1793 = vsel %vm718, %v1730, 0
        %v1795 = vsel %vm718, %v1732, 0
        %v1797 = vsel %vm718, %v1734, 0
        %v1799 = vsel %vm718, %v1736, 0
        %v1801 = vsel %vm718, %v1738, 0
        %v1803 = vsel %vm718, %v1740, 0
        %v1805 = vsel %vm718, %v1742, 0
        %v1807 = vsel %vm718, %v1744, 0
        %v1809 = vsel %vm718, %v1746, 0
        %v1811 = vsel %vm718, %v1748, 0
        %v1813 = vsel %vm718, %v1750, 0
        %v1815 = vsel %vm718, %v1752, 0
        %v1817 = vsel %vm718, %v1754, 0
        %v1819 = vsel %vm718, %v1756, 0
        %v1821 = vsel %vm718, %v1758, 0
        %v1823 = vsel %vm718, %v1760, 0
        %v1825 = vsel %vm718, %v1762, 0
        %v1827 = vsel %vm718, %v1764, 0
        %v1829 = vsel %vm718, %v1766, 0
        %v1831 = vsel %vm718, %v1768, 0
        %v1833 = vsel %vm718, %v1770, 0
        %v1835 = vsel %vm718, %v1772, 0
        %v1837 = vsel %vm718, %v1774, 0
        %v1839 = vsel %vm718, %v1776, 0
        %v1841 = vsel %vm718, %v1778, 0
        %v1843 = vsel %vm718, %v1780, 0
        %v1845 = vsel %vm718, %v1782, 0
        %v1847 = vsel %vm718, %v1784, 0
        %v1849 = vsel %vm718, %v1786, 0
        %v1851 = vsel %vm718, %v1788, 0
        %1853 = vmatprep.subr.mxu0 0.0
        %1854 = vmatpush1.msra.mxu0 0.0
        %1855 = vmatprep.subr.mxu0 0.0
        %1856 = vmatpush1.msra.mxu0 0.0
        %1857 = vmatprep.subr.mxu0 0.0
        %1858 = vmatpush1.msra.mxu0 0.0
        %1859 = vmatprep.subr.mxu0 0.0
        %1860 = vmatpush1.msra.mxu0 0.0
        %1861 = vmatprep.subr.mxu0 0.0
        %1862 = vmatpush1.msra.mxu0 0.0
        %1863 = vmatprep.subr.mxu0 0.0
        %1864 = vmatpush1.msra.mxu0 0.0
        %1865 = vmatprep.subr.mxu0 0.0
        %1866 = vmatpush1.msra.mxu0 0.0
        %1867 = vmatprep.subr.mxu0 0.0
        %1868 = vmatpush1.msra.mxu0 0.0
        %1869 = vmatprep.subr.mxu0 0.0
        %1870 = vmatpush1.msra.mxu0 0.0
        %1871 = vmatprep.subr.mxu0 0.0
        %1872 = vmatpush1.msra.mxu0 0.0
        %1873 = vmatprep.subr.mxu0 0.0
        %1874 = vmatpush1.msra.mxu0 0.0
        %1875 = vmatprep.subr.mxu0 0.0
        %1876 = vmatpush1.msra.mxu0 0.0
        %1877 = vmatprep.subr.mxu0 0.0
        %1878 = vmatpush1.msra.mxu0 0.0
        %1879 = vmatprep.subr.mxu0 0.0
        %1880 = vmatpush1.msra.mxu0 0.0
        %1881 = vmatprep.subr.mxu0 0.0
        %1882 = vmatpush1.msra.mxu0 0.0
        %1883 = vmatprep.subr.mxu0 0.0
        %1884 = vmatpush1.msra.mxu0 %v598
        %1885 = vmatprep.subr.mxu0 0.0
        %1886 = vmatpush2.msra.mxu0 0.0
        %1887 = vmatprep.subr.mxu0 0.0
        %1888 = vmatpush2.msra.mxu0 0.0
        %1889 = vmatprep.subr.mxu0 0.0
        %1890 = vmatpush2.msra.mxu0 0.0
        %1891 = vmatprep.subr.mxu0 0.0
        %1892 = vmatpush2.msra.mxu0 0.0
        %1893 = vmatprep.subr.mxu0 0.0
        %1894 = vmatpush2.msra.mxu0 0.0
        %1895 = vmatprep.subr.mxu0 0.0
        %1896 = vmatpush2.msra.mxu0 0.0
        %1897 = vmatprep.subr.mxu0 0.0
        %1898 = vmatpush2.msra.mxu0 0.0
        %1899 = vmatprep.subr.mxu0 0.0
        %1900 = vmatpush2.msra.mxu0 0.0
        %1901 = vmatprep.subr.mxu0 0.0
        %1902 = vmatpush2.msra.mxu0 0.0
        %1903 = vmatprep.subr.mxu0 0.0
        %1904 = vmatpush2.msra.mxu0 0.0
        %1905 = vmatprep.subr.mxu0 0.0
        %1906 = vmatpush2.msra.mxu0 0.0
        %1907 = vmatprep.subr.mxu0 0.0
        %1908 = vmatpush2.msra.mxu0 0.0
        %1909 = vmatprep.subr.mxu0 0.0
        %1910 = vmatpush2.msra.mxu0 0.0
        %1911 = vmatprep.subr.mxu0 0.0
        %1912 = vmatpush2.msra.mxu0 0.0
        %1913 = vmatprep.subr.mxu0 0.0
        %1914 = vmatpush2.msra.mxu0 0.0
        %1915 = vmatprep.subr.mxu0 0.0
        %1916 = vmatpush2.msra.mxu0 0.0
        %1917 = vmatprep.mubr.f32.mxu0 0.0
        %1918 = vmatmul.mubr.f32.gmra.mxu0 %v1789
        %v1919 = vpop.f32.mrf.mxu0
        %v1920 = vadd.f32 0.0, %v1919
        %v1921 = vpop.f32.mrf.mxu0
        %1922 = vmatprep.mubr.f32.mxu0 0.0
        %1923 = vmatmul.mubr.f32.gmra.mxu0 %v1791
        %v1924 = vpop.f32.mrf.mxu0
        %v1925 = vadd.f32 0.0, %v1924
        %v1926 = vpop.f32.mrf.mxu0
        %1927 = vmatprep.mubr.f32.mxu0 0.0
        %1928 = vmatmul.mubr.f32.gmra.mxu0 %v1793
        %v1929 = vpop.f32.mrf.mxu0
        %v1930 = vadd.f32 0.0, %v1929
        %v1931 = vpop.f32.mrf.mxu0
        %1932 = vmatprep.mubr.f32.mxu0 0.0
        %1933 = vmatmul.mubr.f32.gmra.mxu0 %v1795
        %v1934 = vpop.f32.mrf.mxu0
        %v1935 = vadd.f32 0.0, %v1934
        %v1936 = vpop.f32.mrf.mxu0
        %1937 = vmatprep.mubr.f32.mxu0 0.0
        %1938 = vmatmul.mubr.f32.gmra.mxu0 %v1797
        %v1939 = vpop.f32.mrf.mxu0
        %v1940 = vadd.f32 0.0, %v1939
        %v1941 = vpop.f32.mrf.mxu0
        %1942 = vmatprep.mubr.f32.mxu0 0.0
        %1943 = vmatmul.mubr.f32.gmra.mxu0 %v1799
        %v1944 = vpop.f32.mrf.mxu0
        %v1945 = vadd.f32 0.0, %v1944
        %v1946 = vpop.f32.mrf.mxu0
        %1947 = vmatprep.mubr.f32.mxu0 0.0
        %1948 = vmatmul.mubr.f32.gmra.mxu0 %v1801
        %v1949 = vpop.f32.mrf.mxu0
        %v1950 = vadd.f32 0.0, %v1949
        %v1951 = vpop.f32.mrf.mxu0
        %1952 = vmatprep.mubr.f32.mxu0 0.0
        %1953 = vmatmul.mubr.f32.gmra.mxu0 %v1803
        %v1954 = vpop.f32.mrf.mxu0
        %v1955 = vadd.f32 0.0, %v1954
        %v1956 = vpop.f32.mrf.mxu0
        %1957 = vmatprep.mubr.f32.mxu0 0.0
        %1958 = vmatmul.mubr.f32.gmra.mxu0 %v1805
        %v1959 = vpop.f32.mrf.mxu0
        %v1960 = vadd.f32 0.0, %v1959
        %v1961 = vpop.f32.mrf.mxu0
        %1962 = vmatprep.mubr.f32.mxu0 0.0
        %1963 = vmatmul.mubr.f32.gmra.mxu0 %v1807
        %v1964 = vpop.f32.mrf.mxu0
        %v1965 = vadd.f32 0.0, %v1964
        %v1966 = vpop.f32.mrf.mxu0
        %1967 = vmatprep.mubr.f32.mxu0 0.0
        %1968 = vmatmul.mubr.f32.gmra.mxu0 %v1809
        %v1969 = vpop.f32.mrf.mxu0
        %v1970 = vadd.f32 0.0, %v1969
        %v1971 = vpop.f32.mrf.mxu0
        %1972 = vmatprep.mubr.f32.mxu0 0.0
        %1973 = vmatmul.mubr.f32.gmra.mxu0 %v1811
        %v1974 = vpop.f32.mrf.mxu0
        %v1975 = vadd.f32 0.0, %v1974
        %v1976 = vpop.f32.mrf.mxu0
        %1977 = vmatprep.mubr.f32.mxu0 0.0
        %1978 = vmatmul.mubr.f32.gmra.mxu0 %v1813
        %v1979 = vpop.f32.mrf.mxu0
        %v1980 = vadd.f32 0.0, %v1979
        %v1981 = vpop.f32.mrf.mxu0
        %1982 = vmatprep.mubr.f32.mxu0 0.0
        %1983 = vmatmul.mubr.f32.gmra.mxu0 %v1815
        %v1984 = vpop.f32.mrf.mxu0
        %v1985 = vadd.f32 0.0, %v1984
        %v1986 = vpop.f32.mrf.mxu0
        %1987 = vmatprep.mubr.f32.mxu0 0.0
        %1988 = vmatmul.mubr.f32.gmra.mxu0 %v1817
        %v1989 = vpop.f32.mrf.mxu0
        %v1990 = vadd.f32 0.0, %v1989
        %v1991 = vpop.f32.mrf.mxu0
        %1992 = vmatprep.mubr.f32.mxu0 0.0
        %1993 = vmatmul.mubr.f32.gmra.mxu0 %v1819
        %v1994 = vpop.f32.mrf.mxu0
        %v1995 = vadd.f32 0.0, %v1994
        %v1996 = vpop.f32.mrf.mxu0
        %1997 = vmatprep.mubr.f32.mxu0 0.0
        %1998 = vmatmul.mubr.f32.gmra.mxu0 %v1821
        %v1999 = vpop.f32.mrf.mxu0
        %v2000 = vadd.f32 0.0, %v1999
        %v2001 = vpop.f32.mrf.mxu0
        %2002 = vmatprep.mubr.f32.mxu0 0.0
        %2003 = vmatmul.mubr.f32.gmra.mxu0 %v1823
        %v2004 = vpop.f32.mrf.mxu0
        %v2005 = vadd.f32 0.0, %v2004
        %v2006 = vpop.f32.mrf.mxu0
        %2007 = vmatprep.mubr.f32.mxu0 0.0
        %2008 = vmatmul.mubr.f32.gmra.mxu0 %v1825
        %v2009 = vpop.f32.mrf.mxu0
        %v2010 = vadd.f32 0.0, %v2009
        %v2011 = vpop.f32.mrf.mxu0
        %2012 = vmatprep.mubr.f32.mxu0 0.0
        %2013 = vmatmul.mubr.f32.gmra.mxu0 %v1827
        %v2014 = vpop.f32.mrf.mxu0
        %v2015 = vadd.f32 0.0, %v2014
        %v2016 = vpop.f32.mrf.mxu0
        %2017 = vmatprep.mubr.f32.mxu0 0.0
        %2018 = vmatmul.mubr.f32.gmra.mxu0 %v1829
        %v2019 = vpop.f32.mrf.mxu0
        %v2020 = vadd.f32 0.0, %v2019
        %v2021 = vpop.f32.mrf.mxu0
        %2022 = vmatprep.mubr.f32.mxu0 0.0
        %2023 = vmatmul.mubr.f32.gmra.mxu0 %v1831
        %v2024 = vpop.f32.mrf.mxu0
        %v2025 = vadd.f32 0.0, %v2024
        %v2026 = vpop.f32.mrf.mxu0
        %2027 = vmatprep.mubr.f32.mxu0 0.0
        %2028 = vmatmul.mubr.f32.gmra.mxu0 %v1833
        %v2029 = vpop.f32.mrf.mxu0
        %v2030 = vadd.f32 0.0, %v2029
        %v2031 = vpop.f32.mrf.mxu0
        %2032 = vmatprep.mubr.f32.mxu0 0.0
        %2033 = vmatmul.mubr.f32.gmra.mxu0 %v1835
        %v2034 = vpop.f32.mrf.mxu0
        %v2035 = vadd.f32 0.0, %v2034
        %v2036 = vpop.f32.mrf.mxu0
        %2037 = vmatprep.mubr.f32.mxu0 0.0
        %2038 = vmatmul.mubr.f32.gmra.mxu0 %v1837
        %v2039 = vpop.f32.mrf.mxu0
        %v2040 = vadd.f32 0.0, %v2039
        %v2041 = vpop.f32.mrf.mxu0
        %2042 = vmatprep.mubr.f32.mxu0 0.0
        %2043 = vmatmul.mubr.f32.gmra.mxu0 %v1839
        %v2044 = vpop.f32.mrf.mxu0
        %v2045 = vadd.f32 0.0, %v2044
        %v2046 = vpop.f32.mrf.mxu0
        %2047 = vmatprep.mubr.f32.mxu0 0.0
        %2048 = vmatmul.mubr.f32.gmra.mxu0 %v1841
        %v2049 = vpop.f32.mrf.mxu0
        %v2050 = vadd.f32 0.0, %v2049
        %v2051 = vpop.f32.mrf.mxu0
        %2052 = vmatprep.mubr.f32.mxu0 0.0
        %2053 = vmatmul.mubr.f32.gmra.mxu0 %v1843
        %v2054 = vpop.f32.mrf.mxu0
        %v2055 = vadd.f32 0.0, %v2054
        %v2056 = vpop.f32.mrf.mxu0
        %2057 = vmatprep.mubr.f32.mxu0 0.0
        %2058 = vmatmul.mubr.f32.gmra.mxu0 %v1845
        %v2059 = vpop.f32.mrf.mxu0
        %v2060 = vadd.f32 0.0, %v2059
        %v2061 = vpop.f32.mrf.mxu0
        %2062 = vmatprep.mubr.f32.mxu0 0.0
        %2063 = vmatmul.mubr.f32.gmra.mxu0 %v1847
        %v2064 = vpop.f32.mrf.mxu0
        %v2065 = vadd.f32 0.0, %v2064
        %v2066 = vpop.f32.mrf.mxu0
        %2067 = vmatprep.mubr.f32.mxu0 0.0
        %2068 = vmatmul.mubr.f32.gmra.mxu0 %v1849
        %v2069 = vpop.f32.mrf.mxu0
        %v2070 = vadd.f32 0.0, %v2069
        %v2071 = vpop.f32.mrf.mxu0
        %2072 = vmatprep.mubr.f32.mxu0 0.0
        %2073 = vmatmul.mubr.f32.gmra.mxu0 %v1851
        %v2074 = vpop.f32.mrf.mxu0
        %v2075 = vadd.f32 0.0, %v2074
        %v2076 = vpop.f32.mrf.mxu0
        %2077 = vdwg.mxu0
        %v2078 = vmax.f32 %v1920, %v1940
        %v2079 = vmax.f32 %v1925, %v1945
        %v2080 = vmax.f32 %v1930, %v1950
        %v2081 = vmax.f32 %v1935, %v1955
        %v2082 = vmax.f32 %v2078, %v1960
        %v2083 = vmax.f32 %v2079, %v1965
        %v2084 = vmax.f32 %v2080, %v1970
        %v2085 = vmax.f32 %v2081, %v1975
        %v2086 = vmax.f32 %v2082, %v1980
        %v2087 = vmax.f32 %v2083, %v1985
        %v2088 = vmax.f32 %v2084, %v1990
        %v2089 = vmax.f32 %v2085, %v1995
        %v2090 = vmax.f32 %v2086, %v2000
        %v2091 = vmax.f32 %v2087, %v2005
        %v2092 = vmax.f32 %v2088, %v2010
        %v2093 = vmax.f32 %v2089, %v2015
        %v2094 = vmax.f32 %v2090, %v2020
        %v2095 = vmax.f32 %v2091, %v2025
        %v2096 = vmax.f32 %v2092, %v2030
        %v2097 = vmax.f32 %v2093, %v2035
        %v2098 = vmax.f32 %v2094, %v2040
        %v2099 = vmax.f32 %v2095, %v2045
        %v2100 = vmax.f32 %v2096, %v2050
        %v2101 = vmax.f32 %v2097, %v2055
        %v2102 = vmax.f32 %v2098, %v2060
        %v2103 = vmax.f32 %v2099, %v2065
        %v2104 = vmax.f32 %v2100, %v2070
        %v2105 = vmax.f32 %v2101, %v2075
        %v2106 = vmax.f32 %v2102, %v2103
        %v2107 = vmax.f32 %v2104, %v2105
        %v2108 = vmax.f32 %v2106, %v2107
        %v2109 = vrot.slane %v2108, 4
        %v2110 = vmax.f32 %v2108, %v2109
        %v2111 = vrot.slane %v2110, 2
        %v2112 = vmax.f32 %v2110, %v2111
        %v2113 = vrot.slane %v2112, 1
        %v2114 = vmax.f32 %v2112, %v2113
        %v2115 = vsub.f32 %v1920, %v2114
        %v2116 = vsub.f32 %v1925, %v2114
        %v2117 = vsub.f32 %v1930, %v2114
        %v2118 = vsub.f32 %v1935, %v2114
        %v2119 = vsub.f32 %v1940, %v2114
        %v2120 = vsub.f32 %v1945, %v2114
        %v2121 = vsub.f32 %v1950, %v2114
        %v2122 = vsub.f32 %v1955, %v2114
        %v2123 = vsub.f32 %v1960, %v2114
        %v2124 = vsub.f32 %v1965, %v2114
        %v2125 = vsub.f32 %v1970, %v2114
        %v2126 = vsub.f32 %v1975, %v2114
        %v2127 = vsub.f32 %v1980, %v2114
        %v2128 = vsub.f32 %v1985, %v2114
        %v2129 = vsub.f32 %v1990, %v2114
        %v2130 = vsub.f32 %v1995, %v2114
        %v2131 = vsub.f32 %v2000, %v2114
        %v2132 = vsub.f32 %v2005, %v2114
        %v2133 = vsub.f32 %v2010, %v2114
        %v2134 = vsub.f32 %v2015, %v2114
        %v2135 = vsub.f32 %v2020, %v2114
        %v2136 = vsub.f32 %v2025, %v2114
        %v2137 = vsub.f32 %v2030, %v2114
        %v2138 = vsub.f32 %v2035, %v2114
        %v2139 = vsub.f32 %v2040, %v2114
        %v2140 = vsub.f32 %v2045, %v2114
        %v2141 = vsub.f32 %v2050, %v2114
        %v2142 = vsub.f32 %v2055, %v2114
        %v2143 = vsub.f32 %v2060, %v2114
        %v2144 = vsub.f32 %v2065, %v2114
        %v2145 = vsub.f32 %v2070, %v2114
        %v2146 = vsub.f32 %v2075, %v2114
        %v2147 = vmul.f32 %v2115, 1.442695
        %v2148 = vpow.pop %v2147
        %v2149 = vmul.f32 %v2116, 1.442695
        %v2150 = vpow.pop %v2149
        %v2151 = vmul.f32 %v2117, 1.442695
        %v2152 = vpow.pop %v2151
        %v2153 = vmul.f32 %v2118, 1.442695
        %v2154 = vpow.pop %v2153
        %v2155 = vmul.f32 %v2119, 1.442695
        %v2156 = vpow.pop %v2155
        %v2157 = vmul.f32 %v2120, 1.442695
        %v2158 = vpow.pop %v2157
        %v2159 = vmul.f32 %v2121, 1.442695
        %v2160 = vpow.pop %v2159
        %v2161 = vmul.f32 %v2122, 1.442695
        %v2162 = vpow.pop %v2161
        %v2163 = vmul.f32 %v2123, 1.442695
        %v2164 = vpow.pop %v2163
        %v2165 = vmul.f32 %v2124, 1.442695
        %v2166 = vpow.pop %v2165
        %v2167 = vmul.f32 %v2125, 1.442695
        %v2168 = vpow.pop %v2167
        %v2169 = vmul.f32 %v2126, 1.442695
        %v2170 = vpow.pop %v2169
        %v2171 = vmul.f32 %v2127, 1.442695
        %v2172 = vpow.pop %v2171
        %v2173 = vmul.f32 %v2128, 1.442695
        %v2174 = vpow.pop %v2173
        %v2175 = vmul.f32 %v2129, 1.442695
        %v2176 = vpow.pop %v2175
        %v2177 = vmul.f32 %v2130, 1.442695
        %v2178 = vpow.pop %v2177
        %v2179 = vmul.f32 %v2131, 1.442695
        %v2180 = vpow.pop %v2179
        %v2181 = vmul.f32 %v2132, 1.442695
        %v2182 = vpow.pop %v2181
        %v2183 = vmul.f32 %v2133, 1.442695
        %v2184 = vpow.pop %v2183
        %v2185 = vmul.f32 %v2134, 1.442695
        %v2186 = vpow.pop %v2185
        %v2187 = vmul.f32 %v2135, 1.442695
        %v2188 = vpow.pop %v2187
        %v2189 = vmul.f32 %v2136, 1.442695
        %v2190 = vpow.pop %v2189
        %v2191 = vmul.f32 %v2137, 1.442695
        %v2192 = vpow.pop %v2191
        %v2193 = vmul.f32 %v2138, 1.442695
        %v2194 = vpow.pop %v2193
        %v2195 = vmul.f32 %v2139, 1.442695
        %v2196 = vpow.pop %v2195
        %v2197 = vmul.f32 %v2140, 1.442695
        %v2198 = vpow.pop %v2197
        %v2199 = vmul.f32 %v2141, 1.442695
        %v2200 = vpow.pop %v2199
        %v2201 = vmul.f32 %v2142, 1.442695
        %v2202 = vpow.pop %v2201
        %v2203 = vmul.f32 %v2143, 1.442695
        %v2204 = vpow.pop %v2203
        %v2205 = vmul.f32 %v2144, 1.442695
        %v2206 = vpow.pop %v2205
        %v2207 = vmul.f32 %v2145, 1.442695
        %v2208 = vpow.pop %v2207
        %v2209 = vmul.f32 %v2146, 1.442695
        %v2210 = vpow.pop %v2209
        %v2211 = vadd.f32 %v2148, %v2150
        %v2212 = vadd.f32 %v2211, %v2152
        %v2213 = vadd.f32 %v2212, %v2154
        %v2214 = vadd.f32 %v2213, %v2156
        %v2215 = vadd.f32 %v2214, %v2158
        %v2216 = vadd.f32 %v2215, %v2160
        %v2217 = vadd.f32 %v2216, %v2162
        %v2218 = vadd.f32 %v2217, %v2164
        %v2219 = vadd.f32 %v2218, %v2166
        %v2220 = vadd.f32 %v2219, %v2168
        %v2221 = vadd.f32 %v2220, %v2170
        %v2222 = vadd.f32 %v2221, %v2172
        %v2223 = vadd.f32 %v2222, %v2174
        %v2224 = vadd.f32 %v2223, %v2176
        %v2225 = vadd.f32 %v2224, %v2178
        %v2226 = vadd.f32 %v2225, %v2180
        %v2227 = vadd.f32 %v2226, %v2182
        %v2228 = vadd.f32 %v2227, %v2184
        %v2229 = vadd.f32 %v2228, %v2186
        %v2230 = vadd.f32 %v2229, %v2188
        %v2231 = vadd.f32 %v2230, %v2190
        %v2232 = vadd.f32 %v2231, %v2192
        %v2233 = vadd.f32 %v2232, %v2194
        %v2234 = vadd.f32 %v2233, %v2196
        %v2235 = vadd.f32 %v2234, %v2198
        %v2236 = vadd.f32 %v2235, %v2200
        %v2237 = vadd.f32 %v2236, %v2202
        %v2238 = vadd.f32 %v2237, %v2204
        %v2239 = vadd.f32 %v2238, %v2206
        %v2240 = vadd.f32 %v2239, %v2208
        %v2241 = vadd.f32 %v2240, %v2210
        %v2242 = vrot.slane %v2241, 4
        %v2243 = vadd.f32 %v2241, %v2242
        %v2244 = vrot.slane %v2243, 2
        %v2245 = vadd.f32 %v2243, %v2244
        %v2246 = vrot.slane %v2245, 1
        %v2247 = vadd.f32 %v2245, %v2246
        %v2248 = vrcp.pop %v2247
        %v2249 = vpack.c.bf16 %v2150, %v2148
        %v2250 = vpack.c.bf16 %v2154, %v2152
        %v2251 = vpack.c.bf16 %v2158, %v2156
        %v2252 = vpack.c.bf16 %v2162, %v2160
        %v2253 = vpack.c.bf16 %v2166, %v2164
        %v2254 = vpack.c.bf16 %v2170, %v2168
        %v2255 = vpack.c.bf16 %v2174, %v2172
        %v2256 = vpack.c.bf16 %v2178, %v2176
        %v2257 = vpack.c.bf16 %v2182, %v2180
        %v2258 = vpack.c.bf16 %v2186, %v2184
        %v2259 = vpack.c.bf16 %v2190, %v2188
        %v2260 = vpack.c.bf16 %v2194, %v2192
        %v2261 = vpack.c.bf16 %v2198, %v2196
        %v2262 = vpack.c.bf16 %v2202, %v2200
        %v2263 = vpack.c.bf16 %v2206, %v2204
        %v2264 = vpack.c.bf16 %v2210, %v2208
        %2265 = vmatprep.subr.bf16.mxu0 0
        %2266 = vmatpush1.bf16.msra.mxu0 %v2256
        %2267 = vmatprep.subr.bf16.mxu0 0
        %2268 = vmatpush1.bf16.msra.mxu0 %v2255
        %2269 = vmatprep.subr.bf16.mxu0 0
        %2270 = vmatpush1.bf16.msra.mxu0 %v2254
        %2271 = vmatprep.subr.bf16.mxu0 0
        %2272 = vmatpush1.bf16.msra.mxu0 %v2253
        %2273 = vmatprep.subr.bf16.mxu0 0
        %2274 = vmatpush1.bf16.msra.mxu0 %v2252
        %2275 = vmatprep.subr.bf16.mxu0 0
        %2276 = vmatpush1.bf16.msra.mxu0 %v2251
        %2277 = vmatprep.subr.bf16.mxu0 0
        %2278 = vmatpush1.bf16.msra.mxu0 %v2250
        %2279 = vmatprep.subr.bf16.mxu0 0
        %2280 = vmatpush1.bf16.msra.mxu0 %v2249
        %2281 = vmatprep.subr.bf16.mxu0 0
        %2282 = vmatpush2.bf16.msra.mxu0 %v2264
        %2283 = vmatprep.subr.bf16.mxu0 0
        %2284 = vmatpush2.bf16.msra.mxu0 %v2263
        %2285 = vmatprep.subr.bf16.mxu0 0
        %2286 = vmatpush2.bf16.msra.mxu0 %v2262
        %2287 = vmatprep.subr.bf16.mxu0 0
        %2288 = vmatpush2.bf16.msra.mxu0 %v2261
        %2289 = vmatprep.subr.bf16.mxu0 0
        %2290 = vmatpush2.bf16.msra.mxu0 %v2260
        %2291 = vmatprep.subr.bf16.mxu0 0
        %2292 = vmatpush2.bf16.msra.mxu0 %v2259
        %2293 = vmatprep.subr.bf16.mxu0 0
        %2294 = vmatpush2.bf16.msra.mxu0 %v2258
        %2295 = vmatprep.subr.bf16.mxu0 0
        %2296 = vmatpush2.bf16.msra.mxu0 %v2257
        %2297 = vmatprep.mubr.bf16.mxu0 %v1724
        %2298 = vmatmul.mubr.bf16.gmra.mxu0 %v1723
        %v2299 = vpop.f32.mrf.mxu0
        %v2300 = vadd.f32 0.0, %v2299
        %v2301 = vpop.f32.mrf.mxu0
        %v2302 = vpop.f32.mrf.mxu0
        %v2303 = vpop.f32.mrf.mxu0
        %2304 = vdwg.mxu0
        %v2305 = vmul.f32 %v2300, %v2248
        %2306 = vst [vmem:[#allocation2 + $0x10] sm:$0xff] %v2305
        %2307 = vmatprep.subr.mxu0 0.0
        %2308 = vmatpush1.msra.mxu0 0.0
        %2309 = vmatprep.subr.mxu0 0.0
        %2310 = vmatpush1.msra.mxu0 0.0
        %2311 = vmatprep.subr.mxu0 0.0
        %2312 = vmatpush1.msra.mxu0 0.0
        %2313 = vmatprep.subr.mxu0 0.0
        %2314 = vmatpush1.msra.mxu0 0.0
        %2315 = vmatprep.subr.mxu0 0.0
        %2316 = vmatpush1.msra.mxu0 0.0
        %2317 = vmatprep.subr.mxu0 0.0
        %2318 = vmatpush1.msra.mxu0 0.0
        %2319 = vmatprep.subr.mxu0 0.0
        %2320 = vmatpush1.msra.mxu0 0.0
        %2321 = vmatprep.subr.mxu0 0.0
        %2322 = vmatpush1.msra.mxu0 0.0
        %2323 = vmatprep.subr.mxu0 0.0
        %2324 = vmatpush1.msra.mxu0 0.0
        %2325 = vmatprep.subr.mxu0 0.0
        %2326 = vmatpush1.msra.mxu0 0.0
        %2327 = vmatprep.subr.mxu0 0.0
        %2328 = vmatpush1.msra.mxu0 0.0
        %2329 = vmatprep.subr.mxu0 0.0
        %2330 = vmatpush1.msra.mxu0 0.0
        %2331 = vmatprep.subr.mxu0 0.0
        %2332 = vmatpush1.msra.mxu0 0.0
        %2333 = vmatprep.subr.mxu0 0.0
        %2334 = vmatpush1.msra.mxu0 0.0
        %2335 = vmatprep.subr.mxu0 0.0
        %2336 = vmatpush1.msra.mxu0 0.0
        %2337 = vmatprep.subr.mxu0 0.0
        %2338 = vmatpush1.msra.mxu0 %v600
        %2339 = vmatprep.subr.mxu0 0.0
        %2340 = vmatpush2.msra.mxu0 0.0
        %2341 = vmatprep.subr.mxu0 0.0
        %2342 = vmatpush2.msra.mxu0 0.0
        %2343 = vmatprep.subr.mxu0 0.0
        %2344 = vmatpush2.msra.mxu0 0.0
        %2345 = vmatprep.subr.mxu0 0.0
        %2346 = vmatpush2.msra.mxu0 0.0
        %2347 = vmatprep.subr.mxu0 0.0
        %2348 = vmatpush2.msra.mxu0 0.0
        %2349 = vmatprep.subr.mxu0 0.0
        %2350 = vmatpush2.msra.mxu0 0.0
        %2351 = vmatprep.subr.mxu0 0.0
        %2352 = vmatpush2.msra.mxu0 0.0
        %2353 = vmatprep.subr.mxu0 0.0
        %2354 = vmatpush2.msra.mxu0 0.0
        %2355 = vmatprep.subr.mxu0 0.0
        %2356 = vmatpush2.msra.mxu0 0.0
        %2357 = vmatprep.subr.mxu0 0.0
        %2358 = vmatpush2.msra.mxu0 0.0
        %2359 = vmatprep.subr.mxu0 0.0
        %2360 = vmatpush2.msra.mxu0 0.0
        %2361 = vmatprep.subr.mxu0 0.0
        %2362 = vmatpush2.msra.mxu0 0.0
        %2363 = vmatprep.subr.mxu0 0.0
        %2364 = vmatpush2.msra.mxu0 0.0
        %2365 = vmatprep.subr.mxu0 0.0
        %2366 = vmatpush2.msra.mxu0 0.0
        %2367 = vmatprep.subr.mxu0 0.0
        %2368 = vmatpush2.msra.mxu0 0.0
        %2369 = vmatprep.subr.mxu0 0.0
        %2370 = vmatpush2.msra.mxu0 0.0
        %2371 = vmatprep.mubr.f32.mxu0 0.0
        %2372 = vmatmul.mubr.f32.gmra.mxu0 %v1789
        %v2373 = vpop.f32.mrf.mxu0
        %v2374 = vadd.f32 0.0, %v2373
        %v2375 = vpop.f32.mrf.mxu0
        %2376 = vmatprep.mubr.f32.mxu0 0.0
        %2377 = vmatmul.mubr.f32.gmra.mxu0 %v1791
        %v2378 = vpop.f32.mrf.mxu0
        %v2379 = vadd.f32 0.0, %v2378
        %v2380 = vpop.f32.mrf.mxu0
        %2381 = vmatprep.mubr.f32.mxu0 0.0
        %2382 = vmatmul.mubr.f32.gmra.mxu0 %v1793
        %v2383 = vpop.f32.mrf.mxu0
        %v2384 = vadd.f32 0.0, %v2383
        %v2385 = vpop.f32.mrf.mxu0
        %2386 = vmatprep.mubr.f32.mxu0 0.0
        %2387 = vmatmul.mubr.f32.gmra.mxu0 %v1795
        %v2388 = vpop.f32.mrf.mxu0
        %v2389 = vadd.f32 0.0, %v2388
        %v2390 = vpop.f32.mrf.mxu0
        %2391 = vmatprep.mubr.f32.mxu0 0.0
        %2392 = vmatmul.mubr.f32.gmra.mxu0 %v1797
        %v2393 = vpop.f32.mrf.mxu0
        %v2394 = vadd.f32 0.0, %v2393
        %v2395 = vpop.f32.mrf.mxu0
        %2396 = vmatprep.mubr.f32.mxu0 0.0
        %2397 = vmatmul.mubr.f32.gmra.mxu0 %v1799
        %v2398 = vpop.f32.mrf.mxu0
        %v2399 = vadd.f32 0.0, %v2398
        %v2400 = vpop.f32.mrf.mxu0
        %2401 = vmatprep.mubr.f32.mxu0 0.0
        %2402 = vmatmul.mubr.f32.gmra.mxu0 %v1801
        %v2403 = vpop.f32.mrf.mxu0
        %v2404 = vadd.f32 0.0, %v2403
        %v2405 = vpop.f32.mrf.mxu0
        %2406 = vmatprep.mubr.f32.mxu0 0.0
        %2407 = vmatmul.mubr.f32.gmra.mxu0 %v1803
        %v2408 = vpop.f32.mrf.mxu0
        %v2409 = vadd.f32 0.0, %v2408
        %v2410 = vpop.f32.mrf.mxu0
        %2411 = vmatprep.mubr.f32.mxu0 0.0
        %2412 = vmatmul.mubr.f32.gmra.mxu0 %v1805
        %v2413 = vpop.f32.mrf.mxu0
        %v2414 = vadd.f32 0.0, %v2413
        %v2415 = vpop.f32.mrf.mxu0
        %2416 = vmatprep.mubr.f32.mxu0 0.0
        %2417 = vmatmul.mubr.f32.gmra.mxu0 %v1807
        %v2418 = vpop.f32.mrf.mxu0
        %v2419 = vadd.f32 0.0, %v2418
        %v2420 = vpop.f32.mrf.mxu0
        %2421 = vmatprep.mubr.f32.mxu0 0.0
        %2422 = vmatmul.mubr.f32.gmra.mxu0 %v1809
        %v2423 = vpop.f32.mrf.mxu0
        %v2424 = vadd.f32 0.0, %v2423
        %v2425 = vpop.f32.mrf.mxu0
        %2426 = vmatprep.mubr.f32.mxu0 0.0
        %2427 = vmatmul.mubr.f32.gmra.mxu0 %v1811
        %v2428 = vpop.f32.mrf.mxu0
        %v2429 = vadd.f32 0.0, %v2428
        %v2430 = vpop.f32.mrf.mxu0
        %2431 = vmatprep.mubr.f32.mxu0 0.0
        %2432 = vmatmul.mubr.f32.gmra.mxu0 %v1813
        %v2433 = vpop.f32.mrf.mxu0
        %v2434 = vadd.f32 0.0, %v2433
        %v2435 = vpop.f32.mrf.mxu0
        %2436 = vmatprep.mubr.f32.mxu0 0.0
        %2437 = vmatmul.mubr.f32.gmra.mxu0 %v1815
        %v2438 = vpop.f32.mrf.mxu0
        %v2439 = vadd.f32 0.0, %v2438
        %v2440 = vpop.f32.mrf.mxu0
        %2441 = vmatprep.mubr.f32.mxu0 0.0
        %2442 = vmatmul.mubr.f32.gmra.mxu0 %v1817
        %v2443 = vpop.f32.mrf.mxu0
        %v2444 = vadd.f32 0.0, %v2443
        %v2445 = vpop.f32.mrf.mxu0
        %2446 = vmatprep.mubr.f32.mxu0 0.0
        %2447 = vmatmul.mubr.f32.gmra.mxu0 %v1819
        %v2448 = vpop.f32.mrf.mxu0
        %v2449 = vadd.f32 0.0, %v2448
        %v2450 = vpop.f32.mrf.mxu0
        %2451 = vmatprep.mubr.f32.mxu0 0.0
        %2452 = vmatmul.mubr.f32.gmra.mxu0 %v1821
        %v2453 = vpop.f32.mrf.mxu0
        %v2454 = vadd.f32 0.0, %v2453
        %v2455 = vpop.f32.mrf.mxu0
        %2456 = vmatprep.mubr.f32.mxu0 0.0
        %2457 = vmatmul.mubr.f32.gmra.mxu0 %v1823
        %v2458 = vpop.f32.mrf.mxu0
        %v2459 = vadd.f32 0.0, %v2458
        %v2460 = vpop.f32.mrf.mxu0
        %2461 = vmatprep.mubr.f32.mxu0 0.0
        %2462 = vmatmul.mubr.f32.gmra.mxu0 %v1825
        %v2463 = vpop.f32.mrf.mxu0
        %v2464 = vadd.f32 0.0, %v2463
        %v2465 = vpop.f32.mrf.mxu0
        %2466 = vmatprep.mubr.f32.mxu0 0.0
        %2467 = vmatmul.mubr.f32.gmra.mxu0 %v1827
        %v2468 = vpop.f32.mrf.mxu0
        %v2469 = vadd.f32 0.0, %v2468
        %v2470 = vpop.f32.mrf.mxu0
        %2471 = vmatprep.mubr.f32.mxu0 0.0
        %2472 = vmatmul.mubr.f32.gmra.mxu0 %v1829
        %v2473 = vpop.f32.mrf.mxu0
        %v2474 = vadd.f32 0.0, %v2473
        %v2475 = vpop.f32.mrf.mxu0
        %2476 = vmatprep.mubr.f32.mxu0 0.0
        %2477 = vmatmul.mubr.f32.gmra.mxu0 %v1831
        %v2478 = vpop.f32.mrf.mxu0
        %v2479 = vadd.f32 0.0, %v2478
        %v2480 = vpop.f32.mrf.mxu0
        %2481 = vmatprep.mubr.f32.mxu0 0.0
        %2482 = vmatmul.mubr.f32.gmra.mxu0 %v1833
        %v2483 = vpop.f32.mrf.mxu0
        %v2484 = vadd.f32 0.0, %v2483
        %v2485 = vpop.f32.mrf.mxu0
        %2486 = vmatprep.mubr.f32.mxu0 0.0
        %2487 = vmatmul.mubr.f32.gmra.mxu0 %v1835
        %v2488 = vpop.f32.mrf.mxu0
        %v2489 = vadd.f32 0.0, %v2488
        %v2490 = vpop.f32.mrf.mxu0
        %2491 = vmatprep.mubr.f32.mxu0 0.0
        %2492 = vmatmul.mubr.f32.gmra.mxu0 %v1837
        %v2493 = vpop.f32.mrf.mxu0
        %v2494 = vadd.f32 0.0, %v2493
        %v2495 = vpop.f32.mrf.mxu0
        %2496 = vmatprep.mubr.f32.mxu0 0.0
        %2497 = vmatmul.mubr.f32.gmra.mxu0 %v1839
        %v2498 = vpop.f32.mrf.mxu0
        %v2499 = vadd.f32 0.0, %v2498
        %v2500 = vpop.f32.mrf.mxu0
        %2501 = vmatprep.mubr.f32.mxu0 0.0
        %2502 = vmatmul.mubr.f32.gmra.mxu0 %v1841
        %v2503 = vpop.f32.mrf.mxu0
        %v2504 = vadd.f32 0.0, %v2503
        %v2505 = vpop.f32.mrf.mxu0
        %2506 = vmatprep.mubr.f32.mxu0 0.0
        %2507 = vmatmul.mubr.f32.gmra.mxu0 %v1843
        %v2508 = vpop.f32.mrf.mxu0
        %v2509 = vadd.f32 0.0, %v2508
        %v2510 = vpop.f32.mrf.mxu0
        %2511 = vmatprep.mubr.f32.mxu0 0.0
        %2512 = vmatmul.mubr.f32.gmra.mxu0 %v1845
        %v2513 = vpop.f32.mrf.mxu0
        %v2514 = vadd.f32 0.0, %v2513
        %v2515 = vpop.f32.mrf.mxu0
        %2516 = vmatprep.mubr.f32.mxu0 0.0
        %2517 = vmatmul.mubr.f32.gmra.mxu0 %v1847
        %v2518 = vpop.f32.mrf.mxu0
        %v2519 = vadd.f32 0.0, %v2518
        %v2520 = vpop.f32.mrf.mxu0
        %2521 = vmatprep.mubr.f32.mxu0 0.0
        %2522 = vmatmul.mubr.f32.gmra.mxu0 %v1849
        %v2523 = vpop.f32.mrf.mxu0
        %v2524 = vadd.f32 0.0, %v2523
        %v2525 = vpop.f32.mrf.mxu0
        %2526 = vmatprep.mubr.f32.mxu0 0.0
        %2527 = vmatmul.mubr.f32.gmra.mxu0 %v1851
        %v2528 = vpop.f32.mrf.mxu0
        %v2529 = vadd.f32 0.0, %v2528
        %v2530 = vpop.f32.mrf.mxu0
        %2531 = vdwg.mxu0
        %v2532 = vmax.f32 %v2374, %v2394
        %v2533 = vmax.f32 %v2379, %v2399
        %v2534 = vmax.f32 %v2384, %v2404
        %v2535 = vmax.f32 %v2389, %v2409
        %v2536 = vmax.f32 %v2532, %v2414
        %v2537 = vmax.f32 %v2533, %v2419
        %v2538 = vmax.f32 %v2534, %v2424
        %v2539 = vmax.f32 %v2535, %v2429
        %v2540 = vmax.f32 %v2536, %v2434
        %v2541 = vmax.f32 %v2537, %v2439
        %v2542 = vmax.f32 %v2538, %v2444
        %v2543 = vmax.f32 %v2539, %v2449
        %v2544 = vmax.f32 %v2540, %v2454
        %v2545 = vmax.f32 %v2541, %v2459
        %v2546 = vmax.f32 %v2542, %v2464
        %v2547 = vmax.f32 %v2543, %v2469
        %v2548 = vmax.f32 %v2544, %v2474
        %v2549 = vmax.f32 %v2545, %v2479
        %v2550 = vmax.f32 %v2546, %v2484
        %v2551 = vmax.f32 %v2547, %v2489
        %v2552 = vmax.f32 %v2548, %v2494
        %v2553 = vmax.f32 %v2549, %v2499
        %v2554 = vmax.f32 %v2550, %v2504
        %v2555 = vmax.f32 %v2551, %v2509
        %v2556 = vmax.f32 %v2552, %v2514
        %v2557 = vmax.f32 %v2553, %v2519
        %v2558 = vmax.f32 %v2554, %v2524
        %v2559 = vmax.f32 %v2555, %v2529
        %v2560 = vmax.f32 %v2556, %v2557
        %v2561 = vmax.f32 %v2558, %v2559
        %v2562 = vmax.f32 %v2560, %v2561
        %v2563 = vrot.slane %v2562, 4
        %v2564 = vmax.f32 %v2562, %v2563
        %v2565 = vrot.slane %v2564, 2
        %v2566 = vmax.f32 %v2564, %v2565
        %v2567 = vrot.slane %v2566, 1
        %v2568 = vmax.f32 %v2566, %v2567
        %v2569 = vsub.f32 %v2374, %v2568
        %v2570 = vsub.f32 %v2379, %v2568
        %v2571 = vsub.f32 %v2384, %v2568
        %v2572 = vsub.f32 %v2389, %v2568
        %v2573 = vsub.f32 %v2394, %v2568
        %v2574 = vsub.f32 %v2399, %v2568
        %v2575 = vsub.f32 %v2404, %v2568
        %v2576 = vsub.f32 %v2409, %v2568
        %v2577 = vsub.f32 %v2414, %v2568
        %v2578 = vsub.f32 %v2419, %v2568
        %v2579 = vsub.f32 %v2424, %v2568
        %v2580 = vsub.f32 %v2429, %v2568
        %v2581 = vsub.f32 %v2434, %v2568
        %v2582 = vsub.f32 %v2439, %v2568
        %v2583 = vsub.f32 %v2444, %v2568
        %v2584 = vsub.f32 %v2449, %v2568
        %v2585 = vsub.f32 %v2454, %v2568
        %v2586 = vsub.f32 %v2459, %v2568
        %v2587 = vsub.f32 %v2464, %v2568
        %v2588 = vsub.f32 %v2469, %v2568
        %v2589 = vsub.f32 %v2474, %v2568
        %v2590 = vsub.f32 %v2479, %v2568
        %v2591 = vsub.f32 %v2484, %v2568
        %v2592 = vsub.f32 %v2489, %v2568
        %v2593 = vsub.f32 %v2494, %v2568
        %v2594 = vsub.f32 %v2499, %v2568
        %v2595 = vsub.f32 %v2504, %v2568
        %v2596 = vsub.f32 %v2509, %v2568
        %v2597 = vsub.f32 %v2514, %v2568
        %v2598 = vsub.f32 %v2519, %v2568
        %v2599 = vsub.f32 %v2524, %v2568
        %v2600 = vsub.f32 %v2529, %v2568
        %v2601 = vmul.f32 %v2569, 1.442695
        %v2602 = vpow.pop %v2601
        %v2603 = vmul.f32 %v2570, 1.442695
        %v2604 = vpow.pop %v2603
        %v2605 = vmul.f32 %v2571, 1.442695
        %v2606 = vpow.pop %v2605
        %v2607 = vmul.f32 %v2572, 1.442695
        %v2608 = vpow.pop %v2607
        %v2609 = vmul.f32 %v2573, 1.442695
        %v2610 = vpow.pop %v2609
        %v2611 = vmul.f32 %v2574, 1.442695
        %v2612 = vpow.pop %v2611
        %v2613 = vmul.f32 %v2575, 1.442695
        %v2614 = vpow.pop %v2613
        %v2615 = vmul.f32 %v2576, 1.442695
        %v2616 = vpow.pop %v2615
        %v2617 = vmul.f32 %v2577, 1.442695
        %v2618 = vpow.pop %v2617
        %v2619 = vmul.f32 %v2578, 1.442695
        %v2620 = vpow.pop %v2619
        %v2621 = vmul.f32 %v2579, 1.442695
        %v2622 = vpow.pop %v2621
        %v2623 = vmul.f32 %v2580, 1.442695
        %v2624 = vpow.pop %v2623
        %v2625 = vmul.f32 %v2581, 1.442695
        %v2626 = vpow.pop %v2625
        %v2627 = vmul.f32 %v2582, 1.442695
        %v2628 = vpow.pop %v2627
        %v2629 = vmul.f32 %v2583, 1.442695
        %v2630 = vpow.pop %v2629
        %v2631 = vmul.f32 %v2584, 1.442695
        %v2632 = vpow.pop %v2631
        %v2633 = vmul.f32 %v2585, 1.442695
        %v2634 = vpow.pop %v2633
        %v2635 = vmul.f32 %v2586, 1.442695
        %v2636 = vpow.pop %v2635
        %v2637 = vmul.f32 %v2587, 1.442695
        %v2638 = vpow.pop %v2637
        %v2639 = vmul.f32 %v2588, 1.442695
        %v2640 = vpow.pop %v2639
        %v2641 = vmul.f32 %v2589, 1.442695
        %v2642 = vpow.pop %v2641
        %v2643 = vmul.f32 %v2590, 1.442695
        %v2644 = vpow.pop %v2643
        %v2645 = vmul.f32 %v2591, 1.442695
        %v2646 = vpow.pop %v2645
        %v2647 = vmul.f32 %v2592, 1.442695
        %v2648 = vpow.pop %v2647
        %v2649 = vmul.f32 %v2593, 1.442695
        %v2650 = vpow.pop %v2649
        %v2651 = vmul.f32 %v2594, 1.442695
        %v2652 = vpow.pop %v2651
        %v2653 = vmul.f32 %v2595, 1.442695
        %v2654 = vpow.pop %v2653
        %v2655 = vmul.f32 %v2596, 1.442695
        %v2656 = vpow.pop %v2655
        %v2657 = vmul.f32 %v2597, 1.442695
        %v2658 = vpow.pop %v2657
        %v2659 = vmul.f32 %v2598, 1.442695
        %v2660 = vpow.pop %v2659
        %v2661 = vmul.f32 %v2599, 1.442695
        %v2662 = vpow.pop %v2661
        %v2663 = vmul.f32 %v2600, 1.442695
        %v2664 = vpow.pop %v2663
        %v2665 = vadd.f32 %v2602, %v2604
        %v2666 = vadd.f32 %v2665, %v2606
        %v2667 = vadd.f32 %v2666, %v2608
        %v2668 = vadd.f32 %v2667, %v2610
        %v2669 = vadd.f32 %v2668, %v2612
        %v2670 = vadd.f32 %v2669, %v2614
        %v2671 = vadd.f32 %v2670, %v2616
        %v2672 = vadd.f32 %v2671, %v2618
        %v2673 = vadd.f32 %v2672, %v2620
        %v2674 = vadd.f32 %v2673, %v2622
        %v2675 = vadd.f32 %v2674, %v2624
        %v2676 = vadd.f32 %v2675, %v2626
        %v2677 = vadd.f32 %v2676, %v2628
        %v2678 = vadd.f32 %v2677, %v2630
        %v2679 = vadd.f32 %v2678, %v2632
        %v2680 = vadd.f32 %v2679, %v2634
        %v2681 = vadd.f32 %v2680, %v2636
        %v2682 = vadd.f32 %v2681, %v2638
        %v2683 = vadd.f32 %v2682, %v2640
        %v2684 = vadd.f32 %v2683, %v2642
        %v2685 = vadd.f32 %v2684, %v2644
        %v2686 = vadd.f32 %v2685, %v2646
        %v2687 = vadd.f32 %v2686, %v2648
        %v2688 = vadd.f32 %v2687, %v2650
        %v2689 = vadd.f32 %v2688, %v2652
        %v2690 = vadd.f32 %v2689, %v2654
        %v2691 = vadd.f32 %v2690, %v2656
        %v2692 = vadd.f32 %v2691, %v2658
        %v2693 = vadd.f32 %v2692, %v2660
        %v2694 = vadd.f32 %v2693, %v2662
        %v2695 = vadd.f32 %v2694, %v2664
        %v2696 = vrot.slane %v2695, 4
        %v2697 = vadd.f32 %v2695, %v2696
        %v2698 = vrot.slane %v2697, 2
        %v2699 = vadd.f32 %v2697, %v2698
        %v2700 = vrot.slane %v2699, 1
        %v2701 = vadd.f32 %v2699, %v2700
        %v2702 = vrcp.pop %v2701
        %v2703 = vpack.c.bf16 %v2604, %v2602
        %v2704 = vpack.c.bf16 %v2608, %v2606
        %v2705 = vpack.c.bf16 %v2612, %v2610
        %v2706 = vpack.c.bf16 %v2616, %v2614
        %v2707 = vpack.c.bf16 %v2620, %v2618
        %v2708 = vpack.c.bf16 %v2624, %v2622
        %v2709 = vpack.c.bf16 %v2628, %v2626
        %v2710 = vpack.c.bf16 %v2632, %v2630
        %v2711 = vpack.c.bf16 %v2636, %v2634
        %v2712 = vpack.c.bf16 %v2640, %v2638
        %v2713 = vpack.c.bf16 %v2644, %v2642
        %v2714 = vpack.c.bf16 %v2648, %v2646
        %v2715 = vpack.c.bf16 %v2652, %v2650
        %v2716 = vpack.c.bf16 %v2656, %v2654
        %v2717 = vpack.c.bf16 %v2660, %v2658
        %v2718 = vpack.c.bf16 %v2664, %v2662
        %2719 = vmatprep.subr.bf16.mxu0 0
        %2720 = vmatpush1.bf16.msra.mxu0 %v2710
        %2721 = vmatprep.subr.bf16.mxu0 0
        %2722 = vmatpush1.bf16.msra.mxu0 %v2709
        %2723 = vmatprep.subr.bf16.mxu0 0
        %2724 = vmatpush1.bf16.msra.mxu0 %v2708
        %2725 = vmatprep.subr.bf16.mxu0 0
        %2726 = vmatpush1.bf16.msra.mxu0 %v2707
        %2727 = vmatprep.subr.bf16.mxu0 0
        %2728 = vmatpush1.bf16.msra.mxu0 %v2706
        %2729 = vmatprep.subr.bf16.mxu0 0
        %2730 = vmatpush1.bf16.msra.mxu0 %v2705
        %2731 = vmatprep.subr.bf16.mxu0 0
        %2732 = vmatpush1.bf16.msra.mxu0 %v2704
        %2733 = vmatprep.subr.bf16.mxu0 0
        %2734 = vmatpush1.bf16.msra.mxu0 %v2703
        %2735 = vmatprep.subr.bf16.mxu0 0
        %2736 = vmatpush2.bf16.msra.mxu0 %v2718
        %2737 = vmatprep.subr.bf16.mxu0 0
        %2738 = vmatpush2.bf16.msra.mxu0 %v2717
        %2739 = vmatprep.subr.bf16.mxu0 0
        %2740 = vmatpush2.bf16.msra.mxu0 %v2716
        %2741 = vmatprep.subr.bf16.mxu0 0
        %2742 = vmatpush2.bf16.msra.mxu0 %v2715
        %2743 = vmatprep.subr.bf16.mxu0 0
        %2744 = vmatpush2.bf16.msra.mxu0 %v2714
        %2745 = vmatprep.subr.bf16.mxu0 0
        %2746 = vmatpush2.bf16.msra.mxu0 %v2713
        %2747 = vmatprep.subr.bf16.mxu0 0
        %2748 = vmatpush2.bf16.msra.mxu0 %v2712
        %2749 = vmatprep.subr.bf16.mxu0 0
        %2750 = vmatpush2.bf16.msra.mxu0 %v2711
        %2751 = vmatprep.mubr.bf16.mxu0 %v1724
        %2752 = vmatmul.mubr.bf16.gmra.mxu0 %v1723
        %v2753 = vpop.f32.mrf.mxu0
        %v2754 = vadd.f32 0.0, %v2753
        %v2755 = vpop.f32.mrf.mxu0
        %v2756 = vpop.f32.mrf.mxu0
        %v2757 = vpop.f32.mrf.mxu0
        %2758 = vdwg.mxu0
        %v2759 = vmul.f32 %v2754, %v2702
        %2760 = vst [vmem:[#allocation2 + $0x18] sm:$0xff] %v2759
        %v2761 = vpack.c.bf16 %v644, %v644
        %v2762 = vpack.c.bf16 %v646, %v646
        %2763 = vrot.lane.b32.xlu0 %v668, 112
        %v2764 = vpop.permute.xlu0 %2763
        %2765 = vrot.lane.b32.xlu0 %v669, 112
        %v2766 = vpop.permute.xlu0 %2765
        %2767 = vrot.lane.b32.xlu0 %v670, 112
        %v2768 = vpop.permute.xlu0 %2767
        %2769 = vrot.lane.b32.xlu0 %v671, 112
        %v2770 = vpop.permute.xlu0 %2769
        %2771 = vrot.lane.b32.xlu0 %v672, 112
        %v2772 = vpop.permute.xlu0 %2771
        %2773 = vrot.lane.b32.xlu0 %v673, 112
        %v2774 = vpop.permute.xlu0 %2773
        %2775 = vrot.lane.b32.xlu0 %v674, 112
        %v2776 = vpop.permute.xlu0 %2775
        %2777 = vrot.lane.b32.xlu0 %v675, 112
        %v2778 = vpop.permute.xlu0 %2777
        %2779 = vrot.lane.b32.xlu0 %v676, 112
        %v2780 = vpop.permute.xlu0 %2779
        %2781 = vrot.lane.b32.xlu0 %v677, 112
        %v2782 = vpop.permute.xlu0 %2781
        %2783 = vrot.lane.b32.xlu0 %v678, 112
        %v2784 = vpop.permute.xlu0 %2783
        %2785 = vrot.lane.b32.xlu0 %v679, 112
        %v2786 = vpop.permute.xlu0 %2785
        %2787 = vrot.lane.b32.xlu0 %v680, 112
        %v2788 = vpop.permute.xlu0 %2787
        %2789 = vrot.lane.b32.xlu0 %v681, 112
        %v2790 = vpop.permute.xlu0 %2789
        %2791 = vrot.lane.b32.xlu0 %v682, 112
        %v2792 = vpop.permute.xlu0 %2791
        %2793 = vrot.lane.b32.xlu0 %v683, 112
        %v2794 = vpop.permute.xlu0 %2793
        %2795 = vrot.lane.b32.xlu0 %v700, 112
        %v2796 = vpop.permute.xlu0 %2795
        %2797 = vrot.lane.b32.xlu0 %v701, 112
        %v2798 = vpop.permute.xlu0 %2797
        %2799 = vrot.lane.b32.xlu0 %v702, 112
        %v2800 = vpop.permute.xlu0 %2799
        %2801 = vrot.lane.b32.xlu0 %v703, 112
        %v2802 = vpop.permute.xlu0 %2801
        %2803 = vrot.lane.b32.xlu0 %v704, 112
        %v2804 = vpop.permute.xlu0 %2803
        %2805 = vrot.lane.b32.xlu0 %v705, 112
        %v2806 = vpop.permute.xlu0 %2805
        %2807 = vrot.lane.b32.xlu0 %v706, 112
        %v2808 = vpop.permute.xlu0 %2807
        %2809 = vrot.lane.b32.xlu0 %v707, 112
        %v2810 = vpop.permute.xlu0 %2809
        %2811 = vrot.lane.b32.xlu0 %v708, 112
        %v2812 = vpop.permute.xlu0 %2811
        %2813 = vrot.lane.b32.xlu0 %v709, 112
        %v2814 = vpop.permute.xlu0 %2813
        %2815 = vrot.lane.b32.xlu0 %v710, 112
        %v2816 = vpop.permute.xlu0 %2815
        %2817 = vrot.lane.b32.xlu0 %v711, 112
        %v2818 = vpop.permute.xlu0 %2817
        %2819 = vrot.lane.b32.xlu0 %v712, 112
        %v2820 = vpop.permute.xlu0 %2819
        %2821 = vrot.lane.b32.xlu0 %v713, 112
        %v2822 = vpop.permute.xlu0 %2821
        %2823 = vrot.lane.b32.xlu0 %v714, 112
        %v2824 = vpop.permute.xlu0 %2823
        %2825 = vrot.lane.b32.xlu0 %v715, 112
        %v2826 = vpop.permute.xlu0 %2825
        %v2827 = vsel %vm718, %v2764, 0
        %v2829 = vsel %vm718, %v2766, 0
        %v2831 = vsel %vm718, %v2768, 0
        %v2833 = vsel %vm718, %v2770, 0
        %v2835 = vsel %vm718, %v2772, 0
        %v2837 = vsel %vm718, %v2774, 0
        %v2839 = vsel %vm718, %v2776, 0
        %v2841 = vsel %vm718, %v2778, 0
        %v2843 = vsel %vm718, %v2780, 0
        %v2845 = vsel %vm718, %v2782, 0
        %v2847 = vsel %vm718, %v2784, 0
        %v2849 = vsel %vm718, %v2786, 0
        %v2851 = vsel %vm718, %v2788, 0
        %v2853 = vsel %vm718, %v2790, 0
        %v2855 = vsel %vm718, %v2792, 0
        %v2857 = vsel %vm718, %v2794, 0
        %v2859 = vsel %vm718, %v2796, 0
        %v2861 = vsel %vm718, %v2798, 0
        %v2863 = vsel %vm718, %v2800, 0
        %v2865 = vsel %vm718, %v2802, 0
        %v2867 = vsel %vm718, %v2804, 0
        %v2869 = vsel %vm718, %v2806, 0
        %v2871 = vsel %vm718, %v2808, 0
        %v2873 = vsel %vm718, %v2810, 0
        %v2875 = vsel %vm718, %v2812, 0
        %v2877 = vsel %vm718, %v2814, 0
        %v2879 = vsel %vm718, %v2816, 0
        %v2881 = vsel %vm718, %v2818, 0
        %v2883 = vsel %vm718, %v2820, 0
        %v2885 = vsel %vm718, %v2822, 0
        %v2887 = vsel %vm718, %v2824, 0
        %v2889 = vsel %vm718, %v2826, 0
        %2891 = vmatprep.subr.mxu0 0.0
        %2892 = vmatpush1.msra.mxu0 0.0
        %2893 = vmatprep.subr.mxu0 0.0
        %2894 = vmatpush1.msra.mxu0 0.0
        %2895 = vmatprep.subr.mxu0 0.0
        %2896 = vmatpush1.msra.mxu0 0.0
        %2897 = vmatprep.subr.mxu0 0.0
        %2898 = vmatpush1.msra.mxu0 0.0
        %2899 = vmatprep.subr.mxu0 0.0
        %2900 = vmatpush1.msra.mxu0 0.0
        %2901 = vmatprep.subr.mxu0 0.0
        %2902 = vmatpush1.msra.mxu0 0.0
        %2903 = vmatprep.subr.mxu0 0.0
        %2904 = vmatpush1.msra.mxu0 0.0
        %2905 = vmatprep.subr.mxu0 0.0
        %2906 = vmatpush1.msra.mxu0 0.0
        %2907 = vmatprep.subr.mxu0 0.0
        %2908 = vmatpush1.msra.mxu0 0.0
        %2909 = vmatprep.subr.mxu0 0.0
        %2910 = vmatpush1.msra.mxu0 0.0
        %2911 = vmatprep.subr.mxu0 0.0
        %2912 = vmatpush1.msra.mxu0 0.0
        %2913 = vmatprep.subr.mxu0 0.0
        %2914 = vmatpush1.msra.mxu0 0.0
        %2915 = vmatprep.subr.mxu0 0.0
        %2916 = vmatpush1.msra.mxu0 0.0
        %2917 = vmatprep.subr.mxu0 0.0
        %2918 = vmatpush1.msra.mxu0 0.0
        %2919 = vmatprep.subr.mxu0 0.0
        %2920 = vmatpush1.msra.mxu0 0.0
        %2921 = vmatprep.subr.mxu0 0.0
        %2922 = vmatpush1.msra.mxu0 %v604
        %2923 = vmatprep.subr.mxu0 0.0
        %2924 = vmatpush2.msra.mxu0 0.0
        %2925 = vmatprep.subr.mxu0 0.0
        %2926 = vmatpush2.msra.mxu0 0.0
        %2927 = vmatprep.subr.mxu0 0.0
        %2928 = vmatpush2.msra.mxu0 0.0
        %2929 = vmatprep.subr.mxu0 0.0
        %2930 = vmatpush2.msra.mxu0 0.0
        %2931 = vmatprep.subr.mxu0 0.0
        %2932 = vmatpush2.msra.mxu0 0.0
        %2933 = vmatprep.subr.mxu0 0.0
        %2934 = vmatpush2.msra.mxu0 0.0
        %2935 = vmatprep.subr.mxu0 0.0
        %2936 = vmatpush2.msra.mxu0 0.0
        %2937 = vmatprep.subr.mxu0 0.0
        %2938 = vmatpush2.msra.mxu0 0.0
        %2939 = vmatprep.subr.mxu0 0.0
        %2940 = vmatpush2.msra.mxu0 0.0
        %2941 = vmatprep.subr.mxu0 0.0
        %2942 = vmatpush2.msra.mxu0 0.0
        %2943 = vmatprep.subr.mxu0 0.0
        %2944 = vmatpush2.msra.mxu0 0.0
        %2945 = vmatprep.subr.mxu0 0.0
        %2946 = vmatpush2.msra.mxu0 0.0
        %2947 = vmatprep.subr.mxu0 0.0
        %2948 = vmatpush2.msra.mxu0 0.0
        %2949 = vmatprep.subr.mxu0 0.0
        %2950 = vmatpush2.msra.mxu0 0.0
        %2951 = vmatprep.subr.mxu0 0.0
        %2952 = vmatpush2.msra.mxu0 0.0
        %2953 = vmatprep.subr.mxu0 0.0
        %2954 = vmatpush2.msra.mxu0 0.0
        %2955 = vmatprep.mubr.f32.mxu0 0.0
        %2956 = vmatmul.mubr.f32.gmra.mxu0 %v2827
        %v2957 = vpop.f32.mrf.mxu0
        %v2958 = vadd.f32 0.0, %v2957
        %v2959 = vpop.f32.mrf.mxu0
        %2960 = vmatprep.mubr.f32.mxu0 0.0
        %2961 = vmatmul.mubr.f32.gmra.mxu0 %v2829
        %v2962 = vpop.f32.mrf.mxu0
        %v2963 = vadd.f32 0.0, %v2962
        %v2964 = vpop.f32.mrf.mxu0
        %2965 = vmatprep.mubr.f32.mxu0 0.0
        %2966 = vmatmul.mubr.f32.gmra.mxu0 %v2831
        %v2967 = vpop.f32.mrf.mxu0
        %v2968 = vadd.f32 0.0, %v2967
        %v2969 = vpop.f32.mrf.mxu0
        %2970 = vmatprep.mubr.f32.mxu0 0.0
        %2971 = vmatmul.mubr.f32.gmra.mxu0 %v2833
        %v2972 = vpop.f32.mrf.mxu0
        %v2973 = vadd.f32 0.0, %v2972
        %v2974 = vpop.f32.mrf.mxu0
        %2975 = vmatprep.mubr.f32.mxu0 0.0
        %2976 = vmatmul.mubr.f32.gmra.mxu0 %v2835
        %v2977 = vpop.f32.mrf.mxu0
        %v2978 = vadd.f32 0.0, %v2977
        %v2979 = vpop.f32.mrf.mxu0
        %2980 = vmatprep.mubr.f32.mxu0 0.0
        %2981 = vmatmul.mubr.f32.gmra.mxu0 %v2837
        %v2982 = vpop.f32.mrf.mxu0
        %v2983 = vadd.f32 0.0, %v2982
        %v2984 = vpop.f32.mrf.mxu0
        %2985 = vmatprep.mubr.f32.mxu0 0.0
        %2986 = vmatmul.mubr.f32.gmra.mxu0 %v2839
        %v2987 = vpop.f32.mrf.mxu0
        %v2988 = vadd.f32 0.0, %v2987
        %v2989 = vpop.f32.mrf.mxu0
        %2990 = vmatprep.mubr.f32.mxu0 0.0
        %2991 = vmatmul.mubr.f32.gmra.mxu0 %v2841
        %v2992 = vpop.f32.mrf.mxu0
        %v2993 = vadd.f32 0.0, %v2992
        %v2994 = vpop.f32.mrf.mxu0
        %2995 = vmatprep.mubr.f32.mxu0 0.0
        %2996 = vmatmul.mubr.f32.gmra.mxu0 %v2843
        %v2997 = vpop.f32.mrf.mxu0
        %v2998 = vadd.f32 0.0, %v2997
        %v2999 = vpop.f32.mrf.mxu0
        %3000 = vmatprep.mubr.f32.mxu0 0.0
        %3001 = vmatmul.mubr.f32.gmra.mxu0 %v2845
        %v3002 = vpop.f32.mrf.mxu0
        %v3003 = vadd.f32 0.0, %v3002
        %v3004 = vpop.f32.mrf.mxu0
        %3005 = vmatprep.mubr.f32.mxu0 0.0
        %3006 = vmatmul.mubr.f32.gmra.mxu0 %v2847
        %v3007 = vpop.f32.mrf.mxu0
        %v3008 = vadd.f32 0.0, %v3007
        %v3009 = vpop.f32.mrf.mxu0
        %3010 = vmatprep.mubr.f32.mxu0 0.0
        %3011 = vmatmul.mubr.f32.gmra.mxu0 %v2849
        %v3012 = vpop.f32.mrf.mxu0
        %v3013 = vadd.f32 0.0, %v3012
        %v3014 = vpop.f32.mrf.mxu0
        %3015 = vmatprep.mubr.f32.mxu0 0.0
        %3016 = vmatmul.mubr.f32.gmra.mxu0 %v2851
        %v3017 = vpop.f32.mrf.mxu0
        %v3018 = vadd.f32 0.0, %v3017
        %v3019 = vpop.f32.mrf.mxu0
        %3020 = vmatprep.mubr.f32.mxu0 0.0
        %3021 = vmatmul.mubr.f32.gmra.mxu0 %v2853
        %v3022 = vpop.f32.mrf.mxu0
        %v3023 = vadd.f32 0.0, %v3022
        %v3024 = vpop.f32.mrf.mxu0
        %3025 = vmatprep.mubr.f32.mxu0 0.0
        %3026 = vmatmul.mubr.f32.gmra.mxu0 %v2855
        %v3027 = vpop.f32.mrf.mxu0
        %v3028 = vadd.f32 0.0, %v3027
        %v3029 = vpop.f32.mrf.mxu0
        %3030 = vmatprep.mubr.f32.mxu0 0.0
        %3031 = vmatmul.mubr.f32.gmra.mxu0 %v2857
        %v3032 = vpop.f32.mrf.mxu0
        %v3033 = vadd.f32 0.0, %v3032
        %v3034 = vpop.f32.mrf.mxu0
        %3035 = vmatprep.mubr.f32.mxu0 0.0
        %3036 = vmatmul.mubr.f32.gmra.mxu0 %v2859
        %v3037 = vpop.f32.mrf.mxu0
        %v3038 = vadd.f32 0.0, %v3037
        %v3039 = vpop.f32.mrf.mxu0
        %3040 = vmatprep.mubr.f32.mxu0 0.0
        %3041 = vmatmul.mubr.f32.gmra.mxu0 %v2861
        %v3042 = vpop.f32.mrf.mxu0
        %v3043 = vadd.f32 0.0, %v3042
        %v3044 = vpop.f32.mrf.mxu0
        %3045 = vmatprep.mubr.f32.mxu0 0.0
        %3046 = vmatmul.mubr.f32.gmra.mxu0 %v2863
        %v3047 = vpop.f32.mrf.mxu0
        %v3048 = vadd.f32 0.0, %v3047
        %v3049 = vpop.f32.mrf.mxu0
        %3050 = vmatprep.mubr.f32.mxu0 0.0
        %3051 = vmatmul.mubr.f32.gmra.mxu0 %v2865
        %v3052 = vpop.f32.mrf.mxu0
        %v3053 = vadd.f32 0.0, %v3052
        %v3054 = vpop.f32.mrf.mxu0
        %3055 = vmatprep.mubr.f32.mxu0 0.0
        %3056 = vmatmul.mubr.f32.gmra.mxu0 %v2867
        %v3057 = vpop.f32.mrf.mxu0
        %v3058 = vadd.f32 0.0, %v3057
        %v3059 = vpop.f32.mrf.mxu0
        %3060 = vmatprep.mubr.f32.mxu0 0.0
        %3061 = vmatmul.mubr.f32.gmra.mxu0 %v2869
        %v3062 = vpop.f32.mrf.mxu0
        %v3063 = vadd.f32 0.0, %v3062
        %v3064 = vpop.f32.mrf.mxu0
        %3065 = vmatprep.mubr.f32.mxu0 0.0
        %3066 = vmatmul.mubr.f32.gmra.mxu0 %v2871
        %v3067 = vpop.f32.mrf.mxu0
        %v3068 = vadd.f32 0.0, %v3067
        %v3069 = vpop.f32.mrf.mxu0
        %3070 = vmatprep.mubr.f32.mxu0 0.0
        %3071 = vmatmul.mubr.f32.gmra.mxu0 %v2873
        %v3072 = vpop.f32.mrf.mxu0
        %v3073 = vadd.f32 0.0, %v3072
        %v3074 = vpop.f32.mrf.mxu0
        %3075 = vmatprep.mubr.f32.mxu0 0.0
        %3076 = vmatmul.mubr.f32.gmra.mxu0 %v2875
        %v3077 = vpop.f32.mrf.mxu0
        %v3078 = vadd.f32 0.0, %v3077
        %v3079 = vpop.f32.mrf.mxu0
        %3080 = vmatprep.mubr.f32.mxu0 0.0
        %3081 = vmatmul.mubr.f32.gmra.mxu0 %v2877
        %v3082 = vpop.f32.mrf.mxu0
        %v3083 = vadd.f32 0.0, %v3082
        %v3084 = vpop.f32.mrf.mxu0
        %3085 = vmatprep.mubr.f32.mxu0 0.0
        %3086 = vmatmul.mubr.f32.gmra.mxu0 %v2879
        %v3087 = vpop.f32.mrf.mxu0
        %v3088 = vadd.f32 0.0, %v3087
        %v3089 = vpop.f32.mrf.mxu0
        %3090 = vmatprep.mubr.f32.mxu0 0.0
        %3091 = vmatmul.mubr.f32.gmra.mxu0 %v2881
        %v3092 = vpop.f32.mrf.mxu0
        %v3093 = vadd.f32 0.0, %v3092
        %v3094 = vpop.f32.mrf.mxu0
        %3095 = vmatprep.mubr.f32.mxu0 0.0
        %3096 = vmatmul.mubr.f32.gmra.mxu0 %v2883
        %v3097 = vpop.f32.mrf.mxu0
        %v3098 = vadd.f32 0.0, %v3097
        %v3099 = vpop.f32.mrf.mxu0
        %3100 = vmatprep.mubr.f32.mxu0 0.0
        %3101 = vmatmul.mubr.f32.gmra.mxu0 %v2885
        %v3102 = vpop.f32.mrf.mxu0
        %v3103 = vadd.f32 0.0, %v3102
        %v3104 = vpop.f32.mrf.mxu0
        %3105 = vmatprep.mubr.f32.mxu0 0.0
        %3106 = vmatmul.mubr.f32.gmra.mxu0 %v2887
        %v3107 = vpop.f32.mrf.mxu0
        %v3108 = vadd.f32 0.0, %v3107
        %v3109 = vpop.f32.mrf.mxu0
        %3110 = vmatprep.mubr.f32.mxu0 0.0
        %3111 = vmatmul.mubr.f32.gmra.mxu0 %v2889
        %v3112 = vpop.f32.mrf.mxu0
        %v3113 = vadd.f32 0.0, %v3112
        %v3114 = vpop.f32.mrf.mxu0
        %3115 = vdwg.mxu0
        %v3116 = vmax.f32 %v2958, %v2978
        %v3117 = vmax.f32 %v2963, %v2983
        %v3118 = vmax.f32 %v2968, %v2988
        %v3119 = vmax.f32 %v2973, %v2993
        %v3120 = vmax.f32 %v3116, %v2998
        %v3121 = vmax.f32 %v3117, %v3003
        %v3122 = vmax.f32 %v3118, %v3008
        %v3123 = vmax.f32 %v3119, %v3013
        %v3124 = vmax.f32 %v3120, %v3018
        %v3125 = vmax.f32 %v3121, %v3023
        %v3126 = vmax.f32 %v3122, %v3028
        %v3127 = vmax.f32 %v3123, %v3033
        %v3128 = vmax.f32 %v3124, %v3038
        %v3129 = vmax.f32 %v3125, %v3043
        %v3130 = vmax.f32 %v3126, %v3048
        %v3131 = vmax.f32 %v3127, %v3053
        %v3132 = vmax.f32 %v3128, %v3058
        %v3133 = vmax.f32 %v3129, %v3063
        %v3134 = vmax.f32 %v3130, %v3068
        %v3135 = vmax.f32 %v3131, %v3073
        %v3136 = vmax.f32 %v3132, %v3078
        %v3137 = vmax.f32 %v3133, %v3083
        %v3138 = vmax.f32 %v3134, %v3088
        %v3139 = vmax.f32 %v3135, %v3093
        %v3140 = vmax.f32 %v3136, %v3098
        %v3141 = vmax.f32 %v3137, %v3103
        %v3142 = vmax.f32 %v3138, %v3108
        %v3143 = vmax.f32 %v3139, %v3113
        %v3144 = vmax.f32 %v3140, %v3141
        %v3145 = vmax.f32 %v3142, %v3143
        %v3146 = vmax.f32 %v3144, %v3145
        %v3147 = vrot.slane %v3146, 4
        %v3148 = vmax.f32 %v3146, %v3147
        %v3149 = vrot.slane %v3148, 2
        %v3150 = vmax.f32 %v3148, %v3149
        %v3151 = vrot.slane %v3150, 1
        %v3152 = vmax.f32 %v3150, %v3151
        %v3153 = vsub.f32 %v2958, %v3152
        %v3154 = vsub.f32 %v2963, %v3152
        %v3155 = vsub.f32 %v2968, %v3152
        %v3156 = vsub.f32 %v2973, %v3152
        %v3157 = vsub.f32 %v2978, %v3152
        %v3158 = vsub.f32 %v2983, %v3152
        %v3159 = vsub.f32 %v2988, %v3152
        %v3160 = vsub.f32 %v2993, %v3152
        %v3161 = vsub.f32 %v2998, %v3152
        %v3162 = vsub.f32 %v3003, %v3152
        %v3163 = vsub.f32 %v3008, %v3152
        %v3164 = vsub.f32 %v3013, %v3152
        %v3165 = vsub.f32 %v3018, %v3152
        %v3166 = vsub.f32 %v3023, %v3152
        %v3167 = vsub.f32 %v3028, %v3152
        %v3168 = vsub.f32 %v3033, %v3152
        %v3169 = vsub.f32 %v3038, %v3152
        %v3170 = vsub.f32 %v3043, %v3152
        %v3171 = vsub.f32 %v3048, %v3152
        %v3172 = vsub.f32 %v3053, %v3152
        %v3173 = vsub.f32 %v3058, %v3152
        %v3174 = vsub.f32 %v3063, %v3152
        %v3175 = vsub.f32 %v3068, %v3152
        %v3176 = vsub.f32 %v3073, %v3152
        %v3177 = vsub.f32 %v3078, %v3152
        %v3178 = vsub.f32 %v3083, %v3152
        %v3179 = vsub.f32 %v3088, %v3152
        %v3180 = vsub.f32 %v3093, %v3152
        %v3181 = vsub.f32 %v3098, %v3152
        %v3182 = vsub.f32 %v3103, %v3152
        %v3183 = vsub.f32 %v3108, %v3152
        %v3184 = vsub.f32 %v3113, %v3152
        %v3185 = vmul.f32 %v3153, 1.442695
        %v3186 = vpow.pop %v3185
        %v3187 = vmul.f32 %v3154, 1.442695
        %v3188 = vpow.pop %v3187
        %v3189 = vmul.f32 %v3155, 1.442695
        %v3190 = vpow.pop %v3189
        %v3191 = vmul.f32 %v3156, 1.442695
        %v3192 = vpow.pop %v3191
        %v3193 = vmul.f32 %v3157, 1.442695
        %v3194 = vpow.pop %v3193
        %v3195 = vmul.f32 %v3158, 1.442695
        %v3196 = vpow.pop %v3195
        %v3197 = vmul.f32 %v3159, 1.442695
        %v3198 = vpow.pop %v3197
        %v3199 = vmul.f32 %v3160, 1.442695
        %v3200 = vpow.pop %v3199
        %v3201 = vmul.f32 %v3161, 1.442695
        %v3202 = vpow.pop %v3201
        %v3203 = vmul.f32 %v3162, 1.442695
        %v3204 = vpow.pop %v3203
        %v3205 = vmul.f32 %v3163, 1.442695
        %v3206 = vpow.pop %v3205
        %v3207 = vmul.f32 %v3164, 1.442695
        %v3208 = vpow.pop %v3207
        %v3209 = vmul.f32 %v3165, 1.442695
        %v3210 = vpow.pop %v3209
        %v3211 = vmul.f32 %v3166, 1.442695
        %v3212 = vpow.pop %v3211
        %v3213 = vmul.f32 %v3167, 1.442695
        %v3214 = vpow.pop %v3213
        %v3215 = vmul.f32 %v3168, 1.442695
        %v3216 = vpow.pop %v3215
        %v3217 = vmul.f32 %v3169, 1.442695
        %v3218 = vpow.pop %v3217
        %v3219 = vmul.f32 %v3170, 1.442695
        %v3220 = vpow.pop %v3219
        %v3221 = vmul.f32 %v3171, 1.442695
        %v3222 = vpow.pop %v3221
        %v3223 = vmul.f32 %v3172, 1.442695
        %v3224 = vpow.pop %v3223
        %v3225 = vmul.f32 %v3173, 1.442695
        %v3226 = vpow.pop %v3225
        %v3227 = vmul.f32 %v3174, 1.442695
        %v3228 = vpow.pop %v3227
        %v3229 = vmul.f32 %v3175, 1.442695
        %v3230 = vpow.pop %v3229
        %v3231 = vmul.f32 %v3176, 1.442695
        %v3232 = vpow.pop %v3231
        %v3233 = vmul.f32 %v3177, 1.442695
        %v3234 = vpow.pop %v3233
        %v3235 = vmul.f32 %v3178, 1.442695
        %v3236 = vpow.pop %v3235
        %v3237 = vmul.f32 %v3179, 1.442695
        %v3238 = vpow.pop %v3237
        %v3239 = vmul.f32 %v3180, 1.442695
        %v3240 = vpow.pop %v3239
        %v3241 = vmul.f32 %v3181, 1.442695
        %v3242 = vpow.pop %v3241
        %v3243 = vmul.f32 %v3182, 1.442695
        %v3244 = vpow.pop %v3243
        %v3245 = vmul.f32 %v3183, 1.442695
        %v3246 = vpow.pop %v3245
        %v3247 = vmul.f32 %v3184, 1.442695
        %v3248 = vpow.pop %v3247
        %v3249 = vadd.f32 %v3186, %v3188
        %v3250 = vadd.f32 %v3249, %v3190
        %v3251 = vadd.f32 %v3250, %v3192
        %v3252 = vadd.f32 %v3251, %v3194
        %v3253 = vadd.f32 %v3252, %v3196
        %v3254 = vadd.f32 %v3253, %v3198
        %v3255 = vadd.f32 %v3254, %v3200
        %v3256 = vadd.f32 %v3255, %v3202
        %v3257 = vadd.f32 %v3256, %v3204
        %v3258 = vadd.f32 %v3257, %v3206
        %v3259 = vadd.f32 %v3258, %v3208
        %v3260 = vadd.f32 %v3259, %v3210
        %v3261 = vadd.f32 %v3260, %v3212
        %v3262 = vadd.f32 %v3261, %v3214
        %v3263 = vadd.f32 %v3262, %v3216
        %v3264 = vadd.f32 %v3263, %v3218
        %v3265 = vadd.f32 %v3264, %v3220
        %v3266 = vadd.f32 %v3265, %v3222
        %v3267 = vadd.f32 %v3266, %v3224
        %v3268 = vadd.f32 %v3267, %v3226
        %v3269 = vadd.f32 %v3268, %v3228
        %v3270 = vadd.f32 %v3269, %v3230
        %v3271 = vadd.f32 %v3270, %v3232
        %v3272 = vadd.f32 %v3271, %v3234
        %v3273 = vadd.f32 %v3272, %v3236
        %v3274 = vadd.f32 %v3273, %v3238
        %v3275 = vadd.f32 %v3274, %v3240
        %v3276 = vadd.f32 %v3275, %v3242
        %v3277 = vadd.f32 %v3276, %v3244
        %v3278 = vadd.f32 %v3277, %v3246
        %v3279 = vadd.f32 %v3278, %v3248
        %v3280 = vrot.slane %v3279, 4
        %v3281 = vadd.f32 %v3279, %v3280
        %v3282 = vrot.slane %v3281, 2
        %v3283 = vadd.f32 %v3281, %v3282
        %v3284 = vrot.slane %v3283, 1
        %v3285 = vadd.f32 %v3283, %v3284
        %v3286 = vrcp.pop %v3285
        %v3287 = vpack.c.bf16 %v3188, %v3186
        %v3288 = vpack.c.bf16 %v3192, %v3190
        %v3289 = vpack.c.bf16 %v3196, %v3194
        %v3290 = vpack.c.bf16 %v3200, %v3198
        %v3291 = vpack.c.bf16 %v3204, %v3202
        %v3292 = vpack.c.bf16 %v3208, %v3206
        %v3293 = vpack.c.bf16 %v3212, %v3210
        %v3294 = vpack.c.bf16 %v3216, %v3214
        %v3295 = vpack.c.bf16 %v3220, %v3218
        %v3296 = vpack.c.bf16 %v3224, %v3222
        %v3297 = vpack.c.bf16 %v3228, %v3226
        %v3298 = vpack.c.bf16 %v3232, %v3230
        %v3299 = vpack.c.bf16 %v3236, %v3234
        %v3300 = vpack.c.bf16 %v3240, %v3238
        %v3301 = vpack.c.bf16 %v3244, %v3242
        %v3302 = vpack.c.bf16 %v3248, %v3246
        %3303 = vmatprep.subr.bf16.mxu0 0
        %3304 = vmatpush1.bf16.msra.mxu0 %v3294
        %3305 = vmatprep.subr.bf16.mxu0 0
        %3306 = vmatpush1.bf16.msra.mxu0 %v3293
        %3307 = vmatprep.subr.bf16.mxu0 0
        %3308 = vmatpush1.bf16.msra.mxu0 %v3292
        %3309 = vmatprep.subr.bf16.mxu0 0
        %3310 = vmatpush1.bf16.msra.mxu0 %v3291
        %3311 = vmatprep.subr.bf16.mxu0 0
        %3312 = vmatpush1.bf16.msra.mxu0 %v3290
        %3313 = vmatprep.subr.bf16.mxu0 0
        %3314 = vmatpush1.bf16.msra.mxu0 %v3289
        %3315 = vmatprep.subr.bf16.mxu0 0
        %3316 = vmatpush1.bf16.msra.mxu0 %v3288
        %3317 = vmatprep.subr.bf16.mxu0 0
        %3318 = vmatpush1.bf16.msra.mxu0 %v3287
        %3319 = vmatprep.subr.bf16.mxu0 0
        %3320 = vmatpush2.bf16.msra.mxu0 %v3302
        %3321 = vmatprep.subr.bf16.mxu0 0
        %3322 = vmatpush2.bf16.msra.mxu0 %v3301
        %3323 = vmatprep.subr.bf16.mxu0 0
        %3324 = vmatpush2.bf16.msra.mxu0 %v3300
        %3325 = vmatprep.subr.bf16.mxu0 0
        %3326 = vmatpush2.bf16.msra.mxu0 %v3299
        %3327 = vmatprep.subr.bf16.mxu0 0
        %3328 = vmatpush2.bf16.msra.mxu0 %v3298
        %3329 = vmatprep.subr.bf16.mxu0 0
        %3330 = vmatpush2.bf16.msra.mxu0 %v3297
        %3331 = vmatprep.subr.bf16.mxu0 0
        %3332 = vmatpush2.bf16.msra.mxu0 %v3296
        %3333 = vmatprep.subr.bf16.mxu0 0
        %3334 = vmatpush2.bf16.msra.mxu0 %v3295
        %3335 = vmatprep.mubr.bf16.mxu0 %v2762
        %3336 = vmatmul.mubr.bf16.gmra.mxu0 %v2761
        %v3337 = vpop.f32.mrf.mxu0
        %v3338 = vadd.f32 0.0, %v3337
        %v3339 = vpop.f32.mrf.mxu0
        %v3340 = vpop.f32.mrf.mxu0
        %v3341 = vpop.f32.mrf.mxu0
        %3342 = vdwg.mxu0
        %v3343 = vmul.f32 %v3338, %v3286
        %3344 = vst [vmem:[#allocation2 + $0x20] sm:$0xff] %v3343
        %3345 = vmatprep.subr.mxu0 0.0
        %3346 = vmatpush1.msra.mxu0 0.0
        %3347 = vmatprep.subr.mxu0 0.0
        %3348 = vmatpush1.msra.mxu0 0.0
        %3349 = vmatprep.subr.mxu0 0.0
        %3350 = vmatpush1.msra.mxu0 0.0
        %3351 = vmatprep.subr.mxu0 0.0
        %3352 = vmatpush1.msra.mxu0 0.0
        %3353 = vmatprep.subr.mxu0 0.0
        %3354 = vmatpush1.msra.mxu0 0.0
        %3355 = vmatprep.subr.mxu0 0.0
        %3356 = vmatpush1.msra.mxu0 0.0
        %3357 = vmatprep.subr.mxu0 0.0
        %3358 = vmatpush1.msra.mxu0 0.0
        %3359 = vmatprep.subr.mxu0 0.0
        %3360 = vmatpush1.msra.mxu0 0.0
        %3361 = vmatprep.subr.mxu0 0.0
        %3362 = vmatpush1.msra.mxu0 0.0
        %3363 = vmatprep.subr.mxu0 0.0
        %3364 = vmatpush1.msra.mxu0 0.0
        %3365 = vmatprep.subr.mxu0 0.0
        %3366 = vmatpush1.msra.mxu0 0.0
        %3367 = vmatprep.subr.mxu0 0.0
        %3368 = vmatpush1.msra.mxu0 0.0
        %3369 = vmatprep.subr.mxu0 0.0
        %3370 = vmatpush1.msra.mxu0 0.0
        %3371 = vmatprep.subr.mxu0 0.0
        %3372 = vmatpush1.msra.mxu0 0.0
        %3373 = vmatprep.subr.mxu0 0.0
        %3374 = vmatpush1.msra.mxu0 0.0
        %3375 = vmatprep.subr.mxu0 0.0
        %3376 = vmatpush1.msra.mxu0 %v606
        %3377 = vmatprep.subr.mxu0 0.0
        %3378 = vmatpush2.msra.mxu0 0.0
        %3379 = vmatprep.subr.mxu0 0.0
        %3380 = vmatpush2.msra.mxu0 0.0
        %3381 = vmatprep.subr.mxu0 0.0
        %3382 = vmatpush2.msra.mxu0 0.0
        %3383 = vmatprep.subr.mxu0 0.0
        %3384 = vmatpush2.msra.mxu0 0.0
        %3385 = vmatprep.subr.mxu0 0.0
        %3386 = vmatpush2.msra.mxu0 0.0
        %3387 = vmatprep.subr.mxu0 0.0
        %3388 = vmatpush2.msra.mxu0 0.0
        %3389 = vmatprep.subr.mxu0 0.0
        %3390 = vmatpush2.msra.mxu0 0.0
        %3391 = vmatprep.subr.mxu0 0.0
        %3392 = vmatpush2.msra.mxu0 0.0
        %3393 = vmatprep.subr.mxu0 0.0
        %3394 = vmatpush2.msra.mxu0 0.0
        %3395 = vmatprep.subr.mxu0 0.0
        %3396 = vmatpush2.msra.mxu0 0.0
        %3397 = vmatprep.subr.mxu0 0.0
        %3398 = vmatpush2.msra.mxu0 0.0
        %3399 = vmatprep.subr.mxu0 0.0
        %3400 = vmatpush2.msra.mxu0 0.0
        %3401 = vmatprep.subr.mxu0 0.0
        %3402 = vmatpush2.msra.mxu0 0.0
        %3403 = vmatprep.subr.mxu0 0.0
        %3404 = vmatpush2.msra.mxu0 0.0
        %3405 = vmatprep.subr.mxu0 0.0
        %3406 = vmatpush2.msra.mxu0 0.0
        %3407 = vmatprep.subr.mxu0 0.0
        %3408 = vmatpush2.msra.mxu0 0.0
        %3409 = vmatprep.mubr.f32.mxu0 0.0
        %3410 = vmatmul.mubr.f32.gmra.mxu0 %v2827
        %v3411 = vpop.f32.mrf.mxu0
        %v3412 = vadd.f32 0.0, %v3411
        %v3413 = vpop.f32.mrf.mxu0
        %3414 = vmatprep.mubr.f32.mxu0 0.0
        %3415 = vmatmul.mubr.f32.gmra.mxu0 %v2829
        %v3416 = vpop.f32.mrf.mxu0
        %v3417 = vadd.f32 0.0, %v3416
        %v3418 = vpop.f32.mrf.mxu0
        %3419 = vmatprep.mubr.f32.mxu0 0.0
        %3420 = vmatmul.mubr.f32.gmra.mxu0 %v2831
        %v3421 = vpop.f32.mrf.mxu0
        %v3422 = vadd.f32 0.0, %v3421
        %v3423 = vpop.f32.mrf.mxu0
        %3424 = vmatprep.mubr.f32.mxu0 0.0
        %3425 = vmatmul.mubr.f32.gmra.mxu0 %v2833
        %v3426 = vpop.f32.mrf.mxu0
        %v3427 = vadd.f32 0.0, %v3426
        %v3428 = vpop.f32.mrf.mxu0
        %3429 = vmatprep.mubr.f32.mxu0 0.0
        %3430 = vmatmul.mubr.f32.gmra.mxu0 %v2835
        %v3431 = vpop.f32.mrf.mxu0
        %v3432 = vadd.f32 0.0, %v3431
        %v3433 = vpop.f32.mrf.mxu0
        %3434 = vmatprep.mubr.f32.mxu0 0.0
        %3435 = vmatmul.mubr.f32.gmra.mxu0 %v2837
        %v3436 = vpop.f32.mrf.mxu0
        %v3437 = vadd.f32 0.0, %v3436
        %v3438 = vpop.f32.mrf.mxu0
        %3439 = vmatprep.mubr.f32.mxu0 0.0
        %3440 = vmatmul.mubr.f32.gmra.mxu0 %v2839
        %v3441 = vpop.f32.mrf.mxu0
        %v3442 = vadd.f32 0.0, %v3441
        %v3443 = vpop.f32.mrf.mxu0
        %3444 = vmatprep.mubr.f32.mxu0 0.0
        %3445 = vmatmul.mubr.f32.gmra.mxu0 %v2841
        %v3446 = vpop.f32.mrf.mxu0
        %v3447 = vadd.f32 0.0, %v3446
        %v3448 = vpop.f32.mrf.mxu0
        %3449 = vmatprep.mubr.f32.mxu0 0.0
        %3450 = vmatmul.mubr.f32.gmra.mxu0 %v2843
        %v3451 = vpop.f32.mrf.mxu0
        %v3452 = vadd.f32 0.0, %v3451
        %v3453 = vpop.f32.mrf.mxu0
        %3454 = vmatprep.mubr.f32.mxu0 0.0
        %3455 = vmatmul.mubr.f32.gmra.mxu0 %v2845
        %v3456 = vpop.f32.mrf.mxu0
        %v3457 = vadd.f32 0.0, %v3456
        %v3458 = vpop.f32.mrf.mxu0
        %3459 = vmatprep.mubr.f32.mxu0 0.0
        %3460 = vmatmul.mubr.f32.gmra.mxu0 %v2847
        %v3461 = vpop.f32.mrf.mxu0
        %v3462 = vadd.f32 0.0, %v3461
        %v3463 = vpop.f32.mrf.mxu0
        %3464 = vmatprep.mubr.f32.mxu0 0.0
        %3465 = vmatmul.mubr.f32.gmra.mxu0 %v2849
        %v3466 = vpop.f32.mrf.mxu0
        %v3467 = vadd.f32 0.0, %v3466
        %v3468 = vpop.f32.mrf.mxu0
        %3469 = vmatprep.mubr.f32.mxu0 0.0
        %3470 = vmatmul.mubr.f32.gmra.mxu0 %v2851
        %v3471 = vpop.f32.mrf.mxu0
        %v3472 = vadd.f32 0.0, %v3471
        %v3473 = vpop.f32.mrf.mxu0
        %3474 = vmatprep.mubr.f32.mxu0 0.0
        %3475 = vmatmul.mubr.f32.gmra.mxu0 %v2853
        %v3476 = vpop.f32.mrf.mxu0
        %v3477 = vadd.f32 0.0, %v3476
        %v3478 = vpop.f32.mrf.mxu0
        %3479 = vmatprep.mubr.f32.mxu0 0.0
        %3480 = vmatmul.mubr.f32.gmra.mxu0 %v2855
        %v3481 = vpop.f32.mrf.mxu0
        %v3482 = vadd.f32 0.0, %v3481
        %v3483 = vpop.f32.mrf.mxu0
        %3484 = vmatprep.mubr.f32.mxu0 0.0
        %3485 = vmatmul.mubr.f32.gmra.mxu0 %v2857
        %v3486 = vpop.f32.mrf.mxu0
        %v3487 = vadd.f32 0.0, %v3486
        %v3488 = vpop.f32.mrf.mxu0
        %3489 = vmatprep.mubr.f32.mxu0 0.0
        %3490 = vmatmul.mubr.f32.gmra.mxu0 %v2859
        %v3491 = vpop.f32.mrf.mxu0
        %v3492 = vadd.f32 0.0, %v3491
        %v3493 = vpop.f32.mrf.mxu0
        %3494 = vmatprep.mubr.f32.mxu0 0.0
        %3495 = vmatmul.mubr.f32.gmra.mxu0 %v2861
        %v3496 = vpop.f32.mrf.mxu0
        %v3497 = vadd.f32 0.0, %v3496
        %v3498 = vpop.f32.mrf.mxu0
        %3499 = vmatprep.mubr.f32.mxu0 0.0
        %3500 = vmatmul.mubr.f32.gmra.mxu0 %v2863
        %v3501 = vpop.f32.mrf.mxu0
        %v3502 = vadd.f32 0.0, %v3501
        %v3503 = vpop.f32.mrf.mxu0
        %3504 = vmatprep.mubr.f32.mxu0 0.0
        %3505 = vmatmul.mubr.f32.gmra.mxu0 %v2865
        %v3506 = vpop.f32.mrf.mxu0
        %v3507 = vadd.f32 0.0, %v3506
        %v3508 = vpop.f32.mrf.mxu0
        %3509 = vmatprep.mubr.f32.mxu0 0.0
        %3510 = vmatmul.mubr.f32.gmra.mxu0 %v2867
        %v3511 = vpop.f32.mrf.mxu0
        %v3512 = vadd.f32 0.0, %v3511
        %v3513 = vpop.f32.mrf.mxu0
        %3514 = vmatprep.mubr.f32.mxu0 0.0
        %3515 = vmatmul.mubr.f32.gmra.mxu0 %v2869
        %v3516 = vpop.f32.mrf.mxu0
        %v3517 = vadd.f32 0.0, %v3516
        %v3518 = vpop.f32.mrf.mxu0
        %3519 = vmatprep.mubr.f32.mxu0 0.0
        %3520 = vmatmul.mubr.f32.gmra.mxu0 %v2871
        %v3521 = vpop.f32.mrf.mxu0
        %v3522 = vadd.f32 0.0, %v3521
        %v3523 = vpop.f32.mrf.mxu0
        %3524 = vmatprep.mubr.f32.mxu0 0.0
        %3525 = vmatmul.mubr.f32.gmra.mxu0 %v2873
        %v3526 = vpop.f32.mrf.mxu0
        %v3527 = vadd.f32 0.0, %v3526
        %v3528 = vpop.f32.mrf.mxu0
        %3529 = vmatprep.mubr.f32.mxu0 0.0
        %3530 = vmatmul.mubr.f32.gmra.mxu0 %v2875
        %v3531 = vpop.f32.mrf.mxu0
        %v3532 = vadd.f32 0.0, %v3531
        %v3533 = vpop.f32.mrf.mxu0
        %3534 = vmatprep.mubr.f32.mxu0 0.0
        %3535 = vmatmul.mubr.f32.gmra.mxu0 %v2877
        %v3536 = vpop.f32.mrf.mxu0
        %v3537 = vadd.f32 0.0, %v3536
        %v3538 = vpop.f32.mrf.mxu0
        %3539 = vmatprep.mubr.f32.mxu0 0.0
        %3540 = vmatmul.mubr.f32.gmra.mxu0 %v2879
        %v3541 = vpop.f32.mrf.mxu0
        %v3542 = vadd.f32 0.0, %v3541
        %v3543 = vpop.f32.mrf.mxu0
        %3544 = vmatprep.mubr.f32.mxu0 0.0
        %3545 = vmatmul.mubr.f32.gmra.mxu0 %v2881
        %v3546 = vpop.f32.mrf.mxu0
        %v3547 = vadd.f32 0.0, %v3546
        %v3548 = vpop.f32.mrf.mxu0
        %3549 = vmatprep.mubr.f32.mxu0 0.0
        %3550 = vmatmul.mubr.f32.gmra.mxu0 %v2883
        %v3551 = vpop.f32.mrf.mxu0
        %v3552 = vadd.f32 0.0, %v3551
        %v3553 = vpop.f32.mrf.mxu0
        %3554 = vmatprep.mubr.f32.mxu0 0.0
        %3555 = vmatmul.mubr.f32.gmra.mxu0 %v2885
        %v3556 = vpop.f32.mrf.mxu0
        %v3557 = vadd.f32 0.0, %v3556
        %v3558 = vpop.f32.mrf.mxu0
        %3559 = vmatprep.mubr.f32.mxu0 0.0
        %3560 = vmatmul.mubr.f32.gmra.mxu0 %v2887
        %v3561 = vpop.f32.mrf.mxu0
        %v3562 = vadd.f32 0.0, %v3561
        %v3563 = vpop.f32.mrf.mxu0
        %3564 = vmatprep.mubr.f32.mxu0 0.0
        %3565 = vmatmul.mubr.f32.gmra.mxu0 %v2889
        %v3566 = vpop.f32.mrf.mxu0
        %v3567 = vadd.f32 0.0, %v3566
        %v3568 = vpop.f32.mrf.mxu0
        %3569 = vdwg.mxu0
        %v3570 = vmax.f32 %v3412, %v3432
        %v3571 = vmax.f32 %v3417, %v3437
        %v3572 = vmax.f32 %v3422, %v3442
        %v3573 = vmax.f32 %v3427, %v3447
        %v3574 = vmax.f32 %v3570, %v3452
        %v3575 = vmax.f32 %v3571, %v3457
        %v3576 = vmax.f32 %v3572, %v3462
        %v3577 = vmax.f32 %v3573, %v3467
        %v3578 = vmax.f32 %v3574, %v3472
        %v3579 = vmax.f32 %v3575, %v3477
        %v3580 = vmax.f32 %v3576, %v3482
        %v3581 = vmax.f32 %v3577, %v3487
        %v3582 = vmax.f32 %v3578, %v3492
        %v3583 = vmax.f32 %v3579, %v3497
        %v3584 = vmax.f32 %v3580, %v3502
        %v3585 = vmax.f32 %v3581, %v3507
        %v3586 = vmax.f32 %v3582, %v3512
        %v3587 = vmax.f32 %v3583, %v3517
        %v3588 = vmax.f32 %v3584, %v3522
        %v3589 = vmax.f32 %v3585, %v3527
        %v3590 = vmax.f32 %v3586, %v3532
        %v3591 = vmax.f32 %v3587, %v3537
        %v3592 = vmax.f32 %v3588, %v3542
        %v3593 = vmax.f32 %v3589, %v3547
        %v3594 = vmax.f32 %v3590, %v3552
        %v3595 = vmax.f32 %v3591, %v3557
        %v3596 = vmax.f32 %v3592, %v3562
        %v3597 = vmax.f32 %v3593, %v3567
        %v3598 = vmax.f32 %v3594, %v3595
        %v3599 = vmax.f32 %v3596, %v3597
        %v3600 = vmax.f32 %v3598, %v3599
        %v3601 = vrot.slane %v3600, 4
        %v3602 = vmax.f32 %v3600, %v3601
        %v3603 = vrot.slane %v3602, 2
        %v3604 = vmax.f32 %v3602, %v3603
        %v3605 = vrot.slane %v3604, 1
        %v3606 = vmax.f32 %v3604, %v3605
        %v3607 = vsub.f32 %v3412, %v3606
        %v3608 = vsub.f32 %v3417, %v3606
        %v3609 = vsub.f32 %v3422, %v3606
        %v3610 = vsub.f32 %v3427, %v3606
        %v3611 = vsub.f32 %v3432, %v3606
        %v3612 = vsub.f32 %v3437, %v3606
        %v3613 = vsub.f32 %v3442, %v3606
        %v3614 = vsub.f32 %v3447, %v3606
        %v3615 = vsub.f32 %v3452, %v3606
        %v3616 = vsub.f32 %v3457, %v3606
        %v3617 = vsub.f32 %v3462, %v3606
        %v3618 = vsub.f32 %v3467, %v3606
        %v3619 = vsub.f32 %v3472, %v3606
        %v3620 = vsub.f32 %v3477, %v3606
        %v3621 = vsub.f32 %v3482, %v3606
        %v3622 = vsub.f32 %v3487, %v3606
        %v3623 = vsub.f32 %v3492, %v3606
        %v3624 = vsub.f32 %v3497, %v3606
        %v3625 = vsub.f32 %v3502, %v3606
        %v3626 = vsub.f32 %v3507, %v3606
        %v3627 = vsub.f32 %v3512, %v3606
        %v3628 = vsub.f32 %v3517, %v3606
        %v3629 = vsub.f32 %v3522, %v3606
        %v3630 = vsub.f32 %v3527, %v3606
        %v3631 = vsub.f32 %v3532, %v3606
        %v3632 = vsub.f32 %v3537, %v3606
        %v3633 = vsub.f32 %v3542, %v3606
        %v3634 = vsub.f32 %v3547, %v3606
        %v3635 = vsub.f32 %v3552, %v3606
        %v3636 = vsub.f32 %v3557, %v3606
        %v3637 = vsub.f32 %v3562, %v3606
        %v3638 = vsub.f32 %v3567, %v3606
        %v3639 = vmul.f32 %v3607, 1.442695
        %v3640 = vpow.pop %v3639
        %v3641 = vmul.f32 %v3608, 1.442695
        %v3642 = vpow.pop %v3641
        %v3643 = vmul.f32 %v3609, 1.442695
        %v3644 = vpow.pop %v3643
        %v3645 = vmul.f32 %v3610, 1.442695
        %v3646 = vpow.pop %v3645
        %v3647 = vmul.f32 %v3611, 1.442695
        %v3648 = vpow.pop %v3647
        %v3649 = vmul.f32 %v3612, 1.442695
        %v3650 = vpow.pop %v3649
        %v3651 = vmul.f32 %v3613, 1.442695
        %v3652 = vpow.pop %v3651
        %v3653 = vmul.f32 %v3614, 1.442695
        %v3654 = vpow.pop %v3653
        %v3655 = vmul.f32 %v3615, 1.442695
        %v3656 = vpow.pop %v3655
        %v3657 = vmul.f32 %v3616, 1.442695
        %v3658 = vpow.pop %v3657
        %v3659 = vmul.f32 %v3617, 1.442695
        %v3660 = vpow.pop %v3659
        %v3661 = vmul.f32 %v3618, 1.442695
        %v3662 = vpow.pop %v3661
        %v3663 = vmul.f32 %v3619, 1.442695
        %v3664 = vpow.pop %v3663
        %v3665 = vmul.f32 %v3620, 1.442695
        %v3666 = vpow.pop %v3665
        %v3667 = vmul.f32 %v3621, 1.442695
        %v3668 = vpow.pop %v3667
        %v3669 = vmul.f32 %v3622, 1.442695
        %v3670 = vpow.pop %v3669
        %v3671 = vmul.f32 %v3623, 1.442695
        %v3672 = vpow.pop %v3671
        %v3673 = vmul.f32 %v3624, 1.442695
        %v3674 = vpow.pop %v3673
        %v3675 = vmul.f32 %v3625, 1.442695
        %v3676 = vpow.pop %v3675
        %v3677 = vmul.f32 %v3626, 1.442695
        %v3678 = vpow.pop %v3677
        %v3679 = vmul.f32 %v3627, 1.442695
        %v3680 = vpow.pop %v3679
        %v3681 = vmul.f32 %v3628, 1.442695
        %v3682 = vpow.pop %v3681
        %v3683 = vmul.f32 %v3629, 1.442695
        %v3684 = vpow.pop %v3683
        %v3685 = vmul.f32 %v3630, 1.442695
        %v3686 = vpow.pop %v3685
        %v3687 = vmul.f32 %v3631, 1.442695
        %v3688 = vpow.pop %v3687
        %v3689 = vmul.f32 %v3632, 1.442695
        %v3690 = vpow.pop %v3689
        %v3691 = vmul.f32 %v3633, 1.442695
        %v3692 = vpow.pop %v3691
        %v3693 = vmul.f32 %v3634, 1.442695
        %v3694 = vpow.pop %v3693
        %v3695 = vmul.f32 %v3635, 1.442695
        %v3696 = vpow.pop %v3695
        %v3697 = vmul.f32 %v3636, 1.442695
        %v3698 = vpow.pop %v3697
        %v3699 = vmul.f32 %v3637, 1.442695
        %v3700 = vpow.pop %v3699
        %v3701 = vmul.f32 %v3638, 1.442695
        %v3702 = vpow.pop %v3701
        %v3703 = vadd.f32 %v3640, %v3642
        %v3704 = vadd.f32 %v3703, %v3644
        %v3705 = vadd.f32 %v3704, %v3646
        %v3706 = vadd.f32 %v3705, %v3648
        %v3707 = vadd.f32 %v3706, %v3650
        %v3708 = vadd.f32 %v3707, %v3652
        %v3709 = vadd.f32 %v3708, %v3654
        %v3710 = vadd.f32 %v3709, %v3656
        %v3711 = vadd.f32 %v3710, %v3658
        %v3712 = vadd.f32 %v3711, %v3660
        %v3713 = vadd.f32 %v3712, %v3662
        %v3714 = vadd.f32 %v3713, %v3664
        %v3715 = vadd.f32 %v3714, %v3666
        %v3716 = vadd.f32 %v3715, %v3668
        %v3717 = vadd.f32 %v3716, %v3670
        %v3718 = vadd.f32 %v3717, %v3672
        %v3719 = vadd.f32 %v3718, %v3674
        %v3720 = vadd.f32 %v3719, %v3676
        %v3721 = vadd.f32 %v3720, %v3678
        %v3722 = vadd.f32 %v3721, %v3680
        %v3723 = vadd.f32 %v3722, %v3682
        %v3724 = vadd.f32 %v3723, %v3684
        %v3725 = vadd.f32 %v3724, %v3686
        %v3726 = vadd.f32 %v3725, %v3688
        %v3727 = vadd.f32 %v3726, %v3690
        %v3728 = vadd.f32 %v3727, %v3692
        %v3729 = vadd.f32 %v3728, %v3694
        %v3730 = vadd.f32 %v3729, %v3696
        %v3731 = vadd.f32 %v3730, %v3698
        %v3732 = vadd.f32 %v3731, %v3700
        %v3733 = vadd.f32 %v3732, %v3702
        %v3734 = vrot.slane %v3733, 4
        %v3735 = vadd.f32 %v3733, %v3734
        %v3736 = vrot.slane %v3735, 2
        %v3737 = vadd.f32 %v3735, %v3736
        %v3738 = vrot.slane %v3737, 1
        %v3739 = vadd.f32 %v3737, %v3738
        %v3740 = vrcp.pop %v3739
        %v3741 = vpack.c.bf16 %v3642, %v3640
        %v3742 = vpack.c.bf16 %v3646, %v3644
        %v3743 = vpack.c.bf16 %v3650, %v3648
        %v3744 = vpack.c.bf16 %v3654, %v3652
        %v3745 = vpack.c.bf16 %v3658, %v3656
        %v3746 = vpack.c.bf16 %v3662, %v3660
        %v3747 = vpack.c.bf16 %v3666, %v3664
        %v3748 = vpack.c.bf16 %v3670, %v3668
        %v3749 = vpack.c.bf16 %v3674, %v3672
        %v3750 = vpack.c.bf16 %v3678, %v3676
        %v3751 = vpack.c.bf16 %v3682, %v3680
        %v3752 = vpack.c.bf16 %v3686, %v3684
        %v3753 = vpack.c.bf16 %v3690, %v3688
        %v3754 = vpack.c.bf16 %v3694, %v3692
        %v3755 = vpack.c.bf16 %v3698, %v3696
        %v3756 = vpack.c.bf16 %v3702, %v3700
        %3757 = vmatprep.subr.bf16.mxu0 0
        %3758 = vmatpush1.bf16.msra.mxu0 %v3748
        %3759 = vmatprep.subr.bf16.mxu0 0
        %3760 = vmatpush1.bf16.msra.mxu0 %v3747
        %3761 = vmatprep.subr.bf16.mxu0 0
        %3762 = vmatpush1.bf16.msra.mxu0 %v3746
        %3763 = vmatprep.subr.bf16.mxu0 0
        %3764 = vmatpush1.bf16.msra.mxu0 %v3745
        %3765 = vmatprep.subr.bf16.mxu0 0
        %3766 = vmatpush1.bf16.msra.mxu0 %v3744
        %3767 = vmatprep.subr.bf16.mxu0 0
        %3768 = vmatpush1.bf16.msra.mxu0 %v3743
        %3769 = vmatprep.subr.bf16.mxu0 0
        %3770 = vmatpush1.bf16.msra.mxu0 %v3742
        %3771 = vmatprep.subr.bf16.mxu0 0
        %3772 = vmatpush1.bf16.msra.mxu0 %v3741
        %3773 = vmatprep.subr.bf16.mxu0 0
        %3774 = vmatpush2.bf16.msra.mxu0 %v3756
        %3775 = vmatprep.subr.bf16.mxu0 0
        %3776 = vmatpush2.bf16.msra.mxu0 %v3755
        %3777 = vmatprep.subr.bf16.mxu0 0
        %3778 = vmatpush2.bf16.msra.mxu0 %v3754
        %3779 = vmatprep.subr.bf16.mxu0 0
        %3780 = vmatpush2.bf16.msra.mxu0 %v3753
        %3781 = vmatprep.subr.bf16.mxu0 0
        %3782 = vmatpush2.bf16.msra.mxu0 %v3752
        %3783 = vmatprep.subr.bf16.mxu0 0
        %3784 = vmatpush2.bf16.msra.mxu0 %v3751
        %3785 = vmatprep.subr.bf16.mxu0 0
        %3786 = vmatpush2.bf16.msra.mxu0 %v3750
        %3787 = vmatprep.subr.bf16.mxu0 0
        %3788 = vmatpush2.bf16.msra.mxu0 %v3749
        %3789 = vmatprep.mubr.bf16.mxu0 %v2762
        %3790 = vmatmul.mubr.bf16.gmra.mxu0 %v2761
        %v3791 = vpop.f32.mrf.mxu0
        %v3792 = vadd.f32 0.0, %v3791
        %v3793 = vpop.f32.mrf.mxu0
        %v3794 = vpop.f32.mrf.mxu0
        %v3795 = vpop.f32.mrf.mxu0
        %3796 = vdwg.mxu0
        %v3797 = vmul.f32 %v3792, %v3740
        %3798 = vst [vmem:[#allocation2 + $0x28] sm:$0xff] %v3797
        %v3799 = vpack.c.bf16 %v648, %v648
        %v3800 = vpack.c.bf16 %v650, %v650
        %3801 = vrot.lane.b32.xlu0 %v668, 104
        %v3802 = vpop.permute.xlu0 %3801
        %3803 = vrot.lane.b32.xlu0 %v669, 104
        %v3804 = vpop.permute.xlu0 %3803
        %3805 = vrot.lane.b32.xlu0 %v670, 104
        %v3806 = vpop.permute.xlu0 %3805
        %3807 = vrot.lane.b32.xlu0 %v671, 104
        %v3808 = vpop.permute.xlu0 %3807
        %3809 = vrot.lane.b32.xlu0 %v672, 104
        %v3810 = vpop.permute.xlu0 %3809
        %3811 = vrot.lane.b32.xlu0 %v673, 104
        %v3812 = vpop.permute.xlu0 %3811
        %3813 = vrot.lane.b32.xlu0 %v674, 104
        %v3814 = vpop.permute.xlu0 %3813
        %3815 = vrot.lane.b32.xlu0 %v675, 104
        %v3816 = vpop.permute.xlu0 %3815
        %3817 = vrot.lane.b32.xlu0 %v676, 104
        %v3818 = vpop.permute.xlu0 %3817
        %3819 = vrot.lane.b32.xlu0 %v677, 104
        %v3820 = vpop.permute.xlu0 %3819
        %3821 = vrot.lane.b32.xlu0 %v678, 104
        %v3822 = vpop.permute.xlu0 %3821
        %3823 = vrot.lane.b32.xlu0 %v679, 104
        %v3824 = vpop.permute.xlu0 %3823
        %3825 = vrot.lane.b32.xlu0 %v680, 104
        %v3826 = vpop.permute.xlu0 %3825
        %3827 = vrot.lane.b32.xlu0 %v681, 104
        %v3828 = vpop.permute.xlu0 %3827
        %3829 = vrot.lane.b32.xlu0 %v682, 104
        %v3830 = vpop.permute.xlu0 %3829
        %3831 = vrot.lane.b32.xlu0 %v683, 104
        %v3832 = vpop.permute.xlu0 %3831
        %3833 = vrot.lane.b32.xlu0 %v700, 104
        %v3834 = vpop.permute.xlu0 %3833
        %3835 = vrot.lane.b32.xlu0 %v701, 104
        %v3836 = vpop.permute.xlu0 %3835
        %3837 = vrot.lane.b32.xlu0 %v702, 104
        %v3838 = vpop.permute.xlu0 %3837
        %3839 = vrot.lane.b32.xlu0 %v703, 104
        %v3840 = vpop.permute.xlu0 %3839
        %3841 = vrot.lane.b32.xlu0 %v704, 104
        %v3842 = vpop.permute.xlu0 %3841
        %3843 = vrot.lane.b32.xlu0 %v705, 104
        %v3844 = vpop.permute.xlu0 %3843
        %3845 = vrot.lane.b32.xlu0 %v706, 104
        %v3846 = vpop.permute.xlu0 %3845
        %3847 = vrot.lane.b32.xlu0 %v707, 104
        %v3848 = vpop.permute.xlu0 %3847
        %3849 = vrot.lane.b32.xlu0 %v708, 104
        %v3850 = vpop.permute.xlu0 %3849
        %3851 = vrot.lane.b32.xlu0 %v709, 104
        %v3852 = vpop.permute.xlu0 %3851
        %3853 = vrot.lane.b32.xlu0 %v710, 104
        %v3854 = vpop.permute.xlu0 %3853
        %3855 = vrot.lane.b32.xlu0 %v711, 104
        %v3856 = vpop.permute.xlu0 %3855
        %3857 = vrot.lane.b32.xlu0 %v712, 104
        %v3858 = vpop.permute.xlu0 %3857
        %3859 = vrot.lane.b32.xlu0 %v713, 104
        %v3860 = vpop.permute.xlu0 %3859
        %3861 = vrot.lane.b32.xlu0 %v714, 104
        %v3862 = vpop.permute.xlu0 %3861
        %3863 = vrot.lane.b32.xlu0 %v715, 104
        %v3864 = vpop.permute.xlu0 %3863
        %v3865 = vsel %vm718, %v3802, 0
        %v3867 = vsel %vm718, %v3804, 0
        %v3869 = vsel %vm718, %v3806, 0
        %v3871 = vsel %vm718, %v3808, 0
        %v3873 = vsel %vm718, %v3810, 0
        %v3875 = vsel %vm718, %v3812, 0
        %v3877 = vsel %vm718, %v3814, 0
        %v3879 = vsel %vm718, %v3816, 0
        %v3881 = vsel %vm718, %v3818, 0
        %v3883 = vsel %vm718, %v3820, 0
        %v3885 = vsel %vm718, %v3822, 0
        %v3887 = vsel %vm718, %v3824, 0
        %v3889 = vsel %vm718, %v3826, 0
        %v3891 = vsel %vm718, %v3828, 0
        %v3893 = vsel %vm718, %v3830, 0
        %v3895 = vsel %vm718, %v3832, 0
        %v3897 = vsel %vm718, %v3834, 0
        %v3899 = vsel %vm718, %v3836, 0
        %v3901 = vsel %vm718, %v3838, 0
        %v3903 = vsel %vm718, %v3840, 0
        %v3905 = vsel %vm718, %v3842, 0
        %v3907 = vsel %vm718, %v3844, 0
        %v3909 = vsel %vm718, %v3846, 0
        %v3911 = vsel %vm718, %v3848, 0
        %v3913 = vsel %vm718, %v3850, 0
        %v3915 = vsel %vm718, %v3852, 0
        %v3917 = vsel %vm718, %v3854, 0
        %v3919 = vsel %vm718, %v3856, 0
        %v3921 = vsel %vm718, %v3858, 0
        %v3923 = vsel %vm718, %v3860, 0
        %v3925 = vsel %vm718, %v3862, 0
        %v3927 = vsel %vm718, %v3864, 0
        %3929 = vmatprep.subr.mxu0 0.0
        %3930 = vmatpush1.msra.mxu0 0.0
        %3931 = vmatprep.subr.mxu0 0.0
        %3932 = vmatpush1.msra.mxu0 0.0
        %3933 = vmatprep.subr.mxu0 0.0
        %3934 = vmatpush1.msra.mxu0 0.0
        %3935 = vmatprep.subr.mxu0 0.0
        %3936 = vmatpush1.msra.mxu0 0.0
        %3937 = vmatprep.subr.mxu0 0.0
        %3938 = vmatpush1.msra.mxu0 0.0
        %3939 = vmatprep.subr.mxu0 0.0
        %3940 = vmatpush1.msra.mxu0 0.0
        %3941 = vmatprep.subr.mxu0 0.0
        %3942 = vmatpush1.msra.mxu0 0.0
        %3943 = vmatprep.subr.mxu0 0.0
        %3944 = vmatpush1.msra.mxu0 0.0
        %3945 = vmatprep.subr.mxu0 0.0
        %3946 = vmatpush1.msra.mxu0 0.0
        %3947 = vmatprep.subr.mxu0 0.0
        %3948 = vmatpush1.msra.mxu0 0.0
        %3949 = vmatprep.subr.mxu0 0.0
        %3950 = vmatpush1.msra.mxu0 0.0
        %3951 = vmatprep.subr.mxu0 0.0
        %3952 = vmatpush1.msra.mxu0 0.0
        %3953 = vmatprep.subr.mxu0 0.0
        %3954 = vmatpush1.msra.mxu0 0.0
        %3955 = vmatprep.subr.mxu0 0.0
        %3956 = vmatpush1.msra.mxu0 0.0
        %3957 = vmatprep.subr.mxu0 0.0
        %3958 = vmatpush1.msra.mxu0 0.0
        %3959 = vmatprep.subr.mxu0 0.0
        %3960 = vmatpush1.msra.mxu0 %v608
        %3961 = vmatprep.subr.mxu0 0.0
        %3962 = vmatpush2.msra.mxu0 0.0
        %3963 = vmatprep.subr.mxu0 0.0
        %3964 = vmatpush2.msra.mxu0 0.0
        %3965 = vmatprep.subr.mxu0 0.0
        %3966 = vmatpush2.msra.mxu0 0.0
        %3967 = vmatprep.subr.mxu0 0.0
        %3968 = vmatpush2.msra.mxu0 0.0
        %3969 = vmatprep.subr.mxu0 0.0
        %3970 = vmatpush2.msra.mxu0 0.0
        %3971 = vmatprep.subr.mxu0 0.0
        %3972 = vmatpush2.msra.mxu0 0.0
        %3973 = vmatprep.subr.mxu0 0.0
        %3974 = vmatpush2.msra.mxu0 0.0
        %3975 = vmatprep.subr.mxu0 0.0
        %3976 = vmatpush2.msra.mxu0 0.0
        %3977 = vmatprep.subr.mxu0 0.0
        %3978 = vmatpush2.msra.mxu0 0.0
        %3979 = vmatprep.subr.mxu0 0.0
        %3980 = vmatpush2.msra.mxu0 0.0
        %3981 = vmatprep.subr.mxu0 0.0
        %3982 = vmatpush2.msra.mxu0 0.0
        %3983 = vmatprep.subr.mxu0 0.0
        %3984 = vmatpush2.msra.mxu0 0.0
        %3985 = vmatprep.subr.mxu0 0.0
        %3986 = vmatpush2.msra.mxu0 0.0
        %3987 = vmatprep.subr.mxu0 0.0
        %3988 = vmatpush2.msra.mxu0 0.0
        %3989 = vmatprep.subr.mxu0 0.0
        %3990 = vmatpush2.msra.mxu0 0.0
        %3991 = vmatprep.subr.mxu0 0.0
        %3992 = vmatpush2.msra.mxu0 0.0
        %3993 = vmatprep.mubr.f32.mxu0 0.0
        %3994 = vmatmul.mubr.f32.gmra.mxu0 %v3865
        %v3995 = vpop.f32.mrf.mxu0
        %v3996 = vadd.f32 0.0, %v3995
        %v3997 = vpop.f32.mrf.mxu0
        %3998 = vmatprep.mubr.f32.mxu0 0.0
        %3999 = vmatmul.mubr.f32.gmra.mxu0 %v3867
        %v4000 = vpop.f32.mrf.mxu0
        %v4001 = vadd.f32 0.0, %v4000
        %v4002 = vpop.f32.mrf.mxu0
        %4003 = vmatprep.mubr.f32.mxu0 0.0
        %4004 = vmatmul.mubr.f32.gmra.mxu0 %v3869
        %v4005 = vpop.f32.mrf.mxu0
        %v4006 = vadd.f32 0.0, %v4005
        %v4007 = vpop.f32.mrf.mxu0
        %4008 = vmatprep.mubr.f32.mxu0 0.0
        %4009 = vmatmul.mubr.f32.gmra.mxu0 %v3871
        %v4010 = vpop.f32.mrf.mxu0
        %v4011 = vadd.f32 0.0, %v4010
        %v4012 = vpop.f32.mrf.mxu0
        %4013 = vmatprep.mubr.f32.mxu0 0.0
        %4014 = vmatmul.mubr.f32.gmra.mxu0 %v3873
        %v4015 = vpop.f32.mrf.mxu0
        %v4016 = vadd.f32 0.0, %v4015
        %v4017 = vpop.f32.mrf.mxu0
        %4018 = vmatprep.mubr.f32.mxu0 0.0
        %4019 = vmatmul.mubr.f32.gmra.mxu0 %v3875
        %v4020 = vpop.f32.mrf.mxu0
        %v4021 = vadd.f32 0.0, %v4020
        %v4022 = vpop.f32.mrf.mxu0
        %4023 = vmatprep.mubr.f32.mxu0 0.0
        %4024 = vmatmul.mubr.f32.gmra.mxu0 %v3877
        %v4025 = vpop.f32.mrf.mxu0
        %v4026 = vadd.f32 0.0, %v4025
        %v4027 = vpop.f32.mrf.mxu0
        %4028 = vmatprep.mubr.f32.mxu0 0.0
        %4029 = vmatmul.mubr.f32.gmra.mxu0 %v3879
        %v4030 = vpop.f32.mrf.mxu0
        %v4031 = vadd.f32 0.0, %v4030
        %v4032 = vpop.f32.mrf.mxu0
        %4033 = vmatprep.mubr.f32.mxu0 0.0
        %4034 = vmatmul.mubr.f32.gmra.mxu0 %v3881
        %v4035 = vpop.f32.mrf.mxu0
        %v4036 = vadd.f32 0.0, %v4035
        %v4037 = vpop.f32.mrf.mxu0
        %4038 = vmatprep.mubr.f32.mxu0 0.0
        %4039 = vmatmul.mubr.f32.gmra.mxu0 %v3883
        %v4040 = vpop.f32.mrf.mxu0
        %v4041 = vadd.f32 0.0, %v4040
        %v4042 = vpop.f32.mrf.mxu0
        %4043 = vmatprep.mubr.f32.mxu0 0.0
        %4044 = vmatmul.mubr.f32.gmra.mxu0 %v3885
        %v4045 = vpop.f32.mrf.mxu0
        %v4046 = vadd.f32 0.0, %v4045
        %v4047 = vpop.f32.mrf.mxu0
        %4048 = vmatprep.mubr.f32.mxu0 0.0
        %4049 = vmatmul.mubr.f32.gmra.mxu0 %v3887
        %v4050 = vpop.f32.mrf.mxu0
        %v4051 = vadd.f32 0.0, %v4050
        %v4052 = vpop.f32.mrf.mxu0
        %4053 = vmatprep.mubr.f32.mxu0 0.0
        %4054 = vmatmul.mubr.f32.gmra.mxu0 %v3889
        %v4055 = vpop.f32.mrf.mxu0
        %v4056 = vadd.f32 0.0, %v4055
        %v4057 = vpop.f32.mrf.mxu0
        %4058 = vmatprep.mubr.f32.mxu0 0.0
        %4059 = vmatmul.mubr.f32.gmra.mxu0 %v3891
        %v4060 = vpop.f32.mrf.mxu0
        %v4061 = vadd.f32 0.0, %v4060
        %v4062 = vpop.f32.mrf.mxu0
        %4063 = vmatprep.mubr.f32.mxu0 0.0
        %4064 = vmatmul.mubr.f32.gmra.mxu0 %v3893
        %v4065 = vpop.f32.mrf.mxu0
        %v4066 = vadd.f32 0.0, %v4065
        %v4067 = vpop.f32.mrf.mxu0
        %4068 = vmatprep.mubr.f32.mxu0 0.0
        %4069 = vmatmul.mubr.f32.gmra.mxu0 %v3895
        %v4070 = vpop.f32.mrf.mxu0
        %v4071 = vadd.f32 0.0, %v4070
        %v4072 = vpop.f32.mrf.mxu0
        %4073 = vmatprep.mubr.f32.mxu0 0.0
        %4074 = vmatmul.mubr.f32.gmra.mxu0 %v3897
        %v4075 = vpop.f32.mrf.mxu0
        %v4076 = vadd.f32 0.0, %v4075
        %v4077 = vpop.f32.mrf.mxu0
        %4078 = vmatprep.mubr.f32.mxu0 0.0
        %4079 = vmatmul.mubr.f32.gmra.mxu0 %v3899
        %v4080 = vpop.f32.mrf.mxu0
        %v4081 = vadd.f32 0.0, %v4080
        %v4082 = vpop.f32.mrf.mxu0
        %4083 = vmatprep.mubr.f32.mxu0 0.0
        %4084 = vmatmul.mubr.f32.gmra.mxu0 %v3901
        %v4085 = vpop.f32.mrf.mxu0
        %v4086 = vadd.f32 0.0, %v4085
        %v4087 = vpop.f32.mrf.mxu0
        %4088 = vmatprep.mubr.f32.mxu0 0.0
        %4089 = vmatmul.mubr.f32.gmra.mxu0 %v3903
        %v4090 = vpop.f32.mrf.mxu0
        %v4091 = vadd.f32 0.0, %v4090
        %v4092 = vpop.f32.mrf.mxu0
        %4093 = vmatprep.mubr.f32.mxu0 0.0
        %4094 = vmatmul.mubr.f32.gmra.mxu0 %v3905
        %v4095 = vpop.f32.mrf.mxu0
        %v4096 = vadd.f32 0.0, %v4095
        %v4097 = vpop.f32.mrf.mxu0
        %4098 = vmatprep.mubr.f32.mxu0 0.0
        %4099 = vmatmul.mubr.f32.gmra.mxu0 %v3907
        %v4100 = vpop.f32.mrf.mxu0
        %v4101 = vadd.f32 0.0, %v4100
        %v4102 = vpop.f32.mrf.mxu0
        %4103 = vmatprep.mubr.f32.mxu0 0.0
        %4104 = vmatmul.mubr.f32.gmra.mxu0 %v3909
        %v4105 = vpop.f32.mrf.mxu0
        %v4106 = vadd.f32 0.0, %v4105
        %v4107 = vpop.f32.mrf.mxu0
        %4108 = vmatprep.mubr.f32.mxu0 0.0
        %4109 = vmatmul.mubr.f32.gmra.mxu0 %v3911
        %v4110 = vpop.f32.mrf.mxu0
        %v4111 = vadd.f32 0.0, %v4110
        %v4112 = vpop.f32.mrf.mxu0
        %4113 = vmatprep.mubr.f32.mxu0 0.0
        %4114 = vmatmul.mubr.f32.gmra.mxu0 %v3913
        %v4115 = vpop.f32.mrf.mxu0
        %v4116 = vadd.f32 0.0, %v4115
        %v4117 = vpop.f32.mrf.mxu0
        %4118 = vmatprep.mubr.f32.mxu0 0.0
        %4119 = vmatmul.mubr.f32.gmra.mxu0 %v3915
        %v4120 = vpop.f32.mrf.mxu0
        %v4121 = vadd.f32 0.0, %v4120
        %v4122 = vpop.f32.mrf.mxu0
        %4123 = vmatprep.mubr.f32.mxu0 0.0
        %4124 = vmatmul.mubr.f32.gmra.mxu0 %v3917
        %v4125 = vpop.f32.mrf.mxu0
        %v4126 = vadd.f32 0.0, %v4125
        %v4127 = vpop.f32.mrf.mxu0
        %4128 = vmatprep.mubr.f32.mxu0 0.0
        %4129 = vmatmul.mubr.f32.gmra.mxu0 %v3919
        %v4130 = vpop.f32.mrf.mxu0
        %v4131 = vadd.f32 0.0, %v4130
        %v4132 = vpop.f32.mrf.mxu0
        %4133 = vmatprep.mubr.f32.mxu0 0.0
        %4134 = vmatmul.mubr.f32.gmra.mxu0 %v3921
        %v4135 = vpop.f32.mrf.mxu0
        %v4136 = vadd.f32 0.0, %v4135
        %v4137 = vpop.f32.mrf.mxu0
        %4138 = vmatprep.mubr.f32.mxu0 0.0
        %4139 = vmatmul.mubr.f32.gmra.mxu0 %v3923
        %v4140 = vpop.f32.mrf.mxu0
        %v4141 = vadd.f32 0.0, %v4140
        %v4142 = vpop.f32.mrf.mxu0
        %4143 = vmatprep.mubr.f32.mxu0 0.0
        %4144 = vmatmul.mubr.f32.gmra.mxu0 %v3925
        %v4145 = vpop.f32.mrf.mxu0
        %v4146 = vadd.f32 0.0, %v4145
        %v4147 = vpop.f32.mrf.mxu0
        %4148 = vmatprep.mubr.f32.mxu0 0.0
        %4149 = vmatmul.mubr.f32.gmra.mxu0 %v3927
        %v4150 = vpop.f32.mrf.mxu0
        %v4151 = vadd.f32 0.0, %v4150
        %v4152 = vpop.f32.mrf.mxu0
        %4153 = vdwg.mxu0
        %v4154 = vmax.f32 %v3996, %v4016
        %v4155 = vmax.f32 %v4001, %v4021
        %v4156 = vmax.f32 %v4006, %v4026
        %v4157 = vmax.f32 %v4011, %v4031
        %v4158 = vmax.f32 %v4154, %v4036
        %v4159 = vmax.f32 %v4155, %v4041
        %v4160 = vmax.f32 %v4156, %v4046
        %v4161 = vmax.f32 %v4157, %v4051
        %v4162 = vmax.f32 %v4158, %v4056
        %v4163 = vmax.f32 %v4159, %v4061
        %v4164 = vmax.f32 %v4160, %v4066
        %v4165 = vmax.f32 %v4161, %v4071
        %v4166 = vmax.f32 %v4162, %v4076
        %v4167 = vmax.f32 %v4163, %v4081
        %v4168 = vmax.f32 %v4164, %v4086
        %v4169 = vmax.f32 %v4165, %v4091
        %v4170 = vmax.f32 %v4166, %v4096
        %v4171 = vmax.f32 %v4167, %v4101
        %v4172 = vmax.f32 %v4168, %v4106
        %v4173 = vmax.f32 %v4169, %v4111
        %v4174 = vmax.f32 %v4170, %v4116
        %v4175 = vmax.f32 %v4171, %v4121
        %v4176 = vmax.f32 %v4172, %v4126
        %v4177 = vmax.f32 %v4173, %v4131
        %v4178 = vmax.f32 %v4174, %v4136
        %v4179 = vmax.f32 %v4175, %v4141
        %v4180 = vmax.f32 %v4176, %v4146
        %v4181 = vmax.f32 %v4177, %v4151
        %v4182 = vmax.f32 %v4178, %v4179
        %v4183 = vmax.f32 %v4180, %v4181
        %v4184 = vmax.f32 %v4182, %v4183
        %v4185 = vrot.slane %v4184, 4
        %v4186 = vmax.f32 %v4184, %v4185
        %v4187 = vrot.slane %v4186, 2
        %v4188 = vmax.f32 %v4186, %v4187
        %v4189 = vrot.slane %v4188, 1
        %v4190 = vmax.f32 %v4188, %v4189
        %v4191 = vsub.f32 %v3996, %v4190
        %v4192 = vsub.f32 %v4001, %v4190
        %v4193 = vsub.f32 %v4006, %v4190
        %v4194 = vsub.f32 %v4011, %v4190
        %v4195 = vsub.f32 %v4016, %v4190
        %v4196 = vsub.f32 %v4021, %v4190
        %v4197 = vsub.f32 %v4026, %v4190
        %v4198 = vsub.f32 %v4031, %v4190
        %v4199 = vsub.f32 %v4036, %v4190
        %v4200 = vsub.f32 %v4041, %v4190
        %v4201 = vsub.f32 %v4046, %v4190
        %v4202 = vsub.f32 %v4051, %v4190
        %v4203 = vsub.f32 %v4056, %v4190
        %v4204 = vsub.f32 %v4061, %v4190
        %v4205 = vsub.f32 %v4066, %v4190
        %v4206 = vsub.f32 %v4071, %v4190
        %v4207 = vsub.f32 %v4076, %v4190
        %v4208 = vsub.f32 %v4081, %v4190
        %v4209 = vsub.f32 %v4086, %v4190
        %v4210 = vsub.f32 %v4091, %v4190
        %v4211 = vsub.f32 %v4096, %v4190
        %v4212 = vsub.f32 %v4101, %v4190
        %v4213 = vsub.f32 %v4106, %v4190
        %v4214 = vsub.f32 %v4111, %v4190
        %v4215 = vsub.f32 %v4116, %v4190
        %v4216 = vsub.f32 %v4121, %v4190
        %v4217 = vsub.f32 %v4126, %v4190
        %v4218 = vsub.f32 %v4131, %v4190
        %v4219 = vsub.f32 %v4136, %v4190
        %v4220 = vsub.f32 %v4141, %v4190
        %v4221 = vsub.f32 %v4146, %v4190
        %v4222 = vsub.f32 %v4151, %v4190
        %v4223 = vmul.f32 %v4191, 1.442695
        %v4224 = vpow.pop %v4223
        %v4225 = vmul.f32 %v4192, 1.442695
        %v4226 = vpow.pop %v4225
        %v4227 = vmul.f32 %v4193, 1.442695
        %v4228 = vpow.pop %v4227
        %v4229 = vmul.f32 %v4194, 1.442695
        %v4230 = vpow.pop %v4229
        %v4231 = vmul.f32 %v4195, 1.442695
        %v4232 = vpow.pop %v4231
        %v4233 = vmul.f32 %v4196, 1.442695
        %v4234 = vpow.pop %v4233
        %v4235 = vmul.f32 %v4197, 1.442695
        %v4236 = vpow.pop %v4235
        %v4237 = vmul.f32 %v4198, 1.442695
        %v4238 = vpow.pop %v4237
        %v4239 = vmul.f32 %v4199, 1.442695
        %v4240 = vpow.pop %v4239
        %v4241 = vmul.f32 %v4200, 1.442695
        %v4242 = vpow.pop %v4241
        %v4243 = vmul.f32 %v4201, 1.442695
        %v4244 = vpow.pop %v4243
        %v4245 = vmul.f32 %v4202, 1.442695
        %v4246 = vpow.pop %v4245
        %v4247 = vmul.f32 %v4203, 1.442695
        %v4248 = vpow.pop %v4247
        %v4249 = vmul.f32 %v4204, 1.442695
        %v4250 = vpow.pop %v4249
        %v4251 = vmul.f32 %v4205, 1.442695
        %v4252 = vpow.pop %v4251
        %v4253 = vmul.f32 %v4206, 1.442695
        %v4254 = vpow.pop %v4253
        %v4255 = vmul.f32 %v4207, 1.442695
        %v4256 = vpow.pop %v4255
        %v4257 = vmul.f32 %v4208, 1.442695
        %v4258 = vpow.pop %v4257
        %v4259 = vmul.f32 %v4209, 1.442695
        %v4260 = vpow.pop %v4259
        %v4261 = vmul.f32 %v4210, 1.442695
        %v4262 = vpow.pop %v4261
        %v4263 = vmul.f32 %v4211, 1.442695
        %v4264 = vpow.pop %v4263
        %v4265 = vmul.f32 %v4212, 1.442695
        %v4266 = vpow.pop %v4265
        %v4267 = vmul.f32 %v4213, 1.442695
        %v4268 = vpow.pop %v4267
        %v4269 = vmul.f32 %v4214, 1.442695
        %v4270 = vpow.pop %v4269
        %v4271 = vmul.f32 %v4215, 1.442695
        %v4272 = vpow.pop %v4271
        %v4273 = vmul.f32 %v4216, 1.442695
        %v4274 = vpow.pop %v4273
        %v4275 = vmul.f32 %v4217, 1.442695
        %v4276 = vpow.pop %v4275
        %v4277 = vmul.f32 %v4218, 1.442695
        %v4278 = vpow.pop %v4277
        %v4279 = vmul.f32 %v4219, 1.442695
        %v4280 = vpow.pop %v4279
        %v4281 = vmul.f32 %v4220, 1.442695
        %v4282 = vpow.pop %v4281
        %v4283 = vmul.f32 %v4221, 1.442695
        %v4284 = vpow.pop %v4283
        %v4285 = vmul.f32 %v4222, 1.442695
        %v4286 = vpow.pop %v4285
        %v4287 = vadd.f32 %v4224, %v4226
        %v4288 = vadd.f32 %v4287, %v4228
        %v4289 = vadd.f32 %v4288, %v4230
        %v4290 = vadd.f32 %v4289, %v4232
        %v4291 = vadd.f32 %v4290, %v4234
        %v4292 = vadd.f32 %v4291, %v4236
        %v4293 = vadd.f32 %v4292, %v4238
        %v4294 = vadd.f32 %v4293, %v4240
        %v4295 = vadd.f32 %v4294, %v4242
        %v4296 = vadd.f32 %v4295, %v4244
        %v4297 = vadd.f32 %v4296, %v4246
        %v4298 = vadd.f32 %v4297, %v4248
        %v4299 = vadd.f32 %v4298, %v4250
        %v4300 = vadd.f32 %v4299, %v4252
        %v4301 = vadd.f32 %v4300, %v4254
        %v4302 = vadd.f32 %v4301, %v4256
        %v4303 = vadd.f32 %v4302, %v4258
        %v4304 = vadd.f32 %v4303, %v4260
        %v4305 = vadd.f32 %v4304, %v4262
        %v4306 = vadd.f32 %v4305, %v4264
        %v4307 = vadd.f32 %v4306, %v4266
        %v4308 = vadd.f32 %v4307, %v4268
        %v4309 = vadd.f32 %v4308, %v4270
        %v4310 = vadd.f32 %v4309, %v4272
        %v4311 = vadd.f32 %v4310, %v4274
        %v4312 = vadd.f32 %v4311, %v4276
        %v4313 = vadd.f32 %v4312, %v4278
        %v4314 = vadd.f32 %v4313, %v4280
        %v4315 = vadd.f32 %v4314, %v4282
        %v4316 = vadd.f32 %v4315, %v4284
        %v4317 = vadd.f32 %v4316, %v4286
        %v4318 = vrot.slane %v4317, 4
        %v4319 = vadd.f32 %v4317, %v4318
        %v4320 = vrot.slane %v4319, 2
        %v4321 = vadd.f32 %v4319, %v4320
        %v4322 = vrot.slane %v4321, 1
        %v4323 = vadd.f32 %v4321, %v4322
        %v4324 = vrcp.pop %v4323
        %v4325 = vpack.c.bf16 %v4226, %v4224
        %v4326 = vpack.c.bf16 %v4230, %v4228
        %v4327 = vpack.c.bf16 %v4234, %v4232
        %v4328 = vpack.c.bf16 %v4238, %v4236
        %v4329 = vpack.c.bf16 %v4242, %v4240
        %v4330 = vpack.c.bf16 %v4246, %v4244
        %v4331 = vpack.c.bf16 %v4250, %v4248
        %v4332 = vpack.c.bf16 %v4254, %v4252
        %v4333 = vpack.c.bf16 %v4258, %v4256
        %v4334 = vpack.c.bf16 %v4262, %v4260
        %v4335 = vpack.c.bf16 %v4266, %v4264
        %v4336 = vpack.c.bf16 %v4270, %v4268
        %v4337 = vpack.c.bf16 %v4274, %v4272
        %v4338 = vpack.c.bf16 %v4278, %v4276
        %v4339 = vpack.c.bf16 %v4282, %v4280
        %v4340 = vpack.c.bf16 %v4286, %v4284
        %4341 = vmatprep.subr.bf16.mxu0 0
        %4342 = vmatpush1.bf16.msra.mxu0 %v4332
        %4343 = vmatprep.subr.bf16.mxu0 0
        %4344 = vmatpush1.bf16.msra.mxu0 %v4331
        %4345 = vmatprep.subr.bf16.mxu0 0
        %4346 = vmatpush1.bf16.msra.mxu0 %v4330
        %4347 = vmatprep.subr.bf16.mxu0 0
        %4348 = vmatpush1.bf16.msra.mxu0 %v4329
        %4349 = vmatprep.subr.bf16.mxu0 0
        %4350 = vmatpush1.bf16.msra.mxu0 %v4328
        %4351 = vmatprep.subr.bf16.mxu0 0
        %4352 = vmatpush1.bf16.msra.mxu0 %v4327
        %4353 = vmatprep.subr.bf16.mxu0 0
        %4354 = vmatpush1.bf16.msra.mxu0 %v4326
        %4355 = vmatprep.subr.bf16.mxu0 0
        %4356 = vmatpush1.bf16.msra.mxu0 %v4325
        %4357 = vmatprep.subr.bf16.mxu0 0
        %4358 = vmatpush2.bf16.msra.mxu0 %v4340
        %4359 = vmatprep.subr.bf16.mxu0 0
        %4360 = vmatpush2.bf16.msra.mxu0 %v4339
        %4361 = vmatprep.subr.bf16.mxu0 0
        %4362 = vmatpush2.bf16.msra.mxu0 %v4338
        %4363 = vmatprep.subr.bf16.mxu0 0
        %4364 = vmatpush2.bf16.msra.mxu0 %v4337
        %4365 = vmatprep.subr.bf16.mxu0 0
        %4366 = vmatpush2.bf16.msra.mxu0 %v4336
        %4367 = vmatprep.subr.bf16.mxu0 0
        %4368 = vmatpush2.bf16.msra.mxu0 %v4335
        %4369 = vmatprep.subr.bf16.mxu0 0
        %4370 = vmatpush2.bf16.msra.mxu0 %v4334
        %4371 = vmatprep.subr.bf16.mxu0 0
        %4372 = vmatpush2.bf16.msra.mxu0 %v4333
        %4373 = vmatprep.mubr.bf16.mxu0 %v3800
        %4374 = vmatmul.mubr.bf16.gmra.mxu0 %v3799
        %v4375 = vpop.f32.mrf.mxu0
        %v4376 = vadd.f32 0.0, %v4375
        %v4377 = vpop.f32.mrf.mxu0
        %v4378 = vpop.f32.mrf.mxu0
        %v4379 = vpop.f32.mrf.mxu0
        %4380 = vdwg.mxu0
        %v4381 = vmul.f32 %v4376, %v4324
        %4382 = vst [vmem:[#allocation2 + $0x30] sm:$0xff] %v4381
        %4383 = vmatprep.subr.mxu0 0.0
        %4384 = vmatpush1.msra.mxu0 0.0
        %4385 = vmatprep.subr.mxu0 0.0
        %4386 = vmatpush1.msra.mxu0 0.0
        %4387 = vmatprep.subr.mxu0 0.0
        %4388 = vmatpush1.msra.mxu0 0.0
        %4389 = vmatprep.subr.mxu0 0.0
        %4390 = vmatpush1.msra.mxu0 0.0
        %4391 = vmatprep.subr.mxu0 0.0
        %4392 = vmatpush1.msra.mxu0 0.0
        %4393 = vmatprep.subr.mxu0 0.0
        %4394 = vmatpush1.msra.mxu0 0.0
        %4395 = vmatprep.subr.mxu0 0.0
        %4396 = vmatpush1.msra.mxu0 0.0
        %4397 = vmatprep.subr.mxu0 0.0
        %4398 = vmatpush1.msra.mxu0 0.0
        %4399 = vmatprep.subr.mxu0 0.0
        %4400 = vmatpush1.msra.mxu0 0.0
        %4401 = vmatprep.subr.mxu0 0.0
        %4402 = vmatpush1.msra.mxu0 0.0
        %4403 = vmatprep.subr.mxu0 0.0
        %4404 = vmatpush1.msra.mxu0 0.0
        %4405 = vmatprep.subr.mxu0 0.0
        %4406 = vmatpush1.msra.mxu0 0.0
        %4407 = vmatprep.subr.mxu0 0.0
        %4408 = vmatpush1.msra.mxu0 0.0
        %4409 = vmatprep.subr.mxu0 0.0
        %4410 = vmatpush1.msra.mxu0 0.0
        %4411 = vmatprep.subr.mxu0 0.0
        %4412 = vmatpush1.msra.mxu0 0.0
        %4413 = vmatprep.subr.mxu0 0.0
        %4414 = vmatpush1.msra.mxu0 %v610
        %4415 = vmatprep.subr.mxu0 0.0
        %4416 = vmatpush2.msra.mxu0 0.0
        %4417 = vmatprep.subr.mxu0 0.0
        %4418 = vmatpush2.msra.mxu0 0.0
        %4419 = vmatprep.subr.mxu0 0.0
        %4420 = vmatpush2.msra.mxu0 0.0
        %4421 = vmatprep.subr.mxu0 0.0
        %4422 = vmatpush2.msra.mxu0 0.0
        %4423 = vmatprep.subr.mxu0 0.0
        %4424 = vmatpush2.msra.mxu0 0.0
        %4425 = vmatprep.subr.mxu0 0.0
        %4426 = vmatpush2.msra.mxu0 0.0
        %4427 = vmatprep.subr.mxu0 0.0
        %4428 = vmatpush2.msra.mxu0 0.0
        %4429 = vmatprep.subr.mxu0 0.0
        %4430 = vmatpush2.msra.mxu0 0.0
        %4431 = vmatprep.subr.mxu0 0.0
        %4432 = vmatpush2.msra.mxu0 0.0
        %4433 = vmatprep.subr.mxu0 0.0
        %4434 = vmatpush2.msra.mxu0 0.0
        %4435 = vmatprep.subr.mxu0 0.0
        %4436 = vmatpush2.msra.mxu0 0.0
        %4437 = vmatprep.subr.mxu0 0.0
        %4438 = vmatpush2.msra.mxu0 0.0
        %4439 = vmatprep.subr.mxu0 0.0
        %4440 = vmatpush2.msra.mxu0 0.0
        %4441 = vmatprep.subr.mxu0 0.0
        %4442 = vmatpush2.msra.mxu0 0.0
        %4443 = vmatprep.subr.mxu0 0.0
        %4444 = vmatpush2.msra.mxu0 0.0
        %4445 = vmatprep.subr.mxu0 0.0
        %4446 = vmatpush2.msra.mxu0 0.0
        %4447 = vmatprep.mubr.f32.mxu0 0.0
        %4448 = vmatmul.mubr.f32.gmra.mxu0 %v3865
        %v4449 = vpop.f32.mrf.mxu0
        %v4450 = vadd.f32 0.0, %v4449
        %v4451 = vpop.f32.mrf.mxu0
        %4452 = vmatprep.mubr.f32.mxu0 0.0
        %4453 = vmatmul.mubr.f32.gmra.mxu0 %v3867
        %v4454 = vpop.f32.mrf.mxu0
        %v4455 = vadd.f32 0.0, %v4454
        %v4456 = vpop.f32.mrf.mxu0
        %4457 = vmatprep.mubr.f32.mxu0 0.0
        %4458 = vmatmul.mubr.f32.gmra.mxu0 %v3869
        %v4459 = vpop.f32.mrf.mxu0
        %v4460 = vadd.f32 0.0, %v4459
        %v4461 = vpop.f32.mrf.mxu0
        %4462 = vmatprep.mubr.f32.mxu0 0.0
        %4463 = vmatmul.mubr.f32.gmra.mxu0 %v3871
        %v4464 = vpop.f32.mrf.mxu0
        %v4465 = vadd.f32 0.0, %v4464
        %v4466 = vpop.f32.mrf.mxu0
        %4467 = vmatprep.mubr.f32.mxu0 0.0
        %4468 = vmatmul.mubr.f32.gmra.mxu0 %v3873
        %v4469 = vpop.f32.mrf.mxu0
        %v4470 = vadd.f32 0.0, %v4469
        %v4471 = vpop.f32.mrf.mxu0
        %4472 = vmatprep.mubr.f32.mxu0 0.0
        %4473 = vmatmul.mubr.f32.gmra.mxu0 %v3875
        %v4474 = vpop.f32.mrf.mxu0
        %v4475 = vadd.f32 0.0, %v4474
        %v4476 = vpop.f32.mrf.mxu0
        %4477 = vmatprep.mubr.f32.mxu0 0.0
        %4478 = vmatmul.mubr.f32.gmra.mxu0 %v3877
        %v4479 = vpop.f32.mrf.mxu0
        %v4480 = vadd.f32 0.0, %v4479
        %v4481 = vpop.f32.mrf.mxu0
        %4482 = vmatprep.mubr.f32.mxu0 0.0
        %4483 = vmatmul.mubr.f32.gmra.mxu0 %v3879
        %v4484 = vpop.f32.mrf.mxu0
        %v4485 = vadd.f32 0.0, %v4484
        %v4486 = vpop.f32.mrf.mxu0
        %4487 = vmatprep.mubr.f32.mxu0 0.0
        %4488 = vmatmul.mubr.f32.gmra.mxu0 %v3881
        %v4489 = vpop.f32.mrf.mxu0
        %v4490 = vadd.f32 0.0, %v4489
        %v4491 = vpop.f32.mrf.mxu0
        %4492 = vmatprep.mubr.f32.mxu0 0.0
        %4493 = vmatmul.mubr.f32.gmra.mxu0 %v3883
        %v4494 = vpop.f32.mrf.mxu0
        %v4495 = vadd.f32 0.0, %v4494
        %v4496 = vpop.f32.mrf.mxu0
        %4497 = vmatprep.mubr.f32.mxu0 0.0
        %4498 = vmatmul.mubr.f32.gmra.mxu0 %v3885
        %v4499 = vpop.f32.mrf.mxu0
        %v4500 = vadd.f32 0.0, %v4499
        %v4501 = vpop.f32.mrf.mxu0
        %4502 = vmatprep.mubr.f32.mxu0 0.0
        %4503 = vmatmul.mubr.f32.gmra.mxu0 %v3887
        %v4504 = vpop.f32.mrf.mxu0
        %v4505 = vadd.f32 0.0, %v4504
        %v4506 = vpop.f32.mrf.mxu0
        %4507 = vmatprep.mubr.f32.mxu0 0.0
        %4508 = vmatmul.mubr.f32.gmra.mxu0 %v3889
        %v4509 = vpop.f32.mrf.mxu0
        %v4510 = vadd.f32 0.0, %v4509
        %v4511 = vpop.f32.mrf.mxu0
        %4512 = vmatprep.mubr.f32.mxu0 0.0
        %4513 = vmatmul.mubr.f32.gmra.mxu0 %v3891
        %v4514 = vpop.f32.mrf.mxu0
        %v4515 = vadd.f32 0.0, %v4514
        %v4516 = vpop.f32.mrf.mxu0
        %4517 = vmatprep.mubr.f32.mxu0 0.0
        %4518 = vmatmul.mubr.f32.gmra.mxu0 %v3893
        %v4519 = vpop.f32.mrf.mxu0
        %v4520 = vadd.f32 0.0, %v4519
        %v4521 = vpop.f32.mrf.mxu0
        %4522 = vmatprep.mubr.f32.mxu0 0.0
        %4523 = vmatmul.mubr.f32.gmra.mxu0 %v3895
        %v4524 = vpop.f32.mrf.mxu0
        %v4525 = vadd.f32 0.0, %v4524
        %v4526 = vpop.f32.mrf.mxu0
        %4527 = vmatprep.mubr.f32.mxu0 0.0
        %4528 = vmatmul.mubr.f32.gmra.mxu0 %v3897
        %v4529 = vpop.f32.mrf.mxu0
        %v4530 = vadd.f32 0.0, %v4529
        %v4531 = vpop.f32.mrf.mxu0
        %4532 = vmatprep.mubr.f32.mxu0 0.0
        %4533 = vmatmul.mubr.f32.gmra.mxu0 %v3899
        %v4534 = vpop.f32.mrf.mxu0
        %v4535 = vadd.f32 0.0, %v4534
        %v4536 = vpop.f32.mrf.mxu0
        %4537 = vmatprep.mubr.f32.mxu0 0.0
        %4538 = vmatmul.mubr.f32.gmra.mxu0 %v3901
        %v4539 = vpop.f32.mrf.mxu0
        %v4540 = vadd.f32 0.0, %v4539
        %v4541 = vpop.f32.mrf.mxu0
        %4542 = vmatprep.mubr.f32.mxu0 0.0
        %4543 = vmatmul.mubr.f32.gmra.mxu0 %v3903
        %v4544 = vpop.f32.mrf.mxu0
        %v4545 = vadd.f32 0.0, %v4544
        %v4546 = vpop.f32.mrf.mxu0
        %4547 = vmatprep.mubr.f32.mxu0 0.0
        %4548 = vmatmul.mubr.f32.gmra.mxu0 %v3905
        %v4549 = vpop.f32.mrf.mxu0
        %v4550 = vadd.f32 0.0, %v4549
        %v4551 = vpop.f32.mrf.mxu0
        %4552 = vmatprep.mubr.f32.mxu0 0.0
        %4553 = vmatmul.mubr.f32.gmra.mxu0 %v3907
        %v4554 = vpop.f32.mrf.mxu0
        %v4555 = vadd.f32 0.0, %v4554
        %v4556 = vpop.f32.mrf.mxu0
        %4557 = vmatprep.mubr.f32.mxu0 0.0
        %4558 = vmatmul.mubr.f32.gmra.mxu0 %v3909
        %v4559 = vpop.f32.mrf.mxu0
        %v4560 = vadd.f32 0.0, %v4559
        %v4561 = vpop.f32.mrf.mxu0
        %4562 = vmatprep.mubr.f32.mxu0 0.0
        %4563 = vmatmul.mubr.f32.gmra.mxu0 %v3911
        %v4564 = vpop.f32.mrf.mxu0
        %v4565 = vadd.f32 0.0, %v4564
        %v4566 = vpop.f32.mrf.mxu0
        %4567 = vmatprep.mubr.f32.mxu0 0.0
        %4568 = vmatmul.mubr.f32.gmra.mxu0 %v3913
        %v4569 = vpop.f32.mrf.mxu0
        %v4570 = vadd.f32 0.0, %v4569
        %v4571 = vpop.f32.mrf.mxu0
        %4572 = vmatprep.mubr.f32.mxu0 0.0
        %4573 = vmatmul.mubr.f32.gmra.mxu0 %v3915
        %v4574 = vpop.f32.mrf.mxu0
        %v4575 = vadd.f32 0.0, %v4574
        %v4576 = vpop.f32.mrf.mxu0
        %4577 = vmatprep.mubr.f32.mxu0 0.0
        %4578 = vmatmul.mubr.f32.gmra.mxu0 %v3917
        %v4579 = vpop.f32.mrf.mxu0
        %v4580 = vadd.f32 0.0, %v4579
        %v4581 = vpop.f32.mrf.mxu0
        %4582 = vmatprep.mubr.f32.mxu0 0.0
        %4583 = vmatmul.mubr.f32.gmra.mxu0 %v3919
        %v4584 = vpop.f32.mrf.mxu0
        %v4585 = vadd.f32 0.0, %v4584
        %v4586 = vpop.f32.mrf.mxu0
        %4587 = vmatprep.mubr.f32.mxu0 0.0
        %4588 = vmatmul.mubr.f32.gmra.mxu0 %v3921
        %v4589 = vpop.f32.mrf.mxu0
        %v4590 = vadd.f32 0.0, %v4589
        %v4591 = vpop.f32.mrf.mxu0
        %4592 = vmatprep.mubr.f32.mxu0 0.0
        %4593 = vmatmul.mubr.f32.gmra.mxu0 %v3923
        %v4594 = vpop.f32.mrf.mxu0
        %v4595 = vadd.f32 0.0, %v4594
        %v4596 = vpop.f32.mrf.mxu0
        %4597 = vmatprep.mubr.f32.mxu0 0.0
        %4598 = vmatmul.mubr.f32.gmra.mxu0 %v3925
        %v4599 = vpop.f32.mrf.mxu0
        %v4600 = vadd.f32 0.0, %v4599
        %v4601 = vpop.f32.mrf.mxu0
        %4602 = vmatprep.mubr.f32.mxu0 0.0
        %4603 = vmatmul.mubr.f32.gmra.mxu0 %v3927
        %v4604 = vpop.f32.mrf.mxu0
        %v4605 = vadd.f32 0.0, %v4604
        %v4606 = vpop.f32.mrf.mxu0
        %4607 = vdwg.mxu0
        %v4608 = vmax.f32 %v4450, %v4470
        %v4609 = vmax.f32 %v4455, %v4475
        %v4610 = vmax.f32 %v4460, %v4480
        %v4611 = vmax.f32 %v4465, %v4485
        %v4612 = vmax.f32 %v4608, %v4490
        %v4613 = vmax.f32 %v4609, %v4495
        %v4614 = vmax.f32 %v4610, %v4500
        %v4615 = vmax.f32 %v4611, %v4505
        %v4616 = vmax.f32 %v4612, %v4510
        %v4617 = vmax.f32 %v4613, %v4515
        %v4618 = vmax.f32 %v4614, %v4520
        %v4619 = vmax.f32 %v4615, %v4525
        %v4620 = vmax.f32 %v4616, %v4530
        %v4621 = vmax.f32 %v4617, %v4535
        %v4622 = vmax.f32 %v4618, %v4540
        %v4623 = vmax.f32 %v4619, %v4545
        %v4624 = vmax.f32 %v4620, %v4550
        %v4625 = vmax.f32 %v4621, %v4555
        %v4626 = vmax.f32 %v4622, %v4560
        %v4627 = vmax.f32 %v4623, %v4565
        %v4628 = vmax.f32 %v4624, %v4570
        %v4629 = vmax.f32 %v4625, %v4575
        %v4630 = vmax.f32 %v4626, %v4580
        %v4631 = vmax.f32 %v4627, %v4585
        %v4632 = vmax.f32 %v4628, %v4590
        %v4633 = vmax.f32 %v4629, %v4595
        %v4634 = vmax.f32 %v4630, %v4600
        %v4635 = vmax.f32 %v4631, %v4605
        %v4636 = vmax.f32 %v4632, %v4633
        %v4637 = vmax.f32 %v4634, %v4635
        %v4638 = vmax.f32 %v4636, %v4637
        %v4639 = vrot.slane %v4638, 4
        %v4640 = vmax.f32 %v4638, %v4639
        %v4641 = vrot.slane %v4640, 2
        %v4642 = vmax.f32 %v4640, %v4641
        %v4643 = vrot.slane %v4642, 1
        %v4644 = vmax.f32 %v4642, %v4643
        %v4645 = vsub.f32 %v4450, %v4644
        %v4646 = vsub.f32 %v4455, %v4644
        %v4647 = vsub.f32 %v4460, %v4644
        %v4648 = vsub.f32 %v4465, %v4644
        %v4649 = vsub.f32 %v4470, %v4644
        %v4650 = vsub.f32 %v4475, %v4644
        %v4651 = vsub.f32 %v4480, %v4644
        %v4652 = vsub.f32 %v4485, %v4644
        %v4653 = vsub.f32 %v4490, %v4644
        %v4654 = vsub.f32 %v4495, %v4644
        %v4655 = vsub.f32 %v4500, %v4644
        %v4656 = vsub.f32 %v4505, %v4644
        %v4657 = vsub.f32 %v4510, %v4644
        %v4658 = vsub.f32 %v4515, %v4644
        %v4659 = vsub.f32 %v4520, %v4644
        %v4660 = vsub.f32 %v4525, %v4644
        %v4661 = vsub.f32 %v4530, %v4644
        %v4662 = vsub.f32 %v4535, %v4644
        %v4663 = vsub.f32 %v4540, %v4644
        %v4664 = vsub.f32 %v4545, %v4644
        %v4665 = vsub.f32 %v4550, %v4644
        %v4666 = vsub.f32 %v4555, %v4644
        %v4667 = vsub.f32 %v4560, %v4644
        %v4668 = vsub.f32 %v4565, %v4644
        %v4669 = vsub.f32 %v4570, %v4644
        %v4670 = vsub.f32 %v4575, %v4644
        %v4671 = vsub.f32 %v4580, %v4644
        %v4672 = vsub.f32 %v4585, %v4644
        %v4673 = vsub.f32 %v4590, %v4644
        %v4674 = vsub.f32 %v4595, %v4644
        %v4675 = vsub.f32 %v4600, %v4644
        %v4676 = vsub.f32 %v4605, %v4644
        %v4677 = vmul.f32 %v4645, 1.442695
        %v4678 = vpow.pop %v4677
        %v4679 = vmul.f32 %v4646, 1.442695
        %v4680 = vpow.pop %v4679
        %v4681 = vmul.f32 %v4647, 1.442695
        %v4682 = vpow.pop %v4681
        %v4683 = vmul.f32 %v4648, 1.442695
        %v4684 = vpow.pop %v4683
        %v4685 = vmul.f32 %v4649, 1.442695
        %v4686 = vpow.pop %v4685
        %v4687 = vmul.f32 %v4650, 1.442695
        %v4688 = vpow.pop %v4687
        %v4689 = vmul.f32 %v4651, 1.442695
        %v4690 = vpow.pop %v4689
        %v4691 = vmul.f32 %v4652, 1.442695
        %v4692 = vpow.pop %v4691
        %v4693 = vmul.f32 %v4653, 1.442695
        %v4694 = vpow.pop %v4693
        %v4695 = vmul.f32 %v4654, 1.442695
        %v4696 = vpow.pop %v4695
        %v4697 = vmul.f32 %v4655, 1.442695
        %v4698 = vpow.pop %v4697
        %v4699 = vmul.f32 %v4656, 1.442695
        %v4700 = vpow.pop %v4699
        %v4701 = vmul.f32 %v4657, 1.442695
        %v4702 = vpow.pop %v4701
        %v4703 = vmul.f32 %v4658, 1.442695
        %v4704 = vpow.pop %v4703
        %v4705 = vmul.f32 %v4659, 1.442695
        %v4706 = vpow.pop %v4705
        %v4707 = vmul.f32 %v4660, 1.442695
        %v4708 = vpow.pop %v4707
        %v4709 = vmul.f32 %v4661, 1.442695
        %v4710 = vpow.pop %v4709
        %v4711 = vmul.f32 %v4662, 1.442695
        %v4712 = vpow.pop %v4711
        %v4713 = vmul.f32 %v4663, 1.442695
        %v4714 = vpow.pop %v4713
        %v4715 = vmul.f32 %v4664, 1.442695
        %v4716 = vpow.pop %v4715
        %v4717 = vmul.f32 %v4665, 1.442695
        %v4718 = vpow.pop %v4717
        %v4719 = vmul.f32 %v4666, 1.442695
        %v4720 = vpow.pop %v4719
        %v4721 = vmul.f32 %v4667, 1.442695
        %v4722 = vpow.pop %v4721
        %v4723 = vmul.f32 %v4668, 1.442695
        %v4724 = vpow.pop %v4723
        %v4725 = vmul.f32 %v4669, 1.442695
        %v4726 = vpow.pop %v4725
        %v4727 = vmul.f32 %v4670, 1.442695
        %v4728 = vpow.pop %v4727
        %v4729 = vmul.f32 %v4671, 1.442695
        %v4730 = vpow.pop %v4729
        %v4731 = vmul.f32 %v4672, 1.442695
        %v4732 = vpow.pop %v4731
        %v4733 = vmul.f32 %v4673, 1.442695
        %v4734 = vpow.pop %v4733
        %v4735 = vmul.f32 %v4674, 1.442695
        %v4736 = vpow.pop %v4735
        %v4737 = vmul.f32 %v4675, 1.442695
        %v4738 = vpow.pop %v4737
        %v4739 = vmul.f32 %v4676, 1.442695
        %v4740 = vpow.pop %v4739
        %v4741 = vadd.f32 %v4678, %v4680
        %v4742 = vadd.f32 %v4741, %v4682
        %v4743 = vadd.f32 %v4742, %v4684
        %v4744 = vadd.f32 %v4743, %v4686
        %v4745 = vadd.f32 %v4744, %v4688
        %v4746 = vadd.f32 %v4745, %v4690
        %v4747 = vadd.f32 %v4746, %v4692
        %v4748 = vadd.f32 %v4747, %v4694
        %v4749 = vadd.f32 %v4748, %v4696
        %v4750 = vadd.f32 %v4749, %v4698
        %v4751 = vadd.f32 %v4750, %v4700
        %v4752 = vadd.f32 %v4751, %v4702
        %v4753 = vadd.f32 %v4752, %v4704
        %v4754 = vadd.f32 %v4753, %v4706
        %v4755 = vadd.f32 %v4754, %v4708
        %v4756 = vadd.f32 %v4755, %v4710
        %v4757 = vadd.f32 %v4756, %v4712
        %v4758 = vadd.f32 %v4757, %v4714
        %v4759 = vadd.f32 %v4758, %v4716
        %v4760 = vadd.f32 %v4759, %v4718
        %v4761 = vadd.f32 %v4760, %v4720
        %v4762 = vadd.f32 %v4761, %v4722
        %v4763 = vadd.f32 %v4762, %v4724
        %v4764 = vadd.f32 %v4763, %v4726
        %v4765 = vadd.f32 %v4764, %v4728
        %v4766 = vadd.f32 %v4765, %v4730
        %v4767 = vadd.f32 %v4766, %v4732
        %v4768 = vadd.f32 %v4767, %v4734
        %v4769 = vadd.f32 %v4768, %v4736
        %v4770 = vadd.f32 %v4769, %v4738
        %v4771 = vadd.f32 %v4770, %v4740
        %v4772 = vrot.slane %v4771, 4
        %v4773 = vadd.f32 %v4771, %v4772
        %v4774 = vrot.slane %v4773, 2
        %v4775 = vadd.f32 %v4773, %v4774
        %v4776 = vrot.slane %v4775, 1
        %v4777 = vadd.f32 %v4775, %v4776
        %v4778 = vrcp.pop %v4777
        %v4779 = vpack.c.bf16 %v4680, %v4678
        %v4780 = vpack.c.bf16 %v4684, %v4682
        %v4781 = vpack.c.bf16 %v4688, %v4686
        %v4782 = vpack.c.bf16 %v4692, %v4690
        %v4783 = vpack.c.bf16 %v4696, %v4694
        %v4784 = vpack.c.bf16 %v4700, %v4698
        %v4785 = vpack.c.bf16 %v4704, %v4702
        %v4786 = vpack.c.bf16 %v4708, %v4706
        %v4787 = vpack.c.bf16 %v4712, %v4710
        %v4788 = vpack.c.bf16 %v4716, %v4714
        %v4789 = vpack.c.bf16 %v4720, %v4718
        %v4790 = vpack.c.bf16 %v4724, %v4722
        %v4791 = vpack.c.bf16 %v4728, %v4726
        %v4792 = vpack.c.bf16 %v4732, %v4730
        %v4793 = vpack.c.bf16 %v4736, %v4734
        %v4794 = vpack.c.bf16 %v4740, %v4738
        %4795 = vmatprep.subr.bf16.mxu0 0
        %4796 = vmatpush1.bf16.msra.mxu0 %v4786
        %4797 = vmatprep.subr.bf16.mxu0 0
        %4798 = vmatpush1.bf16.msra.mxu0 %v4785
        %4799 = vmatprep.subr.bf16.mxu0 0
        %4800 = vmatpush1.bf16.msra.mxu0 %v4784
        %4801 = vmatprep.subr.bf16.mxu0 0
        %4802 = vmatpush1.bf16.msra.mxu0 %v4783
        %4803 = vmatprep.subr.bf16.mxu0 0
        %4804 = vmatpush1.bf16.msra.mxu0 %v4782
        %4805 = vmatprep.subr.bf16.mxu0 0
        %4806 = vmatpush1.bf16.msra.mxu0 %v4781
        %4807 = vmatprep.subr.bf16.mxu0 0
        %4808 = vmatpush1.bf16.msra.mxu0 %v4780
        %4809 = vmatprep.subr.bf16.mxu0 0
        %4810 = vmatpush1.bf16.msra.mxu0 %v4779
        %4811 = vmatprep.subr.bf16.mxu0 0
        %4812 = vmatpush2.bf16.msra.mxu0 %v4794
        %4813 = vmatprep.subr.bf16.mxu0 0
        %4814 = vmatpush2.bf16.msra.mxu0 %v4793
        %4815 = vmatprep.subr.bf16.mxu0 0
        %4816 = vmatpush2.bf16.msra.mxu0 %v4792
        %4817 = vmatprep.subr.bf16.mxu0 0
        %4818 = vmatpush2.bf16.msra.mxu0 %v4791
        %4819 = vmatprep.subr.bf16.mxu0 0
        %4820 = vmatpush2.bf16.msra.mxu0 %v4790
        %4821 = vmatprep.subr.bf16.mxu0 0
        %4822 = vmatpush2.bf16.msra.mxu0 %v4789
        %4823 = vmatprep.subr.bf16.mxu0 0
        %4824 = vmatpush2.bf16.msra.mxu0 %v4788
        %4825 = vmatprep.subr.bf16.mxu0 0
        %4826 = vmatpush2.bf16.msra.mxu0 %v4787
        %4827 = vmatprep.mubr.bf16.mxu0 %v3800
        %4828 = vmatmul.mubr.bf16.gmra.mxu0 %v3799
        %v4829 = vpop.f32.mrf.mxu0
        %v4830 = vadd.f32 0.0, %v4829
        %v4831 = vpop.f32.mrf.mxu0
        %v4832 = vpop.f32.mrf.mxu0
        %v4833 = vpop.f32.mrf.mxu0
        %4834 = vdwg.mxu0
        %v4835 = vmul.f32 %v4830, %v4778
        %4836 = vst [vmem:[#allocation2 + $0x38] sm:$0xff] %v4835
        %v4837 = vld [vmem:[%s5] sm:$0xf]
        %v4838 = vld [vmem:[%s5 + $0x4] sm:$0xf]
        %v4839 = vld [vmem:[%s5 + $0x8] sm:$0xf]
        %v4840 = vld [vmem:[%s5 + $0xc] sm:$0xf]
        %v4841 = vld [vmem:[#allocation2] sm:$0xff]
        %v4842 = vld [vmem:[#allocation2 + $0x8] sm:$0xff]
        %v4843 = vld [vmem:[#allocation2 + $0x10] sm:$0xff]
        %v4844 = vld [vmem:[#allocation2 + $0x18] sm:$0xff]
        %v4845 = vld [vmem:[#allocation2 + $0x20] sm:$0xff]
        %v4846 = vld [vmem:[#allocation2 + $0x28] sm:$0xff]
        %v4847 = vld [vmem:[#allocation2 + $0x30] sm:$0xff]
        %v4848 = vld [vmem:[#allocation2 + $0x38] sm:$0xff]
        %v4849 = vpack.c.bf16 %v4843, %v4841
        %v4850 = vpack.c.bf16 %v4844, %v4842
        %v4851 = vpack.c.bf16 %v4847, %v4845
        %v4852 = vpack.c.bf16 %v4848, %v4846
        %v4853 = vld [vmem:[%s6] sm:$0xff]
        %v4854 = vld [vmem:[%s6 + $0x8] sm:$0xff]
        %v4855 = vld [vmem:[%s6 + $0x10] sm:$0xff]
        %v4856 = vld [vmem:[%s6 + $0x18] sm:$0xff]
        %4858 = vset.pattern.permute.xlu0 0
        %4859 = vperm.xlu0 %4858, %v4853
        %v4860 = vpop.permute.xlu0 %4859
        %4863 = vset.pattern.permute.xlu0 0
        %4864 = vperm.xlu0 %4863, %v4854
        %v4865 = vpop.permute.xlu0 %4864
        %4868 = vset.pattern.permute.xlu0 0
        %4869 = vperm.xlu0 %4868, %v4855
        %v4870 = vpop.permute.xlu0 %4869
        %4873 = vset.pattern.permute.xlu0 0
        %4874 = vperm.xlu0 %4873, %v4856
        %v4875 = vpop.permute.xlu0 %4874
        %v4881 = vunpack.c.l.b16 %v4837
        %v4882 = vunpack.c.l.b16 %v4838
        %v4883 = vunpack.c.l.b16 %v4839
        %v4884 = vunpack.c.l.b16 %v4840
        %v4885 = vpack.c.b16 %v4882, %v4881
        %v4886 = vpack.c.b16 %v4884, %v4883
        %v4888 = vsel %vm355, %v4885, 0
        %v4891 = vsel %vm355, %v4886, 0
        %4893 = vmatprep.subr.bf16.mxu0 0
        %4894 = vmatpush1.bf16.msra.mxu0 0
        %4895 = vmatprep.subr.bf16.mxu0 0
        %4896 = vmatpush1.bf16.msra.mxu0 0
        %4897 = vmatprep.subr.bf16.mxu0 0
        %4898 = vmatpush1.bf16.msra.mxu0 0
        %4899 = vmatprep.subr.bf16.mxu0 0
        %4900 = vmatpush1.bf16.msra.mxu0 0
        %4901 = vmatprep.subr.bf16.mxu0 0
        %4902 = vmatpush1.bf16.msra.mxu0 0
        %4903 = vmatprep.subr.bf16.mxu0 0
        %4904 = vmatpush1.bf16.msra.mxu0 0
        %4905 = vmatprep.subr.bf16.mxu0 %v4852
        %4906 = vmatpush1.bf16.msra.mxu0 %v4851
        %4907 = vmatprep.subr.bf16.mxu0 %v4850
        %4908 = vmatpush1.bf16.msra.mxu0 %v4849
        %4909 = vmatprep.subr.bf16.mxu0 0
        %4910 = vmatpush2.bf16.msra.mxu0 0
        %4911 = vmatprep.subr.bf16.mxu0 0
        %4912 = vmatpush2.bf16.msra.mxu0 0
        %4913 = vmatprep.subr.bf16.mxu0 0
        %4914 = vmatpush2.bf16.msra.mxu0 0
        %4915 = vmatprep.subr.bf16.mxu0 0
        %4916 = vmatpush2.bf16.msra.mxu0 0
        %4917 = vmatprep.subr.bf16.mxu0 0
        %4918 = vmatpush2.bf16.msra.mxu0 0
        %4919 = vmatprep.subr.bf16.mxu0 0
        %4920 = vmatpush2.bf16.msra.mxu0 0
        %4921 = vmatprep.subr.bf16.mxu0 0
        %4922 = vmatpush2.bf16.msra.mxu0 0
        %4923 = vmatprep.subr.bf16.mxu0 0
        %4924 = vmatpush2.bf16.msra.mxu0 0
        %4925 = vmatprep.mubr.bf16.mxu0 0
        %4926 = vmatmul.mubr.bf16.gmra.mxu0 %v4888
        %v4927 = vpop.f32.mrf.mxu0
        %v4928 = vadd.f32 %v4860, %v4927
        %v4929 = vpop.f32.mrf.mxu0
        %v4930 = vadd.f32 %v4860, %v4929
        %v4931 = vpop.f32.mrf.mxu0
        %v4932 = vadd.f32 %v4865, %v4931
        %v4933 = vpop.f32.mrf.mxu0
        %v4934 = vadd.f32 %v4865, %v4933
        %4935 = vmatprep.mubr.bf16.mxu0 0
        %4936 = vmatmul.mubr.bf16.gmra.mxu0 %v4891
        %v4937 = vpop.f32.mrf.mxu0
        %v4938 = vadd.f32 %v4870, %v4937
        %v4939 = vpop.f32.mrf.mxu0
        %v4940 = vadd.f32 %v4870, %v4939
        %v4941 = vpop.f32.mrf.mxu0
        %v4942 = vadd.f32 %v4875, %v4941
        %v4943 = vpop.f32.mrf.mxu0
        %v4944 = vadd.f32 %v4875, %v4943
        %4945 = vdwg.mxu0
        %v4946 = vadd.f32 %v4928, %v415
        %v4947 = vadd.f32 %v4930, %v416
        %v4948 = vadd.f32 %v4932, %v417
        %v4949 = vadd.f32 %v4934, %v418
        %v4950 = vadd.f32 %v4938, %v419
        %v4951 = vadd.f32 %v4940, %v420
        %v4952 = vadd.f32 %v4942, %v421
        %v4953 = vadd.f32 %v4944, %v422
        %v4954 = vld [vmem:[%s7] sm:$0xf]
        %v4955 = vld [vmem:[%s7 + $0x4] sm:$0xf]
        %v4956 = vld [vmem:[%s7 + $0x8] sm:$0xf]
        %v4957 = vld [vmem:[%s7 + $0xc] sm:$0xf]
        %v4958 = vpack.c.bf16 %v4948, %v4946
        %v4959 = vpack.c.bf16 %v4949, %v4947
        %v4960 = vpack.c.bf16 %v4952, %v4950
        %v4961 = vpack.c.bf16 %v4953, %v4951
        %v4966 = vunpack.c.l.b16 %v4954
        %v4967 = vunpack.c.l.b16 %v4955
        %v4968 = vunpack.c.l.b16 %v4956
        %v4969 = vunpack.c.l.b16 %v4957
        %v4970 = vpack.c.b16 %v4967, %v4966
        %v4971 = vpack.c.b16 %v4969, %v4968
        %v4973 = vsel %vm355, %v4970, 0
        %v4976 = vsel %vm355, %v4971, 0
        %4978 = vmatprep.subr.bf16.mxu0 0
        %4979 = vmatpush1.bf16.msra.mxu0 0
        %4980 = vmatprep.subr.bf16.mxu0 0
        %4981 = vmatpush1.bf16.msra.mxu0 0
        %4982 = vmatprep.subr.bf16.mxu0 0
        %4983 = vmatpush1.bf16.msra.mxu0 0
        %4984 = vmatprep.subr.bf16.mxu0 0
        %4985 = vmatpush1.bf16.msra.mxu0 0
        %4986 = vmatprep.subr.bf16.mxu0 0
        %4987 = vmatpush1.bf16.msra.mxu0 0
        %4988 = vmatprep.subr.bf16.mxu0 0
        %4989 = vmatpush1.bf16.msra.mxu0 0
        %4990 = vmatprep.subr.bf16.mxu0 %v4961
        %4991 = vmatpush1.bf16.msra.mxu0 %v4960
        %4992 = vmatprep.subr.bf16.mxu0 %v4959
        %4993 = vmatpush1.bf16.msra.mxu0 %v4958
        %4994 = vmatprep.subr.bf16.mxu0 0
        %4995 = vmatpush2.bf16.msra.mxu0 0
        %4996 = vmatprep.subr.bf16.mxu0 0
        %4997 = vmatpush2.bf16.msra.mxu0 0
        %4998 = vmatprep.subr.bf16.mxu0 0
        %4999 = vmatpush2.bf16.msra.mxu0 0
        %5000 = vmatprep.subr.bf16.mxu0 0
        %5001 = vmatpush2.bf16.msra.mxu0 0
        %5002 = vmatprep.subr.bf16.mxu0 0
        %5003 = vmatpush2.bf16.msra.mxu0 0
        %5004 = vmatprep.subr.bf16.mxu0 0
        %5005 = vmatpush2.bf16.msra.mxu0 0
        %5006 = vmatprep.subr.bf16.mxu0 0
        %5007 = vmatpush2.bf16.msra.mxu0 0
        %5008 = vmatprep.subr.bf16.mxu0 0
        %5009 = vmatpush2.bf16.msra.mxu0 0
        %5010 = vmatprep.mubr.bf16.mxu0 0
        %5011 = vmatmul.mubr.bf16.gmra.mxu0 %v4973
        %v5012 = vpop.f32.mrf.mxu0
        %v5013 = vadd.f32 %v4946, %v5012
        %v5014 = vpop.f32.mrf.mxu0
        %v5015 = vadd.f32 %v4947, %v5014
        %v5016 = vpop.f32.mrf.mxu0
        %v5017 = vadd.f32 %v4948, %v5016
        %v5018 = vpop.f32.mrf.mxu0
        %v5019 = vadd.f32 %v4949, %v5018
        %5020 = vmatprep.mubr.bf16.mxu0 0
        %5021 = vmatmul.mubr.bf16.gmra.mxu0 %v4976
        %v5022 = vpop.f32.mrf.mxu0
        %v5023 = vadd.f32 %v4950, %v5022
        %v5024 = vpop.f32.mrf.mxu0
        %v5025 = vadd.f32 %v4951, %v5024
        %v5026 = vpop.f32.mrf.mxu0
        %v5027 = vadd.f32 %v4952, %v5026
        %v5028 = vpop.f32.mrf.mxu0
        %v5029 = vadd.f32 %v4953, %v5028
        %5030 = vdwg.mxu0
        %s5031 = scalar_lea.vmem %s3, 48
        %v5032 = vld [vmem:[%s5031] sm:$0xf]
        %v5033 = vld [vmem:[%s5031 + $0x4] sm:$0xf]
        %v5034 = vld [vmem:[%s5031 + $0x8] sm:$0xf]
        %v5035 = vld [vmem:[%s5031 + $0xc] sm:$0xf]
        %v5036 = vld [vmem:[%s5031 + $0x10] sm:$0xf]
        %v5037 = vld [vmem:[%s5031 + $0x14] sm:$0xf]
        %v5038 = vld [vmem:[%s5031 + $0x18] sm:$0xf]
        %v5039 = vld [vmem:[%s5031 + $0x1c] sm:$0xf]
        %v5040 = vld [vmem:[%s5031 + $0x20] sm:$0xf]
        %v5041 = vld [vmem:[%s5031 + $0x24] sm:$0xf]
        %v5042 = vld [vmem:[%s5031 + $0x28] sm:$0xf]
        %v5043 = vld [vmem:[%s5031 + $0x2c] sm:$0xf]
        %v5044 = vpack.c.bf16 %v5017, %v5013
        %v5045 = vpack.c.bf16 %v5019, %v5015
        %v5046 = vpack.c.bf16 %v5027, %v5023
        %v5047 = vpack.c.bf16 %v5029, %v5025
        %s5048 = scalar_lea.vmem %s4, 96
        %v5049 = vld [vmem:[%s5048] sm:$0xff]
        %v5050 = vld [vmem:[%s5048 + $0x8] sm:$0xff]
        %v5051 = vld [vmem:[%s5048 + $0x10] sm:$0xff]
        %v5052 = vld [vmem:[%s5048 + $0x18] sm:$0xff]
        %v5053 = vld [vmem:[%s5048 + $0x20] sm:$0xff]
        %v5054 = vld [vmem:[%s5048 + $0x28] sm:$0xff]
        %v5055 = vld [vmem:[%s5048 + $0x30] sm:$0xff]
        %v5056 = vld [vmem:[%s5048 + $0x38] sm:$0xff]
        %v5057 = vld [vmem:[%s5048 + $0x40] sm:$0xff]
        %v5058 = vld [vmem:[%s5048 + $0x48] sm:$0xff]
        %v5059 = vld [vmem:[%s5048 + $0x50] sm:$0xff]
        %v5060 = vld [vmem:[%s5048 + $0x58] sm:$0xff]
        %5062 = vset.pattern.permute.xlu0 0
        %5063 = vperm.xlu0 %5062, %v5049
        %v5064 = vpop.permute.xlu0 %5063
        %5067 = vset.pattern.permute.xlu0 0
        %5068 = vperm.xlu0 %5067, %v5050
        %v5069 = vpop.permute.xlu0 %5068
        %5072 = vset.pattern.permute.xlu0 0
        %5073 = vperm.xlu0 %5072, %v5051
        %v5074 = vpop.permute.xlu0 %5073
        %5077 = vset.pattern.permute.xlu0 0
        %5078 = vperm.xlu0 %5077, %v5052
        %v5079 = vpop.permute.xlu0 %5078
        %5082 = vset.pattern.permute.xlu0 0
        %5083 = vperm.xlu0 %5082, %v5053
        %v5084 = vpop.permute.xlu0 %5083
        %5087 = vset.pattern.permute.xlu0 0
        %5088 = vperm.xlu0 %5087, %v5054
        %v5089 = vpop.permute.xlu0 %5088
        %5092 = vset.pattern.permute.xlu0 0
        %5093 = vperm.xlu0 %5092, %v5055
        %v5094 = vpop.permute.xlu0 %5093
        %5097 = vset.pattern.permute.xlu0 0
        %5098 = vperm.xlu0 %5097, %v5056
        %v5099 = vpop.permute.xlu0 %5098
        %5102 = vset.pattern.permute.xlu0 0
        %5103 = vperm.xlu0 %5102, %v5057
        %v5104 = vpop.permute.xlu0 %5103
        %5107 = vset.pattern.permute.xlu0 0
        %5108 = vperm.xlu0 %5107, %v5058
        %v5109 = vpop.permute.xlu0 %5108
        %5112 = vset.pattern.permute.xlu0 0
        %5113 = vperm.xlu0 %5112, %v5059
        %v5114 = vpop.permute.xlu0 %5113
        %5117 = vset.pattern.permute.xlu0 0
        %5118 = vperm.xlu0 %5117, %v5060
        %v5119 = vpop.permute.xlu0 %5118
        %v5133 = vunpack.c.l.b16 %v5032
        %v5134 = vunpack.c.l.b16 %v5033
        %v5135 = vunpack.c.l.b16 %v5034
        %v5136 = vunpack.c.l.b16 %v5035
        %v5137 = vunpack.c.l.b16 %v5036
        %v5138 = vunpack.c.l.b16 %v5037
        %v5139 = vunpack.c.l.b16 %v5038
        %v5140 = vunpack.c.l.b16 %v5039
        %v5141 = vunpack.c.l.b16 %v5040
        %v5142 = vunpack.c.l.b16 %v5041
        %v5143 = vunpack.c.l.b16 %v5042
        %v5144 = vunpack.c.l.b16 %v5043
        %v5145 = vpack.c.b16 %v5134, %v5133
        %v5146 = vpack.c.b16 %v5136, %v5135
        %v5147 = vpack.c.b16 %v5138, %v5137
        %v5148 = vpack.c.b16 %v5140, %v5139
        %v5149 = vpack.c.b16 %v5142, %v5141
        %v5150 = vpack.c.b16 %v5144, %v5143
        %v5152 = vsel %vm355, %v5145, 0
        %v5155 = vsel %vm355, %v5146, 0
        %v5158 = vsel %vm355, %v5147, 0
        %v5161 = vsel %vm355, %v5148, 0
        %v5164 = vsel %vm355, %v5149, 0
        %v5167 = vsel %vm355, %v5150, 0
        %5169 = vmatprep.subr.bf16.mxu0 0
        %5170 = vmatpush1.bf16.msra.mxu0 0
        %5171 = vmatprep.subr.bf16.mxu0 0
        %5172 = vmatpush1.bf16.msra.mxu0 0
        %5173 = vmatprep.subr.bf16.mxu0 0
        %5174 = vmatpush1.bf16.msra.mxu0 0
        %5175 = vmatprep.subr.bf16.mxu0 0
        %5176 = vmatpush1.bf16.msra.mxu0 0
        %5177 = vmatprep.subr.bf16.mxu0 0
        %5178 = vmatpush1.bf16.msra.mxu0 0
        %5179 = vmatprep.subr.bf16.mxu0 0
        %5180 = vmatpush1.bf16.msra.mxu0 0
        %5181 = vmatprep.subr.bf16.mxu0 %v5047
        %5182 = vmatpush1.bf16.msra.mxu0 %v5046
        %5183 = vmatprep.subr.bf16.mxu0 %v5045
        %5184 = vmatpush1.bf16.msra.mxu0 %v5044
        %5185 = vmatprep.subr.bf16.mxu0 0
        %5186 = vmatpush2.bf16.msra.mxu0 0
        %5187 = vmatprep.subr.bf16.mxu0 0
        %5188 = vmatpush2.bf16.msra.mxu0 0
        %5189 = vmatprep.subr.bf16.mxu0 0
        %5190 = vmatpush2.bf16.msra.mxu0 0
        %5191 = vmatprep.subr.bf16.mxu0 0
        %5192 = vmatpush2.bf16.msra.mxu0 0
        %5193 = vmatprep.subr.bf16.mxu0 0
        %5194 = vmatpush2.bf16.msra.mxu0 0
        %5195 = vmatprep.subr.bf16.mxu0 0
        %5196 = vmatpush2.bf16.msra.mxu0 0
        %5197 = vmatprep.subr.bf16.mxu0 0
        %5198 = vmatpush2.bf16.msra.mxu0 0
        %5199 = vmatprep.subr.bf16.mxu0 0
        %5200 = vmatpush2.bf16.msra.mxu0 0
        %5201 = vmatprep.mubr.bf16.mxu0 0
        %5202 = vmatmul.mubr.bf16.gmra.mxu0 %v5152
        %v5203 = vpop.f32.mrf.mxu0
        %v5204 = vadd.f32 %v5064, %v5203
        %v5205 = vpop.f32.mrf.mxu0
        %v5206 = vadd.f32 %v5064, %v5205
        %v5207 = vpop.f32.mrf.mxu0
        %v5208 = vadd.f32 %v5069, %v5207
        %v5209 = vpop.f32.mrf.mxu0
        %v5210 = vadd.f32 %v5069, %v5209
        %5211 = vmatprep.mubr.bf16.mxu0 0
        %5212 = vmatmul.mubr.bf16.gmra.mxu0 %v5155
        %v5213 = vpop.f32.mrf.mxu0
        %v5214 = vadd.f32 %v5074, %v5213
        %v5215 = vpop.f32.mrf.mxu0
        %v5216 = vadd.f32 %v5074, %v5215
        %v5217 = vpop.f32.mrf.mxu0
        %v5218 = vadd.f32 %v5079, %v5217
        %v5219 = vpop.f32.mrf.mxu0
        %v5220 = vadd.f32 %v5079, %v5219
        %5221 = vmatprep.mubr.bf16.mxu0 0
        %5222 = vmatmul.mubr.bf16.gmra.mxu0 %v5158
        %v5223 = vpop.f32.mrf.mxu0
        %v5224 = vadd.f32 %v5084, %v5223
        %v5225 = vpop.f32.mrf.mxu0
        %v5226 = vadd.f32 %v5084, %v5225
        %v5227 = vpop.f32.mrf.mxu0
        %v5228 = vadd.f32 %v5089, %v5227
        %v5229 = vpop.f32.mrf.mxu0
        %v5230 = vadd.f32 %v5089, %v5229
        %5231 = vmatprep.mubr.bf16.mxu0 0
        %5232 = vmatmul.mubr.bf16.gmra.mxu0 %v5161
        %v5233 = vpop.f32.mrf.mxu0
        %v5234 = vadd.f32 %v5094, %v5233
        %v5235 = vpop.f32.mrf.mxu0
        %v5236 = vadd.f32 %v5094, %v5235
        %v5237 = vpop.f32.mrf.mxu0
        %v5238 = vadd.f32 %v5099, %v5237
        %v5239 = vpop.f32.mrf.mxu0
        %v5240 = vadd.f32 %v5099, %v5239
        %5241 = vmatprep.mubr.bf16.mxu0 0
        %5242 = vmatmul.mubr.bf16.gmra.mxu0 %v5164
        %v5243 = vpop.f32.mrf.mxu0
        %v5244 = vadd.f32 %v5104, %v5243
        %v5245 = vpop.f32.mrf.mxu0
        %v5246 = vadd.f32 %v5104, %v5245
        %v5247 = vpop.f32.mrf.mxu0
        %v5248 = vadd.f32 %v5109, %v5247
        %v5249 = vpop.f32.mrf.mxu0
        %v5250 = vadd.f32 %v5109, %v5249
        %5251 = vmatprep.mubr.bf16.mxu0 0
        %5252 = vmatmul.mubr.bf16.gmra.mxu0 %v5167
        %v5253 = vpop.f32.mrf.mxu0
        %v5254 = vadd.f32 %v5114, %v5253
        %v5255 = vpop.f32.mrf.mxu0
        %v5256 = vadd.f32 %v5114, %v5255
        %v5257 = vpop.f32.mrf.mxu0
        %v5258 = vadd.f32 %v5119, %v5257
        %v5259 = vpop.f32.mrf.mxu0
        %v5260 = vadd.f32 %v5119, %v5259
        %5261 = vdwg.mxu0
        %5262 = vxpose.xlu0.b32.start [1/16] %v5224, 128
        %5263 = vxpose.xlu0.b32.cont [2/16] %v5228, 128
        %5264 = vxpose.xlu0.b32.cont [3/16] %v5234, 128
        %5265 = vxpose.xlu0.b32.cont [4/16] %v5238, 128
        %5266 = vxpose.xlu0.b32.cont [5/16] 0.0, 128
        %5267 = vxpose.xlu0.b32.cont [6/16] 0.0, 128
        %5268 = vxpose.xlu0.b32.cont [7/16] 0.0, 128
        %5269 = vxpose.xlu0.b32.cont [8/16] 0.0, 128
        %5270 = vxpose.xlu0.b32.cont [9/16] 0.0, 128
        %5271 = vxpose.xlu0.b32.cont [10/16] 0.0, 128
        %5272 = vxpose.xlu0.b32.cont [11/16] 0.0, 128
        %5273 = vxpose.xlu0.b32.cont [12/16] 0.0, 128
        %5274 = vxpose.xlu0.b32.cont [13/16] 0.0, 128
        %5275 = vxpose.xlu0.b32.cont [14/16] 0.0, 128
        %5276 = vxpose.xlu0.b32.cont [15/16] 0.0, 128
        %5277 = vxpose.xlu0.b32.end [16/16] 0.0, 128
        %v5278 = vpop.trf.xlu0
        %v5279 = vpop.trf.xlu0
        %v5280 = vpop.trf.xlu0
        %v5281 = vpop.trf.xlu0
        %v5282 = vpop.trf.xlu0
        %v5283 = vpop.trf.xlu0
        %v5284 = vpop.trf.xlu0
        %v5285 = vpop.trf.xlu0
        %v5286 = vpop.trf.xlu0
        %v5287 = vpop.trf.xlu0
        %v5288 = vpop.trf.xlu0
        %v5289 = vpop.trf.xlu0
        %v5290 = vpop.trf.xlu0
        %v5291 = vpop.trf.xlu0
        %v5292 = vpop.trf.xlu0
        %v5293 = vpop.trf.xlu0
        %5294 = vxpose.xlu0.b32.start [1/16] %v5226, 128
        %5295 = vxpose.xlu0.b32.cont [2/16] %v5230, 128
        %5296 = vxpose.xlu0.b32.cont [3/16] %v5236, 128
        %5297 = vxpose.xlu0.b32.cont [4/16] %v5240, 128
        %5298 = vxpose.xlu0.b32.cont [5/16] 0.0, 128
        %5299 = vxpose.xlu0.b32.cont [6/16] 0.0, 128
        %5300 = vxpose.xlu0.b32.cont [7/16] 0.0, 128
        %5301 = vxpose.xlu0.b32.cont [8/16] 0.0, 128
        %5302 = vxpose.xlu0.b32.cont [9/16] 0.0, 128
        %5303 = vxpose.xlu0.b32.cont [10/16] 0.0, 128
        %5304 = vxpose.xlu0.b32.cont [11/16] 0.0, 128
        %5305 = vxpose.xlu0.b32.cont [12/16] 0.0, 128
        %5306 = vxpose.xlu0.b32.cont [13/16] 0.0, 128
        %5307 = vxpose.xlu0.b32.cont [14/16] 0.0, 128
        %5308 = vxpose.xlu0.b32.cont [15/16] 0.0, 128
        %5309 = vxpose.xlu0.b32.end [16/16] 0.0, 128
        %v5310 = vpop.trf.xlu0
        %v5311 = vpop.trf.xlu0
        %v5312 = vpop.trf.xlu0
        %v5313 = vpop.trf.xlu0
        %v5314 = vpop.trf.xlu0
        %v5315 = vpop.trf.xlu0
        %v5316 = vpop.trf.xlu0
        %v5317 = vpop.trf.xlu0
        %v5318 = vpop.trf.xlu0
        %v5319 = vpop.trf.xlu0
        %v5320 = vpop.trf.xlu0
        %v5321 = vpop.trf.xlu0
        %v5322 = vpop.trf.xlu0
        %v5323 = vpop.trf.xlu0
        %v5324 = vpop.trf.xlu0
        %v5325 = vpop.trf.xlu0
        %v5326 = vpack.c.bf16 %v5244, %v5244
        %v5327 = vpack.c.bf16 %v5246, %v5246
        %v5329 = vsel %vm718, %v5278, 0
        %v5332 = vsel %vm718, %v5279, 0
        %v5335 = vsel %vm718, %v5280, 0
        %v5338 = vsel %vm718, %v5281, 0
        %v5341 = vsel %vm718, %v5282, 0
        %v5344 = vsel %vm718, %v5283, 0
        %v5347 = vsel %vm718, %v5284, 0
        %v5350 = vsel %vm718, %v5285, 0
        %v5353 = vsel %vm718, %v5286, 0
        %v5356 = vsel %vm718, %v5287, 0
        %v5359 = vsel %vm718, %v5288, 0
        %v5362 = vsel %vm718, %v5289, 0
        %v5365 = vsel %vm718, %v5290, 0
        %v5368 = vsel %vm718, %v5291, 0
        %v5371 = vsel %vm718, %v5292, 0
        %v5374 = vsel %vm718, %v5293, 0
        %v5377 = vsel %vm718, %v5310, 0
        %v5380 = vsel %vm718, %v5311, 0
        %v5383 = vsel %vm718, %v5312, 0
        %v5386 = vsel %vm718, %v5313, 0
        %v5389 = vsel %vm718, %v5314, 0
        %v5392 = vsel %vm718, %v5315, 0
        %v5395 = vsel %vm718, %v5316, 0
        %v5398 = vsel %vm718, %v5317, 0
        %v5401 = vsel %vm718, %v5318, 0
        %v5404 = vsel %vm718, %v5319, 0
        %v5407 = vsel %vm718, %v5320, 0
        %v5410 = vsel %vm718, %v5321, 0
        %v5413 = vsel %vm718, %v5322, 0
        %v5416 = vsel %vm718, %v5323, 0
        %v5419 = vsel %vm718, %v5324, 0
        %v5422 = vsel %vm718, %v5325, 0
        %5424 = vmatprep.subr.mxu0 0.0
        %5425 = vmatpush1.msra.mxu0 0.0
        %5426 = vmatprep.subr.mxu0 0.0
        %5427 = vmatpush1.msra.mxu0 0.0
        %5428 = vmatprep.subr.mxu0 0.0
        %5429 = vmatpush1.msra.mxu0 0.0
        %5430 = vmatprep.subr.mxu0 0.0
        %5431 = vmatpush1.msra.mxu0 0.0
        %5432 = vmatprep.subr.mxu0 0.0
        %5433 = vmatpush1.msra.mxu0 0.0
        %5434 = vmatprep.subr.mxu0 0.0
        %5435 = vmatpush1.msra.mxu0 0.0
        %5436 = vmatprep.subr.mxu0 0.0
        %5437 = vmatpush1.msra.mxu0 0.0
        %5438 = vmatprep.subr.mxu0 0.0
        %5439 = vmatpush1.msra.mxu0 0.0
        %5440 = vmatprep.subr.mxu0 0.0
        %5441 = vmatpush1.msra.mxu0 0.0
        %5442 = vmatprep.subr.mxu0 0.0
        %5443 = vmatpush1.msra.mxu0 0.0
        %5444 = vmatprep.subr.mxu0 0.0
        %5445 = vmatpush1.msra.mxu0 0.0
        %5446 = vmatprep.subr.mxu0 0.0
        %5447 = vmatpush1.msra.mxu0 0.0
        %5448 = vmatprep.subr.mxu0 0.0
        %5449 = vmatpush1.msra.mxu0 0.0
        %5450 = vmatprep.subr.mxu0 0.0
        %5451 = vmatpush1.msra.mxu0 0.0
        %5452 = vmatprep.subr.mxu0 0.0
        %5453 = vmatpush1.msra.mxu0 0.0
        %5454 = vmatprep.subr.mxu0 0.0
        %5455 = vmatpush1.msra.mxu0 %v5204
        %5456 = vmatprep.subr.mxu0 0.0
        %5457 = vmatpush2.msra.mxu0 0.0
        %5458 = vmatprep.subr.mxu0 0.0
        %5459 = vmatpush2.msra.mxu0 0.0
        %5460 = vmatprep.subr.mxu0 0.0
        %5461 = vmatpush2.msra.mxu0 0.0
        %5462 = vmatprep.subr.mxu0 0.0
        %5463 = vmatpush2.msra.mxu0 0.0
        %5464 = vmatprep.subr.mxu0 0.0
        %5465 = vmatpush2.msra.mxu0 0.0
        %5466 = vmatprep.subr.mxu0 0.0
        %5467 = vmatpush2.msra.mxu0 0.0
        %5468 = vmatprep.subr.mxu0 0.0
        %5469 = vmatpush2.msra.mxu0 0.0
        %5470 = vmatprep.subr.mxu0 0.0
        %5471 = vmatpush2.msra.mxu0 0.0
        %5472 = vmatprep.subr.mxu0 0.0
        %5473 = vmatpush2.msra.mxu0 0.0
        %5474 = vmatprep.subr.mxu0 0.0
        %5475 = vmatpush2.msra.mxu0 0.0
        %5476 = vmatprep.subr.mxu0 0.0
        %5477 = vmatpush2.msra.mxu0 0.0
        %5478 = vmatprep.subr.mxu0 0.0
        %5479 = vmatpush2.msra.mxu0 0.0
        %5480 = vmatprep.subr.mxu0 0.0
        %5481 = vmatpush2.msra.mxu0 0.0
        %5482 = vmatprep.subr.mxu0 0.0
        %5483 = vmatpush2.msra.mxu0 0.0
        %5484 = vmatprep.subr.mxu0 0.0
        %5485 = vmatpush2.msra.mxu0 0.0
        %5486 = vmatprep.subr.mxu0 0.0
        %5487 = vmatpush2.msra.mxu0 0.0
        %5488 = vmatprep.mubr.f32.mxu0 0.0
        %5489 = vmatmul.mubr.f32.gmra.mxu0 %v5329
        %v5490 = vpop.f32.mrf.mxu0
        %v5491 = vadd.f32 0.0, %v5490
        %v5492 = vpop.f32.mrf.mxu0
        %5493 = vmatprep.mubr.f32.mxu0 0.0
        %5494 = vmatmul.mubr.f32.gmra.mxu0 %v5332
        %v5495 = vpop.f32.mrf.mxu0
        %v5496 = vadd.f32 0.0, %v5495
        %v5497 = vpop.f32.mrf.mxu0
        %5498 = vmatprep.mubr.f32.mxu0 0.0
        %5499 = vmatmul.mubr.f32.gmra.mxu0 %v5335
        %v5500 = vpop.f32.mrf.mxu0
        %v5501 = vadd.f32 0.0, %v5500
        %v5502 = vpop.f32.mrf.mxu0
        %5503 = vmatprep.mubr.f32.mxu0 0.0
        %5504 = vmatmul.mubr.f32.gmra.mxu0 %v5338
        %v5505 = vpop.f32.mrf.mxu0
        %v5506 = vadd.f32 0.0, %v5505
        %v5507 = vpop.f32.mrf.mxu0
        %5508 = vmatprep.mubr.f32.mxu0 0.0
        %5509 = vmatmul.mubr.f32.gmra.mxu0 %v5341
        %v5510 = vpop.f32.mrf.mxu0
        %v5511 = vadd.f32 0.0, %v5510
        %v5512 = vpop.f32.mrf.mxu0
        %5513 = vmatprep.mubr.f32.mxu0 0.0
        %5514 = vmatmul.mubr.f32.gmra.mxu0 %v5344
        %v5515 = vpop.f32.mrf.mxu0
        %v5516 = vadd.f32 0.0, %v5515
        %v5517 = vpop.f32.mrf.mxu0
        %5518 = vmatprep.mubr.f32.mxu0 0.0
        %5519 = vmatmul.mubr.f32.gmra.mxu0 %v5347
        %v5520 = vpop.f32.mrf.mxu0
        %v5521 = vadd.f32 0.0, %v5520
        %v5522 = vpop.f32.mrf.mxu0
        %5523 = vmatprep.mubr.f32.mxu0 0.0
        %5524 = vmatmul.mubr.f32.gmra.mxu0 %v5350
        %v5525 = vpop.f32.mrf.mxu0
        %v5526 = vadd.f32 0.0, %v5525
        %v5527 = vpop.f32.mrf.mxu0
        %5528 = vmatprep.mubr.f32.mxu0 0.0
        %5529 = vmatmul.mubr.f32.gmra.mxu0 %v5353
        %v5530 = vpop.f32.mrf.mxu0
        %v5531 = vadd.f32 0.0, %v5530
        %v5532 = vpop.f32.mrf.mxu0
        %5533 = vmatprep.mubr.f32.mxu0 0.0
        %5534 = vmatmul.mubr.f32.gmra.mxu0 %v5356
        %v5535 = vpop.f32.mrf.mxu0
        %v5536 = vadd.f32 0.0, %v5535
        %v5537 = vpop.f32.mrf.mxu0
        %5538 = vmatprep.mubr.f32.mxu0 0.0
        %5539 = vmatmul.mubr.f32.gmra.mxu0 %v5359
        %v5540 = vpop.f32.mrf.mxu0
        %v5541 = vadd.f32 0.0, %v5540
        %v5542 = vpop.f32.mrf.mxu0
        %5543 = vmatprep.mubr.f32.mxu0 0.0
        %5544 = vmatmul.mubr.f32.gmra.mxu0 %v5362
        %v5545 = vpop.f32.mrf.mxu0
        %v5546 = vadd.f32 0.0, %v5545
        %v5547 = vpop.f32.mrf.mxu0
        %5548 = vmatprep.mubr.f32.mxu0 0.0
        %5549 = vmatmul.mubr.f32.gmra.mxu0 %v5365
        %v5550 = vpop.f32.mrf.mxu0
        %v5551 = vadd.f32 0.0, %v5550
        %v5552 = vpop.f32.mrf.mxu0
        %5553 = vmatprep.mubr.f32.mxu0 0.0
        %5554 = vmatmul.mubr.f32.gmra.mxu0 %v5368
        %v5555 = vpop.f32.mrf.mxu0
        %v5556 = vadd.f32 0.0, %v5555
        %v5557 = vpop.f32.mrf.mxu0
        %5558 = vmatprep.mubr.f32.mxu0 0.0
        %5559 = vmatmul.mubr.f32.gmra.mxu0 %v5371
        %v5560 = vpop.f32.mrf.mxu0
        %v5561 = vadd.f32 0.0, %v5560
        %v5562 = vpop.f32.mrf.mxu0
        %5563 = vmatprep.mubr.f32.mxu0 0.0
        %5564 = vmatmul.mubr.f32.gmra.mxu0 %v5374
        %v5565 = vpop.f32.mrf.mxu0
        %v5566 = vadd.f32 0.0, %v5565
        %v5567 = vpop.f32.mrf.mxu0
        %5568 = vmatprep.mubr.f32.mxu0 0.0
        %5569 = vmatmul.mubr.f32.gmra.mxu0 %v5377
        %v5570 = vpop.f32.mrf.mxu0
        %v5571 = vadd.f32 0.0, %v5570
        %v5572 = vpop.f32.mrf.mxu0
        %5573 = vmatprep.mubr.f32.mxu0 0.0
        %5574 = vmatmul.mubr.f32.gmra.mxu0 %v5380
        %v5575 = vpop.f32.mrf.mxu0
        %v5576 = vadd.f32 0.0, %v5575
        %v5577 = vpop.f32.mrf.mxu0
        %5578 = vmatprep.mubr.f32.mxu0 0.0
        %5579 = vmatmul.mubr.f32.gmra.mxu0 %v5383
        %v5580 = vpop.f32.mrf.mxu0
        %v5581 = vadd.f32 0.0, %v5580
        %v5582 = vpop.f32.mrf.mxu0
        %5583 = vmatprep.mubr.f32.mxu0 0.0
        %5584 = vmatmul.mubr.f32.gmra.mxu0 %v5386
        %v5585 = vpop.f32.mrf.mxu0
        %v5586 = vadd.f32 0.0, %v5585
        %v5587 = vpop.f32.mrf.mxu0
        %5588 = vmatprep.mubr.f32.mxu0 0.0
        %5589 = vmatmul.mubr.f32.gmra.mxu0 %v5389
        %v5590 = vpop.f32.mrf.mxu0
        %v5591 = vadd.f32 0.0, %v5590
        %v5592 = vpop.f32.mrf.mxu0
        %5593 = vmatprep.mubr.f32.mxu0 0.0
        %5594 = vmatmul.mubr.f32.gmra.mxu0 %v5392
        %v5595 = vpop.f32.mrf.mxu0
        %v5596 = vadd.f32 0.0, %v5595
        %v5597 = vpop.f32.mrf.mxu0
        %5598 = vmatprep.mubr.f32.mxu0 0.0
        %5599 = vmatmul.mubr.f32.gmra.mxu0 %v5395
        %v5600 = vpop.f32.mrf.mxu0
        %v5601 = vadd.f32 0.0, %v5600
        %v5602 = vpop.f32.mrf.mxu0
        %5603 = vmatprep.mubr.f32.mxu0 0.0
        %5604 = vmatmul.mubr.f32.gmra.mxu0 %v5398
        %v5605 = vpop.f32.mrf.mxu0
        %v5606 = vadd.f32 0.0, %v5605
        %v5607 = vpop.f32.mrf.mxu0
        %5608 = vmatprep.mubr.f32.mxu0 0.0
        %5609 = vmatmul.mubr.f32.gmra.mxu0 %v5401
        %v5610 = vpop.f32.mrf.mxu0
        %v5611 = vadd.f32 0.0, %v5610
        %v5612 = vpop.f32.mrf.mxu0
        %5613 = vmatprep.mubr.f32.mxu0 0.0
        %5614 = vmatmul.mubr.f32.gmra.mxu0 %v5404
        %v5615 = vpop.f32.mrf.mxu0
        %v5616 = vadd.f32 0.0, %v5615
        %v5617 = vpop.f32.mrf.mxu0
        %5618 = vmatprep.mubr.f32.mxu0 0.0
        %5619 = vmatmul.mubr.f32.gmra.mxu0 %v5407
        %v5620 = vpop.f32.mrf.mxu0
        %v5621 = vadd.f32 0.0, %v5620
        %v5622 = vpop.f32.mrf.mxu0
        %5623 = vmatprep.mubr.f32.mxu0 0.0
        %5624 = vmatmul.mubr.f32.gmra.mxu0 %v5410
        %v5625 = vpop.f32.mrf.mxu0
        %v5626 = vadd.f32 0.0, %v5625
        %v5627 = vpop.f32.mrf.mxu0
        %5628 = vmatprep.mubr.f32.mxu0 0.0
        %5629 = vmatmul.mubr.f32.gmra.mxu0 %v5413
        %v5630 = vpop.f32.mrf.mxu0
        %v5631 = vadd.f32 0.0, %v5630
        %v5632 = vpop.f32.mrf.mxu0
        %5633 = vmatprep.mubr.f32.mxu0 0.0
        %5634 = vmatmul.mubr.f32.gmra.mxu0 %v5416
        %v5635 = vpop.f32.mrf.mxu0
        %v5636 = vadd.f32 0.0, %v5635
        %v5637 = vpop.f32.mrf.mxu0
        %5638 = vmatprep.mubr.f32.mxu0 0.0
        %5639 = vmatmul.mubr.f32.gmra.mxu0 %v5419
        %v5640 = vpop.f32.mrf.mxu0
        %v5641 = vadd.f32 0.0, %v5640
        %v5642 = vpop.f32.mrf.mxu0
        %5643 = vmatprep.mubr.f32.mxu0 0.0
        %5644 = vmatmul.mubr.f32.gmra.mxu0 %v5422
        %v5645 = vpop.f32.mrf.mxu0
        %v5646 = vadd.f32 0.0, %v5645
        %v5647 = vpop.f32.mrf.mxu0
        %5648 = vdwg.mxu0
        %v5649 = vmax.f32 %v5491, %v5511
        %v5650 = vmax.f32 %v5496, %v5516
        %v5651 = vmax.f32 %v5501, %v5521
        %v5652 = vmax.f32 %v5506, %v5526
        %v5653 = vmax.f32 %v5649, %v5531
        %v5654 = vmax.f32 %v5650, %v5536
        %v5655 = vmax.f32 %v5651, %v5541
        %v5656 = vmax.f32 %v5652, %v5546
        %v5657 = vmax.f32 %v5653, %v5551
        %v5658 = vmax.f32 %v5654, %v5556
        %v5659 = vmax.f32 %v5655, %v5561
        %v5660 = vmax.f32 %v5656, %v5566
        %v5661 = vmax.f32 %v5657, %v5571
        %v5662 = vmax.f32 %v5658, %v5576
        %v5663 = vmax.f32 %v5659, %v5581
        %v5664 = vmax.f32 %v5660, %v5586
        %v5665 = vmax.f32 %v5661, %v5591
        %v5666 = vmax.f32 %v5662, %v5596
        %v5667 = vmax.f32 %v5663, %v5601
        %v5668 = vmax.f32 %v5664, %v5606
        %v5669 = vmax.f32 %v5665, %v5611
        %v5670 = vmax.f32 %v5666, %v5616
        %v5671 = vmax.f32 %v5667, %v5621
        %v5672 = vmax.f32 %v5668, %v5626
        %v5673 = vmax.f32 %v5669, %v5631
        %v5674 = vmax.f32 %v5670, %v5636
        %v5675 = vmax.f32 %v5671, %v5641
        %v5676 = vmax.f32 %v5672, %v5646
        %v5677 = vmax.f32 %v5673, %v5674
        %v5678 = vmax.f32 %v5675, %v5676
        %v5679 = vmax.f32 %v5677, %v5678
        %v5680 = vrot.slane %v5679, 4
        %v5681 = vmax.f32 %v5679, %v5680
        %v5682 = vrot.slane %v5681, 2
        %v5683 = vmax.f32 %v5681, %v5682
        %v5684 = vrot.slane %v5683, 1
        %v5685 = vmax.f32 %v5683, %v5684
        %v5686 = vsub.f32 %v5491, %v5685
        %v5687 = vsub.f32 %v5496, %v5685
        %v5688 = vsub.f32 %v5501, %v5685
        %v5689 = vsub.f32 %v5506, %v5685
        %v5690 = vsub.f32 %v5511, %v5685
        %v5691 = vsub.f32 %v5516, %v5685
        %v5692 = vsub.f32 %v5521, %v5685
        %v5693 = vsub.f32 %v5526, %v5685
        %v5694 = vsub.f32 %v5531, %v5685
        %v5695 = vsub.f32 %v5536, %v5685
        %v5696 = vsub.f32 %v5541, %v5685
        %v5697 = vsub.f32 %v5546, %v5685
        %v5698 = vsub.f32 %v5551, %v5685
        %v5699 = vsub.f32 %v5556, %v5685
        %v5700 = vsub.f32 %v5561, %v5685
        %v5701 = vsub.f32 %v5566, %v5685
        %v5702 = vsub.f32 %v5571, %v5685
        %v5703 = vsub.f32 %v5576, %v5685
        %v5704 = vsub.f32 %v5581, %v5685
        %v5705 = vsub.f32 %v5586, %v5685
        %v5706 = vsub.f32 %v5591, %v5685
        %v5707 = vsub.f32 %v5596, %v5685
        %v5708 = vsub.f32 %v5601, %v5685
        %v5709 = vsub.f32 %v5606, %v5685
        %v5710 = vsub.f32 %v5611, %v5685
        %v5711 = vsub.f32 %v5616, %v5685
        %v5712 = vsub.f32 %v5621, %v5685
        %v5713 = vsub.f32 %v5626, %v5685
        %v5714 = vsub.f32 %v5631, %v5685
        %v5715 = vsub.f32 %v5636, %v5685
        %v5716 = vsub.f32 %v5641, %v5685
        %v5717 = vsub.f32 %v5646, %v5685
        %v5718 = vmul.f32 %v5686, 1.442695
        %v5719 = vpow.pop %v5718
        %v5720 = vmul.f32 %v5687, 1.442695
        %v5721 = vpow.pop %v5720
        %v5722 = vmul.f32 %v5688, 1.442695
        %v5723 = vpow.pop %v5722
        %v5724 = vmul.f32 %v5689, 1.442695
        %v5725 = vpow.pop %v5724
        %v5726 = vmul.f32 %v5690, 1.442695
        %v5727 = vpow.pop %v5726
        %v5728 = vmul.f32 %v5691, 1.442695
        %v5729 = vpow.pop %v5728
        %v5730 = vmul.f32 %v5692, 1.442695
        %v5731 = vpow.pop %v5730
        %v5732 = vmul.f32 %v5693, 1.442695
        %v5733 = vpow.pop %v5732
        %v5734 = vmul.f32 %v5694, 1.442695
        %v5735 = vpow.pop %v5734
        %v5736 = vmul.f32 %v5695, 1.442695
        %v5737 = vpow.pop %v5736
        %v5738 = vmul.f32 %v5696, 1.442695
        %v5739 = vpow.pop %v5738
        %v5740 = vmul.f32 %v5697, 1.442695
        %v5741 = vpow.pop %v5740
        %v5742 = vmul.f32 %v5698, 1.442695
        %v5743 = vpow.pop %v5742
        %v5744 = vmul.f32 %v5699, 1.442695
        %v5745 = vpow.pop %v5744
        %v5746 = vmul.f32 %v5700, 1.442695
        %v5747 = vpow.pop %v5746
        %v5748 = vmul.f32 %v5701, 1.442695
        %v5749 = vpow.pop %v5748
        %v5750 = vmul.f32 %v5702, 1.442695
        %v5751 = vpow.pop %v5750
        %v5752 = vmul.f32 %v5703, 1.442695
        %v5753 = vpow.pop %v5752
        %v5754 = vmul.f32 %v5704, 1.442695
        %v5755 = vpow.pop %v5754
        %v5756 = vmul.f32 %v5705, 1.442695
        %v5757 = vpow.pop %v5756
        %v5758 = vmul.f32 %v5706, 1.442695
        %v5759 = vpow.pop %v5758
        %v5760 = vmul.f32 %v5707, 1.442695
        %v5761 = vpow.pop %v5760
        %v5762 = vmul.f32 %v5708, 1.442695
        %v5763 = vpow.pop %v5762
        %v5764 = vmul.f32 %v5709, 1.442695
        %v5765 = vpow.pop %v5764
        %v5766 = vmul.f32 %v5710, 1.442695
        %v5767 = vpow.pop %v5766
        %v5768 = vmul.f32 %v5711, 1.442695
        %v5769 = vpow.pop %v5768
        %v5770 = vmul.f32 %v5712, 1.442695
        %v5771 = vpow.pop %v5770
        %v5772 = vmul.f32 %v5713, 1.442695
        %v5773 = vpow.pop %v5772
        %v5774 = vmul.f32 %v5714, 1.442695
        %v5775 = vpow.pop %v5774
        %v5776 = vmul.f32 %v5715, 1.442695
        %v5777 = vpow.pop %v5776
        %v5778 = vmul.f32 %v5716, 1.442695
        %v5779 = vpow.pop %v5778
        %v5780 = vmul.f32 %v5717, 1.442695
        %v5781 = vpow.pop %v5780
        %v5782 = vadd.f32 %v5719, %v5721
        %v5783 = vadd.f32 %v5782, %v5723
        %v5784 = vadd.f32 %v5783, %v5725
        %v5785 = vadd.f32 %v5784, %v5727
        %v5786 = vadd.f32 %v5785, %v5729
        %v5787 = vadd.f32 %v5786, %v5731
        %v5788 = vadd.f32 %v5787, %v5733
        %v5789 = vadd.f32 %v5788, %v5735
        %v5790 = vadd.f32 %v5789, %v5737
        %v5791 = vadd.f32 %v5790, %v5739
        %v5792 = vadd.f32 %v5791, %v5741
        %v5793 = vadd.f32 %v5792, %v5743
        %v5794 = vadd.f32 %v5793, %v5745
        %v5795 = vadd.f32 %v5794, %v5747
        %v5796 = vadd.f32 %v5795, %v5749
        %v5797 = vadd.f32 %v5796, %v5751
        %v5798 = vadd.f32 %v5797, %v5753
        %v5799 = vadd.f32 %v5798, %v5755
        %v5800 = vadd.f32 %v5799, %v5757
        %v5801 = vadd.f32 %v5800, %v5759
        %v5802 = vadd.f32 %v5801, %v5761
        %v5803 = vadd.f32 %v5802, %v5763
        %v5804 = vadd.f32 %v5803, %v5765
        %v5805 = vadd.f32 %v5804, %v5767
        %v5806 = vadd.f32 %v5805, %v5769
        %v5807 = vadd.f32 %v5806, %v5771
        %v5808 = vadd.f32 %v5807, %v5773
        %v5809 = vadd.f32 %v5808, %v5775
        %v5810 = vadd.f32 %v5809, %v5777
        %v5811 = vadd.f32 %v5810, %v5779
        %v5812 = vadd.f32 %v5811, %v5781
        %v5813 = vrot.slane %v5812, 4
        %v5814 = vadd.f32 %v5812, %v5813
        %v5815 = vrot.slane %v5814, 2
        %v5816 = vadd.f32 %v5814, %v5815
        %v5817 = vrot.slane %v5816, 1
        %v5818 = vadd.f32 %v5816, %v5817
        %v5819 = vrcp.pop %v5818
        %v5820 = vpack.c.bf16 %v5721, %v5719
        %v5821 = vpack.c.bf16 %v5725, %v5723
        %v5822 = vpack.c.bf16 %v5729, %v5727
        %v5823 = vpack.c.bf16 %v5733, %v5731
        %v5824 = vpack.c.bf16 %v5737, %v5735
        %v5825 = vpack.c.bf16 %v5741, %v5739
        %v5826 = vpack.c.bf16 %v5745, %v5743
        %v5827 = vpack.c.bf16 %v5749, %v5747
        %v5828 = vpack.c.bf16 %v5753, %v5751
        %v5829 = vpack.c.bf16 %v5757, %v5755
        %v5830 = vpack.c.bf16 %v5761, %v5759
        %v5831 = vpack.c.bf16 %v5765, %v5763
        %v5832 = vpack.c.bf16 %v5769, %v5767
        %v5833 = vpack.c.bf16 %v5773, %v5771
        %v5834 = vpack.c.bf16 %v5777, %v5775
        %v5835 = vpack.c.bf16 %v5781, %v5779
        %5836 = vmatprep.subr.bf16.mxu0 0
        %5837 = vmatpush1.bf16.msra.mxu0 %v5827
        %5838 = vmatprep.subr.bf16.mxu0 0
        %5839 = vmatpush1.bf16.msra.mxu0 %v5826
        %5840 = vmatprep.subr.bf16.mxu0 0
        %5841 = vmatpush1.bf16.msra.mxu0 %v5825
        %5842 = vmatprep.subr.bf16.mxu0 0
        %5843 = vmatpush1.bf16.msra.mxu0 %v5824
        %5844 = vmatprep.subr.bf16.mxu0 0
        %5845 = vmatpush1.bf16.msra.mxu0 %v5823
        %5846 = vmatprep.subr.bf16.mxu0 0
        %5847 = vmatpush1.bf16.msra.mxu0 %v5822
        %5848 = vmatprep.subr.bf16.mxu0 0
        %5849 = vmatpush1.bf16.msra.mxu0 %v5821
        %5850 = vmatprep.subr.bf16.mxu0 0
        %5851 = vmatpush1.bf16.msra.mxu0 %v5820
        %5852 = vmatprep.subr.bf16.mxu0 0
        %5853 = vmatpush2.bf16.msra.mxu0 %v5835
        %5854 = vmatprep.subr.bf16.mxu0 0
        %5855 = vmatpush2.bf16.msra.mxu0 %v5834
        %5856 = vmatprep.subr.bf16.mxu0 0
        %5857 = vmatpush2.bf16.msra.mxu0 %v5833
        %5858 = vmatprep.subr.bf16.mxu0 0
        %5859 = vmatpush2.bf16.msra.mxu0 %v5832
        %5860 = vmatprep.subr.bf16.mxu0 0
        %5861 = vmatpush2.bf16.msra.mxu0 %v5831
        %5862 = vmatprep.subr.bf16.mxu0 0
        %5863 = vmatpush2.bf16.msra.mxu0 %v5830
        %5864 = vmatprep.subr.bf16.mxu0 0
        %5865 = vmatpush2.bf16.msra.mxu0 %v5829
        %5866 = vmatprep.subr.bf16.mxu0 0
        %5867 = vmatpush2.bf16.msra.mxu0 %v5828
        %5868 = vmatprep.mubr.bf16.mxu0 %v5327
        %5869 = vmatmul.mubr.bf16.gmra.mxu0 %v5326
        %v5870 = vpop.f32.mrf.mxu0
        %v5871 = vadd.f32 0.0, %v5870
        %v5872 = vpop.f32.mrf.mxu0
        %v5873 = vpop.f32.mrf.mxu0
        %v5874 = vpop.f32.mrf.mxu0
        %5875 = vdwg.mxu0
        %v5876 = vmul.f32 %v5871, %v5819
        %5877 = vst [vmem:[#allocation2] sm:$0xff] %v5876
        %5878 = vmatprep.subr.mxu0 0.0
        %5879 = vmatpush1.msra.mxu0 0.0
        %5880 = vmatprep.subr.mxu0 0.0
        %5881 = vmatpush1.msra.mxu0 0.0
        %5882 = vmatprep.subr.mxu0 0.0
        %5883 = vmatpush1.msra.mxu0 0.0
        %5884 = vmatprep.subr.mxu0 0.0
        %5885 = vmatpush1.msra.mxu0 0.0
        %5886 = vmatprep.subr.mxu0 0.0
        %5887 = vmatpush1.msra.mxu0 0.0
        %5888 = vmatprep.subr.mxu0 0.0
        %5889 = vmatpush1.msra.mxu0 0.0
        %5890 = vmatprep.subr.mxu0 0.0
        %5891 = vmatpush1.msra.mxu0 0.0
        %5892 = vmatprep.subr.mxu0 0.0
        %5893 = vmatpush1.msra.mxu0 0.0
        %5894 = vmatprep.subr.mxu0 0.0
        %5895 = vmatpush1.msra.mxu0 0.0
        %5896 = vmatprep.subr.mxu0 0.0
        %5897 = vmatpush1.msra.mxu0 0.0
        %5898 = vmatprep.subr.mxu0 0.0
        %5899 = vmatpush1.msra.mxu0 0.0
        %5900 = vmatprep.subr.mxu0 0.0
        %5901 = vmatpush1.msra.mxu0 0.0
        %5902 = vmatprep.subr.mxu0 0.0
        %5903 = vmatpush1.msra.mxu0 0.0
        %5904 = vmatprep.subr.mxu0 0.0
        %5905 = vmatpush1.msra.mxu0 0.0
        %5906 = vmatprep.subr.mxu0 0.0
        %5907 = vmatpush1.msra.mxu0 0.0
        %5908 = vmatprep.subr.mxu0 0.0
        %5909 = vmatpush1.msra.mxu0 %v5206
        %5910 = vmatprep.subr.mxu0 0.0
        %5911 = vmatpush2.msra.mxu0 0.0
        %5912 = vmatprep.subr.mxu0 0.0
        %5913 = vmatpush2.msra.mxu0 0.0
        %5914 = vmatprep.subr.mxu0 0.0
        %5915 = vmatpush2.msra.mxu0 0.0
        %5916 = vmatprep.subr.mxu0 0.0
        %5917 = vmatpush2.msra.mxu0 0.0
        %5918 = vmatprep.subr.mxu0 0.0
        %5919 = vmatpush2.msra.mxu0 0.0
        %5920 = vmatprep.subr.mxu0 0.0
        %5921 = vmatpush2.msra.mxu0 0.0
        %5922 = vmatprep.subr.mxu0 0.0
        %5923 = vmatpush2.msra.mxu0 0.0
        %5924 = vmatprep.subr.mxu0 0.0
        %5925 = vmatpush2.msra.mxu0 0.0
        %5926 = vmatprep.subr.mxu0 0.0
        %5927 = vmatpush2.msra.mxu0 0.0
        %5928 = vmatprep.subr.mxu0 0.0
        %5929 = vmatpush2.msra.mxu0 0.0
        %5930 = vmatprep.subr.mxu0 0.0
        %5931 = vmatpush2.msra.mxu0 0.0
        %5932 = vmatprep.subr.mxu0 0.0
        %5933 = vmatpush2.msra.mxu0 0.0
        %5934 = vmatprep.subr.mxu0 0.0
        %5935 = vmatpush2.msra.mxu0 0.0
        %5936 = vmatprep.subr.mxu0 0.0
        %5937 = vmatpush2.msra.mxu0 0.0
        %5938 = vmatprep.subr.mxu0 0.0
        %5939 = vmatpush2.msra.mxu0 0.0
        %5940 = vmatprep.subr.mxu0 0.0
        %5941 = vmatpush2.msra.mxu0 0.0
        %5942 = vmatprep.mubr.f32.mxu0 0.0
        %5943 = vmatmul.mubr.f32.gmra.mxu0 %v5329
        %v5944 = vpop.f32.mrf.mxu0
        %v5945 = vadd.f32 0.0, %v5944
        %v5946 = vpop.f32.mrf.mxu0
        %5947 = vmatprep.mubr.f32.mxu0 0.0
        %5948 = vmatmul.mubr.f32.gmra.mxu0 %v5332
        %v5949 = vpop.f32.mrf.mxu0
        %v5950 = vadd.f32 0.0, %v5949
        %v5951 = vpop.f32.mrf.mxu0
        %5952 = vmatprep.mubr.f32.mxu0 0.0
        %5953 = vmatmul.mubr.f32.gmra.mxu0 %v5335
        %v5954 = vpop.f32.mrf.mxu0
        %v5955 = vadd.f32 0.0, %v5954
        %v5956 = vpop.f32.mrf.mxu0
        %5957 = vmatprep.mubr.f32.mxu0 0.0
        %5958 = vmatmul.mubr.f32.gmra.mxu0 %v5338
        %v5959 = vpop.f32.mrf.mxu0
        %v5960 = vadd.f32 0.0, %v5959
        %v5961 = vpop.f32.mrf.mxu0
        %5962 = vmatprep.mubr.f32.mxu0 0.0
        %5963 = vmatmul.mubr.f32.gmra.mxu0 %v5341
        %v5964 = vpop.f32.mrf.mxu0
        %v5965 = vadd.f32 0.0, %v5964
        %v5966 = vpop.f32.mrf.mxu0
        %5967 = vmatprep.mubr.f32.mxu0 0.0
        %5968 = vmatmul.mubr.f32.gmra.mxu0 %v5344
        %v5969 = vpop.f32.mrf.mxu0
        %v5970 = vadd.f32 0.0, %v5969
        %v5971 = vpop.f32.mrf.mxu0
        %5972 = vmatprep.mubr.f32.mxu0 0.0
        %5973 = vmatmul.mubr.f32.gmra.mxu0 %v5347
        %v5974 = vpop.f32.mrf.mxu0
        %v5975 = vadd.f32 0.0, %v5974
        %v5976 = vpop.f32.mrf.mxu0
        %5977 = vmatprep.mubr.f32.mxu0 0.0
        %5978 = vmatmul.mubr.f32.gmra.mxu0 %v5350
        %v5979 = vpop.f32.mrf.mxu0
        %v5980 = vadd.f32 0.0, %v5979
        %v5981 = vpop.f32.mrf.mxu0
        %5982 = vmatprep.mubr.f32.mxu0 0.0
        %5983 = vmatmul.mubr.f32.gmra.mxu0 %v5353
        %v5984 = vpop.f32.mrf.mxu0
        %v5985 = vadd.f32 0.0, %v5984
        %v5986 = vpop.f32.mrf.mxu0
        %5987 = vmatprep.mubr.f32.mxu0 0.0
        %5988 = vmatmul.mubr.f32.gmra.mxu0 %v5356
        %v5989 = vpop.f32.mrf.mxu0
        %v5990 = vadd.f32 0.0, %v5989
        %v5991 = vpop.f32.mrf.mxu0
        %5992 = vmatprep.mubr.f32.mxu0 0.0
        %5993 = vmatmul.mubr.f32.gmra.mxu0 %v5359
        %v5994 = vpop.f32.mrf.mxu0
        %v5995 = vadd.f32 0.0, %v5994
        %v5996 = vpop.f32.mrf.mxu0
        %5997 = vmatprep.mubr.f32.mxu0 0.0
        %5998 = vmatmul.mubr.f32.gmra.mxu0 %v5362
        %v5999 = vpop.f32.mrf.mxu0
        %v6000 = vadd.f32 0.0, %v5999
        %v6001 = vpop.f32.mrf.mxu0
        %6002 = vmatprep.mubr.f32.mxu0 0.0
        %6003 = vmatmul.mubr.f32.gmra.mxu0 %v5365
        %v6004 = vpop.f32.mrf.mxu0
        %v6005 = vadd.f32 0.0, %v6004
        %v6006 = vpop.f32.mrf.mxu0
        %6007 = vmatprep.mubr.f32.mxu0 0.0
        %6008 = vmatmul.mubr.f32.gmra.mxu0 %v5368
        %v6009 = vpop.f32.mrf.mxu0
        %v6010 = vadd.f32 0.0, %v6009
        %v6011 = vpop.f32.mrf.mxu0
        %6012 = vmatprep.mubr.f32.mxu0 0.0
        %6013 = vmatmul.mubr.f32.gmra.mxu0 %v5371
        %v6014 = vpop.f32.mrf.mxu0
        %v6015 = vadd.f32 0.0, %v6014
        %v6016 = vpop.f32.mrf.mxu0
        %6017 = vmatprep.mubr.f32.mxu0 0.0
        %6018 = vmatmul.mubr.f32.gmra.mxu0 %v5374
        %v6019 = vpop.f32.mrf.mxu0
        %v6020 = vadd.f32 0.0, %v6019
        %v6021 = vpop.f32.mrf.mxu0
        %6022 = vmatprep.mubr.f32.mxu0 0.0
        %6023 = vmatmul.mubr.f32.gmra.mxu0 %v5377
        %v6024 = vpop.f32.mrf.mxu0
        %v6025 = vadd.f32 0.0, %v6024
        %v6026 = vpop.f32.mrf.mxu0
        %6027 = vmatprep.mubr.f32.mxu0 0.0
        %6028 = vmatmul.mubr.f32.gmra.mxu0 %v5380
        %v6029 = vpop.f32.mrf.mxu0
        %v6030 = vadd.f32 0.0, %v6029
        %v6031 = vpop.f32.mrf.mxu0
        %6032 = vmatprep.mubr.f32.mxu0 0.0
        %6033 = vmatmul.mubr.f32.gmra.mxu0 %v5383
        %v6034 = vpop.f32.mrf.mxu0
        %v6035 = vadd.f32 0.0, %v6034
        %v6036 = vpop.f32.mrf.mxu0
        %6037 = vmatprep.mubr.f32.mxu0 0.0
        %6038 = vmatmul.mubr.f32.gmra.mxu0 %v5386
        %v6039 = vpop.f32.mrf.mxu0
        %v6040 = vadd.f32 0.0, %v6039
        %v6041 = vpop.f32.mrf.mxu0
        %6042 = vmatprep.mubr.f32.mxu0 0.0
        %6043 = vmatmul.mubr.f32.gmra.mxu0 %v5389
        %v6044 = vpop.f32.mrf.mxu0
        %v6045 = vadd.f32 0.0, %v6044
        %v6046 = vpop.f32.mrf.mxu0
        %6047 = vmatprep.mubr.f32.mxu0 0.0
        %6048 = vmatmul.mubr.f32.gmra.mxu0 %v5392
        %v6049 = vpop.f32.mrf.mxu0
        %v6050 = vadd.f32 0.0, %v6049
        %v6051 = vpop.f32.mrf.mxu0
        %6052 = vmatprep.mubr.f32.mxu0 0.0
        %6053 = vmatmul.mubr.f32.gmra.mxu0 %v5395
        %v6054 = vpop.f32.mrf.mxu0
        %v6055 = vadd.f32 0.0, %v6054
        %v6056 = vpop.f32.mrf.mxu0
        %6057 = vmatprep.mubr.f32.mxu0 0.0
        %6058 = vmatmul.mubr.f32.gmra.mxu0 %v5398
        %v6059 = vpop.f32.mrf.mxu0
        %v6060 = vadd.f32 0.0, %v6059
        %v6061 = vpop.f32.mrf.mxu0
        %6062 = vmatprep.mubr.f32.mxu0 0.0
        %6063 = vmatmul.mubr.f32.gmra.mxu0 %v5401
        %v6064 = vpop.f32.mrf.mxu0
        %v6065 = vadd.f32 0.0, %v6064
        %v6066 = vpop.f32.mrf.mxu0
        %6067 = vmatprep.mubr.f32.mxu0 0.0
        %6068 = vmatmul.mubr.f32.gmra.mxu0 %v5404
        %v6069 = vpop.f32.mrf.mxu0
        %v6070 = vadd.f32 0.0, %v6069
        %v6071 = vpop.f32.mrf.mxu0
        %6072 = vmatprep.mubr.f32.mxu0 0.0
        %6073 = vmatmul.mubr.f32.gmra.mxu0 %v5407
        %v6074 = vpop.f32.mrf.mxu0
        %v6075 = vadd.f32 0.0, %v6074
        %v6076 = vpop.f32.mrf.mxu0
        %6077 = vmatprep.mubr.f32.mxu0 0.0
        %6078 = vmatmul.mubr.f32.gmra.mxu0 %v5410
        %v6079 = vpop.f32.mrf.mxu0
        %v6080 = vadd.f32 0.0, %v6079
        %v6081 = vpop.f32.mrf.mxu0
        %6082 = vmatprep.mubr.f32.mxu0 0.0
        %6083 = vmatmul.mubr.f32.gmra.mxu0 %v5413
        %v6084 = vpop.f32.mrf.mxu0
        %v6085 = vadd.f32 0.0, %v6084
        %v6086 = vpop.f32.mrf.mxu0
        %6087 = vmatprep.mubr.f32.mxu0 0.0
        %6088 = vmatmul.mubr.f32.gmra.mxu0 %v5416
        %v6089 = vpop.f32.mrf.mxu0
        %v6090 = vadd.f32 0.0, %v6089
        %v6091 = vpop.f32.mrf.mxu0
        %6092 = vmatprep.mubr.f32.mxu0 0.0
        %6093 = vmatmul.mubr.f32.gmra.mxu0 %v5419
        %v6094 = vpop.f32.mrf.mxu0
        %v6095 = vadd.f32 0.0, %v6094
        %v6096 = vpop.f32.mrf.mxu0
        %6097 = vmatprep.mubr.f32.mxu0 0.0
        %6098 = vmatmul.mubr.f32.gmra.mxu0 %v5422
        %v6099 = vpop.f32.mrf.mxu0
        %v6100 = vadd.f32 0.0, %v6099
        %v6101 = vpop.f32.mrf.mxu0
        %6102 = vdwg.mxu0
        %v6103 = vmax.f32 %v5945, %v5965
        %v6104 = vmax.f32 %v5950, %v5970
        %v6105 = vmax.f32 %v5955, %v5975
        %v6106 = vmax.f32 %v5960, %v5980
        %v6107 = vmax.f32 %v6103, %v5985
        %v6108 = vmax.f32 %v6104, %v5990
        %v6109 = vmax.f32 %v6105, %v5995
        %v6110 = vmax.f32 %v6106, %v6000
        %v6111 = vmax.f32 %v6107, %v6005
        %v6112 = vmax.f32 %v6108, %v6010
        %v6113 = vmax.f32 %v6109, %v6015
        %v6114 = vmax.f32 %v6110, %v6020
        %v6115 = vmax.f32 %v6111, %v6025
        %v6116 = vmax.f32 %v6112, %v6030
        %v6117 = vmax.f32 %v6113, %v6035
        %v6118 = vmax.f32 %v6114, %v6040
        %v6119 = vmax.f32 %v6115, %v6045
        %v6120 = vmax.f32 %v6116, %v6050
        %v6121 = vmax.f32 %v6117, %v6055
        %v6122 = vmax.f32 %v6118, %v6060
        %v6123 = vmax.f32 %v6119, %v6065
        %v6124 = vmax.f32 %v6120, %v6070
        %v6125 = vmax.f32 %v6121, %v6075
        %v6126 = vmax.f32 %v6122, %v6080
        %v6127 = vmax.f32 %v6123, %v6085
        %v6128 = vmax.f32 %v6124, %v6090
        %v6129 = vmax.f32 %v6125, %v6095
        %v6130 = vmax.f32 %v6126, %v6100
        %v6131 = vmax.f32 %v6127, %v6128
        %v6132 = vmax.f32 %v6129, %v6130
        %v6133 = vmax.f32 %v6131, %v6132
        %v6134 = vrot.slane %v6133, 4
        %v6135 = vmax.f32 %v6133, %v6134
        %v6136 = vrot.slane %v6135, 2
        %v6137 = vmax.f32 %v6135, %v6136
        %v6138 = vrot.slane %v6137, 1
        %v6139 = vmax.f32 %v6137, %v6138
        %v6140 = vsub.f32 %v5945, %v6139
        %v6141 = vsub.f32 %v5950, %v6139
        %v6142 = vsub.f32 %v5955, %v6139
        %v6143 = vsub.f32 %v5960, %v6139
        %v6144 = vsub.f32 %v5965, %v6139
        %v6145 = vsub.f32 %v5970, %v6139
        %v6146 = vsub.f32 %v5975, %v6139
        %v6147 = vsub.f32 %v5980, %v6139
        %v6148 = vsub.f32 %v5985, %v6139
        %v6149 = vsub.f32 %v5990, %v6139
        %v6150 = vsub.f32 %v5995, %v6139
        %v6151 = vsub.f32 %v6000, %v6139
        %v6152 = vsub.f32 %v6005, %v6139
        %v6153 = vsub.f32 %v6010, %v6139
        %v6154 = vsub.f32 %v6015, %v6139
        %v6155 = vsub.f32 %v6020, %v6139
        %v6156 = vsub.f32 %v6025, %v6139
        %v6157 = vsub.f32 %v6030, %v6139
        %v6158 = vsub.f32 %v6035, %v6139
        %v6159 = vsub.f32 %v6040, %v6139
        %v6160 = vsub.f32 %v6045, %v6139
        %v6161 = vsub.f32 %v6050, %v6139
        %v6162 = vsub.f32 %v6055, %v6139
        %v6163 = vsub.f32 %v6060, %v6139
        %v6164 = vsub.f32 %v6065, %v6139
        %v6165 = vsub.f32 %v6070, %v6139
        %v6166 = vsub.f32 %v6075, %v6139
        %v6167 = vsub.f32 %v6080, %v6139
        %v6168 = vsub.f32 %v6085, %v6139
        %v6169 = vsub.f32 %v6090, %v6139
        %v6170 = vsub.f32 %v6095, %v6139
        %v6171 = vsub.f32 %v6100, %v6139
        %v6172 = vmul.f32 %v6140, 1.442695
        %v6173 = vpow.pop %v6172
        %v6174 = vmul.f32 %v6141, 1.442695
        %v6175 = vpow.pop %v6174
        %v6176 = vmul.f32 %v6142, 1.442695
        %v6177 = vpow.pop %v6176
        %v6178 = vmul.f32 %v6143, 1.442695
        %v6179 = vpow.pop %v6178
        %v6180 = vmul.f32 %v6144, 1.442695
        %v6181 = vpow.pop %v6180
        %v6182 = vmul.f32 %v6145, 1.442695
        %v6183 = vpow.pop %v6182
        %v6184 = vmul.f32 %v6146, 1.442695
        %v6185 = vpow.pop %v6184
        %v6186 = vmul.f32 %v6147, 1.442695
        %v6187 = vpow.pop %v6186
        %v6188 = vmul.f32 %v6148, 1.442695
        %v6189 = vpow.pop %v6188
        %v6190 = vmul.f32 %v6149, 1.442695
        %v6191 = vpow.pop %v6190
        %v6192 = vmul.f32 %v6150, 1.442695
        %v6193 = vpow.pop %v6192
        %v6194 = vmul.f32 %v6151, 1.442695
        %v6195 = vpow.pop %v6194
        %v6196 = vmul.f32 %v6152, 1.442695
        %v6197 = vpow.pop %v6196
        %v6198 = vmul.f32 %v6153, 1.442695
        %v6199 = vpow.pop %v6198
        %v6200 = vmul.f32 %v6154, 1.442695
        %v6201 = vpow.pop %v6200
        %v6202 = vmul.f32 %v6155, 1.442695
        %v6203 = vpow.pop %v6202
        %v6204 = vmul.f32 %v6156, 1.442695
        %v6205 = vpow.pop %v6204
        %v6206 = vmul.f32 %v6157, 1.442695
        %v6207 = vpow.pop %v6206
        %v6208 = vmul.f32 %v6158, 1.442695
        %v6209 = vpow.pop %v6208
        %v6210 = vmul.f32 %v6159, 1.442695
        %v6211 = vpow.pop %v6210
        %v6212 = vmul.f32 %v6160, 1.442695
        %v6213 = vpow.pop %v6212
        %v6214 = vmul.f32 %v6161, 1.442695
        %v6215 = vpow.pop %v6214
        %v6216 = vmul.f32 %v6162, 1.442695
        %v6217 = vpow.pop %v6216
        %v6218 = vmul.f32 %v6163, 1.442695
        %v6219 = vpow.pop %v6218
        %v6220 = vmul.f32 %v6164, 1.442695
        %v6221 = vpow.pop %v6220
        %v6222 = vmul.f32 %v6165, 1.442695
        %v6223 = vpow.pop %v6222
        %v6224 = vmul.f32 %v6166, 1.442695
        %v6225 = vpow.pop %v6224
        %v6226 = vmul.f32 %v6167, 1.442695
        %v6227 = vpow.pop %v6226
        %v6228 = vmul.f32 %v6168, 1.442695
        %v6229 = vpow.pop %v6228
        %v6230 = vmul.f32 %v6169, 1.442695
        %v6231 = vpow.pop %v6230
        %v6232 = vmul.f32 %v6170, 1.442695
        %v6233 = vpow.pop %v6232
        %v6234 = vmul.f32 %v6171, 1.442695
        %v6235 = vpow.pop %v6234
        %v6236 = vadd.f32 %v6173, %v6175
        %v6237 = vadd.f32 %v6236, %v6177
        %v6238 = vadd.f32 %v6237, %v6179
        %v6239 = vadd.f32 %v6238, %v6181
        %v6240 = vadd.f32 %v6239, %v6183
        %v6241 = vadd.f32 %v6240, %v6185
        %v6242 = vadd.f32 %v6241, %v6187
        %v6243 = vadd.f32 %v6242, %v6189
        %v6244 = vadd.f32 %v6243, %v6191
        %v6245 = vadd.f32 %v6244, %v6193
        %v6246 = vadd.f32 %v6245, %v6195
        %v6247 = vadd.f32 %v6246, %v6197
        %v6248 = vadd.f32 %v6247, %v6199
        %v6249 = vadd.f32 %v6248, %v6201
        %v6250 = vadd.f32 %v6249, %v6203
        %v6251 = vadd.f32 %v6250, %v6205
        %v6252 = vadd.f32 %v6251, %v6207
        %v6253 = vadd.f32 %v6252, %v6209
        %v6254 = vadd.f32 %v6253, %v6211
        %v6255 = vadd.f32 %v6254, %v6213
        %v6256 = vadd.f32 %v6255, %v6215
        %v6257 = vadd.f32 %v6256, %v6217
        %v6258 = vadd.f32 %v6257, %v6219
        %v6259 = vadd.f32 %v6258, %v6221
        %v6260 = vadd.f32 %v6259, %v6223
        %v6261 = vadd.f32 %v6260, %v6225
        %v6262 = vadd.f32 %v6261, %v6227
        %v6263 = vadd.f32 %v6262, %v6229
        %v6264 = vadd.f32 %v6263, %v6231
        %v6265 = vadd.f32 %v6264, %v6233
        %v6266 = vadd.f32 %v6265, %v6235
        %v6267 = vrot.slane %v6266, 4
        %v6268 = vadd.f32 %v6266, %v6267
        %v6269 = vrot.slane %v6268, 2
        %v6270 = vadd.f32 %v6268, %v6269
        %v6271 = vrot.slane %v6270, 1
        %v6272 = vadd.f32 %v6270, %v6271
        %v6273 = vrcp.pop %v6272
        %v6274 = vpack.c.bf16 %v6175, %v6173
        %v6275 = vpack.c.bf16 %v6179, %v6177
        %v6276 = vpack.c.bf16 %v6183, %v6181
        %v6277 = vpack.c.bf16 %v6187, %v6185
        %v6278 = vpack.c.bf16 %v6191, %v6189
        %v6279 = vpack.c.bf16 %v6195, %v6193
        %v6280 = vpack.c.bf16 %v6199, %v6197
        %v6281 = vpack.c.bf16 %v6203, %v6201
        %v6282 = vpack.c.bf16 %v6207, %v6205
        %v6283 = vpack.c.bf16 %v6211, %v6209
        %v6284 = vpack.c.bf16 %v6215, %v6213
        %v6285 = vpack.c.bf16 %v6219, %v6217
        %v6286 = vpack.c.bf16 %v6223, %v6221
        %v6287 = vpack.c.bf16 %v6227, %v6225
        %v6288 = vpack.c.bf16 %v6231, %v6229
        %v6289 = vpack.c.bf16 %v6235, %v6233
        %6290 = vmatprep.subr.bf16.mxu0 0
        %6291 = vmatpush1.bf16.msra.mxu0 %v6281
        %6292 = vmatprep.subr.bf16.mxu0 0
        %6293 = vmatpush1.bf16.msra.mxu0 %v6280
        %6294 = vmatprep.subr.bf16.mxu0 0
        %6295 = vmatpush1.bf16.msra.mxu0 %v6279
        %6296 = vmatprep.subr.bf16.mxu0 0
        %6297 = vmatpush1.bf16.msra.mxu0 %v6278
        %6298 = vmatprep.subr.bf16.mxu0 0
        %6299 = vmatpush1.bf16.msra.mxu0 %v6277
        %6300 = vmatprep.subr.bf16.mxu0 0
        %6301 = vmatpush1.bf16.msra.mxu0 %v6276
        %6302 = vmatprep.subr.bf16.mxu0 0
        %6303 = vmatpush1.bf16.msra.mxu0 %v6275
        %6304 = vmatprep.subr.bf16.mxu0 0
        %6305 = vmatpush1.bf16.msra.mxu0 %v6274
        %6306 = vmatprep.subr.bf16.mxu0 0
        %6307 = vmatpush2.bf16.msra.mxu0 %v6289
        %6308 = vmatprep.subr.bf16.mxu0 0
        %6309 = vmatpush2.bf16.msra.mxu0 %v6288
        %6310 = vmatprep.subr.bf16.mxu0 0
        %6311 = vmatpush2.bf16.msra.mxu0 %v6287
        %6312 = vmatprep.subr.bf16.mxu0 0
        %6313 = vmatpush2.bf16.msra.mxu0 %v6286
        %6314 = vmatprep.subr.bf16.mxu0 0
        %6315 = vmatpush2.bf16.msra.mxu0 %v6285
        %6316 = vmatprep.subr.bf16.mxu0 0
        %6317 = vmatpush2.bf16.msra.mxu0 %v6284
        %6318 = vmatprep.subr.bf16.mxu0 0
        %6319 = vmatpush2.bf16.msra.mxu0 %v6283
        %6320 = vmatprep.subr.bf16.mxu0 0
        %6321 = vmatpush2.bf16.msra.mxu0 %v6282
        %6322 = vmatprep.mubr.bf16.mxu0 %v5327
        %6323 = vmatmul.mubr.bf16.gmra.mxu0 %v5326
        %v6324 = vpop.f32.mrf.mxu0
        %v6325 = vadd.f32 0.0, %v6324
        %v6326 = vpop.f32.mrf.mxu0
        %v6327 = vpop.f32.mrf.mxu0
        %v6328 = vpop.f32.mrf.mxu0
        %6329 = vdwg.mxu0
        %v6330 = vmul.f32 %v6325, %v6273
        %6331 = vst [vmem:[#allocation2 + $0x8] sm:$0xff] %v6330
        %v6332 = vpack.c.bf16 %v5248, %v5248
        %v6333 = vpack.c.bf16 %v5250, %v5250
        %6334 = vrot.lane.b32.xlu0 %v5278, 120
        %v6335 = vpop.permute.xlu0 %6334
        %6336 = vrot.lane.b32.xlu0 %v5279, 120
        %v6337 = vpop.permute.xlu0 %6336
        %6338 = vrot.lane.b32.xlu0 %v5280, 120
        %v6339 = vpop.permute.xlu0 %6338
        %6340 = vrot.lane.b32.xlu0 %v5281, 120
        %v6341 = vpop.permute.xlu0 %6340
        %6342 = vrot.lane.b32.xlu0 %v5282, 120
        %v6343 = vpop.permute.xlu0 %6342
        %6344 = vrot.lane.b32.xlu0 %v5283, 120
        %v6345 = vpop.permute.xlu0 %6344
        %6346 = vrot.lane.b32.xlu0 %v5284, 120
        %v6347 = vpop.permute.xlu0 %6346
        %6348 = vrot.lane.b32.xlu0 %v5285, 120
        %v6349 = vpop.permute.xlu0 %6348
        %6350 = vrot.lane.b32.xlu0 %v5286, 120
        %v6351 = vpop.permute.xlu0 %6350
        %6352 = vrot.lane.b32.xlu0 %v5287, 120
        %v6353 = vpop.permute.xlu0 %6352
        %6354 = vrot.lane.b32.xlu0 %v5288, 120
        %v6355 = vpop.permute.xlu0 %6354
        %6356 = vrot.lane.b32.xlu0 %v5289, 120
        %v6357 = vpop.permute.xlu0 %6356
        %6358 = vrot.lane.b32.xlu0 %v5290, 120
        %v6359 = vpop.permute.xlu0 %6358
        %6360 = vrot.lane.b32.xlu0 %v5291, 120
        %v6361 = vpop.permute.xlu0 %6360
        %6362 = vrot.lane.b32.xlu0 %v5292, 120
        %v6363 = vpop.permute.xlu0 %6362
        %6364 = vrot.lane.b32.xlu0 %v5293, 120
        %v6365 = vpop.permute.xlu0 %6364
        %6366 = vrot.lane.b32.xlu0 %v5310, 120
        %v6367 = vpop.permute.xlu0 %6366
        %6368 = vrot.lane.b32.xlu0 %v5311, 120
        %v6369 = vpop.permute.xlu0 %6368
        %6370 = vrot.lane.b32.xlu0 %v5312, 120
        %v6371 = vpop.permute.xlu0 %6370
        %6372 = vrot.lane.b32.xlu0 %v5313, 120
        %v6373 = vpop.permute.xlu0 %6372
        %6374 = vrot.lane.b32.xlu0 %v5314, 120
        %v6375 = vpop.permute.xlu0 %6374
        %6376 = vrot.lane.b32.xlu0 %v5315, 120
        %v6377 = vpop.permute.xlu0 %6376
        %6378 = vrot.lane.b32.xlu0 %v5316, 120
        %v6379 = vpop.permute.xlu0 %6378
        %6380 = vrot.lane.b32.xlu0 %v5317, 120
        %v6381 = vpop.permute.xlu0 %6380
        %6382 = vrot.lane.b32.xlu0 %v5318, 120
        %v6383 = vpop.permute.xlu0 %6382
        %6384 = vrot.lane.b32.xlu0 %v5319, 120
        %v6385 = vpop.permute.xlu0 %6384
        %6386 = vrot.lane.b32.xlu0 %v5320, 120
        %v6387 = vpop.permute.xlu0 %6386
        %6388 = vrot.lane.b32.xlu0 %v5321, 120
        %v6389 = vpop.permute.xlu0 %6388
        %6390 = vrot.lane.b32.xlu0 %v5322, 120
        %v6391 = vpop.permute.xlu0 %6390
        %6392 = vrot.lane.b32.xlu0 %v5323, 120
        %v6393 = vpop.permute.xlu0 %6392
        %6394 = vrot.lane.b32.xlu0 %v5324, 120
        %v6395 = vpop.permute.xlu0 %6394
        %6396 = vrot.lane.b32.xlu0 %v5325, 120
        %v6397 = vpop.permute.xlu0 %6396
        %v6398 = vsel %vm718, %v6335, 0
        %v6400 = vsel %vm718, %v6337, 0
        %v6402 = vsel %vm718, %v6339, 0
        %v6404 = vsel %vm718, %v6341, 0
        %v6406 = vsel %vm718, %v6343, 0
        %v6408 = vsel %vm718, %v6345, 0
        %v6410 = vsel %vm718, %v6347, 0
        %v6412 = vsel %vm718, %v6349, 0
        %v6414 = vsel %vm718, %v6351, 0
        %v6416 = vsel %vm718, %v6353, 0
        %v6418 = vsel %vm718, %v6355, 0
        %v6420 = vsel %vm718, %v6357, 0
        %v6422 = vsel %vm718, %v6359, 0
        %v6424 = vsel %vm718, %v6361, 0
        %v6426 = vsel %vm718, %v6363, 0
        %v6428 = vsel %vm718, %v6365, 0
        %v6430 = vsel %vm718, %v6367, 0
        %v6432 = vsel %vm718, %v6369, 0
        %v6434 = vsel %vm718, %v6371, 0
        %v6436 = vsel %vm718, %v6373, 0
        %v6438 = vsel %vm718, %v6375, 0
        %v6440 = vsel %vm718, %v6377, 0
        %v6442 = vsel %vm718, %v6379, 0
        %v6444 = vsel %vm718, %v6381, 0
        %v6446 = vsel %vm718, %v6383, 0
        %v6448 = vsel %vm718, %v6385, 0
        %v6450 = vsel %vm718, %v6387, 0
        %v6452 = vsel %vm718, %v6389, 0
        %v6454 = vsel %vm718, %v6391, 0
        %v6456 = vsel %vm718, %v6393, 0
        %v6458 = vsel %vm718, %v6395, 0
        %v6460 = vsel %vm718, %v6397, 0
        %6462 = vmatprep.subr.mxu0 0.0
        %6463 = vmatpush1.msra.mxu0 0.0
        %6464 = vmatprep.subr.mxu0 0.0
        %6465 = vmatpush1.msra.mxu0 0.0
        %6466 = vmatprep.subr.mxu0 0.0
        %6467 = vmatpush1.msra.mxu0 0.0
        %6468 = vmatprep.subr.mxu0 0.0
        %6469 = vmatpush1.msra.mxu0 0.0
        %6470 = vmatprep.subr.mxu0 0.0
        %6471 = vmatpush1.msra.mxu0 0.0
        %6472 = vmatprep.subr.mxu0 0.0
        %6473 = vmatpush1.msra.mxu0 0.0
        %6474 = vmatprep.subr.mxu0 0.0
        %6475 = vmatpush1.msra.mxu0 0.0
        %6476 = vmatprep.subr.mxu0 0.0
        %6477 = vmatpush1.msra.mxu0 0.0
        %6478 = vmatprep.subr.mxu0 0.0
        %6479 = vmatpush1.msra.mxu0 0.0
        %6480 = vmatprep.subr.mxu0 0.0
        %6481 = vmatpush1.msra.mxu0 0.0
        %6482 = vmatprep.subr.mxu0 0.0
        %6483 = vmatpush1.msra.mxu0 0.0
        %6484 = vmatprep.subr.mxu0 0.0
        %6485 = vmatpush1.msra.mxu0 0.0
        %6486 = vmatprep.subr.mxu0 0.0
        %6487 = vmatpush1.msra.mxu0 0.0
        %6488 = vmatprep.subr.mxu0 0.0
        %6489 = vmatpush1.msra.mxu0 0.0
        %6490 = vmatprep.subr.mxu0 0.0
        %6491 = vmatpush1.msra.mxu0 0.0
        %6492 = vmatprep.subr.mxu0 0.0
        %6493 = vmatpush1.msra.mxu0 %v5208
        %6494 = vmatprep.subr.mxu0 0.0
        %6495 = vmatpush2.msra.mxu0 0.0
        %6496 = vmatprep.subr.mxu0 0.0
        %6497 = vmatpush2.msra.mxu0 0.0
        %6498 = vmatprep.subr.mxu0 0.0
        %6499 = vmatpush2.msra.mxu0 0.0
        %6500 = vmatprep.subr.mxu0 0.0
        %6501 = vmatpush2.msra.mxu0 0.0
        %6502 = vmatprep.subr.mxu0 0.0
        %6503 = vmatpush2.msra.mxu0 0.0
        %6504 = vmatprep.subr.mxu0 0.0
        %6505 = vmatpush2.msra.mxu0 0.0
        %6506 = vmatprep.subr.mxu0 0.0
        %6507 = vmatpush2.msra.mxu0 0.0
        %6508 = vmatprep.subr.mxu0 0.0
        %6509 = vmatpush2.msra.mxu0 0.0
        %6510 = vmatprep.subr.mxu0 0.0
        %6511 = vmatpush2.msra.mxu0 0.0
        %6512 = vmatprep.subr.mxu0 0.0
        %6513 = vmatpush2.msra.mxu0 0.0
        %6514 = vmatprep.subr.mxu0 0.0
        %6515 = vmatpush2.msra.mxu0 0.0
        %6516 = vmatprep.subr.mxu0 0.0
        %6517 = vmatpush2.msra.mxu0 0.0
        %6518 = vmatprep.subr.mxu0 0.0
        %6519 = vmatpush2.msra.mxu0 0.0
        %6520 = vmatprep.subr.mxu0 0.0
        %6521 = vmatpush2.msra.mxu0 0.0
        %6522 = vmatprep.subr.mxu0 0.0
        %6523 = vmatpush2.msra.mxu0 0.0
        %6524 = vmatprep.subr.mxu0 0.0
        %6525 = vmatpush2.msra.mxu0 0.0
        %6526 = vmatprep.mubr.f32.mxu0 0.0
        %6527 = vmatmul.mubr.f32.gmra.mxu0 %v6398
        %v6528 = vpop.f32.mrf.mxu0
        %v6529 = vadd.f32 0.0, %v6528
        %v6530 = vpop.f32.mrf.mxu0
        %6531 = vmatprep.mubr.f32.mxu0 0.0
        %6532 = vmatmul.mubr.f32.gmra.mxu0 %v6400
        %v6533 = vpop.f32.mrf.mxu0
        %v6534 = vadd.f32 0.0, %v6533
        %v6535 = vpop.f32.mrf.mxu0
        %6536 = vmatprep.mubr.f32.mxu0 0.0
        %6537 = vmatmul.mubr.f32.gmra.mxu0 %v6402
        %v6538 = vpop.f32.mrf.mxu0
        %v6539 = vadd.f32 0.0, %v6538
        %v6540 = vpop.f32.mrf.mxu0
        %6541 = vmatprep.mubr.f32.mxu0 0.0
        %6542 = vmatmul.mubr.f32.gmra.mxu0 %v6404
        %v6543 = vpop.f32.mrf.mxu0
        %v6544 = vadd.f32 0.0, %v6543
        %v6545 = vpop.f32.mrf.mxu0
        %6546 = vmatprep.mubr.f32.mxu0 0.0
        %6547 = vmatmul.mubr.f32.gmra.mxu0 %v6406
        %v6548 = vpop.f32.mrf.mxu0
        %v6549 = vadd.f32 0.0, %v6548
        %v6550 = vpop.f32.mrf.mxu0
        %6551 = vmatprep.mubr.f32.mxu0 0.0
        %6552 = vmatmul.mubr.f32.gmra.mxu0 %v6408
        %v6553 = vpop.f32.mrf.mxu0
        %v6554 = vadd.f32 0.0, %v6553
        %v6555 = vpop.f32.mrf.mxu0
        %6556 = vmatprep.mubr.f32.mxu0 0.0
        %6557 = vmatmul.mubr.f32.gmra.mxu0 %v6410
        %v6558 = vpop.f32.mrf.mxu0
        %v6559 = vadd.f32 0.0, %v6558
        %v6560 = vpop.f32.mrf.mxu0
        %6561 = vmatprep.mubr.f32.mxu0 0.0
        %6562 = vmatmul.mubr.f32.gmra.mxu0 %v6412
        %v6563 = vpop.f32.mrf.mxu0
        %v6564 = vadd.f32 0.0, %v6563
        %v6565 = vpop.f32.mrf.mxu0
        %6566 = vmatprep.mubr.f32.mxu0 0.0
        %6567 = vmatmul.mubr.f32.gmra.mxu0 %v6414
        %v6568 = vpop.f32.mrf.mxu0
        %v6569 = vadd.f32 0.0, %v6568
        %v6570 = vpop.f32.mrf.mxu0
        %6571 = vmatprep.mubr.f32.mxu0 0.0
        %6572 = vmatmul.mubr.f32.gmra.mxu0 %v6416
        %v6573 = vpop.f32.mrf.mxu0
        %v6574 = vadd.f32 0.0, %v6573
        %v6575 = vpop.f32.mrf.mxu0
        %6576 = vmatprep.mubr.f32.mxu0 0.0
        %6577 = vmatmul.mubr.f32.gmra.mxu0 %v6418
        %v6578 = vpop.f32.mrf.mxu0
        %v6579 = vadd.f32 0.0, %v6578
        %v6580 = vpop.f32.mrf.mxu0
        %6581 = vmatprep.mubr.f32.mxu0 0.0
        %6582 = vmatmul.mubr.f32.gmra.mxu0 %v6420
        %v6583 = vpop.f32.mrf.mxu0
        %v6584 = vadd.f32 0.0, %v6583
        %v6585 = vpop.f32.mrf.mxu0
        %6586 = vmatprep.mubr.f32.mxu0 0.0
        %6587 = vmatmul.mubr.f32.gmra.mxu0 %v6422
        %v6588 = vpop.f32.mrf.mxu0
        %v6589 = vadd.f32 0.0, %v6588
        %v6590 = vpop.f32.mrf.mxu0
        %6591 = vmatprep.mubr.f32.mxu0 0.0
        %6592 = vmatmul.mubr.f32.gmra.mxu0 %v6424
        %v6593 = vpop.f32.mrf.mxu0
        %v6594 = vadd.f32 0.0, %v6593
        %v6595 = vpop.f32.mrf.mxu0
        %6596 = vmatprep.mubr.f32.mxu0 0.0
        %6597 = vmatmul.mubr.f32.gmra.mxu0 %v6426
        %v6598 = vpop.f32.mrf.mxu0
        %v6599 = vadd.f32 0.0, %v6598
        %v6600 = vpop.f32.mrf.mxu0
        %6601 = vmatprep.mubr.f32.mxu0 0.0
        %6602 = vmatmul.mubr.f32.gmra.mxu0 %v6428
        %v6603 = vpop.f32.mrf.mxu0
        %v6604 = vadd.f32 0.0, %v6603
        %v6605 = vpop.f32.mrf.mxu0
        %6606 = vmatprep.mubr.f32.mxu0 0.0
        %6607 = vmatmul.mubr.f32.gmra.mxu0 %v6430
        %v6608 = vpop.f32.mrf.mxu0
        %v6609 = vadd.f32 0.0, %v6608
        %v6610 = vpop.f32.mrf.mxu0
        %6611 = vmatprep.mubr.f32.mxu0 0.0
        %6612 = vmatmul.mubr.f32.gmra.mxu0 %v6432
        %v6613 = vpop.f32.mrf.mxu0
        %v6614 = vadd.f32 0.0, %v6613
        %v6615 = vpop.f32.mrf.mxu0
        %6616 = vmatprep.mubr.f32.mxu0 0.0
        %6617 = vmatmul.mubr.f32.gmra.mxu0 %v6434
        %v6618 = vpop.f32.mrf.mxu0
        %v6619 = vadd.f32 0.0, %v6618
        %v6620 = vpop.f32.mrf.mxu0
        %6621 = vmatprep.mubr.f32.mxu0 0.0
        %6622 = vmatmul.mubr.f32.gmra.mxu0 %v6436
        %v6623 = vpop.f32.mrf.mxu0
        %v6624 = vadd.f32 0.0, %v6623
        %v6625 = vpop.f32.mrf.mxu0
        %6626 = vmatprep.mubr.f32.mxu0 0.0
        %6627 = vmatmul.mubr.f32.gmra.mxu0 %v6438
        %v6628 = vpop.f32.mrf.mxu0
        %v6629 = vadd.f32 0.0, %v6628
        %v6630 = vpop.f32.mrf.mxu0
        %6631 = vmatprep.mubr.f32.mxu0 0.0
        %6632 = vmatmul.mubr.f32.gmra.mxu0 %v6440
        %v6633 = vpop.f32.mrf.mxu0
        %v6634 = vadd.f32 0.0, %v6633
        %v6635 = vpop.f32.mrf.mxu0
        %6636 = vmatprep.mubr.f32.mxu0 0.0
        %6637 = vmatmul.mubr.f32.gmra.mxu0 %v6442
        %v6638 = vpop.f32.mrf.mxu0
        %v6639 = vadd.f32 0.0, %v6638
        %v6640 = vpop.f32.mrf.mxu0
        %6641 = vmatprep.mubr.f32.mxu0 0.0
        %6642 = vmatmul.mubr.f32.gmra.mxu0 %v6444
        %v6643 = vpop.f32.mrf.mxu0
        %v6644 = vadd.f32 0.0, %v6643
        %v6645 = vpop.f32.mrf.mxu0
        %6646 = vmatprep.mubr.f32.mxu0 0.0
        %6647 = vmatmul.mubr.f32.gmra.mxu0 %v6446
        %v6648 = vpop.f32.mrf.mxu0
        %v6649 = vadd.f32 0.0, %v6648
        %v6650 = vpop.f32.mrf.mxu0
        %6651 = vmatprep.mubr.f32.mxu0 0.0
        %6652 = vmatmul.mubr.f32.gmra.mxu0 %v6448
        %v6653 = vpop.f32.mrf.mxu0
        %v6654 = vadd.f32 0.0, %v6653
        %v6655 = vpop.f32.mrf.mxu0
        %6656 = vmatprep.mubr.f32.mxu0 0.0
        %6657 = vmatmul.mubr.f32.gmra.mxu0 %v6450
        %v6658 = vpop.f32.mrf.mxu0
        %v6659 = vadd.f32 0.0, %v6658
        %v6660 = vpop.f32.mrf.mxu0
        %6661 = vmatprep.mubr.f32.mxu0 0.0
        %6662 = vmatmul.mubr.f32.gmra.mxu0 %v6452
        %v6663 = vpop.f32.mrf.mxu0
        %v6664 = vadd.f32 0.0, %v6663
        %v6665 = vpop.f32.mrf.mxu0
        %6666 = vmatprep.mubr.f32.mxu0 0.0
        %6667 = vmatmul.mubr.f32.gmra.mxu0 %v6454
        %v6668 = vpop.f32.mrf.mxu0
        %v6669 = vadd.f32 0.0, %v6668
        %v6670 = vpop.f32.mrf.mxu0
        %6671 = vmatprep.mubr.f32.mxu0 0.0
        %6672 = vmatmul.mubr.f32.gmra.mxu0 %v6456
        %v6673 = vpop.f32.mrf.mxu0
        %v6674 = vadd.f32 0.0, %v6673
        %v6675 = vpop.f32.mrf.mxu0
        %6676 = vmatprep.mubr.f32.mxu0 0.0
        %6677 = vmatmul.mubr.f32.gmra.mxu0 %v6458
        %v6678 = vpop.f32.mrf.mxu0
        %v6679 = vadd.f32 0.0, %v6678
        %v6680 = vpop.f32.mrf.mxu0
        %6681 = vmatprep.mubr.f32.mxu0 0.0
        %6682 = vmatmul.mubr.f32.gmra.mxu0 %v6460
        %v6683 = vpop.f32.mrf.mxu0
        %v6684 = vadd.f32 0.0, %v6683
        %v6685 = vpop.f32.mrf.mxu0
        %6686 = vdwg.mxu0
        %v6687 = vmax.f32 %v6529, %v6549
        %v6688 = vmax.f32 %v6534, %v6554
        %v6689 = vmax.f32 %v6539, %v6559
        %v6690 = vmax.f32 %v6544, %v6564
        %v6691 = vmax.f32 %v6687, %v6569
        %v6692 = vmax.f32 %v6688, %v6574
        %v6693 = vmax.f32 %v6689, %v6579
        %v6694 = vmax.f32 %v6690, %v6584
        %v6695 = vmax.f32 %v6691, %v6589
        %v6696 = vmax.f32 %v6692, %v6594
        %v6697 = vmax.f32 %v6693, %v6599
        %v6698 = vmax.f32 %v6694, %v6604
        %v6699 = vmax.f32 %v6695, %v6609
        %v6700 = vmax.f32 %v6696, %v6614
        %v6701 = vmax.f32 %v6697, %v6619
        %v6702 = vmax.f32 %v6698, %v6624
        %v6703 = vmax.f32 %v6699, %v6629
        %v6704 = vmax.f32 %v6700, %v6634
        %v6705 = vmax.f32 %v6701, %v6639
        %v6706 = vmax.f32 %v6702, %v6644
        %v6707 = vmax.f32 %v6703, %v6649
        %v6708 = vmax.f32 %v6704, %v6654
        %v6709 = vmax.f32 %v6705, %v6659
        %v6710 = vmax.f32 %v6706, %v6664
        %v6711 = vmax.f32 %v6707, %v6669
        %v6712 = vmax.f32 %v6708, %v6674
        %v6713 = vmax.f32 %v6709, %v6679
        %v6714 = vmax.f32 %v6710, %v6684
        %v6715 = vmax.f32 %v6711, %v6712
        %v6716 = vmax.f32 %v6713, %v6714
        %v6717 = vmax.f32 %v6715, %v6716
        %v6718 = vrot.slane %v6717, 4
        %v6719 = vmax.f32 %v6717, %v6718
        %v6720 = vrot.slane %v6719, 2
        %v6721 = vmax.f32 %v6719, %v6720
        %v6722 = vrot.slane %v6721, 1
        %v6723 = vmax.f32 %v6721, %v6722
        %v6724 = vsub.f32 %v6529, %v6723
        %v6725 = vsub.f32 %v6534, %v6723
        %v6726 = vsub.f32 %v6539, %v6723
        %v6727 = vsub.f32 %v6544, %v6723
        %v6728 = vsub.f32 %v6549, %v6723
        %v6729 = vsub.f32 %v6554, %v6723
        %v6730 = vsub.f32 %v6559, %v6723
        %v6731 = vsub.f32 %v6564, %v6723
        %v6732 = vsub.f32 %v6569, %v6723
        %v6733 = vsub.f32 %v6574, %v6723
        %v6734 = vsub.f32 %v6579, %v6723
        %v6735 = vsub.f32 %v6584, %v6723
        %v6736 = vsub.f32 %v6589, %v6723
        %v6737 = vsub.f32 %v6594, %v6723
        %v6738 = vsub.f32 %v6599, %v6723
        %v6739 = vsub.f32 %v6604, %v6723
        %v6740 = vsub.f32 %v6609, %v6723
        %v6741 = vsub.f32 %v6614, %v6723
        %v6742 = vsub.f32 %v6619, %v6723
        %v6743 = vsub.f32 %v6624, %v6723
        %v6744 = vsub.f32 %v6629, %v6723
        %v6745 = vsub.f32 %v6634, %v6723
        %v6746 = vsub.f32 %v6639, %v6723
        %v6747 = vsub.f32 %v6644, %v6723
        %v6748 = vsub.f32 %v6649, %v6723
        %v6749 = vsub.f32 %v6654, %v6723
        %v6750 = vsub.f32 %v6659, %v6723
        %v6751 = vsub.f32 %v6664, %v6723
        %v6752 = vsub.f32 %v6669, %v6723
        %v6753 = vsub.f32 %v6674, %v6723
        %v6754 = vsub.f32 %v6679, %v6723
        %v6755 = vsub.f32 %v6684, %v6723
        %v6756 = vmul.f32 %v6724, 1.442695
        %v6757 = vpow.pop %v6756
        %v6758 = vmul.f32 %v6725, 1.442695
        %v6759 = vpow.pop %v6758
        %v6760 = vmul.f32 %v6726, 1.442695
        %v6761 = vpow.pop %v6760
        %v6762 = vmul.f32 %v6727, 1.442695
        %v6763 = vpow.pop %v6762
        %v6764 = vmul.f32 %v6728, 1.442695
        %v6765 = vpow.pop %v6764
        %v6766 = vmul.f32 %v6729, 1.442695
        %v6767 = vpow.pop %v6766
        %v6768 = vmul.f32 %v6730, 1.442695
        %v6769 = vpow.pop %v6768
        %v6770 = vmul.f32 %v6731, 1.442695
        %v6771 = vpow.pop %v6770
        %v6772 = vmul.f32 %v6732, 1.442695
        %v6773 = vpow.pop %v6772
        %v6774 = vmul.f32 %v6733, 1.442695
        %v6775 = vpow.pop %v6774
        %v6776 = vmul.f32 %v6734, 1.442695
        %v6777 = vpow.pop %v6776
        %v6778 = vmul.f32 %v6735, 1.442695
        %v6779 = vpow.pop %v6778
        %v6780 = vmul.f32 %v6736, 1.442695
        %v6781 = vpow.pop %v6780
        %v6782 = vmul.f32 %v6737, 1.442695
        %v6783 = vpow.pop %v6782
        %v6784 = vmul.f32 %v6738, 1.442695
        %v6785 = vpow.pop %v6784
        %v6786 = vmul.f32 %v6739, 1.442695
        %v6787 = vpow.pop %v6786
        %v6788 = vmul.f32 %v6740, 1.442695
        %v6789 = vpow.pop %v6788
        %v6790 = vmul.f32 %v6741, 1.442695
        %v6791 = vpow.pop %v6790
        %v6792 = vmul.f32 %v6742, 1.442695
        %v6793 = vpow.pop %v6792
        %v6794 = vmul.f32 %v6743, 1.442695
        %v6795 = vpow.pop %v6794
        %v6796 = vmul.f32 %v6744, 1.442695
        %v6797 = vpow.pop %v6796
        %v6798 = vmul.f32 %v6745, 1.442695
        %v6799 = vpow.pop %v6798
        %v6800 = vmul.f32 %v6746, 1.442695
        %v6801 = vpow.pop %v6800
        %v6802 = vmul.f32 %v6747, 1.442695
        %v6803 = vpow.pop %v6802
        %v6804 = vmul.f32 %v6748, 1.442695
        %v6805 = vpow.pop %v6804
        %v6806 = vmul.f32 %v6749, 1.442695
        %v6807 = vpow.pop %v6806
        %v6808 = vmul.f32 %v6750, 1.442695
        %v6809 = vpow.pop %v6808
        %v6810 = vmul.f32 %v6751, 1.442695
        %v6811 = vpow.pop %v6810
        %v6812 = vmul.f32 %v6752, 1.442695
        %v6813 = vpow.pop %v6812
        %v6814 = vmul.f32 %v6753, 1.442695
        %v6815 = vpow.pop %v6814
        %v6816 = vmul.f32 %v6754, 1.442695
        %v6817 = vpow.pop %v6816
        %v6818 = vmul.f32 %v6755, 1.442695
        %v6819 = vpow.pop %v6818
        %v6820 = vadd.f32 %v6757, %v6759
        %v6821 = vadd.f32 %v6820, %v6761
        %v6822 = vadd.f32 %v6821, %v6763
        %v6823 = vadd.f32 %v6822, %v6765
        %v6824 = vadd.f32 %v6823, %v6767
        %v6825 = vadd.f32 %v6824, %v6769
        %v6826 = vadd.f32 %v6825, %v6771
        %v6827 = vadd.f32 %v6826, %v6773
        %v6828 = vadd.f32 %v6827, %v6775
        %v6829 = vadd.f32 %v6828, %v6777
        %v6830 = vadd.f32 %v6829, %v6779
        %v6831 = vadd.f32 %v6830, %v6781
        %v6832 = vadd.f32 %v6831, %v6783
        %v6833 = vadd.f32 %v6832, %v6785
        %v6834 = vadd.f32 %v6833, %v6787
        %v6835 = vadd.f32 %v6834, %v6789
        %v6836 = vadd.f32 %v6835, %v6791
        %v6837 = vadd.f32 %v6836, %v6793
        %v6838 = vadd.f32 %v6837, %v6795
        %v6839 = vadd.f32 %v6838, %v6797
        %v6840 = vadd.f32 %v6839, %v6799
        %v6841 = vadd.f32 %v6840, %v6801
        %v6842 = vadd.f32 %v6841, %v6803
        %v6843 = vadd.f32 %v6842, %v6805
        %v6844 = vadd.f32 %v6843, %v6807
        %v6845 = vadd.f32 %v6844, %v6809
        %v6846 = vadd.f32 %v6845, %v6811
        %v6847 = vadd.f32 %v6846, %v6813
        %v6848 = vadd.f32 %v6847, %v6815
        %v6849 = vadd.f32 %v6848, %v6817
        %v6850 = vadd.f32 %v6849, %v6819
        %v6851 = vrot.slane %v6850, 4
        %v6852 = vadd.f32 %v6850, %v6851
        %v6853 = vrot.slane %v6852, 2
        %v6854 = vadd.f32 %v6852, %v6853
        %v6855 = vrot.slane %v6854, 1
        %v6856 = vadd.f32 %v6854, %v6855
        %v6857 = vrcp.pop %v6856
        %v6858 = vpack.c.bf16 %v6759, %v6757
        %v6859 = vpack.c.bf16 %v6763, %v6761
        %v6860 = vpack.c.bf16 %v6767, %v6765
        %v6861 = vpack.c.bf16 %v6771, %v6769
        %v6862 = vpack.c.bf16 %v6775, %v6773
        %v6863 = vpack.c.bf16 %v6779, %v6777
        %v6864 = vpack.c.bf16 %v6783, %v6781
        %v6865 = vpack.c.bf16 %v6787, %v6785
        %v6866 = vpack.c.bf16 %v6791, %v6789
        %v6867 = vpack.c.bf16 %v6795, %v6793
        %v6868 = vpack.c.bf16 %v6799, %v6797
        %v6869 = vpack.c.bf16 %v6803, %v6801
        %v6870 = vpack.c.bf16 %v6807, %v6805
        %v6871 = vpack.c.bf16 %v6811, %v6809
        %v6872 = vpack.c.bf16 %v6815, %v6813
        %v6873 = vpack.c.bf16 %v6819, %v6817
        %6874 = vmatprep.subr.bf16.mxu0 0
        %6875 = vmatpush1.bf16.msra.mxu0 %v6865
        %6876 = vmatprep.subr.bf16.mxu0 0
        %6877 = vmatpush1.bf16.msra.mxu0 %v6864
        %6878 = vmatprep.subr.bf16.mxu0 0
        %6879 = vmatpush1.bf16.msra.mxu0 %v6863
        %6880 = vmatprep.subr.bf16.mxu0 0
        %6881 = vmatpush1.bf16.msra.mxu0 %v6862
        %6882 = vmatprep.subr.bf16.mxu0 0
        %6883 = vmatpush1.bf16.msra.mxu0 %v6861
        %6884 = vmatprep.subr.bf16.mxu0 0
        %6885 = vmatpush1.bf16.msra.mxu0 %v6860
        %6886 = vmatprep.subr.bf16.mxu0 0
        %6887 = vmatpush1.bf16.msra.mxu0 %v6859
        %6888 = vmatprep.subr.bf16.mxu0 0
        %6889 = vmatpush1.bf16.msra.mxu0 %v6858
        %6890 = vmatprep.subr.bf16.mxu0 0
        %6891 = vmatpush2.bf16.msra.mxu0 %v6873
        %6892 = vmatprep.subr.bf16.mxu0 0
        %6893 = vmatpush2.bf16.msra.mxu0 %v6872
        %6894 = vmatprep.subr.bf16.mxu0 0
        %6895 = vmatpush2.bf16.msra.mxu0 %v6871
        %6896 = vmatprep.subr.bf16.mxu0 0
        %6897 = vmatpush2.bf16.msra.mxu0 %v6870
        %6898 = vmatprep.subr.bf16.mxu0 0
        %6899 = vmatpush2.bf16.msra.mxu0 %v6869
        %6900 = vmatprep.subr.bf16.mxu0 0
        %6901 = vmatpush2.bf16.msra.mxu0 %v6868
        %6902 = vmatprep.subr.bf16.mxu0 0
        %6903 = vmatpush2.bf16.msra.mxu0 %v6867
        %6904 = vmatprep.subr.bf16.mxu0 0
        %6905 = vmatpush2.bf16.msra.mxu0 %v6866
        %6906 = vmatprep.mubr.bf16.mxu0 %v6333
        %6907 = vmatmul.mubr.bf16.gmra.mxu0 %v6332
        %v6908 = vpop.f32.mrf.mxu0
        %v6909 = vadd.f32 0.0, %v6908
        %v6910 = vpop.f32.mrf.mxu0
        %v6911 = vpop.f32.mrf.mxu0
        %v6912 = vpop.f32.mrf.mxu0
        %6913 = vdwg.mxu0
        %v6914 = vmul.f32 %v6909, %v6857
        %6915 = vst [vmem:[#allocation2 + $0x10] sm:$0xff] %v6914
        %6916 = vmatprep.subr.mxu0 0.0
        %6917 = vmatpush1.msra.mxu0 0.0
        %6918 = vmatprep.subr.mxu0 0.0
        %6919 = vmatpush1.msra.mxu0 0.0
        %6920 = vmatprep.subr.mxu0 0.0
        %6921 = vmatpush1.msra.mxu0 0.0
        %6922 = vmatprep.subr.mxu0 0.0
        %6923 = vmatpush1.msra.mxu0 0.0
        %6924 = vmatprep.subr.mxu0 0.0
        %6925 = vmatpush1.msra.mxu0 0.0
        %6926 = vmatprep.subr.mxu0 0.0
        %6927 = vmatpush1.msra.mxu0 0.0
        %6928 = vmatprep.subr.mxu0 0.0
        %6929 = vmatpush1.msra.mxu0 0.0
        %6930 = vmatprep.subr.mxu0 0.0
        %6931 = vmatpush1.msra.mxu0 0.0
        %6932 = vmatprep.subr.mxu0 0.0
        %6933 = vmatpush1.msra.mxu0 0.0
        %6934 = vmatprep.subr.mxu0 0.0
        %6935 = vmatpush1.msra.mxu0 0.0
        %6936 = vmatprep.subr.mxu0 0.0
        %6937 = vmatpush1.msra.mxu0 0.0
        %6938 = vmatprep.subr.mxu0 0.0
        %6939 = vmatpush1.msra.mxu0 0.0
        %6940 = vmatprep.subr.mxu0 0.0
        %6941 = vmatpush1.msra.mxu0 0.0
        %6942 = vmatprep.subr.mxu0 0.0
        %6943 = vmatpush1.msra.mxu0 0.0
        %6944 = vmatprep.subr.mxu0 0.0
        %6945 = vmatpush1.msra.mxu0 0.0
        %6946 = vmatprep.subr.mxu0 0.0
        %6947 = vmatpush1.msra.mxu0 %v5210
        %6948 = vmatprep.subr.mxu0 0.0
        %6949 = vmatpush2.msra.mxu0 0.0
        %6950 = vmatprep.subr.mxu0 0.0
        %6951 = vmatpush2.msra.mxu0 0.0
        %6952 = vmatprep.subr.mxu0 0.0
        %6953 = vmatpush2.msra.mxu0 0.0
        %6954 = vmatprep.subr.mxu0 0.0
        %6955 = vmatpush2.msra.mxu0 0.0
        %6956 = vmatprep.subr.mxu0 0.0
        %6957 = vmatpush2.msra.mxu0 0.0
        %6958 = vmatprep.subr.mxu0 0.0
        %6959 = vmatpush2.msra.mxu0 0.0
        %6960 = vmatprep.subr.mxu0 0.0
        %6961 = vmatpush2.msra.mxu0 0.0
        %6962 = vmatprep.subr.mxu0 0.0
        %6963 = vmatpush2.msra.mxu0 0.0
        %6964 = vmatprep.subr.mxu0 0.0
        %6965 = vmatpush2.msra.mxu0 0.0
        %6966 = vmatprep.subr.mxu0 0.0
        %6967 = vmatpush2.msra.mxu0 0.0
        %6968 = vmatprep.subr.mxu0 0.0
        %6969 = vmatpush2.msra.mxu0 0.0
        %6970 = vmatprep.subr.mxu0 0.0
        %6971 = vmatpush2.msra.mxu0 0.0
        %6972 = vmatprep.subr.mxu0 0.0
        %6973 = vmatpush2.msra.mxu0 0.0
        %6974 = vmatprep.subr.mxu0 0.0
        %6975 = vmatpush2.msra.mxu0 0.0
        %6976 = vmatprep.subr.mxu0 0.0
        %6977 = vmatpush2.msra.mxu0 0.0
        %6978 = vmatprep.subr.mxu0 0.0
        %6979 = vmatpush2.msra.mxu0 0.0
        %6980 = vmatprep.mubr.f32.mxu0 0.0
        %6981 = vmatmul.mubr.f32.gmra.mxu0 %v6398
        %v6982 = vpop.f32.mrf.mxu0
        %v6983 = vadd.f32 0.0, %v6982
        %v6984 = vpop.f32.mrf.mxu0
        %6985 = vmatprep.mubr.f32.mxu0 0.0
        %6986 = vmatmul.mubr.f32.gmra.mxu0 %v6400
        %v6987 = vpop.f32.mrf.mxu0
        %v6988 = vadd.f32 0.0, %v6987
        %v6989 = vpop.f32.mrf.mxu0
        %6990 = vmatprep.mubr.f32.mxu0 0.0
        %6991 = vmatmul.mubr.f32.gmra.mxu0 %v6402
        %v6992 = vpop.f32.mrf.mxu0
        %v6993 = vadd.f32 0.0, %v6992
        %v6994 = vpop.f32.mrf.mxu0
        %6995 = vmatprep.mubr.f32.mxu0 0.0
        %6996 = vmatmul.mubr.f32.gmra.mxu0 %v6404
        %v6997 = vpop.f32.mrf.mxu0
        %v6998 = vadd.f32 0.0, %v6997
        %v6999 = vpop.f32.mrf.mxu0
        %7000 = vmatprep.mubr.f32.mxu0 0.0
        %7001 = vmatmul.mubr.f32.gmra.mxu0 %v6406
        %v7002 = vpop.f32.mrf.mxu0
        %v7003 = vadd.f32 0.0, %v7002
        %v7004 = vpop.f32.mrf.mxu0
        %7005 = vmatprep.mubr.f32.mxu0 0.0
        %7006 = vmatmul.mubr.f32.gmra.mxu0 %v6408
        %v7007 = vpop.f32.mrf.mxu0
        %v7008 = vadd.f32 0.0, %v7007
        %v7009 = vpop.f32.mrf.mxu0
        %7010 = vmatprep.mubr.f32.mxu0 0.0
        %7011 = vmatmul.mubr.f32.gmra.mxu0 %v6410
        %v7012 = vpop.f32.mrf.mxu0
        %v7013 = vadd.f32 0.0, %v7012
        %v7014 = vpop.f32.mrf.mxu0
        %7015 = vmatprep.mubr.f32.mxu0 0.0
        %7016 = vmatmul.mubr.f32.gmra.mxu0 %v6412
        %v7017 = vpop.f32.mrf.mxu0
        %v7018 = vadd.f32 0.0, %v7017
        %v7019 = vpop.f32.mrf.mxu0
        %7020 = vmatprep.mubr.f32.mxu0 0.0
        %7021 = vmatmul.mubr.f32.gmra.mxu0 %v6414
        %v7022 = vpop.f32.mrf.mxu0
        %v7023 = vadd.f32 0.0, %v7022
        %v7024 = vpop.f32.mrf.mxu0
        %7025 = vmatprep.mubr.f32.mxu0 0.0
        %7026 = vmatmul.mubr.f32.gmra.mxu0 %v6416
        %v7027 = vpop.f32.mrf.mxu0
        %v7028 = vadd.f32 0.0, %v7027
        %v7029 = vpop.f32.mrf.mxu0
        %7030 = vmatprep.mubr.f32.mxu0 0.0
        %7031 = vmatmul.mubr.f32.gmra.mxu0 %v6418
        %v7032 = vpop.f32.mrf.mxu0
        %v7033 = vadd.f32 0.0, %v7032
        %v7034 = vpop.f32.mrf.mxu0
        %7035 = vmatprep.mubr.f32.mxu0 0.0
        %7036 = vmatmul.mubr.f32.gmra.mxu0 %v6420
        %v7037 = vpop.f32.mrf.mxu0
        %v7038 = vadd.f32 0.0, %v7037
        %v7039 = vpop.f32.mrf.mxu0
        %7040 = vmatprep.mubr.f32.mxu0 0.0
        %7041 = vmatmul.mubr.f32.gmra.mxu0 %v6422
        %v7042 = vpop.f32.mrf.mxu0
        %v7043 = vadd.f32 0.0, %v7042
        %v7044 = vpop.f32.mrf.mxu0
        %7045 = vmatprep.mubr.f32.mxu0 0.0
        %7046 = vmatmul.mubr.f32.gmra.mxu0 %v6424
        %v7047 = vpop.f32.mrf.mxu0
        %v7048 = vadd.f32 0.0, %v7047
        %v7049 = vpop.f32.mrf.mxu0
        %7050 = vmatprep.mubr.f32.mxu0 0.0
        %7051 = vmatmul.mubr.f32.gmra.mxu0 %v6426
        %v7052 = vpop.f32.mrf.mxu0
        %v7053 = vadd.f32 0.0, %v7052
        %v7054 = vpop.f32.mrf.mxu0
        %7055 = vmatprep.mubr.f32.mxu0 0.0
        %7056 = vmatmul.mubr.f32.gmra.mxu0 %v6428
        %v7057 = vpop.f32.mrf.mxu0
        %v7058 = vadd.f32 0.0, %v7057
        %v7059 = vpop.f32.mrf.mxu0
        %7060 = vmatprep.mubr.f32.mxu0 0.0
        %7061 = vmatmul.mubr.f32.gmra.mxu0 %v6430
        %v7062 = vpop.f32.mrf.mxu0
        %v7063 = vadd.f32 0.0, %v7062
        %v7064 = vpop.f32.mrf.mxu0
        %7065 = vmatprep.mubr.f32.mxu0 0.0
        %7066 = vmatmul.mubr.f32.gmra.mxu0 %v6432
        %v7067 = vpop.f32.mrf.mxu0
        %v7068 = vadd.f32 0.0, %v7067
        %v7069 = vpop.f32.mrf.mxu0
        %7070 = vmatprep.mubr.f32.mxu0 0.0
        %7071 = vmatmul.mubr.f32.gmra.mxu0 %v6434
        %v7072 = vpop.f32.mrf.mxu0
        %v7073 = vadd.f32 0.0, %v7072
        %v7074 = vpop.f32.mrf.mxu0
        %7075 = vmatprep.mubr.f32.mxu0 0.0
        %7076 = vmatmul.mubr.f32.gmra.mxu0 %v6436
        %v7077 = vpop.f32.mrf.mxu0
        %v7078 = vadd.f32 0.0, %v7077
        %v7079 = vpop.f32.mrf.mxu0
        %7080 = vmatprep.mubr.f32.mxu0 0.0
        %7081 = vmatmul.mubr.f32.gmra.mxu0 %v6438
        %v7082 = vpop.f32.mrf.mxu0
        %v7083 = vadd.f32 0.0, %v7082
        %v7084 = vpop.f32.mrf.mxu0
        %7085 = vmatprep.mubr.f32.mxu0 0.0
        %7086 = vmatmul.mubr.f32.gmra.mxu0 %v6440
        %v7087 = vpop.f32.mrf.mxu0
        %v7088 = vadd.f32 0.0, %v7087
        %v7089 = vpop.f32.mrf.mxu0
        %7090 = vmatprep.mubr.f32.mxu0 0.0
        %7091 = vmatmul.mubr.f32.gmra.mxu0 %v6442
        %v7092 = vpop.f32.mrf.mxu0
        %v7093 = vadd.f32 0.0, %v7092
        %v7094 = vpop.f32.mrf.mxu0
        %7095 = vmatprep.mubr.f32.mxu0 0.0
        %7096 = vmatmul.mubr.f32.gmra.mxu0 %v6444
        %v7097 = vpop.f32.mrf.mxu0
        %v7098 = vadd.f32 0.0, %v7097
        %v7099 = vpop.f32.mrf.mxu0
        %7100 = vmatprep.mubr.f32.mxu0 0.0
        %7101 = vmatmul.mubr.f32.gmra.mxu0 %v6446
        %v7102 = vpop.f32.mrf.mxu0
        %v7103 = vadd.f32 0.0, %v7102
        %v7104 = vpop.f32.mrf.mxu0
        %7105 = vmatprep.mubr.f32.mxu0 0.0
        %7106 = vmatmul.mubr.f32.gmra.mxu0 %v6448
        %v7107 = vpop.f32.mrf.mxu0
        %v7108 = vadd.f32 0.0, %v7107
        %v7109 = vpop.f32.mrf.mxu0
        %7110 = vmatprep.mubr.f32.mxu0 0.0
        %7111 = vmatmul.mubr.f32.gmra.mxu0 %v6450
        %v7112 = vpop.f32.mrf.mxu0
        %v7113 = vadd.f32 0.0, %v7112
        %v7114 = vpop.f32.mrf.mxu0
        %7115 = vmatprep.mubr.f32.mxu0 0.0
        %7116 = vmatmul.mubr.f32.gmra.mxu0 %v6452
        %v7117 = vpop.f32.mrf.mxu0
        %v7118 = vadd.f32 0.0, %v7117
        %v7119 = vpop.f32.mrf.mxu0
        %7120 = vmatprep.mubr.f32.mxu0 0.0
        %7121 = vmatmul.mubr.f32.gmra.mxu0 %v6454
        %v7122 = vpop.f32.mrf.mxu0
        %v7123 = vadd.f32 0.0, %v7122
        %v7124 = vpop.f32.mrf.mxu0
        %7125 = vmatprep.mubr.f32.mxu0 0.0
        %7126 = vmatmul.mubr.f32.gmra.mxu0 %v6456
        %v7127 = vpop.f32.mrf.mxu0
        %v7128 = vadd.f32 0.0, %v7127
        %v7129 = vpop.f32.mrf.mxu0
        %7130 = vmatprep.mubr.f32.mxu0 0.0
        %7131 = vmatmul.mubr.f32.gmra.mxu0 %v6458
        %v7132 = vpop.f32.mrf.mxu0
        %v7133 = vadd.f32 0.0, %v7132
        %v7134 = vpop.f32.mrf.mxu0
        %7135 = vmatprep.mubr.f32.mxu0 0.0
        %7136 = vmatmul.mubr.f32.gmra.mxu0 %v6460
        %v7137 = vpop.f32.mrf.mxu0
        %v7138 = vadd.f32 0.0, %v7137
        %v7139 = vpop.f32.mrf.mxu0
        %7140 = vdwg.mxu0
        %v7141 = vmax.f32 %v6983, %v7003
        %v7142 = vmax.f32 %v6988, %v7008
        %v7143 = vmax.f32 %v6993, %v7013
        %v7144 = vmax.f32 %v6998, %v7018
        %v7145 = vmax.f32 %v7141, %v7023
        %v7146 = vmax.f32 %v7142, %v7028
        %v7147 = vmax.f32 %v7143, %v7033
        %v7148 = vmax.f32 %v7144, %v7038
        %v7149 = vmax.f32 %v7145, %v7043
        %v7150 = vmax.f32 %v7146, %v7048
        %v7151 = vmax.f32 %v7147, %v7053
        %v7152 = vmax.f32 %v7148, %v7058
        %v7153 = vmax.f32 %v7149, %v7063
        %v7154 = vmax.f32 %v7150, %v7068
        %v7155 = vmax.f32 %v7151, %v7073
        %v7156 = vmax.f32 %v7152, %v7078
        %v7157 = vmax.f32 %v7153, %v7083
        %v7158 = vmax.f32 %v7154, %v7088
        %v7159 = vmax.f32 %v7155, %v7093
        %v7160 = vmax.f32 %v7156, %v7098
        %v7161 = vmax.f32 %v7157, %v7103
        %v7162 = vmax.f32 %v7158, %v7108
        %v7163 = vmax.f32 %v7159, %v7113
        %v7164 = vmax.f32 %v7160, %v7118
        %v7165 = vmax.f32 %v7161, %v7123
        %v7166 = vmax.f32 %v7162, %v7128
        %v7167 = vmax.f32 %v7163, %v7133
        %v7168 = vmax.f32 %v7164, %v7138
        %v7169 = vmax.f32 %v7165, %v7166
        %v7170 = vmax.f32 %v7167, %v7168
        %v7171 = vmax.f32 %v7169, %v7170
        %v7172 = vrot.slane %v7171, 4
        %v7173 = vmax.f32 %v7171, %v7172
        %v7174 = vrot.slane %v7173, 2
        %v7175 = vmax.f32 %v7173, %v7174
        %v7176 = vrot.slane %v7175, 1
        %v7177 = vmax.f32 %v7175, %v7176
        %v7178 = vsub.f32 %v6983, %v7177
        %v7179 = vsub.f32 %v6988, %v7177
        %v7180 = vsub.f32 %v6993, %v7177
        %v7181 = vsub.f32 %v6998, %v7177
        %v7182 = vsub.f32 %v7003, %v7177
        %v7183 = vsub.f32 %v7008, %v7177
        %v7184 = vsub.f32 %v7013, %v7177
        %v7185 = vsub.f32 %v7018, %v7177
        %v7186 = vsub.f32 %v7023, %v7177
        %v7187 = vsub.f32 %v7028, %v7177
        %v7188 = vsub.f32 %v7033, %v7177
        %v7189 = vsub.f32 %v7038, %v7177
        %v7190 = vsub.f32 %v7043, %v7177
        %v7191 = vsub.f32 %v7048, %v7177
        %v7192 = vsub.f32 %v7053, %v7177
        %v7193 = vsub.f32 %v7058, %v7177
        %v7194 = vsub.f32 %v7063, %v7177
        %v7195 = vsub.f32 %v7068, %v7177
        %v7196 = vsub.f32 %v7073, %v7177
        %v7197 = vsub.f32 %v7078, %v7177
        %v7198 = vsub.f32 %v7083, %v7177
        %v7199 = vsub.f32 %v7088, %v7177
        %v7200 = vsub.f32 %v7093, %v7177
        %v7201 = vsub.f32 %v7098, %v7177
        %v7202 = vsub.f32 %v7103, %v7177
        %v7203 = vsub.f32 %v7108, %v7177
        %v7204 = vsub.f32 %v7113, %v7177
        %v7205 = vsub.f32 %v7118, %v7177
        %v7206 = vsub.f32 %v7123, %v7177
        %v7207 = vsub.f32 %v7128, %v7177
        %v7208 = vsub.f32 %v7133, %v7177
        %v7209 = vsub.f32 %v7138, %v7177
        %v7210 = vmul.f32 %v7178, 1.442695
        %v7211 = vpow.pop %v7210
        %v7212 = vmul.f32 %v7179, 1.442695
        %v7213 = vpow.pop %v7212
        %v7214 = vmul.f32 %v7180, 1.442695
        %v7215 = vpow.pop %v7214
        %v7216 = vmul.f32 %v7181, 1.442695
        %v7217 = vpow.pop %v7216
        %v7218 = vmul.f32 %v7182, 1.442695
        %v7219 = vpow.pop %v7218
        %v7220 = vmul.f32 %v7183, 1.442695
        %v7221 = vpow.pop %v7220
        %v7222 = vmul.f32 %v7184, 1.442695
        %v7223 = vpow.pop %v7222
        %v7224 = vmul.f32 %v7185, 1.442695
        %v7225 = vpow.pop %v7224
        %v7226 = vmul.f32 %v7186, 1.442695
        %v7227 = vpow.pop %v7226
        %v7228 = vmul.f32 %v7187, 1.442695
        %v7229 = vpow.pop %v7228
        %v7230 = vmul.f32 %v7188, 1.442695
        %v7231 = vpow.pop %v7230
        %v7232 = vmul.f32 %v7189, 1.442695
        %v7233 = vpow.pop %v7232
        %v7234 = vmul.f32 %v7190, 1.442695
        %v7235 = vpow.pop %v7234
        %v7236 = vmul.f32 %v7191, 1.442695
        %v7237 = vpow.pop %v7236
        %v7238 = vmul.f32 %v7192, 1.442695
        %v7239 = vpow.pop %v7238
        %v7240 = vmul.f32 %v7193, 1.442695
        %v7241 = vpow.pop %v7240
        %v7242 = vmul.f32 %v7194, 1.442695
        %v7243 = vpow.pop %v7242
        %v7244 = vmul.f32 %v7195, 1.442695
        %v7245 = vpow.pop %v7244
        %v7246 = vmul.f32 %v7196, 1.442695
        %v7247 = vpow.pop %v7246
        %v7248 = vmul.f32 %v7197, 1.442695
        %v7249 = vpow.pop %v7248
        %v7250 = vmul.f32 %v7198, 1.442695
        %v7251 = vpow.pop %v7250
        %v7252 = vmul.f32 %v7199, 1.442695
        %v7253 = vpow.pop %v7252
        %v7254 = vmul.f32 %v7200, 1.442695
        %v7255 = vpow.pop %v7254
        %v7256 = vmul.f32 %v7201, 1.442695
        %v7257 = vpow.pop %v7256
        %v7258 = vmul.f32 %v7202, 1.442695
        %v7259 = vpow.pop %v7258
        %v7260 = vmul.f32 %v7203, 1.442695
        %v7261 = vpow.pop %v7260
        %v7262 = vmul.f32 %v7204, 1.442695
        %v7263 = vpow.pop %v7262
        %v7264 = vmul.f32 %v7205, 1.442695
        %v7265 = vpow.pop %v7264
        %v7266 = vmul.f32 %v7206, 1.442695
        %v7267 = vpow.pop %v7266
        %v7268 = vmul.f32 %v7207, 1.442695
        %v7269 = vpow.pop %v7268
        %v7270 = vmul.f32 %v7208, 1.442695
        %v7271 = vpow.pop %v7270
        %v7272 = vmul.f32 %v7209, 1.442695
        %v7273 = vpow.pop %v7272
        %v7274 = vadd.f32 %v7211, %v7213
        %v7275 = vadd.f32 %v7274, %v7215
        %v7276 = vadd.f32 %v7275, %v7217
        %v7277 = vadd.f32 %v7276, %v7219
        %v7278 = vadd.f32 %v7277, %v7221
        %v7279 = vadd.f32 %v7278, %v7223
        %v7280 = vadd.f32 %v7279, %v7225
        %v7281 = vadd.f32 %v7280, %v7227
        %v7282 = vadd.f32 %v7281, %v7229
        %v7283 = vadd.f32 %v7282, %v7231
        %v7284 = vadd.f32 %v7283, %v7233
        %v7285 = vadd.f32 %v7284, %v7235
        %v7286 = vadd.f32 %v7285, %v7237
        %v7287 = vadd.f32 %v7286, %v7239
        %v7288 = vadd.f32 %v7287, %v7241
        %v7289 = vadd.f32 %v7288, %v7243
        %v7290 = vadd.f32 %v7289, %v7245
        %v7291 = vadd.f32 %v7290, %v7247
        %v7292 = vadd.f32 %v7291, %v7249
        %v7293 = vadd.f32 %v7292, %v7251
        %v7294 = vadd.f32 %v7293, %v7253
        %v7295 = vadd.f32 %v7294, %v7255
        %v7296 = vadd.f32 %v7295, %v7257
        %v7297 = vadd.f32 %v7296, %v7259
        %v7298 = vadd.f32 %v7297, %v7261
        %v7299 = vadd.f32 %v7298, %v7263
        %v7300 = vadd.f32 %v7299, %v7265
        %v7301 = vadd.f32 %v7300, %v7267
        %v7302 = vadd.f32 %v7301, %v7269
        %v7303 = vadd.f32 %v7302, %v7271
        %v7304 = vadd.f32 %v7303, %v7273
        %v7305 = vrot.slane %v7304, 4
        %v7306 = vadd.f32 %v7304, %v7305
        %v7307 = vrot.slane %v7306, 2
        %v7308 = vadd.f32 %v7306, %v7307
        %v7309 = vrot.slane %v7308, 1
        %v7310 = vadd.f32 %v7308, %v7309
        %v7311 = vrcp.pop %v7310
        %v7312 = vpack.c.bf16 %v7213, %v7211
        %v7313 = vpack.c.bf16 %v7217, %v7215
        %v7314 = vpack.c.bf16 %v7221, %v7219
        %v7315 = vpack.c.bf16 %v7225, %v7223
        %v7316 = vpack.c.bf16 %v7229, %v7227
        %v7317 = vpack.c.bf16 %v7233, %v7231
        %v7318 = vpack.c.bf16 %v7237, %v7235
        %v7319 = vpack.c.bf16 %v7241, %v7239
        %v7320 = vpack.c.bf16 %v7245, %v7243
        %v7321 = vpack.c.bf16 %v7249, %v7247
        %v7322 = vpack.c.bf16 %v7253, %v7251
        %v7323 = vpack.c.bf16 %v7257, %v7255
        %v7324 = vpack.c.bf16 %v7261, %v7259
        %v7325 = vpack.c.bf16 %v7265, %v7263
        %v7326 = vpack.c.bf16 %v7269, %v7267
        %v7327 = vpack.c.bf16 %v7273, %v7271
        %7328 = vmatprep.subr.bf16.mxu0 0
        %7329 = vmatpush1.bf16.msra.mxu0 %v7319
        %7330 = vmatprep.subr.bf16.mxu0 0
        %7331 = vmatpush1.bf16.msra.mxu0 %v7318
        %7332 = vmatprep.subr.bf16.mxu0 0
        %7333 = vmatpush1.bf16.msra.mxu0 %v7317
        %7334 = vmatprep.subr.bf16.mxu0 0
        %7335 = vmatpush1.bf16.msra.mxu0 %v7316
        %7336 = vmatprep.subr.bf16.mxu0 0
        %7337 = vmatpush1.bf16.msra.mxu0 %v7315
        %7338 = vmatprep.subr.bf16.mxu0 0
        %7339 = vmatpush1.bf16.msra.mxu0 %v7314
        %7340 = vmatprep.subr.bf16.mxu0 0
        %7341 = vmatpush1.bf16.msra.mxu0 %v7313
        %7342 = vmatprep.subr.bf16.mxu0 0
        %7343 = vmatpush1.bf16.msra.mxu0 %v7312
        %7344 = vmatprep.subr.bf16.mxu0 0
        %7345 = vmatpush2.bf16.msra.mxu0 %v7327
        %7346 = vmatprep.subr.bf16.mxu0 0
        %7347 = vmatpush2.bf16.msra.mxu0 %v7326
        %7348 = vmatprep.subr.bf16.mxu0 0
        %7349 = vmatpush2.bf16.msra.mxu0 %v7325
        %7350 = vmatprep.subr.bf16.mxu0 0
        %7351 = vmatpush2.bf16.msra.mxu0 %v7324
        %7352 = vmatprep.subr.bf16.mxu0 0
        %7353 = vmatpush2.bf16.msra.mxu0 %v7323
        %7354 = vmatprep.subr.bf16.mxu0 0
        %7355 = vmatpush2.bf16.msra.mxu0 %v7322
        %7356 = vmatprep.subr.bf16.mxu0 0
        %7357 = vmatpush2.bf16.msra.mxu0 %v7321
        %7358 = vmatprep.subr.bf16.mxu0 0
        %7359 = vmatpush2.bf16.msra.mxu0 %v7320
        %7360 = vmatprep.mubr.bf16.mxu0 %v6333
        %7361 = vmatmul.mubr.bf16.gmra.mxu0 %v6332
        %v7362 = vpop.f32.mrf.mxu0
        %v7363 = vadd.f32 0.0, %v7362
        %v7364 = vpop.f32.mrf.mxu0
        %v7365 = vpop.f32.mrf.mxu0
        %v7366 = vpop.f32.mrf.mxu0
        %7367 = vdwg.mxu0
        %v7368 = vmul.f32 %v7363, %v7311
        %7369 = vst [vmem:[#allocation2 + $0x18] sm:$0xff] %v7368
        %v7370 = vpack.c.bf16 %v5254, %v5254
        %v7371 = vpack.c.bf16 %v5256, %v5256
        %7372 = vrot.lane.b32.xlu0 %v5278, 112
        %v7373 = vpop.permute.xlu0 %7372
        %7374 = vrot.lane.b32.xlu0 %v5279, 112
        %v7375 = vpop.permute.xlu0 %7374
        %7376 = vrot.lane.b32.xlu0 %v5280, 112
        %v7377 = vpop.permute.xlu0 %7376
        %7378 = vrot.lane.b32.xlu0 %v5281, 112
        %v7379 = vpop.permute.xlu0 %7378
        %7380 = vrot.lane.b32.xlu0 %v5282, 112
        %v7381 = vpop.permute.xlu0 %7380
        %7382 = vrot.lane.b32.xlu0 %v5283, 112
        %v7383 = vpop.permute.xlu0 %7382
        %7384 = vrot.lane.b32.xlu0 %v5284, 112
        %v7385 = vpop.permute.xlu0 %7384
        %7386 = vrot.lane.b32.xlu0 %v5285, 112
        %v7387 = vpop.permute.xlu0 %7386
        %7388 = vrot.lane.b32.xlu0 %v5286, 112
        %v7389 = vpop.permute.xlu0 %7388
        %7390 = vrot.lane.b32.xlu0 %v5287, 112
        %v7391 = vpop.permute.xlu0 %7390
        %7392 = vrot.lane.b32.xlu0 %v5288, 112
        %v7393 = vpop.permute.xlu0 %7392
        %7394 = vrot.lane.b32.xlu0 %v5289, 112
        %v7395 = vpop.permute.xlu0 %7394
        %7396 = vrot.lane.b32.xlu0 %v5290, 112
        %v7397 = vpop.permute.xlu0 %7396
        %7398 = vrot.lane.b32.xlu0 %v5291, 112
        %v7399 = vpop.permute.xlu0 %7398
        %7400 = vrot.lane.b32.xlu0 %v5292, 112
        %v7401 = vpop.permute.xlu0 %7400
        %7402 = vrot.lane.b32.xlu0 %v5293, 112
        %v7403 = vpop.permute.xlu0 %7402
        %7404 = vrot.lane.b32.xlu0 %v5310, 112
        %v7405 = vpop.permute.xlu0 %7404
        %7406 = vrot.lane.b32.xlu0 %v5311, 112
        %v7407 = vpop.permute.xlu0 %7406
        %7408 = vrot.lane.b32.xlu0 %v5312, 112
        %v7409 = vpop.permute.xlu0 %7408
        %7410 = vrot.lane.b32.xlu0 %v5313, 112
        %v7411 = vpop.permute.xlu0 %7410
        %7412 = vrot.lane.b32.xlu0 %v5314, 112
        %v7413 = vpop.permute.xlu0 %7412
        %7414 = vrot.lane.b32.xlu0 %v5315, 112
        %v7415 = vpop.permute.xlu0 %7414
        %7416 = vrot.lane.b32.xlu0 %v5316, 112
        %v7417 = vpop.permute.xlu0 %7416
        %7418 = vrot.lane.b32.xlu0 %v5317, 112
        %v7419 = vpop.permute.xlu0 %7418
        %7420 = vrot.lane.b32.xlu0 %v5318, 112
        %v7421 = vpop.permute.xlu0 %7420
        %7422 = vrot.lane.b32.xlu0 %v5319, 112
        %v7423 = vpop.permute.xlu0 %7422
        %7424 = vrot.lane.b32.xlu0 %v5320, 112
        %v7425 = vpop.permute.xlu0 %7424
        %7426 = vrot.lane.b32.xlu0 %v5321, 112
        %v7427 = vpop.permute.xlu0 %7426
        %7428 = vrot.lane.b32.xlu0 %v5322, 112
        %v7429 = vpop.permute.xlu0 %7428
        %7430 = vrot.lane.b32.xlu0 %v5323, 112
        %v7431 = vpop.permute.xlu0 %7430
        %7432 = vrot.lane.b32.xlu0 %v5324, 112
        %v7433 = vpop.permute.xlu0 %7432
        %7434 = vrot.lane.b32.xlu0 %v5325, 112
        %v7435 = vpop.permute.xlu0 %7434
        %v7436 = vsel %vm718, %v7373, 0
        %v7438 = vsel %vm718, %v7375, 0
        %v7440 = vsel %vm718, %v7377, 0
        %v7442 = vsel %vm718, %v7379, 0
        %v7444 = vsel %vm718, %v7381, 0
        %v7446 = vsel %vm718, %v7383, 0
        %v7448 = vsel %vm718, %v7385, 0
        %v7450 = vsel %vm718, %v7387, 0
        %v7452 = vsel %vm718, %v7389, 0
        %v7454 = vsel %vm718, %v7391, 0
        %v7456 = vsel %vm718, %v7393, 0
        %v7458 = vsel %vm718, %v7395, 0
        %v7460 = vsel %vm718, %v7397, 0
        %v7462 = vsel %vm718, %v7399, 0
        %v7464 = vsel %vm718, %v7401, 0
        %v7466 = vsel %vm718, %v7403, 0
        %v7468 = vsel %vm718, %v7405, 0
        %v7470 = vsel %vm718, %v7407, 0
        %v7472 = vsel %vm718, %v7409, 0
        %v7474 = vsel %vm718, %v7411, 0
        %v7476 = vsel %vm718, %v7413, 0
        %v7478 = vsel %vm718, %v7415, 0
        %v7480 = vsel %vm718, %v7417, 0
        %v7482 = vsel %vm718, %v7419, 0
        %v7484 = vsel %vm718, %v7421, 0
        %v7486 = vsel %vm718, %v7423, 0
        %v7488 = vsel %vm718, %v7425, 0
        %v7490 = vsel %vm718, %v7427, 0
        %v7492 = vsel %vm718, %v7429, 0
        %v7494 = vsel %vm718, %v7431, 0
        %v7496 = vsel %vm718, %v7433, 0
        %v7498 = vsel %vm718, %v7435, 0
        %7500 = vmatprep.subr.mxu0 0.0
        %7501 = vmatpush1.msra.mxu0 0.0
        %7502 = vmatprep.subr.mxu0 0.0
        %7503 = vmatpush1.msra.mxu0 0.0
        %7504 = vmatprep.subr.mxu0 0.0
        %7505 = vmatpush1.msra.mxu0 0.0
        %7506 = vmatprep.subr.mxu0 0.0
        %7507 = vmatpush1.msra.mxu0 0.0
        %7508 = vmatprep.subr.mxu0 0.0
        %7509 = vmatpush1.msra.mxu0 0.0
        %7510 = vmatprep.subr.mxu0 0.0
        %7511 = vmatpush1.msra.mxu0 0.0
        %7512 = vmatprep.subr.mxu0 0.0
        %7513 = vmatpush1.msra.mxu0 0.0
        %7514 = vmatprep.subr.mxu0 0.0
        %7515 = vmatpush1.msra.mxu0 0.0
        %7516 = vmatprep.subr.mxu0 0.0
        %7517 = vmatpush1.msra.mxu0 0.0
        %7518 = vmatprep.subr.mxu0 0.0
        %7519 = vmatpush1.msra.mxu0 0.0
        %7520 = vmatprep.subr.mxu0 0.0
        %7521 = vmatpush1.msra.mxu0 0.0
        %7522 = vmatprep.subr.mxu0 0.0
        %7523 = vmatpush1.msra.mxu0 0.0
        %7524 = vmatprep.subr.mxu0 0.0
        %7525 = vmatpush1.msra.mxu0 0.0
        %7526 = vmatprep.subr.mxu0 0.0
        %7527 = vmatpush1.msra.mxu0 0.0
        %7528 = vmatprep.subr.mxu0 0.0
        %7529 = vmatpush1.msra.mxu0 0.0
        %7530 = vmatprep.subr.mxu0 0.0
        %7531 = vmatpush1.msra.mxu0 %v5214
        %7532 = vmatprep.subr.mxu0 0.0
        %7533 = vmatpush2.msra.mxu0 0.0
        %7534 = vmatprep.subr.mxu0 0.0
        %7535 = vmatpush2.msra.mxu0 0.0
        %7536 = vmatprep.subr.mxu0 0.0
        %7537 = vmatpush2.msra.mxu0 0.0
        %7538 = vmatprep.subr.mxu0 0.0
        %7539 = vmatpush2.msra.mxu0 0.0
        %7540 = vmatprep.subr.mxu0 0.0
        %7541 = vmatpush2.msra.mxu0 0.0
        %7542 = vmatprep.subr.mxu0 0.0
        %7543 = vmatpush2.msra.mxu0 0.0
        %7544 = vmatprep.subr.mxu0 0.0
        %7545 = vmatpush2.msra.mxu0 0.0
        %7546 = vmatprep.subr.mxu0 0.0
        %7547 = vmatpush2.msra.mxu0 0.0
        %7548 = vmatprep.subr.mxu0 0.0
        %7549 = vmatpush2.msra.mxu0 0.0
        %7550 = vmatprep.subr.mxu0 0.0
        %7551 = vmatpush2.msra.mxu0 0.0
        %7552 = vmatprep.subr.mxu0 0.0
        %7553 = vmatpush2.msra.mxu0 0.0
        %7554 = vmatprep.subr.mxu0 0.0
        %7555 = vmatpush2.msra.mxu0 0.0
        %7556 = vmatprep.subr.mxu0 0.0
        %7557 = vmatpush2.msra.mxu0 0.0
        %7558 = vmatprep.subr.mxu0 0.0
        %7559 = vmatpush2.msra.mxu0 0.0
        %7560 = vmatprep.subr.mxu0 0.0
        %7561 = vmatpush2.msra.mxu0 0.0
        %7562 = vmatprep.subr.mxu0 0.0
        %7563 = vmatpush2.msra.mxu0 0.0
        %7564 = vmatprep.mubr.f32.mxu0 0.0
        %7565 = vmatmul.mubr.f32.gmra.mxu0 %v7436
        %v7566 = vpop.f32.mrf.mxu0
        %v7567 = vadd.f32 0.0, %v7566
        %v7568 = vpop.f32.mrf.mxu0
        %7569 = vmatprep.mubr.f32.mxu0 0.0
        %7570 = vmatmul.mubr.f32.gmra.mxu0 %v7438
        %v7571 = vpop.f32.mrf.mxu0
        %v7572 = vadd.f32 0.0, %v7571
        %v7573 = vpop.f32.mrf.mxu0
        %7574 = vmatprep.mubr.f32.mxu0 0.0
        %7575 = vmatmul.mubr.f32.gmra.mxu0 %v7440
        %v7576 = vpop.f32.mrf.mxu0
        %v7577 = vadd.f32 0.0, %v7576
        %v7578 = vpop.f32.mrf.mxu0
        %7579 = vmatprep.mubr.f32.mxu0 0.0
        %7580 = vmatmul.mubr.f32.gmra.mxu0 %v7442
        %v7581 = vpop.f32.mrf.mxu0
        %v7582 = vadd.f32 0.0, %v7581
        %v7583 = vpop.f32.mrf.mxu0
        %7584 = vmatprep.mubr.f32.mxu0 0.0
        %7585 = vmatmul.mubr.f32.gmra.mxu0 %v7444
        %v7586 = vpop.f32.mrf.mxu0
        %v7587 = vadd.f32 0.0, %v7586
        %v7588 = vpop.f32.mrf.mxu0
        %7589 = vmatprep.mubr.f32.mxu0 0.0
        %7590 = vmatmul.mubr.f32.gmra.mxu0 %v7446
        %v7591 = vpop.f32.mrf.mxu0
        %v7592 = vadd.f32 0.0, %v7591
        %v7593 = vpop.f32.mrf.mxu0
        %7594 = vmatprep.mubr.f32.mxu0 0.0
        %7595 = vmatmul.mubr.f32.gmra.mxu0 %v7448
        %v7596 = vpop.f32.mrf.mxu0
        %v7597 = vadd.f32 0.0, %v7596
        %v7598 = vpop.f32.mrf.mxu0
        %7599 = vmatprep.mubr.f32.mxu0 0.0
        %7600 = vmatmul.mubr.f32.gmra.mxu0 %v7450
        %v7601 = vpop.f32.mrf.mxu0
        %v7602 = vadd.f32 0.0, %v7601
        %v7603 = vpop.f32.mrf.mxu0
        %7604 = vmatprep.mubr.f32.mxu0 0.0
        %7605 = vmatmul.mubr.f32.gmra.mxu0 %v7452
        %v7606 = vpop.f32.mrf.mxu0
        %v7607 = vadd.f32 0.0, %v7606
        %v7608 = vpop.f32.mrf.mxu0
        %7609 = vmatprep.mubr.f32.mxu0 0.0
        %7610 = vmatmul.mubr.f32.gmra.mxu0 %v7454
        %v7611 = vpop.f32.mrf.mxu0
        %v7612 = vadd.f32 0.0, %v7611
        %v7613 = vpop.f32.mrf.mxu0
        %7614 = vmatprep.mubr.f32.mxu0 0.0
        %7615 = vmatmul.mubr.f32.gmra.mxu0 %v7456
        %v7616 = vpop.f32.mrf.mxu0
        %v7617 = vadd.f32 0.0, %v7616
        %v7618 = vpop.f32.mrf.mxu0
        %7619 = vmatprep.mubr.f32.mxu0 0.0
        %7620 = vmatmul.mubr.f32.gmra.mxu0 %v7458
        %v7621 = vpop.f32.mrf.mxu0
        %v7622 = vadd.f32 0.0, %v7621
        %v7623 = vpop.f32.mrf.mxu0
        %7624 = vmatprep.mubr.f32.mxu0 0.0
        %7625 = vmatmul.mubr.f32.gmra.mxu0 %v7460
        %v7626 = vpop.f32.mrf.mxu0
        %v7627 = vadd.f32 0.0, %v7626
        %v7628 = vpop.f32.mrf.mxu0
        %7629 = vmatprep.mubr.f32.mxu0 0.0
        %7630 = vmatmul.mubr.f32.gmra.mxu0 %v7462
        %v7631 = vpop.f32.mrf.mxu0
        %v7632 = vadd.f32 0.0, %v7631
        %v7633 = vpop.f32.mrf.mxu0
        %7634 = vmatprep.mubr.f32.mxu0 0.0
        %7635 = vmatmul.mubr.f32.gmra.mxu0 %v7464
        %v7636 = vpop.f32.mrf.mxu0
        %v7637 = vadd.f32 0.0, %v7636
        %v7638 = vpop.f32.mrf.mxu0
        %7639 = vmatprep.mubr.f32.mxu0 0.0
        %7640 = vmatmul.mubr.f32.gmra.mxu0 %v7466
        %v7641 = vpop.f32.mrf.mxu0
        %v7642 = vadd.f32 0.0, %v7641
        %v7643 = vpop.f32.mrf.mxu0
        %7644 = vmatprep.mubr.f32.mxu0 0.0
        %7645 = vmatmul.mubr.f32.gmra.mxu0 %v7468
        %v7646 = vpop.f32.mrf.mxu0
        %v7647 = vadd.f32 0.0, %v7646
        %v7648 = vpop.f32.mrf.mxu0
        %7649 = vmatprep.mubr.f32.mxu0 0.0
        %7650 = vmatmul.mubr.f32.gmra.mxu0 %v7470
        %v7651 = vpop.f32.mrf.mxu0
        %v7652 = vadd.f32 0.0, %v7651
        %v7653 = vpop.f32.mrf.mxu0
        %7654 = vmatprep.mubr.f32.mxu0 0.0
        %7655 = vmatmul.mubr.f32.gmra.mxu0 %v7472
        %v7656 = vpop.f32.mrf.mxu0
        %v7657 = vadd.f32 0.0, %v7656
        %v7658 = vpop.f32.mrf.mxu0
        %7659 = vmatprep.mubr.f32.mxu0 0.0
        %7660 = vmatmul.mubr.f32.gmra.mxu0 %v7474
        %v7661 = vpop.f32.mrf.mxu0
        %v7662 = vadd.f32 0.0, %v7661
        %v7663 = vpop.f32.mrf.mxu0
        %7664 = vmatprep.mubr.f32.mxu0 0.0
        %7665 = vmatmul.mubr.f32.gmra.mxu0 %v7476
        %v7666 = vpop.f32.mrf.mxu0
        %v7667 = vadd.f32 0.0, %v7666
        %v7668 = vpop.f32.mrf.mxu0
        %7669 = vmatprep.mubr.f32.mxu0 0.0
        %7670 = vmatmul.mubr.f32.gmra.mxu0 %v7478
        %v7671 = vpop.f32.mrf.mxu0
        %v7672 = vadd.f32 0.0, %v7671
        %v7673 = vpop.f32.mrf.mxu0
        %7674 = vmatprep.mubr.f32.mxu0 0.0
        %7675 = vmatmul.mubr.f32.gmra.mxu0 %v7480
        %v7676 = vpop.f32.mrf.mxu0
        %v7677 = vadd.f32 0.0, %v7676
        %v7678 = vpop.f32.mrf.mxu0
        %7679 = vmatprep.mubr.f32.mxu0 0.0
        %7680 = vmatmul.mubr.f32.gmra.mxu0 %v7482
        %v7681 = vpop.f32.mrf.mxu0
        %v7682 = vadd.f32 0.0, %v7681
        %v7683 = vpop.f32.mrf.mxu0
        %7684 = vmatprep.mubr.f32.mxu0 0.0
        %7685 = vmatmul.mubr.f32.gmra.mxu0 %v7484
        %v7686 = vpop.f32.mrf.mxu0
        %v7687 = vadd.f32 0.0, %v7686
        %v7688 = vpop.f32.mrf.mxu0
        %7689 = vmatprep.mubr.f32.mxu0 0.0
        %7690 = vmatmul.mubr.f32.gmra.mxu0 %v7486
        %v7691 = vpop.f32.mrf.mxu0
        %v7692 = vadd.f32 0.0, %v7691
        %v7693 = vpop.f32.mrf.mxu0
        %7694 = vmatprep.mubr.f32.mxu0 0.0
        %7695 = vmatmul.mubr.f32.gmra.mxu0 %v7488
        %v7696 = vpop.f32.mrf.mxu0
        %v7697 = vadd.f32 0.0, %v7696
        %v7698 = vpop.f32.mrf.mxu0
        %7699 = vmatprep.mubr.f32.mxu0 0.0
        %7700 = vmatmul.mubr.f32.gmra.mxu0 %v7490
        %v7701 = vpop.f32.mrf.mxu0
        %v7702 = vadd.f32 0.0, %v7701
        %v7703 = vpop.f32.mrf.mxu0
        %7704 = vmatprep.mubr.f32.mxu0 0.0
        %7705 = vmatmul.mubr.f32.gmra.mxu0 %v7492
        %v7706 = vpop.f32.mrf.mxu0
        %v7707 = vadd.f32 0.0, %v7706
        %v7708 = vpop.f32.mrf.mxu0
        %7709 = vmatprep.mubr.f32.mxu0 0.0
        %7710 = vmatmul.mubr.f32.gmra.mxu0 %v7494
        %v7711 = vpop.f32.mrf.mxu0
        %v7712 = vadd.f32 0.0, %v7711
        %v7713 = vpop.f32.mrf.mxu0
        %7714 = vmatprep.mubr.f32.mxu0 0.0
        %7715 = vmatmul.mubr.f32.gmra.mxu0 %v7496
        %v7716 = vpop.f32.mrf.mxu0
        %v7717 = vadd.f32 0.0, %v7716
        %v7718 = vpop.f32.mrf.mxu0
        %7719 = vmatprep.mubr.f32.mxu0 0.0
        %7720 = vmatmul.mubr.f32.gmra.mxu0 %v7498
        %v7721 = vpop.f32.mrf.mxu0
        %v7722 = vadd.f32 0.0, %v7721
        %v7723 = vpop.f32.mrf.mxu0
        %7724 = vdwg.mxu0
        %v7725 = vmax.f32 %v7567, %v7587
        %v7726 = vmax.f32 %v7572, %v7592
        %v7727 = vmax.f32 %v7577, %v7597
        %v7728 = vmax.f32 %v7582, %v7602
        %v7729 = vmax.f32 %v7725, %v7607
        %v7730 = vmax.f32 %v7726, %v7612
        %v7731 = vmax.f32 %v7727, %v7617
        %v7732 = vmax.f32 %v7728, %v7622
        %v7733 = vmax.f32 %v7729, %v7627
        %v7734 = vmax.f32 %v7730, %v7632
        %v7735 = vmax.f32 %v7731, %v7637
        %v7736 = vmax.f32 %v7732, %v7642
        %v7737 = vmax.f32 %v7733, %v7647
        %v7738 = vmax.f32 %v7734, %v7652
        %v7739 = vmax.f32 %v7735, %v7657
        %v7740 = vmax.f32 %v7736, %v7662
        %v7741 = vmax.f32 %v7737, %v7667
        %v7742 = vmax.f32 %v7738, %v7672
        %v7743 = vmax.f32 %v7739, %v7677
        %v7744 = vmax.f32 %v7740, %v7682
        %v7745 = vmax.f32 %v7741, %v7687
        %v7746 = vmax.f32 %v7742, %v7692
        %v7747 = vmax.f32 %v7743, %v7697
        %v7748 = vmax.f32 %v7744, %v7702
        %v7749 = vmax.f32 %v7745, %v7707
        %v7750 = vmax.f32 %v7746, %v7712
        %v7751 = vmax.f32 %v7747, %v7717
        %v7752 = vmax.f32 %v7748, %v7722
        %v7753 = vmax.f32 %v7749, %v7750
        %v7754 = vmax.f32 %v7751, %v7752
        %v7755 = vmax.f32 %v7753, %v7754
        %v7756 = vrot.slane %v7755, 4
        %v7757 = vmax.f32 %v7755, %v7756
        %v7758 = vrot.slane %v7757, 2
        %v7759 = vmax.f32 %v7757, %v7758
        %v7760 = vrot.slane %v7759, 1
        %v7761 = vmax.f32 %v7759, %v7760
        %v7762 = vsub.f32 %v7567, %v7761
        %v7763 = vsub.f32 %v7572, %v7761
        %v7764 = vsub.f32 %v7577, %v7761
        %v7765 = vsub.f32 %v7582, %v7761
        %v7766 = vsub.f32 %v7587, %v7761
        %v7767 = vsub.f32 %v7592, %v7761
        %v7768 = vsub.f32 %v7597, %v7761
        %v7769 = vsub.f32 %v7602, %v7761
        %v7770 = vsub.f32 %v7607, %v7761
        %v7771 = vsub.f32 %v7612, %v7761
        %v7772 = vsub.f32 %v7617, %v7761
        %v7773 = vsub.f32 %v7622, %v7761
        %v7774 = vsub.f32 %v7627, %v7761
        %v7775 = vsub.f32 %v7632, %v7761
        %v7776 = vsub.f32 %v7637, %v7761
        %v7777 = vsub.f32 %v7642, %v7761
        %v7778 = vsub.f32 %v7647, %v7761
        %v7779 = vsub.f32 %v7652, %v7761
        %v7780 = vsub.f32 %v7657, %v7761
        %v7781 = vsub.f32 %v7662, %v7761
        %v7782 = vsub.f32 %v7667, %v7761
        %v7783 = vsub.f32 %v7672, %v7761
        %v7784 = vsub.f32 %v7677, %v7761
        %v7785 = vsub.f32 %v7682, %v7761
        %v7786 = vsub.f32 %v7687, %v7761
        %v7787 = vsub.f32 %v7692, %v7761
        %v7788 = vsub.f32 %v7697, %v7761
        %v7789 = vsub.f32 %v7702, %v7761
        %v7790 = vsub.f32 %v7707, %v7761
        %v7791 = vsub.f32 %v7712, %v7761
        %v7792 = vsub.f32 %v7717, %v7761
        %v7793 = vsub.f32 %v7722, %v7761
        %v7794 = vmul.f32 %v7762, 1.442695
        %v7795 = vpow.pop %v7794
        %v7796 = vmul.f32 %v7763, 1.442695
        %v7797 = vpow.pop %v7796
        %v7798 = vmul.f32 %v7764, 1.442695
        %v7799 = vpow.pop %v7798
        %v7800 = vmul.f32 %v7765, 1.442695
        %v7801 = vpow.pop %v7800
        %v7802 = vmul.f32 %v7766, 1.442695
        %v7803 = vpow.pop %v7802
        %v7804 = vmul.f32 %v7767, 1.442695
        %v7805 = vpow.pop %v7804
        %v7806 = vmul.f32 %v7768, 1.442695
        %v7807 = vpow.pop %v7806
        %v7808 = vmul.f32 %v7769, 1.442695
        %v7809 = vpow.pop %v7808
        %v7810 = vmul.f32 %v7770, 1.442695
        %v7811 = vpow.pop %v7810
        %v7812 = vmul.f32 %v7771, 1.442695
        %v7813 = vpow.pop %v7812
        %v7814 = vmul.f32 %v7772, 1.442695
        %v7815 = vpow.pop %v7814
        %v7816 = vmul.f32 %v7773, 1.442695
        %v7817 = vpow.pop %v7816
        %v7818 = vmul.f32 %v7774, 1.442695
        %v7819 = vpow.pop %v7818
        %v7820 = vmul.f32 %v7775, 1.442695
        %v7821 = vpow.pop %v7820
        %v7822 = vmul.f32 %v7776, 1.442695
        %v7823 = vpow.pop %v7822
        %v7824 = vmul.f32 %v7777, 1.442695
        %v7825 = vpow.pop %v7824
        %v7826 = vmul.f32 %v7778, 1.442695
        %v7827 = vpow.pop %v7826
        %v7828 = vmul.f32 %v7779, 1.442695
        %v7829 = vpow.pop %v7828
        %v7830 = vmul.f32 %v7780, 1.442695
        %v7831 = vpow.pop %v7830
        %v7832 = vmul.f32 %v7781, 1.442695
        %v7833 = vpow.pop %v7832
        %v7834 = vmul.f32 %v7782, 1.442695
        %v7835 = vpow.pop %v7834
        %v7836 = vmul.f32 %v7783, 1.442695
        %v7837 = vpow.pop %v7836
        %v7838 = vmul.f32 %v7784, 1.442695
        %v7839 = vpow.pop %v7838
        %v7840 = vmul.f32 %v7785, 1.442695
        %v7841 = vpow.pop %v7840
        %v7842 = vmul.f32 %v7786, 1.442695
        %v7843 = vpow.pop %v7842
        %v7844 = vmul.f32 %v7787, 1.442695
        %v7845 = vpow.pop %v7844
        %v7846 = vmul.f32 %v7788, 1.442695
        %v7847 = vpow.pop %v7846
        %v7848 = vmul.f32 %v7789, 1.442695
        %v7849 = vpow.pop %v7848
        %v7850 = vmul.f32 %v7790, 1.442695
        %v7851 = vpow.pop %v7850
        %v7852 = vmul.f32 %v7791, 1.442695
        %v7853 = vpow.pop %v7852
        %v7854 = vmul.f32 %v7792, 1.442695
        %v7855 = vpow.pop %v7854
        %v7856 = vmul.f32 %v7793, 1.442695
        %v7857 = vpow.pop %v7856
        %v7858 = vadd.f32 %v7795, %v7797
        %v7859 = vadd.f32 %v7858, %v7799
        %v7860 = vadd.f32 %v7859, %v7801
        %v7861 = vadd.f32 %v7860, %v7803
        %v7862 = vadd.f32 %v7861, %v7805
        %v7863 = vadd.f32 %v7862, %v7807
        %v7864 = vadd.f32 %v7863, %v7809
        %v7865 = vadd.f32 %v7864, %v7811
        %v7866 = vadd.f32 %v7865, %v7813
        %v7867 = vadd.f32 %v7866, %v7815
        %v7868 = vadd.f32 %v7867, %v7817
        %v7869 = vadd.f32 %v7868, %v7819
        %v7870 = vadd.f32 %v7869, %v7821
        %v7871 = vadd.f32 %v7870, %v7823
        %v7872 = vadd.f32 %v7871, %v7825
        %v7873 = vadd.f32 %v7872, %v7827
        %v7874 = vadd.f32 %v7873, %v7829
        %v7875 = vadd.f32 %v7874, %v7831
        %v7876 = vadd.f32 %v7875, %v7833
        %v7877 = vadd.f32 %v7876, %v7835
        %v7878 = vadd.f32 %v7877, %v7837
        %v7879 = vadd.f32 %v7878, %v7839
        %v7880 = vadd.f32 %v7879, %v7841
        %v7881 = vadd.f32 %v7880, %v7843
        %v7882 = vadd.f32 %v7881, %v7845
        %v7883 = vadd.f32 %v7882, %v7847
        %v7884 = vadd.f32 %v7883, %v7849
        %v7885 = vadd.f32 %v7884, %v7851
        %v7886 = vadd.f32 %v7885, %v7853
        %v7887 = vadd.f32 %v7886, %v7855
        %v7888 = vadd.f32 %v7887, %v7857
        %v7889 = vrot.slane %v7888, 4
        %v7890 = vadd.f32 %v7888, %v7889
        %v7891 = vrot.slane %v7890, 2
        %v7892 = vadd.f32 %v7890, %v7891
        %v7893 = vrot.slane %v7892, 1
        %v7894 = vadd.f32 %v7892, %v7893
        %v7895 = vrcp.pop %v7894
        %v7896 = vpack.c.bf16 %v7797, %v7795
        %v7897 = vpack.c.bf16 %v7801, %v7799
        %v7898 = vpack.c.bf16 %v7805, %v7803
        %v7899 = vpack.c.bf16 %v7809, %v7807
        %v7900 = vpack.c.bf16 %v7813, %v7811
        %v7901 = vpack.c.bf16 %v7817, %v7815
        %v7902 = vpack.c.bf16 %v7821, %v7819
        %v7903 = vpack.c.bf16 %v7825, %v7823
        %v7904 = vpack.c.bf16 %v7829, %v7827
        %v7905 = vpack.c.bf16 %v7833, %v7831
        %v7906 = vpack.c.bf16 %v7837, %v7835
        %v7907 = vpack.c.bf16 %v7841, %v7839
        %v7908 = vpack.c.bf16 %v7845, %v7843
        %v7909 = vpack.c.bf16 %v7849, %v7847
        %v7910 = vpack.c.bf16 %v7853, %v7851
        %v7911 = vpack.c.bf16 %v7857, %v7855
        %7912 = vmatprep.subr.bf16.mxu0 0
        %7913 = vmatpush1.bf16.msra.mxu0 %v7903
        %7914 = vmatprep.subr.bf16.mxu0 0
        %7915 = vmatpush1.bf16.msra.mxu0 %v7902
        %7916 = vmatprep.subr.bf16.mxu0 0
        %7917 = vmatpush1.bf16.msra.mxu0 %v7901
        %7918 = vmatprep.subr.bf16.mxu0 0
        %7919 = vmatpush1.bf16.msra.mxu0 %v7900
        %7920 = vmatprep.subr.bf16.mxu0 0
        %7921 = vmatpush1.bf16.msra.mxu0 %v7899
        %7922 = vmatprep.subr.bf16.mxu0 0
        %7923 = vmatpush1.bf16.msra.mxu0 %v7898
        %7924 = vmatprep.subr.bf16.mxu0 0
        %7925 = vmatpush1.bf16.msra.mxu0 %v7897
        %7926 = vmatprep.subr.bf16.mxu0 0
        %7927 = vmatpush1.bf16.msra.mxu0 %v7896
        %7928 = vmatprep.subr.bf16.mxu0 0
        %7929 = vmatpush2.bf16.msra.mxu0 %v7911
        %7930 = vmatprep.subr.bf16.mxu0 0
        %7931 = vmatpush2.bf16.msra.mxu0 %v7910
        %7932 = vmatprep.subr.bf16.mxu0 0
        %7933 = vmatpush2.bf16.msra.mxu0 %v7909
        %7934 = vmatprep.subr.bf16.mxu0 0
        %7935 = vmatpush2.bf16.msra.mxu0 %v7908
        %7936 = vmatprep.subr.bf16.mxu0 0
        %7937 = vmatpush2.bf16.msra.mxu0 %v7907
        %7938 = vmatprep.subr.bf16.mxu0 0
        %7939 = vmatpush2.bf16.msra.mxu0 %v7906
        %7940 = vmatprep.subr.bf16.mxu0 0
        %7941 = vmatpush2.bf16.msra.mxu0 %v7905
        %7942 = vmatprep.subr.bf16.mxu0 0
        %7943 = vmatpush2.bf16.msra.mxu0 %v7904
        %7944 = vmatprep.mubr.bf16.mxu0 %v7371
        %7945 = vmatmul.mubr.bf16.gmra.mxu0 %v7370
        %v7946 = vpop.f32.mrf.mxu0
        %v7947 = vadd.f32 0.0, %v7946
        %v7948 = vpop.f32.mrf.mxu0
        %v7949 = vpop.f32.mrf.mxu0
        %v7950 = vpop.f32.mrf.mxu0
        %7951 = vdwg.mxu0
        %v7952 = vmul.f32 %v7947, %v7895
        %7953 = vst [vmem:[#allocation2 + $0x20] sm:$0xff] %v7952
        %7954 = vmatprep.subr.mxu0 0.0
        %7955 = vmatpush1.msra.mxu0 0.0
        %7956 = vmatprep.subr.mxu0 0.0
        %7957 = vmatpush1.msra.mxu0 0.0
        %7958 = vmatprep.subr.mxu0 0.0
        %7959 = vmatpush1.msra.mxu0 0.0
        %7960 = vmatprep.subr.mxu0 0.0
        %7961 = vmatpush1.msra.mxu0 0.0
        %7962 = vmatprep.subr.mxu0 0.0
        %7963 = vmatpush1.msra.mxu0 0.0
        %7964 = vmatprep.subr.mxu0 0.0
        %7965 = vmatpush1.msra.mxu0 0.0
        %7966 = vmatprep.subr.mxu0 0.0
        %7967 = vmatpush1.msra.mxu0 0.0
        %7968 = vmatprep.subr.mxu0 0.0
        %7969 = vmatpush1.msra.mxu0 0.0
        %7970 = vmatprep.subr.mxu0 0.0
        %7971 = vmatpush1.msra.mxu0 0.0
        %7972 = vmatprep.subr.mxu0 0.0
        %7973 = vmatpush1.msra.mxu0 0.0
        %7974 = vmatprep.subr.mxu0 0.0
        %7975 = vmatpush1.msra.mxu0 0.0
        %7976 = vmatprep.subr.mxu0 0.0
        %7977 = vmatpush1.msra.mxu0 0.0
        %7978 = vmatprep.subr.mxu0 0.0
        %7979 = vmatpush1.msra.mxu0 0.0
        %7980 = vmatprep.subr.mxu0 0.0
        %7981 = vmatpush1.msra.mxu0 0.0
        %7982 = vmatprep.subr.mxu0 0.0
        %7983 = vmatpush1.msra.mxu0 0.0
        %7984 = vmatprep.subr.mxu0 0.0
        %7985 = vmatpush1.msra.mxu0 %v5216
        %7986 = vmatprep.subr.mxu0 0.0
        %7987 = vmatpush2.msra.mxu0 0.0
        %7988 = vmatprep.subr.mxu0 0.0
        %7989 = vmatpush2.msra.mxu0 0.0
        %7990 = vmatprep.subr.mxu0 0.0
        %7991 = vmatpush2.msra.mxu0 0.0
        %7992 = vmatprep.subr.mxu0 0.0
        %7993 = vmatpush2.msra.mxu0 0.0
        %7994 = vmatprep.subr.mxu0 0.0
        %7995 = vmatpush2.msra.mxu0 0.0
        %7996 = vmatprep.subr.mxu0 0.0
        %7997 = vmatpush2.msra.mxu0 0.0
        %7998 = vmatprep.subr.mxu0 0.0
        %7999 = vmatpush2.msra.mxu0 0.0
        %8000 = vmatprep.subr.mxu0 0.0
        %8001 = vmatpush2.msra.mxu0 0.0
        %8002 = vmatprep.subr.mxu0 0.0
        %8003 = vmatpush2.msra.mxu0 0.0
        %8004 = vmatprep.subr.mxu0 0.0
        %8005 = vmatpush2.msra.mxu0 0.0
        %8006 = vmatprep.subr.mxu0 0.0
        %8007 = vmatpush2.msra.mxu0 0.0
        %8008 = vmatprep.subr.mxu0 0.0
        %8009 = vmatpush2.msra.mxu0 0.0
        %8010 = vmatprep.subr.mxu0 0.0
        %8011 = vmatpush2.msra.mxu0 0.0
        %8012 = vmatprep.subr.mxu0 0.0
        %8013 = vmatpush2.msra.mxu0 0.0
        %8014 = vmatprep.subr.mxu0 0.0
        %8015 = vmatpush2.msra.mxu0 0.0
        %8016 = vmatprep.subr.mxu0 0.0
        %8017 = vmatpush2.msra.mxu0 0.0
        %8018 = vmatprep.mubr.f32.mxu0 0.0
        %8019 = vmatmul.mubr.f32.gmra.mxu0 %v7436
        %v8020 = vpop.f32.mrf.mxu0
        %v8021 = vadd.f32 0.0, %v8020
        %v8022 = vpop.f32.mrf.mxu0
        %8023 = vmatprep.mubr.f32.mxu0 0.0
        %8024 = vmatmul.mubr.f32.gmra.mxu0 %v7438
        %v8025 = vpop.f32.mrf.mxu0
        %v8026 = vadd.f32 0.0, %v8025
        %v8027 = vpop.f32.mrf.mxu0
        %8028 = vmatprep.mubr.f32.mxu0 0.0
        %8029 = vmatmul.mubr.f32.gmra.mxu0 %v7440
        %v8030 = vpop.f32.mrf.mxu0
        %v8031 = vadd.f32 0.0, %v8030
        %v8032 = vpop.f32.mrf.mxu0
        %8033 = vmatprep.mubr.f32.mxu0 0.0
        %8034 = vmatmul.mubr.f32.gmra.mxu0 %v7442
        %v8035 = vpop.f32.mrf.mxu0
        %v8036 = vadd.f32 0.0, %v8035
        %v8037 = vpop.f32.mrf.mxu0
        %8038 = vmatprep.mubr.f32.mxu0 0.0
        %8039 = vmatmul.mubr.f32.gmra.mxu0 %v7444
        %v8040 = vpop.f32.mrf.mxu0
        %v8041 = vadd.f32 0.0, %v8040
        %v8042 = vpop.f32.mrf.mxu0
        %8043 = vmatprep.mubr.f32.mxu0 0.0
        %8044 = vmatmul.mubr.f32.gmra.mxu0 %v7446
        %v8045 = vpop.f32.mrf.mxu0
        %v8046 = vadd.f32 0.0, %v8045
        %v8047 = vpop.f32.mrf.mxu0
        %8048 = vmatprep.mubr.f32.mxu0 0.0
        %8049 = vmatmul.mubr.f32.gmra.mxu0 %v7448
        %v8050 = vpop.f32.mrf.mxu0
        %v8051 = vadd.f32 0.0, %v8050
        %v8052 = vpop.f32.mrf.mxu0
        %8053 = vmatprep.mubr.f32.mxu0 0.0
        %8054 = vmatmul.mubr.f32.gmra.mxu0 %v7450
        %v8055 = vpop.f32.mrf.mxu0
        %v8056 = vadd.f32 0.0, %v8055
        %v8057 = vpop.f32.mrf.mxu0
        %8058 = vmatprep.mubr.f32.mxu0 0.0
        %8059 = vmatmul.mubr.f32.gmra.mxu0 %v7452
        %v8060 = vpop.f32.mrf.mxu0
        %v8061 = vadd.f32 0.0, %v8060
        %v8062 = vpop.f32.mrf.mxu0
        %8063 = vmatprep.mubr.f32.mxu0 0.0
        %8064 = vmatmul.mubr.f32.gmra.mxu0 %v7454
        %v8065 = vpop.f32.mrf.mxu0
        %v8066 = vadd.f32 0.0, %v8065
        %v8067 = vpop.f32.mrf.mxu0
        %8068 = vmatprep.mubr.f32.mxu0 0.0
        %8069 = vmatmul.mubr.f32.gmra.mxu0 %v7456
        %v8070 = vpop.f32.mrf.mxu0
        %v8071 = vadd.f32 0.0, %v8070
        %v8072 = vpop.f32.mrf.mxu0
        %8073 = vmatprep.mubr.f32.mxu0 0.0
        %8074 = vmatmul.mubr.f32.gmra.mxu0 %v7458
        %v8075 = vpop.f32.mrf.mxu0
        %v8076 = vadd.f32 0.0, %v8075
        %v8077 = vpop.f32.mrf.mxu0
        %8078 = vmatprep.mubr.f32.mxu0 0.0
        %8079 = vmatmul.mubr.f32.gmra.mxu0 %v7460
        %v8080 = vpop.f32.mrf.mxu0
        %v8081 = vadd.f32 0.0, %v8080
        %v8082 = vpop.f32.mrf.mxu0
        %8083 = vmatprep.mubr.f32.mxu0 0.0
        %8084 = vmatmul.mubr.f32.gmra.mxu0 %v7462
        %v8085 = vpop.f32.mrf.mxu0
        %v8086 = vadd.f32 0.0, %v8085
        %v8087 = vpop.f32.mrf.mxu0
        %8088 = vmatprep.mubr.f32.mxu0 0.0
        %8089 = vmatmul.mubr.f32.gmra.mxu0 %v7464
        %v8090 = vpop.f32.mrf.mxu0
        %v8091 = vadd.f32 0.0, %v8090
        %v8092 = vpop.f32.mrf.mxu0
        %8093 = vmatprep.mubr.f32.mxu0 0.0
        %8094 = vmatmul.mubr.f32.gmra.mxu0 %v7466
        %v8095 = vpop.f32.mrf.mxu0
        %v8096 = vadd.f32 0.0, %v8095
        %v8097 = vpop.f32.mrf.mxu0
        %8098 = vmatprep.mubr.f32.mxu0 0.0
        %8099 = vmatmul.mubr.f32.gmra.mxu0 %v7468
        %v8100 = vpop.f32.mrf.mxu0
        %v8101 = vadd.f32 0.0, %v8100
        %v8102 = vpop.f32.mrf.mxu0
        %8103 = vmatprep.mubr.f32.mxu0 0.0
        %8104 = vmatmul.mubr.f32.gmra.mxu0 %v7470
        %v8105 = vpop.f32.mrf.mxu0
        %v8106 = vadd.f32 0.0, %v8105
        %v8107 = vpop.f32.mrf.mxu0
        %8108 = vmatprep.mubr.f32.mxu0 0.0
        %8109 = vmatmul.mubr.f32.gmra.mxu0 %v7472
        %v8110 = vpop.f32.mrf.mxu0
        %v8111 = vadd.f32 0.0, %v8110
        %v8112 = vpop.f32.mrf.mxu0
        %8113 = vmatprep.mubr.f32.mxu0 0.0
        %8114 = vmatmul.mubr.f32.gmra.mxu0 %v7474
        %v8115 = vpop.f32.mrf.mxu0
        %v8116 = vadd.f32 0.0, %v8115
        %v8117 = vpop.f32.mrf.mxu0
        %8118 = vmatprep.mubr.f32.mxu0 0.0
        %8119 = vmatmul.mubr.f32.gmra.mxu0 %v7476
        %v8120 = vpop.f32.mrf.mxu0
        %v8121 = vadd.f32 0.0, %v8120
        %v8122 = vpop.f32.mrf.mxu0
        %8123 = vmatprep.mubr.f32.mxu0 0.0
        %8124 = vmatmul.mubr.f32.gmra.mxu0 %v7478
        %v8125 = vpop.f32.mrf.mxu0
        %v8126 = vadd.f32 0.0, %v8125
        %v8127 = vpop.f32.mrf.mxu0
        %8128 = vmatprep.mubr.f32.mxu0 0.0
        %8129 = vmatmul.mubr.f32.gmra.mxu0 %v7480
        %v8130 = vpop.f32.mrf.mxu0
        %v8131 = vadd.f32 0.0, %v8130
        %v8132 = vpop.f32.mrf.mxu0
        %8133 = vmatprep.mubr.f32.mxu0 0.0
        %8134 = vmatmul.mubr.f32.gmra.mxu0 %v7482
        %v8135 = vpop.f32.mrf.mxu0
        %v8136 = vadd.f32 0.0, %v8135
        %v8137 = vpop.f32.mrf.mxu0
        %8138 = vmatprep.mubr.f32.mxu0 0.0
        %8139 = vmatmul.mubr.f32.gmra.mxu0 %v7484
        %v8140 = vpop.f32.mrf.mxu0
        %v8141 = vadd.f32 0.0, %v8140
        %v8142 = vpop.f32.mrf.mxu0
        %8143 = vmatprep.mubr.f32.mxu0 0.0
        %8144 = vmatmul.mubr.f32.gmra.mxu0 %v7486
        %v8145 = vpop.f32.mrf.mxu0
        %v8146 = vadd.f32 0.0, %v8145
        %v8147 = vpop.f32.mrf.mxu0
        %8148 = vmatprep.mubr.f32.mxu0 0.0
        %8149 = vmatmul.mubr.f32.gmra.mxu0 %v7488
        %v8150 = vpop.f32.mrf.mxu0
        %v8151 = vadd.f32 0.0, %v8150
        %v8152 = vpop.f32.mrf.mxu0
        %8153 = vmatprep.mubr.f32.mxu0 0.0
        %8154 = vmatmul.mubr.f32.gmra.mxu0 %v7490
        %v8155 = vpop.f32.mrf.mxu0
        %v8156 = vadd.f32 0.0, %v8155
        %v8157 = vpop.f32.mrf.mxu0
        %8158 = vmatprep.mubr.f32.mxu0 0.0
        %8159 = vmatmul.mubr.f32.gmra.mxu0 %v7492
        %v8160 = vpop.f32.mrf.mxu0
        %v8161 = vadd.f32 0.0, %v8160
        %v8162 = vpop.f32.mrf.mxu0
        %8163 = vmatprep.mubr.f32.mxu0 0.0
        %8164 = vmatmul.mubr.f32.gmra.mxu0 %v7494
        %v8165 = vpop.f32.mrf.mxu0
        %v8166 = vadd.f32 0.0, %v8165
        %v8167 = vpop.f32.mrf.mxu0
        %8168 = vmatprep.mubr.f32.mxu0 0.0
        %8169 = vmatmul.mubr.f32.gmra.mxu0 %v7496
        %v8170 = vpop.f32.mrf.mxu0
        %v8171 = vadd.f32 0.0, %v8170
        %v8172 = vpop.f32.mrf.mxu0
        %8173 = vmatprep.mubr.f32.mxu0 0.0
        %8174 = vmatmul.mubr.f32.gmra.mxu0 %v7498
        %v8175 = vpop.f32.mrf.mxu0
        %v8176 = vadd.f32 0.0, %v8175
        %v8177 = vpop.f32.mrf.mxu0
        %8178 = vdwg.mxu0
        %v8179 = vmax.f32 %v8021, %v8041
        %v8180 = vmax.f32 %v8026, %v8046
        %v8181 = vmax.f32 %v8031, %v8051
        %v8182 = vmax.f32 %v8036, %v8056
        %v8183 = vmax.f32 %v8179, %v8061
        %v8184 = vmax.f32 %v8180, %v8066
        %v8185 = vmax.f32 %v8181, %v8071
        %v8186 = vmax.f32 %v8182, %v8076
        %v8187 = vmax.f32 %v8183, %v8081
        %v8188 = vmax.f32 %v8184, %v8086
        %v8189 = vmax.f32 %v8185, %v8091
        %v8190 = vmax.f32 %v8186, %v8096
        %v8191 = vmax.f32 %v8187, %v8101
        %v8192 = vmax.f32 %v8188, %v8106
        %v8193 = vmax.f32 %v8189, %v8111
        %v8194 = vmax.f32 %v8190, %v8116
        %v8195 = vmax.f32 %v8191, %v8121
        %v8196 = vmax.f32 %v8192, %v8126
        %v8197 = vmax.f32 %v8193, %v8131
        %v8198 = vmax.f32 %v8194, %v8136
        %v8199 = vmax.f32 %v8195, %v8141
        %v8200 = vmax.f32 %v8196, %v8146
        %v8201 = vmax.f32 %v8197, %v8151
        %v8202 = vmax.f32 %v8198, %v8156
        %v8203 = vmax.f32 %v8199, %v8161
        %v8204 = vmax.f32 %v8200, %v8166
        %v8205 = vmax.f32 %v8201, %v8171
        %v8206 = vmax.f32 %v8202, %v8176
        %v8207 = vmax.f32 %v8203, %v8204
        %v8208 = vmax.f32 %v8205, %v8206
        %v8209 = vmax.f32 %v8207, %v8208
        %v8210 = vrot.slane %v8209, 4
        %v8211 = vmax.f32 %v8209, %v8210
        %v8212 = vrot.slane %v8211, 2
        %v8213 = vmax.f32 %v8211, %v8212
        %v8214 = vrot.slane %v8213, 1
        %v8215 = vmax.f32 %v8213, %v8214
        %v8216 = vsub.f32 %v8021, %v8215
        %v8217 = vsub.f32 %v8026, %v8215
        %v8218 = vsub.f32 %v8031, %v8215
        %v8219 = vsub.f32 %v8036, %v8215
        %v8220 = vsub.f32 %v8041, %v8215
        %v8221 = vsub.f32 %v8046, %v8215
        %v8222 = vsub.f32 %v8051, %v8215
        %v8223 = vsub.f32 %v8056, %v8215
        %v8224 = vsub.f32 %v8061, %v8215
        %v8225 = vsub.f32 %v8066, %v8215
        %v8226 = vsub.f32 %v8071, %v8215
        %v8227 = vsub.f32 %v8076, %v8215
        %v8228 = vsub.f32 %v8081, %v8215
        %v8229 = vsub.f32 %v8086, %v8215
        %v8230 = vsub.f32 %v8091, %v8215
        %v8231 = vsub.f32 %v8096, %v8215
        %v8232 = vsub.f32 %v8101, %v8215
        %v8233 = vsub.f32 %v8106, %v8215
        %v8234 = vsub.f32 %v8111, %v8215
        %v8235 = vsub.f32 %v8116, %v8215
        %v8236 = vsub.f32 %v8121, %v8215
        %v8237 = vsub.f32 %v8126, %v8215
        %v8238 = vsub.f32 %v8131, %v8215
        %v8239 = vsub.f32 %v8136, %v8215
        %v8240 = vsub.f32 %v8141, %v8215
        %v8241 = vsub.f32 %v8146, %v8215
        %v8242 = vsub.f32 %v8151, %v8215
        %v8243 = vsub.f32 %v8156, %v8215
        %v8244 = vsub.f32 %v8161, %v8215
        %v8245 = vsub.f32 %v8166, %v8215
        %v8246 = vsub.f32 %v8171, %v8215
        %v8247 = vsub.f32 %v8176, %v8215
        %v8248 = vmul.f32 %v8216, 1.442695
        %v8249 = vpow.pop %v8248
        %v8250 = vmul.f32 %v8217, 1.442695
        %v8251 = vpow.pop %v8250
        %v8252 = vmul.f32 %v8218, 1.442695
        %v8253 = vpow.pop %v8252
        %v8254 = vmul.f32 %v8219, 1.442695
        %v8255 = vpow.pop %v8254
        %v8256 = vmul.f32 %v8220, 1.442695
        %v8257 = vpow.pop %v8256
        %v8258 = vmul.f32 %v8221, 1.442695
        %v8259 = vpow.pop %v8258
        %v8260 = vmul.f32 %v8222, 1.442695
        %v8261 = vpow.pop %v8260
        %v8262 = vmul.f32 %v8223, 1.442695
        %v8263 = vpow.pop %v8262
        %v8264 = vmul.f32 %v8224, 1.442695
        %v8265 = vpow.pop %v8264
        %v8266 = vmul.f32 %v8225, 1.442695
        %v8267 = vpow.pop %v8266
        %v8268 = vmul.f32 %v8226, 1.442695
        %v8269 = vpow.pop %v8268
        %v8270 = vmul.f32 %v8227, 1.442695
        %v8271 = vpow.pop %v8270
        %v8272 = vmul.f32 %v8228, 1.442695
        %v8273 = vpow.pop %v8272
        %v8274 = vmul.f32 %v8229, 1.442695
        %v8275 = vpow.pop %v8274
        %v8276 = vmul.f32 %v8230, 1.442695
        %v8277 = vpow.pop %v8276
        %v8278 = vmul.f32 %v8231, 1.442695
        %v8279 = vpow.pop %v8278
        %v8280 = vmul.f32 %v8232, 1.442695
        %v8281 = vpow.pop %v8280
        %v8282 = vmul.f32 %v8233, 1.442695
        %v8283 = vpow.pop %v8282
        %v8284 = vmul.f32 %v8234, 1.442695
        %v8285 = vpow.pop %v8284
        %v8286 = vmul.f32 %v8235, 1.442695
        %v8287 = vpow.pop %v8286
        %v8288 = vmul.f32 %v8236, 1.442695
        %v8289 = vpow.pop %v8288
        %v8290 = vmul.f32 %v8237, 1.442695
        %v8291 = vpow.pop %v8290
        %v8292 = vmul.f32 %v8238, 1.442695
        %v8293 = vpow.pop %v8292
        %v8294 = vmul.f32 %v8239, 1.442695
        %v8295 = vpow.pop %v8294
        %v8296 = vmul.f32 %v8240, 1.442695
        %v8297 = vpow.pop %v8296
        %v8298 = vmul.f32 %v8241, 1.442695
        %v8299 = vpow.pop %v8298
        %v8300 = vmul.f32 %v8242, 1.442695
        %v8301 = vpow.pop %v8300
        %v8302 = vmul.f32 %v8243, 1.442695
        %v8303 = vpow.pop %v8302
        %v8304 = vmul.f32 %v8244, 1.442695
        %v8305 = vpow.pop %v8304
        %v8306 = vmul.f32 %v8245, 1.442695
        %v8307 = vpow.pop %v8306
        %v8308 = vmul.f32 %v8246, 1.442695
        %v8309 = vpow.pop %v8308
        %v8310 = vmul.f32 %v8247, 1.442695
        %v8311 = vpow.pop %v8310
        %v8312 = vadd.f32 %v8249, %v8251
        %v8313 = vadd.f32 %v8312, %v8253
        %v8314 = vadd.f32 %v8313, %v8255
        %v8315 = vadd.f32 %v8314, %v8257
        %v8316 = vadd.f32 %v8315, %v8259
        %v8317 = vadd.f32 %v8316, %v8261
        %v8318 = vadd.f32 %v8317, %v8263
        %v8319 = vadd.f32 %v8318, %v8265
        %v8320 = vadd.f32 %v8319, %v8267
        %v8321 = vadd.f32 %v8320, %v8269
        %v8322 = vadd.f32 %v8321, %v8271
        %v8323 = vadd.f32 %v8322, %v8273
        %v8324 = vadd.f32 %v8323, %v8275
        %v8325 = vadd.f32 %v8324, %v8277
        %v8326 = vadd.f32 %v8325, %v8279
        %v8327 = vadd.f32 %v8326, %v8281
        %v8328 = vadd.f32 %v8327, %v8283
        %v8329 = vadd.f32 %v8328, %v8285
        %v8330 = vadd.f32 %v8329, %v8287
        %v8331 = vadd.f32 %v8330, %v8289
        %v8332 = vadd.f32 %v8331, %v8291
        %v8333 = vadd.f32 %v8332, %v8293
        %v8334 = vadd.f32 %v8333, %v8295
        %v8335 = vadd.f32 %v8334, %v8297
        %v8336 = vadd.f32 %v8335, %v8299
        %v8337 = vadd.f32 %v8336, %v8301
        %v8338 = vadd.f32 %v8337, %v8303
        %v8339 = vadd.f32 %v8338, %v8305
        %v8340 = vadd.f32 %v8339, %v8307
        %v8341 = vadd.f32 %v8340, %v8309
        %v8342 = vadd.f32 %v8341, %v8311
        %v8343 = vrot.slane %v8342, 4
        %v8344 = vadd.f32 %v8342, %v8343
        %v8345 = vrot.slane %v8344, 2
        %v8346 = vadd.f32 %v8344, %v8345
        %v8347 = vrot.slane %v8346, 1
        %v8348 = vadd.f32 %v8346, %v8347
        %v8349 = vrcp.pop %v8348
        %v8350 = vpack.c.bf16 %v8251, %v8249
        %v8351 = vpack.c.bf16 %v8255, %v8253
        %v8352 = vpack.c.bf16 %v8259, %v8257
        %v8353 = vpack.c.bf16 %v8263, %v8261
        %v8354 = vpack.c.bf16 %v8267, %v8265
        %v8355 = vpack.c.bf16 %v8271, %v8269
        %v8356 = vpack.c.bf16 %v8275, %v8273
        %v8357 = vpack.c.bf16 %v8279, %v8277
        %v8358 = vpack.c.bf16 %v8283, %v8281
        %v8359 = vpack.c.bf16 %v8287, %v8285
        %v8360 = vpack.c.bf16 %v8291, %v8289
        %v8361 = vpack.c.bf16 %v8295, %v8293
        %v8362 = vpack.c.bf16 %v8299, %v8297
        %v8363 = vpack.c.bf16 %v8303, %v8301
        %v8364 = vpack.c.bf16 %v8307, %v8305
        %v8365 = vpack.c.bf16 %v8311, %v8309
        %8366 = vmatprep.subr.bf16.mxu0 0
        %8367 = vmatpush1.bf16.msra.mxu0 %v8357
        %8368 = vmatprep.subr.bf16.mxu0 0
        %8369 = vmatpush1.bf16.msra.mxu0 %v8356
        %8370 = vmatprep.subr.bf16.mxu0 0
        %8371 = vmatpush1.bf16.msra.mxu0 %v8355
        %8372 = vmatprep.subr.bf16.mxu0 0
        %8373 = vmatpush1.bf16.msra.mxu0 %v8354
        %8374 = vmatprep.subr.bf16.mxu0 0
        %8375 = vmatpush1.bf16.msra.mxu0 %v8353
        %8376 = vmatprep.subr.bf16.mxu0 0
        %8377 = vmatpush1.bf16.msra.mxu0 %v8352
        %8378 = vmatprep.subr.bf16.mxu0 0
        %8379 = vmatpush1.bf16.msra.mxu0 %v8351
        %8380 = vmatprep.subr.bf16.mxu0 0
        %8381 = vmatpush1.bf16.msra.mxu0 %v8350
        %8382 = vmatprep.subr.bf16.mxu0 0
        %8383 = vmatpush2.bf16.msra.mxu0 %v8365
        %8384 = vmatprep.subr.bf16.mxu0 0
        %8385 = vmatpush2.bf16.msra.mxu0 %v8364
        %8386 = vmatprep.subr.bf16.mxu0 0
        %8387 = vmatpush2.bf16.msra.mxu0 %v8363
        %8388 = vmatprep.subr.bf16.mxu0 0
        %8389 = vmatpush2.bf16.msra.mxu0 %v8362
        %8390 = vmatprep.subr.bf16.mxu0 0
        %8391 = vmatpush2.bf16.msra.mxu0 %v8361
        %8392 = vmatprep.subr.bf16.mxu0 0
        %8393 = vmatpush2.bf16.msra.mxu0 %v8360
        %8394 = vmatprep.subr.bf16.mxu0 0
        %8395 = vmatpush2.bf16.msra.mxu0 %v8359
        %8396 = vmatprep.subr.bf16.mxu0 0
        %8397 = vmatpush2.bf16.msra.mxu0 %v8358
        %8398 = vmatprep.mubr.bf16.mxu0 %v7371
        %8399 = vmatmul.mubr.bf16.gmra.mxu0 %v7370
        %v8400 = vpop.f32.mrf.mxu0
        %v8401 = vadd.f32 0.0, %v8400
        %v8402 = vpop.f32.mrf.mxu0
        %v8403 = vpop.f32.mrf.mxu0
        %v8404 = vpop.f32.mrf.mxu0
        %8405 = vdwg.mxu0
        %v8406 = vmul.f32 %v8401, %v8349
        %8407 = vst [vmem:[#allocation2 + $0x28] sm:$0xff] %v8406
        %v8408 = vpack.c.bf16 %v5258, %v5258
        %v8409 = vpack.c.bf16 %v5260, %v5260
        %8410 = vrot.lane.b32.xlu0 %v5278, 104
        %v8411 = vpop.permute.xlu0 %8410
        %8412 = vrot.lane.b32.xlu0 %v5279, 104
        %v8413 = vpop.permute.xlu0 %8412
        %8414 = vrot.lane.b32.xlu0 %v5280, 104
        %v8415 = vpop.permute.xlu0 %8414
        %8416 = vrot.lane.b32.xlu0 %v5281, 104
        %v8417 = vpop.permute.xlu0 %8416
        %8418 = vrot.lane.b32.xlu0 %v5282, 104
        %v8419 = vpop.permute.xlu0 %8418
        %8420 = vrot.lane.b32.xlu0 %v5283, 104
        %v8421 = vpop.permute.xlu0 %8420
        %8422 = vrot.lane.b32.xlu0 %v5284, 104
        %v8423 = vpop.permute.xlu0 %8422
        %8424 = vrot.lane.b32.xlu0 %v5285, 104
        %v8425 = vpop.permute.xlu0 %8424
        %8426 = vrot.lane.b32.xlu0 %v5286, 104
        %v8427 = vpop.permute.xlu0 %8426
        %8428 = vrot.lane.b32.xlu0 %v5287, 104
        %v8429 = vpop.permute.xlu0 %8428
        %8430 = vrot.lane.b32.xlu0 %v5288, 104
        %v8431 = vpop.permute.xlu0 %8430
        %8432 = vrot.lane.b32.xlu0 %v5289, 104
        %v8433 = vpop.permute.xlu0 %8432
        %8434 = vrot.lane.b32.xlu0 %v5290, 104
        %v8435 = vpop.permute.xlu0 %8434
        %8436 = vrot.lane.b32.xlu0 %v5291, 104
        %v8437 = vpop.permute.xlu0 %8436
        %8438 = vrot.lane.b32.xlu0 %v5292, 104
        %v8439 = vpop.permute.xlu0 %8438
        %8440 = vrot.lane.b32.xlu0 %v5293, 104
        %v8441 = vpop.permute.xlu0 %8440
        %8442 = vrot.lane.b32.xlu0 %v5310, 104
        %v8443 = vpop.permute.xlu0 %8442
        %8444 = vrot.lane.b32.xlu0 %v5311, 104
        %v8445 = vpop.permute.xlu0 %8444
        %8446 = vrot.lane.b32.xlu0 %v5312, 104
        %v8447 = vpop.permute.xlu0 %8446
        %8448 = vrot.lane.b32.xlu0 %v5313, 104
        %v8449 = vpop.permute.xlu0 %8448
        %8450 = vrot.lane.b32.xlu0 %v5314, 104
        %v8451 = vpop.permute.xlu0 %8450
        %8452 = vrot.lane.b32.xlu0 %v5315, 104
        %v8453 = vpop.permute.xlu0 %8452
        %8454 = vrot.lane.b32.xlu0 %v5316, 104
        %v8455 = vpop.permute.xlu0 %8454
        %8456 = vrot.lane.b32.xlu0 %v5317, 104
        %v8457 = vpop.permute.xlu0 %8456
        %8458 = vrot.lane.b32.xlu0 %v5318, 104
        %v8459 = vpop.permute.xlu0 %8458
        %8460 = vrot.lane.b32.xlu0 %v5319, 104
        %v8461 = vpop.permute.xlu0 %8460
        %8462 = vrot.lane.b32.xlu0 %v5320, 104
        %v8463 = vpop.permute.xlu0 %8462
        %8464 = vrot.lane.b32.xlu0 %v5321, 104
        %v8465 = vpop.permute.xlu0 %8464
        %8466 = vrot.lane.b32.xlu0 %v5322, 104
        %v8467 = vpop.permute.xlu0 %8466
        %8468 = vrot.lane.b32.xlu0 %v5323, 104
        %v8469 = vpop.permute.xlu0 %8468
        %8470 = vrot.lane.b32.xlu0 %v5324, 104
        %v8471 = vpop.permute.xlu0 %8470
        %8472 = vrot.lane.b32.xlu0 %v5325, 104
        %v8473 = vpop.permute.xlu0 %8472
        %v8474 = vsel %vm718, %v8411, 0
        %v8476 = vsel %vm718, %v8413, 0
        %v8478 = vsel %vm718, %v8415, 0
        %v8480 = vsel %vm718, %v8417, 0
        %v8482 = vsel %vm718, %v8419, 0
        %v8484 = vsel %vm718, %v8421, 0
        %v8486 = vsel %vm718, %v8423, 0
        %v8488 = vsel %vm718, %v8425, 0
        %v8490 = vsel %vm718, %v8427, 0
        %v8492 = vsel %vm718, %v8429, 0
        %v8494 = vsel %vm718, %v8431, 0
        %v8496 = vsel %vm718, %v8433, 0
        %v8498 = vsel %vm718, %v8435, 0
        %v8500 = vsel %vm718, %v8437, 0
        %v8502 = vsel %vm718, %v8439, 0
        %v8504 = vsel %vm718, %v8441, 0
        %v8506 = vsel %vm718, %v8443, 0
        %v8508 = vsel %vm718, %v8445, 0
        %v8510 = vsel %vm718, %v8447, 0
        %v8512 = vsel %vm718, %v8449, 0
        %v8514 = vsel %vm718, %v8451, 0
        %v8516 = vsel %vm718, %v8453, 0
        %v8518 = vsel %vm718, %v8455, 0
        %v8520 = vsel %vm718, %v8457, 0
        %v8522 = vsel %vm718, %v8459, 0
        %v8524 = vsel %vm718, %v8461, 0
        %v8526 = vsel %vm718, %v8463, 0
        %v8528 = vsel %vm718, %v8465, 0
        %v8530 = vsel %vm718, %v8467, 0
        %v8532 = vsel %vm718, %v8469, 0
        %v8534 = vsel %vm718, %v8471, 0
        %v8536 = vsel %vm718, %v8473, 0
        %8538 = vmatprep.subr.mxu0 0.0
        %8539 = vmatpush1.msra.mxu0 0.0
        %8540 = vmatprep.subr.mxu0 0.0
        %8541 = vmatpush1.msra.mxu0 0.0
        %8542 = vmatprep.subr.mxu0 0.0
        %8543 = vmatpush1.msra.mxu0 0.0
        %8544 = vmatprep.subr.mxu0 0.0
        %8545 = vmatpush1.msra.mxu0 0.0
        %8546 = vmatprep.subr.mxu0 0.0
        %8547 = vmatpush1.msra.mxu0 0.0
        %8548 = vmatprep.subr.mxu0 0.0
        %8549 = vmatpush1.msra.mxu0 0.0
        %8550 = vmatprep.subr.mxu0 0.0
        %8551 = vmatpush1.msra.mxu0 0.0
        %8552 = vmatprep.subr.mxu0 0.0
        %8553 = vmatpush1.msra.mxu0 0.0
        %8554 = vmatprep.subr.mxu0 0.0
        %8555 = vmatpush1.msra.mxu0 0.0
        %8556 = vmatprep.subr.mxu0 0.0
        %8557 = vmatpush1.msra.mxu0 0.0
        %8558 = vmatprep.subr.mxu0 0.0
        %8559 = vmatpush1.msra.mxu0 0.0
        %8560 = vmatprep.subr.mxu0 0.0
        %8561 = vmatpush1.msra.mxu0 0.0
        %8562 = vmatprep.subr.mxu0 0.0
        %8563 = vmatpush1.msra.mxu0 0.0
        %8564 = vmatprep.subr.mxu0 0.0
        %8565 = vmatpush1.msra.mxu0 0.0
        %8566 = vmatprep.subr.mxu0 0.0
        %8567 = vmatpush1.msra.mxu0 0.0
        %8568 = vmatprep.subr.mxu0 0.0
        %8569 = vmatpush1.msra.mxu0 %v5218
        %8570 = vmatprep.subr.mxu0 0.0
        %8571 = vmatpush2.msra.mxu0 0.0
        %8572 = vmatprep.subr.mxu0 0.0
        %8573 = vmatpush2.msra.mxu0 0.0
        %8574 = vmatprep.subr.mxu0 0.0
        %8575 = vmatpush2.msra.mxu0 0.0
        %8576 = vmatprep.subr.mxu0 0.0
        %8577 = vmatpush2.msra.mxu0 0.0
        %8578 = vmatprep.subr.mxu0 0.0
        %8579 = vmatpush2.msra.mxu0 0.0
        %8580 = vmatprep.subr.mxu0 0.0
        %8581 = vmatpush2.msra.mxu0 0.0
        %8582 = vmatprep.subr.mxu0 0.0
        %8583 = vmatpush2.msra.mxu0 0.0
        %8584 = vmatprep.subr.mxu0 0.0
        %8585 = vmatpush2.msra.mxu0 0.0
        %8586 = vmatprep.subr.mxu0 0.0
        %8587 = vmatpush2.msra.mxu0 0.0
        %8588 = vmatprep.subr.mxu0 0.0
        %8589 = vmatpush2.msra.mxu0 0.0
        %8590 = vmatprep.subr.mxu0 0.0
        %8591 = vmatpush2.msra.mxu0 0.0
        %8592 = vmatprep.subr.mxu0 0.0
        %8593 = vmatpush2.msra.mxu0 0.0
        %8594 = vmatprep.subr.mxu0 0.0
        %8595 = vmatpush2.msra.mxu0 0.0
        %8596 = vmatprep.subr.mxu0 0.0
        %8597 = vmatpush2.msra.mxu0 0.0
        %8598 = vmatprep.subr.mxu0 0.0
        %8599 = vmatpush2.msra.mxu0 0.0
        %8600 = vmatprep.subr.mxu0 0.0
        %8601 = vmatpush2.msra.mxu0 0.0
        %8602 = vmatprep.mubr.f32.mxu0 0.0
        %8603 = vmatmul.mubr.f32.gmra.mxu0 %v8474
        %v8604 = vpop.f32.mrf.mxu0
        %v8605 = vadd.f32 0.0, %v8604
        %v8606 = vpop.f32.mrf.mxu0
        %8607 = vmatprep.mubr.f32.mxu0 0.0
        %8608 = vmatmul.mubr.f32.gmra.mxu0 %v8476
        %v8609 = vpop.f32.mrf.mxu0
        %v8610 = vadd.f32 0.0, %v8609
        %v8611 = vpop.f32.mrf.mxu0
        %8612 = vmatprep.mubr.f32.mxu0 0.0
        %8613 = vmatmul.mubr.f32.gmra.mxu0 %v8478
        %v8614 = vpop.f32.mrf.mxu0
        %v8615 = vadd.f32 0.0, %v8614
        %v8616 = vpop.f32.mrf.mxu0
        %8617 = vmatprep.mubr.f32.mxu0 0.0
        %8618 = vmatmul.mubr.f32.gmra.mxu0 %v8480
        %v8619 = vpop.f32.mrf.mxu0
        %v8620 = vadd.f32 0.0, %v8619
        %v8621 = vpop.f32.mrf.mxu0
        %8622 = vmatprep.mubr.f32.mxu0 0.0
        %8623 = vmatmul.mubr.f32.gmra.mxu0 %v8482
        %v8624 = vpop.f32.mrf.mxu0
        %v8625 = vadd.f32 0.0, %v8624
        %v8626 = vpop.f32.mrf.mxu0
        %8627 = vmatprep.mubr.f32.mxu0 0.0
        %8628 = vmatmul.mubr.f32.gmra.mxu0 %v8484
        %v8629 = vpop.f32.mrf.mxu0
        %v8630 = vadd.f32 0.0, %v8629
        %v8631 = vpop.f32.mrf.mxu0
        %8632 = vmatprep.mubr.f32.mxu0 0.0
        %8633 = vmatmul.mubr.f32.gmra.mxu0 %v8486
        %v8634 = vpop.f32.mrf.mxu0
        %v8635 = vadd.f32 0.0, %v8634
        %v8636 = vpop.f32.mrf.mxu0
        %8637 = vmatprep.mubr.f32.mxu0 0.0
        %8638 = vmatmul.mubr.f32.gmra.mxu0 %v8488
        %v8639 = vpop.f32.mrf.mxu0
        %v8640 = vadd.f32 0.0, %v8639
        %v8641 = vpop.f32.mrf.mxu0
        %8642 = vmatprep.mubr.f32.mxu0 0.0
        %8643 = vmatmul.mubr.f32.gmra.mxu0 %v8490
        %v8644 = vpop.f32.mrf.mxu0
        %v8645 = vadd.f32 0.0, %v8644
        %v8646 = vpop.f32.mrf.mxu0
        %8647 = vmatprep.mubr.f32.mxu0 0.0
        %8648 = vmatmul.mubr.f32.gmra.mxu0 %v8492
        %v8649 = vpop.f32.mrf.mxu0
        %v8650 = vadd.f32 0.0, %v8649
        %v8651 = vpop.f32.mrf.mxu0
        %8652 = vmatprep.mubr.f32.mxu0 0.0
        %8653 = vmatmul.mubr.f32.gmra.mxu0 %v8494
        %v8654 = vpop.f32.mrf.mxu0
        %v8655 = vadd.f32 0.0, %v8654
        %v8656 = vpop.f32.mrf.mxu0
        %8657 = vmatprep.mubr.f32.mxu0 0.0
        %8658 = vmatmul.mubr.f32.gmra.mxu0 %v8496
        %v8659 = vpop.f32.mrf.mxu0
        %v8660 = vadd.f32 0.0, %v8659
        %v8661 = vpop.f32.mrf.mxu0
        %8662 = vmatprep.mubr.f32.mxu0 0.0
        %8663 = vmatmul.mubr.f32.gmra.mxu0 %v8498
        %v8664 = vpop.f32.mrf.mxu0
        %v8665 = vadd.f32 0.0, %v8664
        %v8666 = vpop.f32.mrf.mxu0
        %8667 = vmatprep.mubr.f32.mxu0 0.0
        %8668 = vmatmul.mubr.f32.gmra.mxu0 %v8500
        %v8669 = vpop.f32.mrf.mxu0
        %v8670 = vadd.f32 0.0, %v8669
        %v8671 = vpop.f32.mrf.mxu0
        %8672 = vmatprep.mubr.f32.mxu0 0.0
        %8673 = vmatmul.mubr.f32.gmra.mxu0 %v8502
        %v8674 = vpop.f32.mrf.mxu0
        %v8675 = vadd.f32 0.0, %v8674
        %v8676 = vpop.f32.mrf.mxu0
        %8677 = vmatprep.mubr.f32.mxu0 0.0
        %8678 = vmatmul.mubr.f32.gmra.mxu0 %v8504
        %v8679 = vpop.f32.mrf.mxu0
        %v8680 = vadd.f32 0.0, %v8679
        %v8681 = vpop.f32.mrf.mxu0
        %8682 = vmatprep.mubr.f32.mxu0 0.0
        %8683 = vmatmul.mubr.f32.gmra.mxu0 %v8506
        %v8684 = vpop.f32.mrf.mxu0
        %v8685 = vadd.f32 0.0, %v8684
        %v8686 = vpop.f32.mrf.mxu0
        %8687 = vmatprep.mubr.f32.mxu0 0.0
        %8688 = vmatmul.mubr.f32.gmra.mxu0 %v8508
        %v8689 = vpop.f32.mrf.mxu0
        %v8690 = vadd.f32 0.0, %v8689
        %v8691 = vpop.f32.mrf.mxu0
        %8692 = vmatprep.mubr.f32.mxu0 0.0
        %8693 = vmatmul.mubr.f32.gmra.mxu0 %v8510
        %v8694 = vpop.f32.mrf.mxu0
        %v8695 = vadd.f32 0.0, %v8694
        %v8696 = vpop.f32.mrf.mxu0
        %8697 = vmatprep.mubr.f32.mxu0 0.0
        %8698 = vmatmul.mubr.f32.gmra.mxu0 %v8512
        %v8699 = vpop.f32.mrf.mxu0
        %v8700 = vadd.f32 0.0, %v8699
        %v8701 = vpop.f32.mrf.mxu0
        %8702 = vmatprep.mubr.f32.mxu0 0.0
        %8703 = vmatmul.mubr.f32.gmra.mxu0 %v8514
        %v8704 = vpop.f32.mrf.mxu0
        %v8705 = vadd.f32 0.0, %v8704
        %v8706 = vpop.f32.mrf.mxu0
        %8707 = vmatprep.mubr.f32.mxu0 0.0
        %8708 = vmatmul.mubr.f32.gmra.mxu0 %v8516
        %v8709 = vpop.f32.mrf.mxu0
        %v8710 = vadd.f32 0.0, %v8709
        %v8711 = vpop.f32.mrf.mxu0
        %8712 = vmatprep.mubr.f32.mxu0 0.0
        %8713 = vmatmul.mubr.f32.gmra.mxu0 %v8518
        %v8714 = vpop.f32.mrf.mxu0
        %v8715 = vadd.f32 0.0, %v8714
        %v8716 = vpop.f32.mrf.mxu0
        %8717 = vmatprep.mubr.f32.mxu0 0.0
        %8718 = vmatmul.mubr.f32.gmra.mxu0 %v8520
        %v8719 = vpop.f32.mrf.mxu0
        %v8720 = vadd.f32 0.0, %v8719
        %v8721 = vpop.f32.mrf.mxu0
        %8722 = vmatprep.mubr.f32.mxu0 0.0
        %8723 = vmatmul.mubr.f32.gmra.mxu0 %v8522
        %v8724 = vpop.f32.mrf.mxu0
        %v8725 = vadd.f32 0.0, %v8724
        %v8726 = vpop.f32.mrf.mxu0
        %8727 = vmatprep.mubr.f32.mxu0 0.0
        %8728 = vmatmul.mubr.f32.gmra.mxu0 %v8524
        %v8729 = vpop.f32.mrf.mxu0
        %v8730 = vadd.f32 0.0, %v8729
        %v8731 = vpop.f32.mrf.mxu0
        %8732 = vmatprep.mubr.f32.mxu0 0.0
        %8733 = vmatmul.mubr.f32.gmra.mxu0 %v8526
        %v8734 = vpop.f32.mrf.mxu0
        %v8735 = vadd.f32 0.0, %v8734
        %v8736 = vpop.f32.mrf.mxu0
        %8737 = vmatprep.mubr.f32.mxu0 0.0
        %8738 = vmatmul.mubr.f32.gmra.mxu0 %v8528
        %v8739 = vpop.f32.mrf.mxu0
        %v8740 = vadd.f32 0.0, %v8739
        %v8741 = vpop.f32.mrf.mxu0
        %8742 = vmatprep.mubr.f32.mxu0 0.0
        %8743 = vmatmul.mubr.f32.gmra.mxu0 %v8530
        %v8744 = vpop.f32.mrf.mxu0
        %v8745 = vadd.f32 0.0, %v8744
        %v8746 = vpop.f32.mrf.mxu0
        %8747 = vmatprep.mubr.f32.mxu0 0.0
        %8748 = vmatmul.mubr.f32.gmra.mxu0 %v8532
        %v8749 = vpop.f32.mrf.mxu0
        %v8750 = vadd.f32 0.0, %v8749
        %v8751 = vpop.f32.mrf.mxu0
        %8752 = vmatprep.mubr.f32.mxu0 0.0
        %8753 = vmatmul.mubr.f32.gmra.mxu0 %v8534
        %v8754 = vpop.f32.mrf.mxu0
        %v8755 = vadd.f32 0.0, %v8754
        %v8756 = vpop.f32.mrf.mxu0
        %8757 = vmatprep.mubr.f32.mxu0 0.0
        %8758 = vmatmul.mubr.f32.gmra.mxu0 %v8536
        %v8759 = vpop.f32.mrf.mxu0
        %v8760 = vadd.f32 0.0, %v8759
        %v8761 = vpop.f32.mrf.mxu0
        %8762 = vdwg.mxu0
        %v8763 = vmax.f32 %v8605, %v8625
        %v8764 = vmax.f32 %v8610, %v8630
        %v8765 = vmax.f32 %v8615, %v8635
        %v8766 = vmax.f32 %v8620, %v8640
        %v8767 = vmax.f32 %v8763, %v8645
        %v8768 = vmax.f32 %v8764, %v8650
        %v8769 = vmax.f32 %v8765, %v8655
        %v8770 = vmax.f32 %v8766, %v8660
        %v8771 = vmax.f32 %v8767, %v8665
        %v8772 = vmax.f32 %v8768, %v8670
        %v8773 = vmax.f32 %v8769, %v8675
        %v8774 = vmax.f32 %v8770, %v8680
        %v8775 = vmax.f32 %v8771, %v8685
        %v8776 = vmax.f32 %v8772, %v8690
        %v8777 = vmax.f32 %v8773, %v8695
        %v8778 = vmax.f32 %v8774, %v8700
        %v8779 = vmax.f32 %v8775, %v8705
        %v8780 = vmax.f32 %v8776, %v8710
        %v8781 = vmax.f32 %v8777, %v8715
        %v8782 = vmax.f32 %v8778, %v8720
        %v8783 = vmax.f32 %v8779, %v8725
        %v8784 = vmax.f32 %v8780, %v8730
        %v8785 = vmax.f32 %v8781, %v8735
        %v8786 = vmax.f32 %v8782, %v8740
        %v8787 = vmax.f32 %v8783, %v8745
        %v8788 = vmax.f32 %v8784, %v8750
        %v8789 = vmax.f32 %v8785, %v8755
        %v8790 = vmax.f32 %v8786, %v8760
        %v8791 = vmax.f32 %v8787, %v8788
        %v8792 = vmax.f32 %v8789, %v8790
        %v8793 = vmax.f32 %v8791, %v8792
        %v8794 = vrot.slane %v8793, 4
        %v8795 = vmax.f32 %v8793, %v8794
        %v8796 = vrot.slane %v8795, 2
        %v8797 = vmax.f32 %v8795, %v8796
        %v8798 = vrot.slane %v8797, 1
        %v8799 = vmax.f32 %v8797, %v8798
        %v8800 = vsub.f32 %v8605, %v8799
        %v8801 = vsub.f32 %v8610, %v8799
        %v8802 = vsub.f32 %v8615, %v8799
        %v8803 = vsub.f32 %v8620, %v8799
        %v8804 = vsub.f32 %v8625, %v8799
        %v8805 = vsub.f32 %v8630, %v8799
        %v8806 = vsub.f32 %v8635, %v8799
        %v8807 = vsub.f32 %v8640, %v8799
        %v8808 = vsub.f32 %v8645, %v8799
        %v8809 = vsub.f32 %v8650, %v8799
        %v8810 = vsub.f32 %v8655, %v8799
        %v8811 = vsub.f32 %v8660, %v8799
        %v8812 = vsub.f32 %v8665, %v8799
        %v8813 = vsub.f32 %v8670, %v8799
        %v8814 = vsub.f32 %v8675, %v8799
        %v8815 = vsub.f32 %v8680, %v8799
        %v8816 = vsub.f32 %v8685, %v8799
        %v8817 = vsub.f32 %v8690, %v8799
        %v8818 = vsub.f32 %v8695, %v8799
        %v8819 = vsub.f32 %v8700, %v8799
        %v8820 = vsub.f32 %v8705, %v8799
        %v8821 = vsub.f32 %v8710, %v8799
        %v8822 = vsub.f32 %v8715, %v8799
        %v8823 = vsub.f32 %v8720, %v8799
        %v8824 = vsub.f32 %v8725, %v8799
        %v8825 = vsub.f32 %v8730, %v8799
        %v8826 = vsub.f32 %v8735, %v8799
        %v8827 = vsub.f32 %v8740, %v8799
        %v8828 = vsub.f32 %v8745, %v8799
        %v8829 = vsub.f32 %v8750, %v8799
        %v8830 = vsub.f32 %v8755, %v8799
        %v8831 = vsub.f32 %v8760, %v8799
        %v8832 = vmul.f32 %v8800, 1.442695
        %v8833 = vpow.pop %v8832
        %v8834 = vmul.f32 %v8801, 1.442695
        %v8835 = vpow.pop %v8834
        %v8836 = vmul.f32 %v8802, 1.442695
        %v8837 = vpow.pop %v8836
        %v8838 = vmul.f32 %v8803, 1.442695
        %v8839 = vpow.pop %v8838
        %v8840 = vmul.f32 %v8804, 1.442695
        %v8841 = vpow.pop %v8840
        %v8842 = vmul.f32 %v8805, 1.442695
        %v8843 = vpow.pop %v8842
        %v8844 = vmul.f32 %v8806, 1.442695
        %v8845 = vpow.pop %v8844
        %v8846 = vmul.f32 %v8807, 1.442695
        %v8847 = vpow.pop %v8846
        %v8848 = vmul.f32 %v8808, 1.442695
        %v8849 = vpow.pop %v8848
        %v8850 = vmul.f32 %v8809, 1.442695
        %v8851 = vpow.pop %v8850
        %v8852 = vmul.f32 %v8810, 1.442695
        %v8853 = vpow.pop %v8852
        %v8854 = vmul.f32 %v8811, 1.442695
        %v8855 = vpow.pop %v8854
        %v8856 = vmul.f32 %v8812, 1.442695
        %v8857 = vpow.pop %v8856
        %v8858 = vmul.f32 %v8813, 1.442695
        %v8859 = vpow.pop %v8858
        %v8860 = vmul.f32 %v8814, 1.442695
        %v8861 = vpow.pop %v8860
        %v8862 = vmul.f32 %v8815, 1.442695
        %v8863 = vpow.pop %v8862
        %v8864 = vmul.f32 %v8816, 1.442695
        %v8865 = vpow.pop %v8864
        %v8866 = vmul.f32 %v8817, 1.442695
        %v8867 = vpow.pop %v8866
        %v8868 = vmul.f32 %v8818, 1.442695
        %v8869 = vpow.pop %v8868
        %v8870 = vmul.f32 %v8819, 1.442695
        %v8871 = vpow.pop %v8870
        %v8872 = vmul.f32 %v8820, 1.442695
        %v8873 = vpow.pop %v8872
        %v8874 = vmul.f32 %v8821, 1.442695
        %v8875 = vpow.pop %v8874
        %v8876 = vmul.f32 %v8822, 1.442695
        %v8877 = vpow.pop %v8876
        %v8878 = vmul.f32 %v8823, 1.442695
        %v8879 = vpow.pop %v8878
        %v8880 = vmul.f32 %v8824, 1.442695
        %v8881 = vpow.pop %v8880
        %v8882 = vmul.f32 %v8825, 1.442695
        %v8883 = vpow.pop %v8882
        %v8884 = vmul.f32 %v8826, 1.442695
        %v8885 = vpow.pop %v8884
        %v8886 = vmul.f32 %v8827, 1.442695
        %v8887 = vpow.pop %v8886
        %v8888 = vmul.f32 %v8828, 1.442695
        %v8889 = vpow.pop %v8888
        %v8890 = vmul.f32 %v8829, 1.442695
        %v8891 = vpow.pop %v8890
        %v8892 = vmul.f32 %v8830, 1.442695
        %v8893 = vpow.pop %v8892
        %v8894 = vmul.f32 %v8831, 1.442695
        %v8895 = vpow.pop %v8894
        %v8896 = vadd.f32 %v8833, %v8835
        %v8897 = vadd.f32 %v8896, %v8837
        %v8898 = vadd.f32 %v8897, %v8839
        %v8899 = vadd.f32 %v8898, %v8841
        %v8900 = vadd.f32 %v8899, %v8843
        %v8901 = vadd.f32 %v8900, %v8845
        %v8902 = vadd.f32 %v8901, %v8847
        %v8903 = vadd.f32 %v8902, %v8849
        %v8904 = vadd.f32 %v8903, %v8851
        %v8905 = vadd.f32 %v8904, %v8853
        %v8906 = vadd.f32 %v8905, %v8855
        %v8907 = vadd.f32 %v8906, %v8857
        %v8908 = vadd.f32 %v8907, %v8859
        %v8909 = vadd.f32 %v8908, %v8861
        %v8910 = vadd.f32 %v8909, %v8863
        %v8911 = vadd.f32 %v8910, %v8865
        %v8912 = vadd.f32 %v8911, %v8867
        %v8913 = vadd.f32 %v8912, %v8869
        %v8914 = vadd.f32 %v8913, %v8871
        %v8915 = vadd.f32 %v8914, %v8873
        %v8916 = vadd.f32 %v8915, %v8875
        %v8917 = vadd.f32 %v8916, %v8877
        %v8918 = vadd.f32 %v8917, %v8879
        %v8919 = vadd.f32 %v8918, %v8881
        %v8920 = vadd.f32 %v8919, %v8883
        %v8921 = vadd.f32 %v8920, %v8885
        %v8922 = vadd.f32 %v8921, %v8887
        %v8923 = vadd.f32 %v8922, %v8889
        %v8924 = vadd.f32 %v8923, %v8891
        %v8925 = vadd.f32 %v8924, %v8893
        %v8926 = vadd.f32 %v8925, %v8895
        %v8927 = vrot.slane %v8926, 4
        %v8928 = vadd.f32 %v8926, %v8927
        %v8929 = vrot.slane %v8928, 2
        %v8930 = vadd.f32 %v8928, %v8929
        %v8931 = vrot.slane %v8930, 1
        %v8932 = vadd.f32 %v8930, %v8931
        %v8933 = vrcp.pop %v8932
        %v8934 = vpack.c.bf16 %v8835, %v8833
        %v8935 = vpack.c.bf16 %v8839, %v8837
        %v8936 = vpack.c.bf16 %v8843, %v8841
        %v8937 = vpack.c.bf16 %v8847, %v8845
        %v8938 = vpack.c.bf16 %v8851, %v8849
        %v8939 = vpack.c.bf16 %v8855, %v8853
        %v8940 = vpack.c.bf16 %v8859, %v8857
        %v8941 = vpack.c.bf16 %v8863, %v8861
        %v8942 = vpack.c.bf16 %v8867, %v8865
        %v8943 = vpack.c.bf16 %v8871, %v8869
        %v8944 = vpack.c.bf16 %v8875, %v8873
        %v8945 = vpack.c.bf16 %v8879, %v8877
        %v8946 = vpack.c.bf16 %v8883, %v8881
        %v8947 = vpack.c.bf16 %v8887, %v8885
        %v8948 = vpack.c.bf16 %v8891, %v8889
        %v8949 = vpack.c.bf16 %v8895, %v8893
        %8950 = vmatprep.subr.bf16.mxu0 0
        %8951 = vmatpush1.bf16.msra.mxu0 %v8941
        %8952 = vmatprep.subr.bf16.mxu0 0
        %8953 = vmatpush1.bf16.msra.mxu0 %v8940
        %8954 = vmatprep.subr.bf16.mxu0 0
        %8955 = vmatpush1.bf16.msra.mxu0 %v8939
        %8956 = vmatprep.subr.bf16.mxu0 0
        %8957 = vmatpush1.bf16.msra.mxu0 %v8938
        %8958 = vmatprep.subr.bf16.mxu0 0
        %8959 = vmatpush1.bf16.msra.mxu0 %v8937
        %8960 = vmatprep.subr.bf16.mxu0 0
        %8961 = vmatpush1.bf16.msra.mxu0 %v8936
        %8962 = vmatprep.subr.bf16.mxu0 0
        %8963 = vmatpush1.bf16.msra.mxu0 %v8935
        %8964 = vmatprep.subr.bf16.mxu0 0
        %8965 = vmatpush1.bf16.msra.mxu0 %v8934
        %8966 = vmatprep.subr.bf16.mxu0 0
        %8967 = vmatpush2.bf16.msra.mxu0 %v8949
        %8968 = vmatprep.subr.bf16.mxu0 0
        %8969 = vmatpush2.bf16.msra.mxu0 %v8948
        %8970 = vmatprep.subr.bf16.mxu0 0
        %8971 = vmatpush2.bf16.msra.mxu0 %v8947
        %8972 = vmatprep.subr.bf16.mxu0 0
        %8973 = vmatpush2.bf16.msra.mxu0 %v8946
        %8974 = vmatprep.subr.bf16.mxu0 0
        %8975 = vmatpush2.bf16.msra.mxu0 %v8945
        %8976 = vmatprep.subr.bf16.mxu0 0
        %8977 = vmatpush2.bf16.msra.mxu0 %v8944
        %8978 = vmatprep.subr.bf16.mxu0 0
        %8979 = vmatpush2.bf16.msra.mxu0 %v8943
        %8980 = vmatprep.subr.bf16.mxu0 0
        %8981 = vmatpush2.bf16.msra.mxu0 %v8942
        %8982 = vmatprep.mubr.bf16.mxu0 %v8409
        %8983 = vmatmul.mubr.bf16.gmra.mxu0 %v8408
        %v8984 = vpop.f32.mrf.mxu0
        %v8985 = vadd.f32 0.0, %v8984
        %v8986 = vpop.f32.mrf.mxu0
        %v8987 = vpop.f32.mrf.mxu0
        %v8988 = vpop.f32.mrf.mxu0
        %8989 = vdwg.mxu0
        %v8990 = vmul.f32 %v8985, %v8933
        %8991 = vst [vmem:[#allocation2 + $0x30] sm:$0xff] %v8990
        %8992 = vmatprep.subr.mxu0 0.0
        %8993 = vmatpush1.msra.mxu0 0.0
        %8994 = vmatprep.subr.mxu0 0.0
        %8995 = vmatpush1.msra.mxu0 0.0
        %8996 = vmatprep.subr.mxu0 0.0
        %8997 = vmatpush1.msra.mxu0 0.0
        %8998 = vmatprep.subr.mxu0 0.0
        %8999 = vmatpush1.msra.mxu0 0.0
        %9000 = vmatprep.subr.mxu0 0.0
        %9001 = vmatpush1.msra.mxu0 0.0
        %9002 = vmatprep.subr.mxu0 0.0
        %9003 = vmatpush1.msra.mxu0 0.0
        %9004 = vmatprep.subr.mxu0 0.0
        %9005 = vmatpush1.msra.mxu0 0.0
        %9006 = vmatprep.subr.mxu0 0.0
        %9007 = vmatpush1.msra.mxu0 0.0
        %9008 = vmatprep.subr.mxu0 0.0
        %9009 = vmatpush1.msra.mxu0 0.0
        %9010 = vmatprep.subr.mxu0 0.0
        %9011 = vmatpush1.msra.mxu0 0.0
        %9012 = vmatprep.subr.mxu0 0.0
        %9013 = vmatpush1.msra.mxu0 0.0
        %9014 = vmatprep.subr.mxu0 0.0
        %9015 = vmatpush1.msra.mxu0 0.0
        %9016 = vmatprep.subr.mxu0 0.0
        %9017 = vmatpush1.msra.mxu0 0.0
        %9018 = vmatprep.subr.mxu0 0.0
        %9019 = vmatpush1.msra.mxu0 0.0
        %9020 = vmatprep.subr.mxu0 0.0
        %9021 = vmatpush1.msra.mxu0 0.0
        %9022 = vmatprep.subr.mxu0 0.0
        %9023 = vmatpush1.msra.mxu0 %v5220
        %9024 = vmatprep.subr.mxu0 0.0
        %9025 = vmatpush2.msra.mxu0 0.0
        %9026 = vmatprep.subr.mxu0 0.0
        %9027 = vmatpush2.msra.mxu0 0.0
        %9028 = vmatprep.subr.mxu0 0.0
        %9029 = vmatpush2.msra.mxu0 0.0
        %9030 = vmatprep.subr.mxu0 0.0
        %9031 = vmatpush2.msra.mxu0 0.0
        %9032 = vmatprep.subr.mxu0 0.0
        %9033 = vmatpush2.msra.mxu0 0.0
        %9034 = vmatprep.subr.mxu0 0.0
        %9035 = vmatpush2.msra.mxu0 0.0
        %9036 = vmatprep.subr.mxu0 0.0
        %9037 = vmatpush2.msra.mxu0 0.0
        %9038 = vmatprep.subr.mxu0 0.0
        %9039 = vmatpush2.msra.mxu0 0.0
        %9040 = vmatprep.subr.mxu0 0.0
        %9041 = vmatpush2.msra.mxu0 0.0
        %9042 = vmatprep.subr.mxu0 0.0
        %9043 = vmatpush2.msra.mxu0 0.0
        %9044 = vmatprep.subr.mxu0 0.0
        %9045 = vmatpush2.msra.mxu0 0.0
        %9046 = vmatprep.subr.mxu0 0.0
        %9047 = vmatpush2.msra.mxu0 0.0
        %9048 = vmatprep.subr.mxu0 0.0
        %9049 = vmatpush2.msra.mxu0 0.0
        %9050 = vmatprep.subr.mxu0 0.0
        %9051 = vmatpush2.msra.mxu0 0.0
        %9052 = vmatprep.subr.mxu0 0.0
        %9053 = vmatpush2.msra.mxu0 0.0
        %9054 = vmatprep.subr.mxu0 0.0
        %9055 = vmatpush2.msra.mxu0 0.0
        %9056 = vmatprep.mubr.f32.mxu0 0.0
        %9057 = vmatmul.mubr.f32.gmra.mxu0 %v8474
        %v9058 = vpop.f32.mrf.mxu0
        %v9059 = vadd.f32 0.0, %v9058
        %v9060 = vpop.f32.mrf.mxu0
        %9061 = vmatprep.mubr.f32.mxu0 0.0
        %9062 = vmatmul.mubr.f32.gmra.mxu0 %v8476
        %v9063 = vpop.f32.mrf.mxu0
        %v9064 = vadd.f32 0.0, %v9063
        %v9065 = vpop.f32.mrf.mxu0
        %9066 = vmatprep.mubr.f32.mxu0 0.0
        %9067 = vmatmul.mubr.f32.gmra.mxu0 %v8478
        %v9068 = vpop.f32.mrf.mxu0
        %v9069 = vadd.f32 0.0, %v9068
        %v9070 = vpop.f32.mrf.mxu0
        %9071 = vmatprep.mubr.f32.mxu0 0.0
        %9072 = vmatmul.mubr.f32.gmra.mxu0 %v8480
        %v9073 = vpop.f32.mrf.mxu0
        %v9074 = vadd.f32 0.0, %v9073
        %v9075 = vpop.f32.mrf.mxu0
        %9076 = vmatprep.mubr.f32.mxu0 0.0
        %9077 = vmatmul.mubr.f32.gmra.mxu0 %v8482
        %v9078 = vpop.f32.mrf.mxu0
        %v9079 = vadd.f32 0.0, %v9078
        %v9080 = vpop.f32.mrf.mxu0
        %9081 = vmatprep.mubr.f32.mxu0 0.0
        %9082 = vmatmul.mubr.f32.gmra.mxu0 %v8484
        %v9083 = vpop.f32.mrf.mxu0
        %v9084 = vadd.f32 0.0, %v9083
        %v9085 = vpop.f32.mrf.mxu0
        %9086 = vmatprep.mubr.f32.mxu0 0.0
        %9087 = vmatmul.mubr.f32.gmra.mxu0 %v8486
        %v9088 = vpop.f32.mrf.mxu0
        %v9089 = vadd.f32 0.0, %v9088
        %v9090 = vpop.f32.mrf.mxu0
        %9091 = vmatprep.mubr.f32.mxu0 0.0
        %9092 = vmatmul.mubr.f32.gmra.mxu0 %v8488
        %v9093 = vpop.f32.mrf.mxu0
        %v9094 = vadd.f32 0.0, %v9093
        %v9095 = vpop.f32.mrf.mxu0
        %9096 = vmatprep.mubr.f32.mxu0 0.0
        %9097 = vmatmul.mubr.f32.gmra.mxu0 %v8490
        %v9098 = vpop.f32.mrf.mxu0
        %v9099 = vadd.f32 0.0, %v9098
        %v9100 = vpop.f32.mrf.mxu0
        %9101 = vmatprep.mubr.f32.mxu0 0.0
        %9102 = vmatmul.mubr.f32.gmra.mxu0 %v8492
        %v9103 = vpop.f32.mrf.mxu0
        %v9104 = vadd.f32 0.0, %v9103
        %v9105 = vpop.f32.mrf.mxu0
        %9106 = vmatprep.mubr.f32.mxu0 0.0
        %9107 = vmatmul.mubr.f32.gmra.mxu0 %v8494
        %v9108 = vpop.f32.mrf.mxu0
        %v9109 = vadd.f32 0.0, %v9108
        %v9110 = vpop.f32.mrf.mxu0
        %9111 = vmatprep.mubr.f32.mxu0 0.0
        %9112 = vmatmul.mubr.f32.gmra.mxu0 %v8496
        %v9113 = vpop.f32.mrf.mxu0
        %v9114 = vadd.f32 0.0, %v9113
        %v9115 = vpop.f32.mrf.mxu0
        %9116 = vmatprep.mubr.f32.mxu0 0.0
        %9117 = vmatmul.mubr.f32.gmra.mxu0 %v8498
        %v9118 = vpop.f32.mrf.mxu0
        %v9119 = vadd.f32 0.0, %v9118
        %v9120 = vpop.f32.mrf.mxu0
        %9121 = vmatprep.mubr.f32.mxu0 0.0
        %9122 = vmatmul.mubr.f32.gmra.mxu0 %v8500
        %v9123 = vpop.f32.mrf.mxu0
        %v9124 = vadd.f32 0.0, %v9123
        %v9125 = vpop.f32.mrf.mxu0
        %9126 = vmatprep.mubr.f32.mxu0 0.0
        %9127 = vmatmul.mubr.f32.gmra.mxu0 %v8502
        %v9128 = vpop.f32.mrf.mxu0
        %v9129 = vadd.f32 0.0, %v9128
        %v9130 = vpop.f32.mrf.mxu0
        %9131 = vmatprep.mubr.f32.mxu0 0.0
        %9132 = vmatmul.mubr.f32.gmra.mxu0 %v8504
        %v9133 = vpop.f32.mrf.mxu0
        %v9134 = vadd.f32 0.0, %v9133
        %v9135 = vpop.f32.mrf.mxu0
        %9136 = vmatprep.mubr.f32.mxu0 0.0
        %9137 = vmatmul.mubr.f32.gmra.mxu0 %v8506
        %v9138 = vpop.f32.mrf.mxu0
        %v9139 = vadd.f32 0.0, %v9138
        %v9140 = vpop.f32.mrf.mxu0
        %9141 = vmatprep.mubr.f32.mxu0 0.0
        %9142 = vmatmul.mubr.f32.gmra.mxu0 %v8508
        %v9143 = vpop.f32.mrf.mxu0
        %v9144 = vadd.f32 0.0, %v9143
        %v9145 = vpop.f32.mrf.mxu0
        %9146 = vmatprep.mubr.f32.mxu0 0.0
        %9147 = vmatmul.mubr.f32.gmra.mxu0 %v8510
        %v9148 = vpop.f32.mrf.mxu0
        %v9149 = vadd.f32 0.0, %v9148
        %v9150 = vpop.f32.mrf.mxu0
        %9151 = vmatprep.mubr.f32.mxu0 0.0
        %9152 = vmatmul.mubr.f32.gmra.mxu0 %v8512
        %v9153 = vpop.f32.mrf.mxu0
        %v9154 = vadd.f32 0.0, %v9153
        %v9155 = vpop.f32.mrf.mxu0
        %9156 = vmatprep.mubr.f32.mxu0 0.0
        %9157 = vmatmul.mubr.f32.gmra.mxu0 %v8514
        %v9158 = vpop.f32.mrf.mxu0
        %v9159 = vadd.f32 0.0, %v9158
        %v9160 = vpop.f32.mrf.mxu0
        %9161 = vmatprep.mubr.f32.mxu0 0.0
        %9162 = vmatmul.mubr.f32.gmra.mxu0 %v8516
        %v9163 = vpop.f32.mrf.mxu0
        %v9164 = vadd.f32 0.0, %v9163
        %v9165 = vpop.f32.mrf.mxu0
        %9166 = vmatprep.mubr.f32.mxu0 0.0
        %9167 = vmatmul.mubr.f32.gmra.mxu0 %v8518
        %v9168 = vpop.f32.mrf.mxu0
        %v9169 = vadd.f32 0.0, %v9168
        %v9170 = vpop.f32.mrf.mxu0
        %9171 = vmatprep.mubr.f32.mxu0 0.0
        %9172 = vmatmul.mubr.f32.gmra.mxu0 %v8520
        %v9173 = vpop.f32.mrf.mxu0
        %v9174 = vadd.f32 0.0, %v9173
        %v9175 = vpop.f32.mrf.mxu0
        %9176 = vmatprep.mubr.f32.mxu0 0.0
        %9177 = vmatmul.mubr.f32.gmra.mxu0 %v8522
        %v9178 = vpop.f32.mrf.mxu0
        %v9179 = vadd.f32 0.0, %v9178
        %v9180 = vpop.f32.mrf.mxu0
        %9181 = vmatprep.mubr.f32.mxu0 0.0
        %9182 = vmatmul.mubr.f32.gmra.mxu0 %v8524
        %v9183 = vpop.f32.mrf.mxu0
        %v9184 = vadd.f32 0.0, %v9183
        %v9185 = vpop.f32.mrf.mxu0
        %9186 = vmatprep.mubr.f32.mxu0 0.0
        %9187 = vmatmul.mubr.f32.gmra.mxu0 %v8526
        %v9188 = vpop.f32.mrf.mxu0
        %v9189 = vadd.f32 0.0, %v9188
        %v9190 = vpop.f32.mrf.mxu0
        %9191 = vmatprep.mubr.f32.mxu0 0.0
        %9192 = vmatmul.mubr.f32.gmra.mxu0 %v8528
        %v9193 = vpop.f32.mrf.mxu0
        %v9194 = vadd.f32 0.0, %v9193
        %v9195 = vpop.f32.mrf.mxu0
        %9196 = vmatprep.mubr.f32.mxu0 0.0
        %9197 = vmatmul.mubr.f32.gmra.mxu0 %v8530
        %v9198 = vpop.f32.mrf.mxu0
        %v9199 = vadd.f32 0.0, %v9198
        %v9200 = vpop.f32.mrf.mxu0
        %9201 = vmatprep.mubr.f32.mxu0 0.0
        %9202 = vmatmul.mubr.f32.gmra.mxu0 %v8532
        %v9203 = vpop.f32.mrf.mxu0
        %v9204 = vadd.f32 0.0, %v9203
        %v9205 = vpop.f32.mrf.mxu0
        %9206 = vmatprep.mubr.f32.mxu0 0.0
        %9207 = vmatmul.mubr.f32.gmra.mxu0 %v8534
        %v9208 = vpop.f32.mrf.mxu0
        %v9209 = vadd.f32 0.0, %v9208
        %v9210 = vpop.f32.mrf.mxu0
        %9211 = vmatprep.mubr.f32.mxu0 0.0
        %9212 = vmatmul.mubr.f32.gmra.mxu0 %v8536
        %v9213 = vpop.f32.mrf.mxu0
        %v9214 = vadd.f32 0.0, %v9213
        %v9215 = vpop.f32.mrf.mxu0
        %9216 = vdwg.mxu0
        %v9217 = vmax.f32 %v9059, %v9079
        %v9218 = vmax.f32 %v9064, %v9084
        %v9219 = vmax.f32 %v9069, %v9089
        %v9220 = vmax.f32 %v9074, %v9094
        %v9221 = vmax.f32 %v9217, %v9099
        %v9222 = vmax.f32 %v9218, %v9104
        %v9223 = vmax.f32 %v9219, %v9109
        %v9224 = vmax.f32 %v9220, %v9114
        %v9225 = vmax.f32 %v9221, %v9119
        %v9226 = vmax.f32 %v9222, %v9124
        %v9227 = vmax.f32 %v9223, %v9129
        %v9228 = vmax.f32 %v9224, %v9134
        %v9229 = vmax.f32 %v9225, %v9139
        %v9230 = vmax.f32 %v9226, %v9144
        %v9231 = vmax.f32 %v9227, %v9149
        %v9232 = vmax.f32 %v9228, %v9154
        %v9233 = vmax.f32 %v9229, %v9159
        %v9234 = vmax.f32 %v9230, %v9164
        %v9235 = vmax.f32 %v9231, %v9169
        %v9236 = vmax.f32 %v9232, %v9174
        %v9237 = vmax.f32 %v9233, %v9179
        %v9238 = vmax.f32 %v9234, %v9184
        %v9239 = vmax.f32 %v9235, %v9189
        %v9240 = vmax.f32 %v9236, %v9194
        %v9241 = vmax.f32 %v9237, %v9199
        %v9242 = vmax.f32 %v9238, %v9204
        %v9243 = vmax.f32 %v9239, %v9209
        %v9244 = vmax.f32 %v9240, %v9214
        %v9245 = vmax.f32 %v9241, %v9242
        %v9246 = vmax.f32 %v9243, %v9244
        %v9247 = vmax.f32 %v9245, %v9246
        %v9248 = vrot.slane %v9247, 4
        %v9249 = vmax.f32 %v9247, %v9248
        %v9250 = vrot.slane %v9249, 2
        %v9251 = vmax.f32 %v9249, %v9250
        %v9252 = vrot.slane %v9251, 1
        %v9253 = vmax.f32 %v9251, %v9252
        %v9254 = vsub.f32 %v9059, %v9253
        %v9255 = vsub.f32 %v9064, %v9253
        %v9256 = vsub.f32 %v9069, %v9253
        %v9257 = vsub.f32 %v9074, %v9253
        %v9258 = vsub.f32 %v9079, %v9253
        %v9259 = vsub.f32 %v9084, %v9253
        %v9260 = vsub.f32 %v9089, %v9253
        %v9261 = vsub.f32 %v9094, %v9253
        %v9262 = vsub.f32 %v9099, %v9253
        %v9263 = vsub.f32 %v9104, %v9253
        %v9264 = vsub.f32 %v9109, %v9253
        %v9265 = vsub.f32 %v9114, %v9253
        %v9266 = vsub.f32 %v9119, %v9253
        %v9267 = vsub.f32 %v9124, %v9253
        %v9268 = vsub.f32 %v9129, %v9253
        %v9269 = vsub.f32 %v9134, %v9253
        %v9270 = vsub.f32 %v9139, %v9253
        %v9271 = vsub.f32 %v9144, %v9253
        %v9272 = vsub.f32 %v9149, %v9253
        %v9273 = vsub.f32 %v9154, %v9253
        %v9274 = vsub.f32 %v9159, %v9253
        %v9275 = vsub.f32 %v9164, %v9253
        %v9276 = vsub.f32 %v9169, %v9253
        %v9277 = vsub.f32 %v9174, %v9253
        %v9278 = vsub.f32 %v9179, %v9253
        %v9279 = vsub.f32 %v9184, %v9253
        %v9280 = vsub.f32 %v9189, %v9253
        %v9281 = vsub.f32 %v9194, %v9253
        %v9282 = vsub.f32 %v9199, %v9253
        %v9283 = vsub.f32 %v9204, %v9253
        %v9284 = vsub.f32 %v9209, %v9253
        %v9285 = vsub.f32 %v9214, %v9253
        %v9286 = vmul.f32 %v9254, 1.442695
        %v9287 = vpow.pop %v9286
        %v9288 = vmul.f32 %v9255, 1.442695
        %v9289 = vpow.pop %v9288
        %v9290 = vmul.f32 %v9256, 1.442695
        %v9291 = vpow.pop %v9290
        %v9292 = vmul.f32 %v9257, 1.442695
        %v9293 = vpow.pop %v9292
        %v9294 = vmul.f32 %v9258, 1.442695
        %v9295 = vpow.pop %v9294
        %v9296 = vmul.f32 %v9259, 1.442695
        %v9297 = vpow.pop %v9296
        %v9298 = vmul.f32 %v9260, 1.442695
        %v9299 = vpow.pop %v9298
        %v9300 = vmul.f32 %v9261, 1.442695
        %v9301 = vpow.pop %v9300
        %v9302 = vmul.f32 %v9262, 1.442695
        %v9303 = vpow.pop %v9302
        %v9304 = vmul.f32 %v9263, 1.442695
        %v9305 = vpow.pop %v9304
        %v9306 = vmul.f32 %v9264, 1.442695
        %v9307 = vpow.pop %v9306
        %v9308 = vmul.f32 %v9265, 1.442695
        %v9309 = vpow.pop %v9308
        %v9310 = vmul.f32 %v9266, 1.442695
        %v9311 = vpow.pop %v9310
        %v9312 = vmul.f32 %v9267, 1.442695
        %v9313 = vpow.pop %v9312
        %v9314 = vmul.f32 %v9268, 1.442695
        %v9315 = vpow.pop %v9314
        %v9316 = vmul.f32 %v9269, 1.442695
        %v9317 = vpow.pop %v9316
        %v9318 = vmul.f32 %v9270, 1.442695
        %v9319 = vpow.pop %v9318
        %v9320 = vmul.f32 %v9271, 1.442695
        %v9321 = vpow.pop %v9320
        %v9322 = vmul.f32 %v9272, 1.442695
        %v9323 = vpow.pop %v9322
        %v9324 = vmul.f32 %v9273, 1.442695
        %v9325 = vpow.pop %v9324
        %v9326 = vmul.f32 %v9274, 1.442695
        %v9327 = vpow.pop %v9326
        %v9328 = vmul.f32 %v9275, 1.442695
        %v9329 = vpow.pop %v9328
        %v9330 = vmul.f32 %v9276, 1.442695
        %v9331 = vpow.pop %v9330
        %v9332 = vmul.f32 %v9277, 1.442695
        %v9333 = vpow.pop %v9332
        %v9334 = vmul.f32 %v9278, 1.442695
        %v9335 = vpow.pop %v9334
        %v9336 = vmul.f32 %v9279, 1.442695
        %v9337 = vpow.pop %v9336
        %v9338 = vmul.f32 %v9280, 1.442695
        %v9339 = vpow.pop %v9338
        %v9340 = vmul.f32 %v9281, 1.442695
        %v9341 = vpow.pop %v9340
        %v9342 = vmul.f32 %v9282, 1.442695
        %v9343 = vpow.pop %v9342
        %v9344 = vmul.f32 %v9283, 1.442695
        %v9345 = vpow.pop %v9344
        %v9346 = vmul.f32 %v9284, 1.442695
        %v9347 = vpow.pop %v9346
        %v9348 = vmul.f32 %v9285, 1.442695
        %v9349 = vpow.pop %v9348
        %v9350 = vadd.f32 %v9287, %v9289
        %v9351 = vadd.f32 %v9350, %v9291
        %v9352 = vadd.f32 %v9351, %v9293
        %v9353 = vadd.f32 %v9352, %v9295
        %v9354 = vadd.f32 %v9353, %v9297
        %v9355 = vadd.f32 %v9354, %v9299
        %v9356 = vadd.f32 %v9355, %v9301
        %v9357 = vadd.f32 %v9356, %v9303
        %v9358 = vadd.f32 %v9357, %v9305
        %v9359 = vadd.f32 %v9358, %v9307
        %v9360 = vadd.f32 %v9359, %v9309
        %v9361 = vadd.f32 %v9360, %v9311
        %v9362 = vadd.f32 %v9361, %v9313
        %v9363 = vadd.f32 %v9362, %v9315
        %v9364 = vadd.f32 %v9363, %v9317
        %v9365 = vadd.f32 %v9364, %v9319
        %v9366 = vadd.f32 %v9365, %v9321
        %v9367 = vadd.f32 %v9366, %v9323
        %v9368 = vadd.f32 %v9367, %v9325
        %v9369 = vadd.f32 %v9368, %v9327
        %v9370 = vadd.f32 %v9369, %v9329
        %v9371 = vadd.f32 %v9370, %v9331
        %v9372 = vadd.f32 %v9371, %v9333
        %v9373 = vadd.f32 %v9372, %v9335
        %v9374 = vadd.f32 %v9373, %v9337
        %v9375 = vadd.f32 %v9374, %v9339
        %v9376 = vadd.f32 %v9375, %v9341
        %v9377 = vadd.f32 %v9376, %v9343
        %v9378 = vadd.f32 %v9377, %v9345
        %v9379 = vadd.f32 %v9378, %v9347
        %v9380 = vadd.f32 %v9379, %v9349
        %v9381 = vrot.slane %v9380, 4
        %v9382 = vadd.f32 %v9380, %v9381
        %v9383 = vrot.slane %v9382, 2
        %v9384 = vadd.f32 %v9382, %v9383
        %v9385 = vrot.slane %v9384, 1
        %v9386 = vadd.f32 %v9384, %v9385
        %v9387 = vrcp.pop %v9386
        %v9388 = vpack.c.bf16 %v9289, %v9287
        %v9389 = vpack.c.bf16 %v9293, %v9291
        %v9390 = vpack.c.bf16 %v9297, %v9295
        %v9391 = vpack.c.bf16 %v9301, %v9299
        %v9392 = vpack.c.bf16 %v9305, %v9303
        %v9393 = vpack.c.bf16 %v9309, %v9307
        %v9394 = vpack.c.bf16 %v9313, %v9311
        %v9395 = vpack.c.bf16 %v9317, %v9315
        %v9396 = vpack.c.bf16 %v9321, %v9319
        %v9397 = vpack.c.bf16 %v9325, %v9323
        %v9398 = vpack.c.bf16 %v9329, %v9327
        %v9399 = vpack.c.bf16 %v9333, %v9331
        %v9400 = vpack.c.bf16 %v9337, %v9335
        %v9401 = vpack.c.bf16 %v9341, %v9339
        %v9402 = vpack.c.bf16 %v9345, %v9343
        %v9403 = vpack.c.bf16 %v9349, %v9347
        %9404 = vmatprep.subr.bf16.mxu0 0
        %9405 = vmatpush1.bf16.msra.mxu0 %v9395
        %9406 = vmatprep.subr.bf16.mxu0 0
        %9407 = vmatpush1.bf16.msra.mxu0 %v9394
        %9408 = vmatprep.subr.bf16.mxu0 0
        %9409 = vmatpush1.bf16.msra.mxu0 %v9393
        %9410 = vmatprep.subr.bf16.mxu0 0
        %9411 = vmatpush1.bf16.msra.mxu0 %v9392
        %9412 = vmatprep.subr.bf16.mxu0 0
        %9413 = vmatpush1.bf16.msra.mxu0 %v9391
        %9414 = vmatprep.subr.bf16.mxu0 0
        %9415 = vmatpush1.bf16.msra.mxu0 %v9390
        %9416 = vmatprep.subr.bf16.mxu0 0
        %9417 = vmatpush1.bf16.msra.mxu0 %v9389
        %9418 = vmatprep.subr.bf16.mxu0 0
        %9419 = vmatpush1.bf16.msra.mxu0 %v9388
        %9420 = vmatprep.subr.bf16.mxu0 0
        %9421 = vmatpush2.bf16.msra.mxu0 %v9403
        %9422 = vmatprep.subr.bf16.mxu0 0
        %9423 = vmatpush2.bf16.msra.mxu0 %v9402
        %9424 = vmatprep.subr.bf16.mxu0 0
        %9425 = vmatpush2.bf16.msra.mxu0 %v9401
        %9426 = vmatprep.subr.bf16.mxu0 0
        %9427 = vmatpush2.bf16.msra.mxu0 %v9400
        %9428 = vmatprep.subr.bf16.mxu0 0
        %9429 = vmatpush2.bf16.msra.mxu0 %v9399
        %9430 = vmatprep.subr.bf16.mxu0 0
        %9431 = vmatpush2.bf16.msra.mxu0 %v9398
        %9432 = vmatprep.subr.bf16.mxu0 0
        %9433 = vmatpush2.bf16.msra.mxu0 %v9397
        %9434 = vmatprep.subr.bf16.mxu0 0
        %9435 = vmatpush2.bf16.msra.mxu0 %v9396
        %9436 = vmatprep.mubr.bf16.mxu0 %v8409
        %9437 = vmatmul.mubr.bf16.gmra.mxu0 %v8408
        %v9438 = vpop.f32.mrf.mxu0
        %v9439 = vadd.f32 0.0, %v9438
        %v9440 = vpop.f32.mrf.mxu0
        %v9441 = vpop.f32.mrf.mxu0
        %v9442 = vpop.f32.mrf.mxu0
        %9443 = vdwg.mxu0
        %v9444 = vmul.f32 %v9439, %v9387
        %9445 = vst [vmem:[#allocation2 + $0x38] sm:$0xff] %v9444
        %s9446 = scalar_lea.vmem %s5, 16
        %v9447 = vld [vmem:[%s9446] sm:$0xf]
        %v9448 = vld [vmem:[%s9446 + $0x4] sm:$0xf]
        %v9449 = vld [vmem:[%s9446 + $0x8] sm:$0xf]
        %v9450 = vld [vmem:[%s9446 + $0xc] sm:$0xf]
        %v9451 = vld [vmem:[#allocation2] sm:$0xff]
        %v9452 = vld [vmem:[#allocation2 + $0x8] sm:$0xff]
        %v9453 = vld [vmem:[#allocation2 + $0x10] sm:$0xff]
        %v9454 = vld [vmem:[#allocation2 + $0x18] sm:$0xff]
        %v9455 = vld [vmem:[#allocation2 + $0x20] sm:$0xff]
        %v9456 = vld [vmem:[#allocation2 + $0x28] sm:$0xff]
        %v9457 = vld [vmem:[#allocation2 + $0x30] sm:$0xff]
        %v9458 = vld [vmem:[#allocation2 + $0x38] sm:$0xff]
        %v9459 = vpack.c.bf16 %v9453, %v9451
        %v9460 = vpack.c.bf16 %v9454, %v9452
        %v9461 = vpack.c.bf16 %v9457, %v9455
        %v9462 = vpack.c.bf16 %v9458, %v9456
        %s9463 = scalar_lea.vmem %s6, 32
        %v9464 = vld [vmem:[%s9463] sm:$0xff]
        %v9465 = vld [vmem:[%s9463 + $0x8] sm:$0xff]
        %v9466 = vld [vmem:[%s9463 + $0x10] sm:$0xff]
        %v9467 = vld [vmem:[%s9463 + $0x18] sm:$0xff]
        %9469 = vset.pattern.permute.xlu0 0
        %9470 = vperm.xlu0 %9469, %v9464
        %v9471 = vpop.permute.xlu0 %9470
        %9474 = vset.pattern.permute.xlu0 0
        %9475 = vperm.xlu0 %9474, %v9465
        %v9476 = vpop.permute.xlu0 %9475
        %9479 = vset.pattern.permute.xlu0 0
        %9480 = vperm.xlu0 %9479, %v9466
        %v9481 = vpop.permute.xlu0 %9480
        %9484 = vset.pattern.permute.xlu0 0
        %9485 = vperm.xlu0 %9484, %v9467
        %v9486 = vpop.permute.xlu0 %9485
        %v9492 = vunpack.c.l.b16 %v9447
        %v9493 = vunpack.c.l.b16 %v9448
        %v9494 = vunpack.c.l.b16 %v9449
        %v9495 = vunpack.c.l.b16 %v9450
        %v9496 = vpack.c.b16 %v9493, %v9492
        %v9497 = vpack.c.b16 %v9495, %v9494
        %v9499 = vsel %vm355, %v9496, 0
        %v9502 = vsel %vm355, %v9497, 0
        %9504 = vmatprep.subr.bf16.mxu0 0
        %9505 = vmatpush1.bf16.msra.mxu0 0
        %9506 = vmatprep.subr.bf16.mxu0 0
        %9507 = vmatpush1.bf16.msra.mxu0 0
        %9508 = vmatprep.subr.bf16.mxu0 0
        %9509 = vmatpush1.bf16.msra.mxu0 0
        %9510 = vmatprep.subr.bf16.mxu0 0
        %9511 = vmatpush1.bf16.msra.mxu0 0
        %9512 = vmatprep.subr.bf16.mxu0 0
        %9513 = vmatpush1.bf16.msra.mxu0 0
        %9514 = vmatprep.subr.bf16.mxu0 0
        %9515 = vmatpush1.bf16.msra.mxu0 0
        %9516 = vmatprep.subr.bf16.mxu0 %v9462
        %9517 = vmatpush1.bf16.msra.mxu0 %v9461
        %9518 = vmatprep.subr.bf16.mxu0 %v9460
        %9519 = vmatpush1.bf16.msra.mxu0 %v9459
        %9520 = vmatprep.subr.bf16.mxu0 0
        %9521 = vmatpush2.bf16.msra.mxu0 0
        %9522 = vmatprep.subr.bf16.mxu0 0
        %9523 = vmatpush2.bf16.msra.mxu0 0
        %9524 = vmatprep.subr.bf16.mxu0 0
        %9525 = vmatpush2.bf16.msra.mxu0 0
        %9526 = vmatprep.subr.bf16.mxu0 0
        %9527 = vmatpush2.bf16.msra.mxu0 0
        %9528 = vmatprep.subr.bf16.mxu0 0
        %9529 = vmatpush2.bf16.msra.mxu0 0
        %9530 = vmatprep.subr.bf16.mxu0 0
        %9531 = vmatpush2.bf16.msra.mxu0 0
        %9532 = vmatprep.subr.bf16.mxu0 0
        %9533 = vmatpush2.bf16.msra.mxu0 0
        %9534 = vmatprep.subr.bf16.mxu0 0
        %9535 = vmatpush2.bf16.msra.mxu0 0
        %9536 = vmatprep.mubr.bf16.mxu0 0
        %9537 = vmatmul.mubr.bf16.gmra.mxu0 %v9499
        %v9538 = vpop.f32.mrf.mxu0
        %v9539 = vadd.f32 %v9471, %v9538
        %v9540 = vpop.f32.mrf.mxu0
        %v9541 = vadd.f32 %v9471, %v9540
        %v9542 = vpop.f32.mrf.mxu0
        %v9543 = vadd.f32 %v9476, %v9542
        %v9544 = vpop.f32.mrf.mxu0
        %v9545 = vadd.f32 %v9476, %v9544
        %9546 = vmatprep.mubr.bf16.mxu0 0
        %9547 = vmatmul.mubr.bf16.gmra.mxu0 %v9502
        %v9548 = vpop.f32.mrf.mxu0
        %v9549 = vadd.f32 %v9481, %v9548
        %v9550 = vpop.f32.mrf.mxu0
        %v9551 = vadd.f32 %v9481, %v9550
        %v9552 = vpop.f32.mrf.mxu0
        %v9553 = vadd.f32 %v9486, %v9552
        %v9554 = vpop.f32.mrf.mxu0
        %v9555 = vadd.f32 %v9486, %v9554
        %9556 = vdwg.mxu0
        %v9557 = vadd.f32 %v9539, %v5013
        %v9558 = vadd.f32 %v9541, %v5015
        %v9559 = vadd.f32 %v9543, %v5017
        %v9560 = vadd.f32 %v9545, %v5019
        %v9561 = vadd.f32 %v9549, %v5023
        %v9562 = vadd.f32 %v9551, %v5025
        %v9563 = vadd.f32 %v9553, %v5027
        %v9564 = vadd.f32 %v9555, %v5029
        %s9565 = scalar_lea.vmem %s7, 16
        %v9566 = vld [vmem:[%s9565] sm:$0xf]
        %v9567 = vld [vmem:[%s9565 + $0x4] sm:$0xf]
        %v9568 = vld [vmem:[%s9565 + $0x8] sm:$0xf]
        %v9569 = vld [vmem:[%s9565 + $0xc] sm:$0xf]
        %v9570 = vpack.c.bf16 %v9559, %v9557
        %v9571 = vpack.c.bf16 %v9560, %v9558
        %v9572 = vpack.c.bf16 %v9563, %v9561
        %v9573 = vpack.c.bf16 %v9564, %v9562
        %v9578 = vunpack.c.l.b16 %v9566
        %v9579 = vunpack.c.l.b16 %v9567
        %v9580 = vunpack.c.l.b16 %v9568
        %v9581 = vunpack.c.l.b16 %v9569
        %v9582 = vpack.c.b16 %v9579, %v9578
        %v9583 = vpack.c.b16 %v9581, %v9580
        %v9585 = vsel %vm355, %v9582, 0
        %v9588 = vsel %vm355, %v9583, 0
        %9590 = vmatprep.subr.bf16.mxu0 0
        %9591 = vmatpush1.bf16.msra.mxu0 0
        %9592 = vmatprep.subr.bf16.mxu0 0
        %9593 = vmatpush1.bf16.msra.mxu0 0
        %9594 = vmatprep.subr.bf16.mxu0 0
        %9595 = vmatpush1.bf16.msra.mxu0 0
        %9596 = vmatprep.subr.bf16.mxu0 0
        %9597 = vmatpush1.bf16.msra.mxu0 0
        %9598 = vmatprep.subr.bf16.mxu0 0
        %9599 = vmatpush1.bf16.msra.mxu0 0
        %9600 = vmatprep.subr.bf16.mxu0 0
        %9601 = vmatpush1.bf16.msra.mxu0 0
        %9602 = vmatprep.subr.bf16.mxu0 %v9573
        %9603 = vmatpush1.bf16.msra.mxu0 %v9572
        %9604 = vmatprep.subr.bf16.mxu0 %v9571
        %9605 = vmatpush1.bf16.msra.mxu0 %v9570
        %9606 = vmatprep.subr.bf16.mxu0 0
        %9607 = vmatpush2.bf16.msra.mxu0 0
        %9608 = vmatprep.subr.bf16.mxu0 0
        %9609 = vmatpush2.bf16.msra.mxu0 0
        %9610 = vmatprep.subr.bf16.mxu0 0
        %9611 = vmatpush2.bf16.msra.mxu0 0
        %9612 = vmatprep.subr.bf16.mxu0 0
        %9613 = vmatpush2.bf16.msra.mxu0 0
        %9614 = vmatprep.subr.bf16.mxu0 0
        %9615 = vmatpush2.bf16.msra.mxu0 0
        %9616 = vmatprep.subr.bf16.mxu0 0
        %9617 = vmatpush2.bf16.msra.mxu0 0
        %9618 = vmatprep.subr.bf16.mxu0 0
        %9619 = vmatpush2.bf16.msra.mxu0 0
        %9620 = vmatprep.subr.bf16.mxu0 0
        %9621 = vmatpush2.bf16.msra.mxu0 0
        %9622 = vmatprep.mubr.bf16.mxu0 0
        %9623 = vmatmul.mubr.bf16.gmra.mxu0 %v9585
        %v9624 = vpop.f32.mrf.mxu0
        %v9625 = vadd.f32 %v9557, %v9624
        %v9626 = vpop.f32.mrf.mxu0
        %v9627 = vadd.f32 %v9558, %v9626
        %v9628 = vpop.f32.mrf.mxu0
        %v9629 = vadd.f32 %v9559, %v9628
        %v9630 = vpop.f32.mrf.mxu0
        %v9631 = vadd.f32 %v9560, %v9630
        %9632 = vmatprep.mubr.bf16.mxu0 0
        %9633 = vmatmul.mubr.bf16.gmra.mxu0 %v9588
        %v9634 = vpop.f32.mrf.mxu0
        %v9635 = vadd.f32 %v9561, %v9634
        %v9636 = vpop.f32.mrf.mxu0
        %v9637 = vadd.f32 %v9562, %v9636
        %v9638 = vpop.f32.mrf.mxu0
        %v9639 = vadd.f32 %v9563, %v9638
        %v9640 = vpop.f32.mrf.mxu0
        %v9641 = vadd.f32 %v9564, %v9640
        %9642 = vdwg.mxu0
        %9643 = vst [vmem:[%s298] sm:$0xff] %v9625
        %9644 = vst [vmem:[%s298 + $0x8] sm:$0xff] %v9627
        %9645 = vst [vmem:[%s298 + $0x10] sm:$0xff] %v9629
        %9646 = vst [vmem:[%s298 + $0x18] sm:$0xff] %v9631
        %9647 = vst [vmem:[%s298 + $0x20] sm:$0xff] %v9635
        %9648 = vst [vmem:[%s298 + $0x28] sm:$0xff] %v9637
        %9649 = vst [vmem:[%s298 + $0x30] sm:$0xff] %v9639
        %9650 = vst [vmem:[%s298 + $0x38] sm:$0xff] %v9641
        %s9651 = sand.u32 %s203, 1
        %s9652 = scalar_lea.sflag [#allocation4], %s9651
        %s9653 = sand.u32 %s203, 1
        %s9654 = smul.addr %s9653, 64
        %s9655 = scalar_lea.vmem [#allocation3], %s9654
        // Predicated region
        $region53: #{tpu_custom_call.1} parent=51 // pred_check
          %p9656 = pneg %p213
        $region54: #{tpu_custom_call.1} parent=51 // pred_check_branch
          %9658 = sbr.rel (%p9656) target = $region56
        $region55: #{tpu_custom_call.1} parent=51 // pred_region
          %s9660 = ssub.s32 1024, 1024
          %9661 = vsyncadd %s9652, %s9660
          %s9662 = smul.addr %s22, 8
          %s9663 = smul.addr %s9662, 128
          %s9664 = scalar_lea.hbm %s8, %s9663
          %s9665 = sshll.u32 %s9655, 4
          %s9666 = int_to_ptr.vmem [resolvable:$true] %s9665
          %9671 = dma.vmem_to_hbm [thread:$0]  %s9666, 1024, %s9664, %s9652, 256, 256, 16
        $region56: #{tpu_custom_call.1} parent=51 // pred_fallthru
          _
      $region52: #{tpu_custom_call.1} parent=5 // pred_fallthru
        _
      %p9672 = scmp.le.s32.totalorder 2, %s17
      // Predicated region
      $region57: #{tpu_custom_call.1} parent=5 // pred_check
        %p9673 = pneg %p9672
      $region58: #{tpu_custom_call.1} parent=5 // pred_check_branch
        %9675 = sbr.rel (%p9673) target = $region60
      $region59: #{tpu_custom_call.1} parent=5 // pred_region
        %s9676 = ssub.s32 %s17, 2
        // Predicated region
        $region61: #{tpu_custom_call.1} parent=59 // pred_check
          %p9677 = pneg %p219
        $region62: #{tpu_custom_call.1} parent=59 // pred_check_branch
          %9679 = sbr.rel (%p9677) target = $region64
        $region63: #{tpu_custom_call.1} parent=59 // pred_region
          %s9680 = sand.u32 %s204, 1
          %s9681 = scalar_lea.sflag [#allocation4], %s9680
          %s9682 = sand.u32 %s204, 1
          %s9683 = smul.addr %s9682, 64
          %s9684 = scalar_lea.vmem [#allocation3], %s9683
          %9685 = dma.done %s9681, 1024
        $region64: #{tpu_custom_call.1} parent=59 // pred_fallthru
          _
      $region60: #{tpu_custom_call.1} parent=5 // pred_fallthru
        _
    $region6: #{tpu_custom_call.1} parent=1 // loop_footer
      %s21 = sadd.s32 1, %s17
    $region7: #{tpu_custom_call.1} parent=1 // loop_footer_branch
      %16 = sbr.rel target = $region3
    $region8: #{tpu_custom_call.1} parent=1 // loop_exit
      _
    %9686 = vsyncpa [#allocation4], 1
    %s9687 = scalar_lea.sflag [#allocation4], 1
    %9688 = vsyncpa %s9687, 1

</llo_original>
